<compile_context>
chip_gen: v6e
topology: v6e:2x2x1
jax: 0.10.0
libtpu: 0.0.40
codegen_flags: <defaults>
</compile_context>

<pallas_src>
import functools

import jax
import jax.numpy as jnp
from jax import lax
from jax.experimental import pallas as pl
from jax.experimental.pallas import tpu as pltpu


# ----------------------------------------------------------------------------
# In-kernel building blocks
# ----------------------------------------------------------------------------
def _reflect_pad_into(pad_ref, x):
    """Write ReflectionPad2d(1) of x (H, W, C) into pad_ref (H+2, W+2, C)."""
    hh, ww, _ = x.shape
    pad_ref[1:hh + 1, 1:ww + 1, :] = x                       # interior
    pad_ref[0:1, 1:ww + 1, :] = x[1:2]                       # top    <- row 1
    pad_ref[hh + 1:hh + 2, 1:ww + 1, :] = x[hh - 2:hh - 1]   # bottom <- row H-2
    # Column reflection reads rows just written, so the corners come out right.
    pad_ref[:, 0:1, :] = pad_ref[:, 2:3, :]
    pad_ref[:, ww + 1:ww + 2, :] = pad_ref[:, ww - 1:ww, :]


def _conv3x3(pad_ref, slab_ref, w, hh, ww, cin, cout):
    """3x3 "VALID" conv on a reflect-padded (H+2, W+2, Cin) bf16 scratch tile.

    The three kh taps are concatenated along channels into a (H, W+2, 3*Cin)
    VMEM slab, so the inner loop is 3 MXU matmuls with K = 3*Cin (f32 accum)
    instead of 9 taps with K = Cin.
    """
    for kh in range(3):
        slab_ref[:, :, kh * cin:(kh + 1) * cin] = pad_ref[kh:kh + hh]
    k3 = 3 * cin
    acc = None
    for kw in range(3):
        patch = slab_ref[:, kw:kw + ww, :].reshape(hh * ww, k3)   # bf16
        part = jnp.dot(patch, w[kw * k3:(kw + 1) * k3, :],
                       preferred_element_type=jnp.float32)
        acc = part if acc is None else acc + part
    return acc                                                    # (H*W, Cout) f32


def _instance_norm(y, gamma, beta, eps):
    """InstanceNorm2d (per-sample, per-channel stats over H*W, biased var)."""
    mean = jnp.mean(y, axis=0, keepdims=True)
    var = jnp.mean(jnp.square(y - mean), axis=0, keepdims=True)
    return (y - mean) * lax.rsqrt(var + eps) * gamma + beta


# ----------------------------------------------------------------------------
# Fused ResidualBlock kernel (per batch block)
# ----------------------------------------------------------------------------
def residual_block_kernel(x_ref, w1_ref, g1_ref, b1_ref, w2_ref, g2_ref, b2_ref,
                          sw1_ref, sb1_ref, sw2_ref, sb2_ref, o_ref,
                          pad1_ref, slab1_ref, pad2_ref, slab2_ref,
                          *, bb, hh, ww, c, cmid, eps):
    w1 = w1_ref[...]
    w2 = w2_ref[...]
    g1, b1 = g1_ref[...], b1_ref[...]
    g2, b2 = g2_ref[...], b2_ref[...]
    sw1, sb1 = sw1_ref[...], sb1_ref[...]
    sw2, sb2 = sw2_ref[...], sb2_ref[...]

    for b in range(bb):                       # static (unrolled) per-sample loop
        x32 = x_ref[b]                                           # (H, W, C) f32

        # --- conv1 = reflect-pad + 3x3 conv + InstanceNorm, then ReLU --------
        _reflect_pad_into(pad1_ref, x32.astype(jnp.bfloat16))    # bf16 cast once
        y1 = _conv3x3(pad1_ref, slab1_ref, w1, hh, ww, c, cmid)  # (H*W, Cmid)
        h1 = jnp.maximum(_instance_norm(y1, g1, b1, eps), 0.0)

        # --- conv2 = reflect-pad + 3x3 conv + InstanceNorm (h1 stays in VMEM) -
        _reflect_pad_into(pad2_ref,
                          h1.astype(jnp.bfloat16).reshape(hh, ww, cmid))
        y2 = _conv3x3(pad2_ref, slab2_ref, w2, hh, ww, cmid, c)  # (H*W, C)
        z = _instance_norm(y2, g2, b2, eps)

        # --- Squeeze-Excitation: GAP -> Linear -> ReLU -> Linear -> sigmoid --
        gap = jnp.mean(z, axis=0, keepdims=True)                 # (1, C)
        s = jnp.maximum(
            jnp.dot(gap, sw1, preferred_element_type=jnp.float32) + sb1, 0.0)
        e = jnp.dot(s, sw2, preferred_element_type=jnp.float32) + sb2
        gate = pl.reciprocal(1.0 + jnp.exp(-e), approx=True)     # sigmoid (EUP)

        # --- gate + residual --------------------------------------------------
        out = z * gate + x32.reshape(hh * ww, c)
        o_ref[b] = out.reshape(hh, ww, c)


# ----------------------------------------------------------------------------
# pallas_call wrapper
# ----------------------------------------------------------------------------
def residual_block_forward(params, x, *, eps=1e-5, batch_block=1):
    """x: (N, H, W, C) NHWC.  Matches ResidualBlock.forward."""
    n, hh, ww, c = x.shape
    cmid = params["g1"].shape[-1]
    bb = batch_block
    assert n % bb == 0, (n, bb)

    kernel = functools.partial(residual_block_kernel, bb=bb, hh=hh, ww=ww,
                               c=c, cmid=cmid, eps=eps)

    # VMEM budget: double-buffered in/out blocks + weights + padded/slab
    # scratch + in-kernel temporaries (2x safety, clamped to [32, 100] MiB).
    est = (2 * 2 * bb * hh * ww * c * 4
           + 2 * 2 * (9 * c * cmid + 9 * cmid * c + 2 * c * cmid) * 2
           + 2 * ((hh + 2) * (ww + 2) * (c + cmid) + hh * (ww + 2) * 3 * (c + cmid))
           + 10 * bb * hh * ww * max(c, cmid) * 4)
    vmem_limit = int(min(100 * 2 ** 20, max(32 * 2 ** 20, 2 * est)))

    return pl.pallas_call(
        kernel,
        out_shape=jax.ShapeDtypeStruct((n, hh, ww, c), jnp.float32),
        grid=(n // bb,),
        in_specs=[
            pl.BlockSpec((bb, hh, ww, c), lambda i: (i, 0, 0, 0)),   # x
            pl.BlockSpec((9 * c, cmid), lambda i: (0, 0)),           # w1 (bf16)
            pl.BlockSpec((1, cmid), lambda i: (0, 0)),               # gamma1
            pl.BlockSpec((1, cmid), lambda i: (0, 0)),               # beta1
            pl.BlockSpec((9 * cmid, c), lambda i: (0, 0)),           # w2 (bf16)
            pl.BlockSpec((1, c), lambda i: (0, 0)),                  # gamma2
            pl.BlockSpec((1, c), lambda i: (0, 0)),                  # beta2
            pl.BlockSpec((c, cmid), lambda i: (0, 0)),               # se_w1
            pl.BlockSpec((1, cmid), lambda i: (0, 0)),               # se_b1
            pl.BlockSpec((cmid, c), lambda i: (0, 0)),               # se_w2
            pl.BlockSpec((1, c), lambda i: (0, 0)),                  # se_b2
        ],
        out_specs=pl.BlockSpec((bb, hh, ww, c), lambda i: (i, 0, 0, 0)),
        scratch_shapes=[
            pltpu.VMEM((hh + 2, ww + 2, c), jnp.bfloat16),       # pad1
            pltpu.VMEM((hh, ww + 2, 3 * c), jnp.bfloat16),       # slab1
            pltpu.VMEM((hh + 2, ww + 2, cmid), jnp.bfloat16),    # pad2
            pltpu.VMEM((hh, ww + 2, 3 * cmid), jnp.bfloat16),    # slab2
        ],
        compiler_params=pltpu.CompilerParams(
            dimension_semantics=("parallel",),
            vmem_limit_bytes=vmem_limit),
    )(x, params["w1"], params["g1"], params["b1"],
      params["w2"], params["g2"], params["b2"],
      params["se_w1"], params["se_b1"], params["se_w2"], params["se_b2"])


# ----------------------------------------------------------------------------
# Deterministic parameter init (shapes mirror the PyTorch __init__)
# ----------------------------------------------------------------------------
def init_residual_block(key, channels, reduction_factor=2):
    cmid = channels // reduction_factor
    ks = jax.random.split(key, 8)
    w1 = jax.random.normal(ks[0], (3, 3, channels, cmid), jnp.float32) * (2.0 / (9 * channels)) ** 0.5
    w2 = jax.random.normal(ks[1], (3, 3, cmid, channels), jnp.float32) * (2.0 / (9 * cmid)) ** 0.5

    def pack(w):
        # HWIO -> rows ordered (kw, kh, cin); bf16 for the MXU.
        cin, cout = w.shape[2], w.shape[3]
        return w.transpose(1, 0, 2, 3).reshape(9 * cin, cout).astype(jnp.bfloat16)

    return {
        # Conv bias omitted: cancelled exactly by the following InstanceNorm.
        "w1": pack(w1),
        "g1": 1.0 + 0.1 * jax.random.normal(ks[2], (1, cmid), jnp.float32),
        "b1": 0.1 * jax.random.normal(ks[3], (1, cmid), jnp.float32),
        "w2": pack(w2),
        "g2": 1.0 + 0.1 * jax.random.normal(ks[4], (1, channels), jnp.float32),
        "b2": 0.1 * jax.random.normal(ks[5], (1, channels), jnp.float32),
        # Squeeze-Excitation Linear weights stored transposed (in, out).
        "se_w1": jax.random.normal(ks[6], (channels, cmid), jnp.float32) * (1.0 / channels) ** 0.5,
        "se_b1": jnp.zeros((1, cmid), jnp.float32),
        "se_w2": jax.random.normal(ks[7], (cmid, channels), jnp.float32) * (1.0 / cmid) ** 0.5,
        "se_b2": jnp.zeros((1, channels), jnp.float32),
    }


# ----------------------------------------------------------------------------
# Pure-JAX/XLA reference (same semantics, f32 everywhere except stored weights)
# ----------------------------------------------------------------------------
def residual_block_reference(params, x, *, eps=1e-5):
    n, hh, ww, c = x.shape
    cmid = params["g1"].shape[-1]
    # Undo the (kw, kh, cin) packing back to HWIO.
    w1 = params["w1"].astype(jnp.float32).reshape(3, 3, c, cmid).transpose(1, 0, 2, 3)
    w2 = params["w2"].astype(jnp.float32).reshape(3, 3, cmid, c).transpose(1, 0, 2, 3)

    def conv_layer(inp, w, gamma, beta):
        p = jnp.pad(inp, ((0, 0), (1, 1), (1, 1), (0, 0)), mode="reflect")
        y = lax.conv_general_dilated(p, w, (1, 1), "VALID",
                                     dimension_numbers=("NHWC", "HWIO", "NHWC"))
        mean = jnp.mean(y, axis=(1, 2), keepdims=True)
        var = jnp.mean(jnp.square(y - mean), axis=(1, 2), keepdims=True)
        return (y - mean) * lax.rsqrt(var + eps) * gamma.reshape(1, 1, 1, -1) \
            + beta.reshape(1, 1, 1, -1)

    h1 = jnp.maximum(conv_layer(x, w1, params["g1"], params["b1"]), 0.0)
    h2 = conv_layer(h1, w2, params["g2"], params["b2"])
    gap = jnp.mean(h2, axis=(1, 2))                                   # (N, C)
    s = jnp.maximum(gap @ params["se_w1"] + params["se_b1"], 0.0)
    gate = jax.nn.sigmoid(s @ params["se_w2"] + params["se_b2"])      # (N, C)
    return h2 * gate[:, None, None, :] + x


if __name__ == "__main__":
    channels, reduction_factor = 64, 2
    key = jax.random.PRNGKey(0)
    pkey, xkey = jax.random.split(key)
    params = init_residual_block(pkey, channels, reduction_factor)

    # NHWC input; PyTorch-equivalent NCHW shape would be (2, 64, 16, 16).
    x = jax.random.normal(xkey, (2, 16, 16, channels), jnp.float32)

    fwd = jax.jit(residual_block_forward)
    out = jax.block_until_ready(fwd(params, x))

    assert out.shape == x.shape, out.shape
    assert bool(jnp.all(jnp.isfinite(out)))

    # Numerical check vs. the XLA reference (tolerance covers bf16 MXU inputs
    # and the approximate-reciprocal sigmoid).
    ref = jax.block_until_ready(residual_block_reference(params, x))
    rel_err = float(jnp.linalg.norm(out - ref) / jnp.linalg.norm(ref))
    assert rel_err < 5e-2, rel_err

    print("KERNEL_OK")
</pallas_src>

<mosaic_0001>
module attributes {stable_mosaic.version = 11 : i64} {
  func.func @residual_block_kernel(%arg0: i32, %arg1: memref<1x16x16x64xf32, #tpu.memory_space<vmem>>, %arg2: memref<576x32xbf16, #tpu.memory_space<vmem>>, %arg3: memref<1x32xf32, #tpu.memory_space<vmem>>, %arg4: memref<1x32xf32, #tpu.memory_space<vmem>>, %arg5: memref<288x64xbf16, #tpu.memory_space<vmem>>, %arg6: memref<1x64xf32, #tpu.memory_space<vmem>>, %arg7: memref<1x64xf32, #tpu.memory_space<vmem>>, %arg8: memref<64x32xf32, #tpu.memory_space<vmem>>, %arg9: memref<1x32xf32, #tpu.memory_space<vmem>>, %arg10: memref<32x64xf32, #tpu.memory_space<vmem>>, %arg11: memref<1x64xf32, #tpu.memory_space<vmem>>, %arg12: memref<1x16x16x64xf32, #tpu.memory_space<vmem>>, %arg13: memref<18x18x64xbf16, #tpu.memory_space<vmem>>, %arg14: memref<16x18x192xbf16, #tpu.memory_space<vmem>>, %arg15: memref<18x18x32xbf16, #tpu.memory_space<vmem>>, %arg16: memref<16x18x96xbf16, #tpu.memory_space<vmem>>) attributes {dimension_semantics = [#tpu.dimension_semantics<parallel>], iteration_bounds = array<i64: 2>, scalar_prefetch = 0 : i64, scratch_operands = 4 : i64, tpu.core_type = #tpu.core_type<tc>, window_params = [{transform_indices = @transform_0, window_bounds = array<i64: 1, 16, 16, 64>}, {pipeline_mode = #tpu.pipeline_mode<synchronous>, transform_indices = @transform_1, window_bounds = array<i64: 576, 32>}, {pipeline_mode = #tpu.pipeline_mode<synchronous>, transform_indices = @transform_2, window_bounds = array<i64: 1, 32>}, {pipeline_mode = #tpu.pipeline_mode<synchronous>, transform_indices = @transform_3, window_bounds = array<i64: 1, 32>}, {pipeline_mode = #tpu.pipeline_mode<synchronous>, transform_indices = @transform_4, window_bounds = array<i64: 288, 64>}, {pipeline_mode = #tpu.pipeline_mode<synchronous>, transform_indices = @transform_5, window_bounds = array<i64: 1, 64>}, {pipeline_mode = #tpu.pipeline_mode<synchronous>, transform_indices = @transform_6, window_bounds = array<i64: 1, 64>}, {pipeline_mode = #tpu.pipeline_mode<synchronous>, transform_indices = @transform_7, window_bounds = array<i64: 64, 32>}, {pipeline_mode = #tpu.pipeline_mode<synchronous>, transform_indices = @transform_8, window_bounds = array<i64: 1, 32>}, {pipeline_mode = #tpu.pipeline_mode<synchronous>, transform_indices = @transform_9, window_bounds = array<i64: 32, 64>}, {pipeline_mode = #tpu.pipeline_mode<synchronous>, transform_indices = @transform_10, window_bounds = array<i64: 1, 64>}, {transform_indices = @transform_11, window_bounds = array<i64: 1, 16, 16, 64>}]} {
    %c0 = arith.constant 0 : index
    %c0_0 = arith.constant 0 : index
    %0 = vector.load %arg2[%c0, %c0_0] : memref<576x32xbf16, #tpu.memory_space<vmem>>, vector<576x32xbf16>
    %c0_1 = arith.constant 0 : index
    %c0_2 = arith.constant 0 : index
    %1 = vector.load %arg5[%c0_1, %c0_2] : memref<288x64xbf16, #tpu.memory_space<vmem>>, vector<288x64xbf16>
    %c0_3 = arith.constant 0 : index
    %c0_4 = arith.constant 0 : index
    %2 = vector.load %arg3[%c0_3, %c0_4] : memref<1x32xf32, #tpu.memory_space<vmem>>, vector<1x32xf32>
    %c0_5 = arith.constant 0 : index
    %c0_6 = arith.constant 0 : index
    %3 = vector.load %arg4[%c0_5, %c0_6] : memref<1x32xf32, #tpu.memory_space<vmem>>, vector<1x32xf32>
    %c0_7 = arith.constant 0 : index
    %c0_8 = arith.constant 0 : index
    %4 = vector.load %arg6[%c0_7, %c0_8] : memref<1x64xf32, #tpu.memory_space<vmem>>, vector<1x64xf32>
    %c0_9 = arith.constant 0 : index
    %c0_10 = arith.constant 0 : index
    %5 = vector.load %arg7[%c0_9, %c0_10] : memref<1x64xf32, #tpu.memory_space<vmem>>, vector<1x64xf32>
    %c0_11 = arith.constant 0 : index
    %c0_12 = arith.constant 0 : index
    %6 = vector.load %arg8[%c0_11, %c0_12] : memref<64x32xf32, #tpu.memory_space<vmem>>, vector<64x32xf32>
    %c0_13 = arith.constant 0 : index
    %c0_14 = arith.constant 0 : index
    %7 = vector.load %arg9[%c0_13, %c0_14] : memref<1x32xf32, #tpu.memory_space<vmem>>, vector<1x32xf32>
    %c0_15 = arith.constant 0 : index
    %c0_16 = arith.constant 0 : index
    %8 = vector.load %arg10[%c0_15, %c0_16] : memref<32x64xf32, #tpu.memory_space<vmem>>, vector<32x64xf32>
    %c0_17 = arith.constant 0 : index
    %c0_18 = arith.constant 0 : index
    %9 = vector.load %arg11[%c0_17, %c0_18] : memref<1x64xf32, #tpu.memory_space<vmem>>, vector<1x64xf32>
    %c0_19 = arith.constant 0 : index
    %c0_20 = arith.constant 0 : index
    %c0_21 = arith.constant 0 : index
    %c0_22 = arith.constant 0 : index
    %10 = vector.load %arg1[%c0_19, %c0_20, %c0_21, %c0_22] : memref<1x16x16x64xf32, #tpu.memory_space<vmem>>, vector<1x16x16x64xf32>
    %11 = vector.shape_cast %10 : vector<1x16x16x64xf32> to vector<16x16x64xf32>
    %12 = arith.truncf %11 : vector<16x16x64xf32> to vector<16x16x64xbf16>
    %c1 = arith.constant 1 : index
    %c1_23 = arith.constant 1 : index
    %c0_24 = arith.constant 0 : index
    %13 = vector.load %arg13[%c1, %c1_23, %c0_24] : memref<18x18x64xbf16, #tpu.memory_space<vmem>>, vector<16x16x64xbf16>
    tpu.vector_store %arg13[%c1, %c1_23, %c0_24], %12 {strides = array<i32>} : memref<18x18x64xbf16, #tpu.memory_space<vmem>>, vector<16x16x64xbf16>,
    %14 = vector.extract_strided_slice %12 {offsets = [1, 0, 0], sizes = [1, 16, 64], strides = [1, 1, 1]} : vector<16x16x64xbf16> to vector<1x16x64xbf16>
    %c0_25 = arith.constant 0 : index
    %c1_26 = arith.constant 1 : index
    %c0_27 = arith.constant 0 : index
    %15 = vector.load %arg13[%c0_25, %c1_26, %c0_27] : memref<18x18x64xbf16, #tpu.memory_space<vmem>>, vector<1x16x64xbf16>
    tpu.vector_store %arg13[%c0_25, %c1_26, %c0_27], %14 {strides = array<i32>} : memref<18x18x64xbf16, #tpu.memory_space<vmem>>, vector<1x16x64xbf16>,
    %16 = vector.extract_strided_slice %12 {offsets = [14, 0, 0], sizes = [1, 16, 64], strides = [1, 1, 1]} : vector<16x16x64xbf16> to vector<1x16x64xbf16>
    %c17 = arith.constant 17 : index
    %c1_28 = arith.constant 1 : index
    %c0_29 = arith.constant 0 : index
    %17 = vector.load %arg13[%c17, %c1_28, %c0_29] : memref<18x18x64xbf16, #tpu.memory_space<vmem>>, vector<1x16x64xbf16>
    tpu.vector_store %arg13[%c17, %c1_28, %c0_29], %16 {strides = array<i32>} : memref<18x18x64xbf16, #tpu.memory_space<vmem>>, vector<1x16x64xbf16>,
    %c0_30 = arith.constant 0 : index
    %c2 = arith.constant 2 : index
    %c0_31 = arith.constant 0 : index
    %18 = vector.load %arg13[%c0_30, %c2, %c0_31] : memref<18x18x64xbf16, #tpu.memory_space<vmem>>, vector<18x1x64xbf16>
    %c0_32 = arith.constant 0 : index
    %c0_33 = arith.constant 0 : index
    %c0_34 = arith.constant 0 : index
    %19 = vector.load %arg13[%c0_32, %c0_33, %c0_34] : memref<18x18x64xbf16, #tpu.memory_space<vmem>>, vector<18x1x64xbf16>
    tpu.vector_store %arg13[%c0_32, %c0_33, %c0_34], %18 {strides = array<i32>} : memref<18x18x64xbf16, #tpu.memory_space<vmem>>, vector<18x1x64xbf16>,
    %c0_35 = arith.constant 0 : index
    %c15 = arith.constant 15 : index
    %c0_36 = arith.constant 0 : index
    %20 = vector.load %arg13[%c0_35, %c15, %c0_36] : memref<18x18x64xbf16, #tpu.memory_space<vmem>>, vector<18x1x64xbf16>
    %c0_37 = arith.constant 0 : index
    %c17_38 = arith.constant 17 : index
    %c0_39 = arith.constant 0 : index
    %21 = vector.load %arg13[%c0_37, %c17_38, %c0_39] : memref<18x18x64xbf16, #tpu.memory_space<vmem>>, vector<18x1x64xbf16>
    tpu.vector_store %arg13[%c0_37, %c17_38, %c0_39], %20 {strides = array<i32>} : memref<18x18x64xbf16, #tpu.memory_space<vmem>>, vector<18x1x64xbf16>,
    %c0_40 = arith.constant 0 : index
    %c0_41 = arith.constant 0 : index
    %c0_42 = arith.constant 0 : index
    %22 = vector.load %arg13[%c0_40, %c0_41, %c0_42] : memref<18x18x64xbf16, #tpu.memory_space<vmem>>, vector<16x18x64xbf16>
    %c0_43 = arith.constant 0 : index
    %c0_44 = arith.constant 0 : index
    %c0_45 = arith.constant 0 : index
    %23 = vector.load %arg14[%c0_43, %c0_44, %c0_45] : memref<16x18x192xbf16, #tpu.memory_space<vmem>>, vector<16x18x64xbf16>
    tpu.vector_store %arg14[%c0_43, %c0_44, %c0_45], %22 {strides = array<i32>} : memref<16x18x192xbf16, #tpu.memory_space<vmem>>, vector<16x18x64xbf16>,
    %c1_46 = arith.constant 1 : index
    %c0_47 = arith.constant 0 : index
    %c0_48 = arith.constant 0 : index
    %24 = vector.load %arg13[%c1_46, %c0_47, %c0_48] : memref<18x18x64xbf16, #tpu.memory_space<vmem>>, vector<16x18x64xbf16>
    %c0_49 = arith.constant 0 : index
    %c0_50 = arith.constant 0 : index
    %c64 = arith.constant 64 : index
    %25 = vector.load %arg14[%c0_49, %c0_50, %c64] : memref<16x18x192xbf16, #tpu.memory_space<vmem>>, vector<16x18x64xbf16>
    tpu.vector_store %arg14[%c0_49, %c0_50, %c64], %24 {strides = array<i32>} : memref<16x18x192xbf16, #tpu.memory_space<vmem>>, vector<16x18x64xbf16>,
    %c2_51 = arith.constant 2 : index
    %c0_52 = arith.constant 0 : index
    %c0_53 = arith.constant 0 : index
    %26 = vector.load %arg13[%c2_51, %c0_52, %c0_53] : memref<18x18x64xbf16, #tpu.memory_space<vmem>>, vector<16x18x64xbf16>
    %c0_54 = arith.constant 0 : index
    %c0_55 = arith.constant 0 : index
    %c128 = arith.constant 128 : index
    %27 = vector.load %arg14[%c0_54, %c0_55, %c128] : memref<16x18x192xbf16, #tpu.memory_space<vmem>>, vector<16x18x64xbf16>
    tpu.vector_store %arg14[%c0_54, %c0_55, %c128], %26 {strides = array<i32>} : memref<16x18x192xbf16, #tpu.memory_space<vmem>>, vector<16x18x64xbf16>,
    %c0_56 = arith.constant 0 : index
    %c0_57 = arith.constant 0 : index
    %c0_58 = arith.constant 0 : index
    %28 = vector.load %arg14[%c0_56, %c0_57, %c0_58] : memref<16x18x192xbf16, #tpu.memory_space<vmem>>, vector<16x16x192xbf16>
    %29 = vector.shape_cast %28 : vector<16x16x192xbf16> to vector<256x192xbf16>
    %30 = vector.extract_strided_slice %0 {offsets = [0, 0], sizes = [192, 32], strides = [1, 1]} : vector<576x32xbf16> to vector<192x32xbf16>
    %cst = arith.constant dense<0.000000e+00> : vector<256x32xf32>
    %31 = tpu.matmul %29, %30, %cst {dimension_numbers = #tpu.dot_dimension_numbers<[1], [0], [0], [1], [0, 0, 1, 1], [], []>} : vector<256x192xbf16>, vector<192x32xbf16>, vector<256x32xf32> -> vector<256x32xf32>
    %c0_59 = arith.constant 0 : index
    %c1_60 = arith.constant 1 : index
    %c0_61 = arith.constant 0 : index
    %32 = vector.load %arg14[%c0_59, %c1_60, %c0_61] : memref<16x18x192xbf16, #tpu.memory_space<vmem>>, vector<16x16x192xbf16>
    %33 = vector.shape_cast %32 : vector<16x16x192xbf16> to vector<256x192xbf16>
    %34 = vector.extract_strided_slice %0 {offsets = [192, 0], sizes = [192, 32], strides = [1, 1]} : vector<576x32xbf16> to vector<192x32xbf16>
    %cst_62 = arith.constant dense<0.000000e+00> : vector<256x32xf32>
    %35 = tpu.matmul %33, %34, %cst_62 {dimension_numbers = #tpu.dot_dimension_numbers<[1], [0], [0], [1], [0, 0, 1, 1], [], []>} : vector<256x192xbf16>, vector<192x32xbf16>, vector<256x32xf32> -> vector<256x32xf32>
    %36 = arith.addf %31, %35 : vector<256x32xf32>
    %c0_63 = arith.constant 0 : index
    %c2_64 = arith.constant 2 : index
    %c0_65 = arith.constant 0 : index
    %37 = vector.load %arg14[%c0_63, %c2_64, %c0_65] : memref<16x18x192xbf16, #tpu.memory_space<vmem>>, vector<16x16x192xbf16>
    %38 = vector.shape_cast %37 : vector<16x16x192xbf16> to vector<256x192xbf16>
    %39 = vector.extract_strided_slice %0 {offsets = [384, 0], sizes = [192, 32], strides = [1, 1]} : vector<576x32xbf16> to vector<192x32xbf16>
    %cst_66 = arith.constant dense<0.000000e+00> : vector<256x32xf32>
    %40 = tpu.matmul %38, %39, %cst_66 {dimension_numbers = #tpu.dot_dimension_numbers<[1], [0], [0], [1], [0, 0, 1, 1], [], []>} : vector<256x192xbf16>, vector<192x32xbf16>, vector<256x32xf32> -> vector<256x32xf32>
    %41 = arith.addf %36, %40 : vector<256x32xf32>
    %cst_67 = arith.constant dense<0.000000e+00> : vector<32xf32>
    %42 = vector.multi_reduction <add>, %41, %cst_67 [0] : vector<256x32xf32> to vector<32xf32>
    %43 = vector.shape_cast %42 : vector<32xf32> to vector<1x32xf32>
    %cst_68 = arith.constant 2.560000e+02 : f32
    %44 = vector.broadcast %cst_68 : f32 to vector<1x32xf32>
    %45 = arith.divf %43, %44 : vector<1x32xf32>
    %46 = vector.broadcast %45 : vector<1x32xf32> to vector<256x32xf32>
    %47 = arith.subf %41, %46 : vector<256x32xf32>
    %48 = arith.mulf %47, %47 : vector<256x32xf32>
    %cst_69 = arith.constant dense<0.000000e+00> : vector<32xf32>
    %49 = vector.multi_reduction <add>, %48, %cst_69 [0] : vector<256x32xf32> to vector<32xf32>
    %50 = vector.shape_cast %49 : vector<32xf32> to vector<1x32xf32>
    %cst_70 = arith.constant 2.560000e+02 : f32
    %51 = vector.broadcast %cst_70 : f32 to vector<1x32xf32>
    %52 = arith.divf %50, %51 : vector<1x32xf32>
    %53 = vector.broadcast %45 : vector<1x32xf32> to vector<256x32xf32>
    %54 = arith.subf %41, %53 : vector<256x32xf32>
    %cst_71 = arith.constant 9.99999974E-6 : f32
    %55 = vector.broadcast %cst_71 : f32 to vector<1x32xf32>
    %56 = arith.addf %52, %55 : vector<1x32xf32>
    %57 = math.rsqrt %56 : vector<1x32xf32>
    %58 = vector.broadcast %57 : vector<1x32xf32> to vector<256x32xf32>
    %59 = arith.mulf %54, %58 : vector<256x32xf32>
    %60 = vector.broadcast %2 : vector<1x32xf32> to vector<256x32xf32>
    %61 = arith.mulf %59, %60 : vector<256x32xf32>
    %62 = vector.broadcast %3 : vector<1x32xf32> to vector<256x32xf32>
    %63 = arith.addf %61, %62 : vector<256x32xf32>
    %cst_72 = arith.constant 0.000000e+00 : f32
    %64 = vector.broadcast %cst_72 : f32 to vector<256x32xf32>
    %65 = arith.maximumf %63, %64 : vector<256x32xf32>
    %66 = arith.truncf %65 : vector<256x32xf32> to vector<256x32xbf16>
    %67 = vector.shape_cast %66 : vector<256x32xbf16> to vector<16x16x32xbf16>
    %c1_73 = arith.constant 1 : index
    %c1_74 = arith.constant 1 : index
    %c0_75 = arith.constant 0 : index
    %68 = vector.load %arg15[%c1_73, %c1_74, %c0_75] : memref<18x18x32xbf16, #tpu.memory_space<vmem>>, vector<16x16x32xbf16>
    tpu.vector_store %arg15[%c1_73, %c1_74, %c0_75], %67 {strides = array<i32>} : memref<18x18x32xbf16, #tpu.memory_space<vmem>>, vector<16x16x32xbf16>,
    %69 = vector.extract_strided_slice %67 {offsets = [1, 0, 0], sizes = [1, 16, 32], strides = [1, 1, 1]} : vector<16x16x32xbf16> to vector<1x16x32xbf16>
    %c0_76 = arith.constant 0 : index
    %c1_77 = arith.constant 1 : index
    %c0_78 = arith.constant 0 : index
    %70 = vector.load %arg15[%c0_76, %c1_77, %c0_78] : memref<18x18x32xbf16, #tpu.memory_space<vmem>>, vector<1x16x32xbf16>
    tpu.vector_store %arg15[%c0_76, %c1_77, %c0_78], %69 {strides = array<i32>} : memref<18x18x32xbf16, #tpu.memory_space<vmem>>, vector<1x16x32xbf16>,
    %71 = vector.extract_strided_slice %67 {offsets = [14, 0, 0], sizes = [1, 16, 32], strides = [1, 1, 1]} : vector<16x16x32xbf16> to vector<1x16x32xbf16>
    %c17_79 = arith.constant 17 : index
    %c1_80 = arith.constant 1 : index
    %c0_81 = arith.constant 0 : index
    %72 = vector.load %arg15[%c17_79, %c1_80, %c0_81] : memref<18x18x32xbf16, #tpu.memory_space<vmem>>, vector<1x16x32xbf16>
    tpu.vector_store %arg15[%c17_79, %c1_80, %c0_81], %71 {strides = array<i32>} : memref<18x18x32xbf16, #tpu.memory_space<vmem>>, vector<1x16x32xbf16>,
    %c0_82 = arith.constant 0 : index
    %c2_83 = arith.constant 2 : index
    %c0_84 = arith.constant 0 : index
    %73 = vector.load %arg15[%c0_82, %c2_83, %c0_84] : memref<18x18x32xbf16, #tpu.memory_space<vmem>>, vector<18x1x32xbf16>
    %c0_85 = arith.constant 0 : index
    %c0_86 = arith.constant 0 : index
    %c0_87 = arith.constant 0 : index
    %74 = vector.load %arg15[%c0_85, %c0_86, %c0_87] : memref<18x18x32xbf16, #tpu.memory_space<vmem>>, vector<18x1x32xbf16>
    tpu.vector_store %arg15[%c0_85, %c0_86, %c0_87], %73 {strides = array<i32>} : memref<18x18x32xbf16, #tpu.memory_space<vmem>>, vector<18x1x32xbf16>,
    %c0_88 = arith.constant 0 : index
    %c15_89 = arith.constant 15 : index
    %c0_90 = arith.constant 0 : index
    %75 = vector.load %arg15[%c0_88, %c15_89, %c0_90] : memref<18x18x32xbf16, #tpu.memory_space<vmem>>, vector<18x1x32xbf16>
    %c0_91 = arith.constant 0 : index
    %c17_92 = arith.constant 17 : index
    %c0_93 = arith.constant 0 : index
    %76 = vector.load %arg15[%c0_91, %c17_92, %c0_93] : memref<18x18x32xbf16, #tpu.memory_space<vmem>>, vector<18x1x32xbf16>
    tpu.vector_store %arg15[%c0_91, %c17_92, %c0_93], %75 {strides = array<i32>} : memref<18x18x32xbf16, #tpu.memory_space<vmem>>, vector<18x1x32xbf16>,
    %c0_94 = arith.constant 0 : index
    %c0_95 = arith.constant 0 : index
    %c0_96 = arith.constant 0 : index
    %77 = vector.load %arg15[%c0_94, %c0_95, %c0_96] : memref<18x18x32xbf16, #tpu.memory_space<vmem>>, vector<16x18x32xbf16>
    %c0_97 = arith.constant 0 : index
    %c0_98 = arith.constant 0 : index
    %c0_99 = arith.constant 0 : index
    %78 = vector.load %arg16[%c0_97, %c0_98, %c0_99] : memref<16x18x96xbf16, #tpu.memory_space<vmem>>, vector<16x18x32xbf16>
    tpu.vector_store %arg16[%c0_97, %c0_98, %c0_99], %77 {strides = array<i32>} : memref<16x18x96xbf16, #tpu.memory_space<vmem>>, vector<16x18x32xbf16>,
    %c1_100 = arith.constant 1 : index
    %c0_101 = arith.constant 0 : index
    %c0_102 = arith.constant 0 : index
    %79 = vector.load %arg15[%c1_100, %c0_101, %c0_102] : memref<18x18x32xbf16, #tpu.memory_space<vmem>>, vector<16x18x32xbf16>
    %c0_103 = arith.constant 0 : index
    %c0_104 = arith.constant 0 : index
    %c32 = arith.constant 32 : index
    %80 = vector.load %arg16[%c0_103, %c0_104, %c32] : memref<16x18x96xbf16, #tpu.memory_space<vmem>>, vector<16x18x32xbf16>
    tpu.vector_store %arg16[%c0_103, %c0_104, %c32], %79 {strides = array<i32>} : memref<16x18x96xbf16, #tpu.memory_space<vmem>>, vector<16x18x32xbf16>,
    %c2_105 = arith.constant 2 : index
    %c0_106 = arith.constant 0 : index
    %c0_107 = arith.constant 0 : index
    %81 = vector.load %arg15[%c2_105, %c0_106, %c0_107] : memref<18x18x32xbf16, #tpu.memory_space<vmem>>, vector<16x18x32xbf16>
    %c0_108 = arith.constant 0 : index
    %c0_109 = arith.constant 0 : index
    %c64_110 = arith.constant 64 : index
    %82 = vector.load %arg16[%c0_108, %c0_109, %c64_110] : memref<16x18x96xbf16, #tpu.memory_space<vmem>>, vector<16x18x32xbf16>
    tpu.vector_store %arg16[%c0_108, %c0_109, %c64_110], %81 {strides = array<i32>} : memref<16x18x96xbf16, #tpu.memory_space<vmem>>, vector<16x18x32xbf16>,
    %c0_111 = arith.constant 0 : index
    %c0_112 = arith.constant 0 : index
    %c0_113 = arith.constant 0 : index
    %83 = vector.load %arg16[%c0_111, %c0_112, %c0_113] : memref<16x18x96xbf16, #tpu.memory_space<vmem>>, vector<16x16x96xbf16>
    %84 = vector.shape_cast %83 : vector<16x16x96xbf16> to vector<256x96xbf16>
    %85 = vector.extract_strided_slice %1 {offsets = [0, 0], sizes = [96, 64], strides = [1, 1]} : vector<288x64xbf16> to vector<96x64xbf16>
    %cst_114 = arith.constant dense<0.000000e+00> : vector<256x64xf32>
    %86 = tpu.matmul %84, %85, %cst_114 {dimension_numbers = #tpu.dot_dimension_numbers<[1], [0], [0], [1], [0, 0, 1, 1], [], []>} : vector<256x96xbf16>, vector<96x64xbf16>, vector<256x64xf32> -> vector<256x64xf32>
    %c0_115 = arith.constant 0 : index
    %c1_116 = arith.constant 1 : index
    %c0_117 = arith.constant 0 : index
    %87 = vector.load %arg16[%c0_115, %c1_116, %c0_117] : memref<16x18x96xbf16, #tpu.memory_space<vmem>>, vector<16x16x96xbf16>
    %88 = vector.shape_cast %87 : vector<16x16x96xbf16> to vector<256x96xbf16>
    %89 = vector.extract_strided_slice %1 {offsets = [96, 0], sizes = [96, 64], strides = [1, 1]} : vector<288x64xbf16> to vector<96x64xbf16>
    %cst_118 = arith.constant dense<0.000000e+00> : vector<256x64xf32>
    %90 = tpu.matmul %88, %89, %cst_118 {dimension_numbers = #tpu.dot_dimension_numbers<[1], [0], [0], [1], [0, 0, 1, 1], [], []>} : vector<256x96xbf16>, vector<96x64xbf16>, vector<256x64xf32> -> vector<256x64xf32>
    %91 = arith.addf %86, %90 : vector<256x64xf32>
    %c0_119 = arith.constant 0 : index
    %c2_120 = arith.constant 2 : index
    %c0_121 = arith.constant 0 : index
    %92 = vector.load %arg16[%c0_119, %c2_120, %c0_121] : memref<16x18x96xbf16, #tpu.memory_space<vmem>>, vector<16x16x96xbf16>
    %93 = vector.shape_cast %92 : vector<16x16x96xbf16> to vector<256x96xbf16>
    %94 = vector.extract_strided_slice %1 {offsets = [192, 0], sizes = [96, 64], strides = [1, 1]} : vector<288x64xbf16> to vector<96x64xbf16>
    %cst_122 = arith.constant dense<0.000000e+00> : vector<256x64xf32>
    %95 = tpu.matmul %93, %94, %cst_122 {dimension_numbers = #tpu.dot_dimension_numbers<[1], [0], [0], [1], [0, 0, 1, 1], [], []>} : vector<256x96xbf16>, vector<96x64xbf16>, vector<256x64xf32> -> vector<256x64xf32>
    %96 = arith.addf %91, %95 : vector<256x64xf32>
    %cst_123 = arith.constant dense<0.000000e+00> : vector<64xf32>
    %97 = vector.multi_reduction <add>, %96, %cst_123 [0] : vector<256x64xf32> to vector<64xf32>
    %98 = vector.shape_cast %97 : vector<64xf32> to vector<1x64xf32>
    %cst_124 = arith.constant 2.560000e+02 : f32
    %99 = vector.broadcast %cst_124 : f32 to vector<1x64xf32>
    %100 = arith.divf %98, %99 : vector<1x64xf32>
    %101 = vector.broadcast %100 : vector<1x64xf32> to vector<256x64xf32>
    %102 = arith.subf %96, %101 : vector<256x64xf32>
    %103 = arith.mulf %102, %102 : vector<256x64xf32>
    %cst_125 = arith.constant dense<0.000000e+00> : vector<64xf32>
    %104 = vector.multi_reduction <add>, %103, %cst_125 [0] : vector<256x64xf32> to vector<64xf32>
    %105 = vector.shape_cast %104 : vector<64xf32> to vector<1x64xf32>
    %cst_126 = arith.constant 2.560000e+02 : f32
    %106 = vector.broadcast %cst_126 : f32 to vector<1x64xf32>
    %107 = arith.divf %105, %106 : vector<1x64xf32>
    %108 = vector.broadcast %100 : vector<1x64xf32> to vector<256x64xf32>
    %109 = arith.subf %96, %108 : vector<256x64xf32>
    %cst_127 = arith.constant 9.99999974E-6 : f32
    %110 = vector.broadcast %cst_127 : f32 to vector<1x64xf32>
    %111 = arith.addf %107, %110 : vector<1x64xf32>
    %112 = math.rsqrt %111 : vector<1x64xf32>
    %113 = vector.broadcast %112 : vector<1x64xf32> to vector<256x64xf32>
    %114 = arith.mulf %109, %113 : vector<256x64xf32>
    %115 = vector.broadcast %4 : vector<1x64xf32> to vector<256x64xf32>
    %116 = arith.mulf %114, %115 : vector<256x64xf32>
    %117 = vector.broadcast %5 : vector<1x64xf32> to vector<256x64xf32>
    %118 = arith.addf %116, %117 : vector<256x64xf32>
    %cst_128 = arith.constant dense<0.000000e+00> : vector<64xf32>
    %119 = vector.multi_reduction <add>, %118, %cst_128 [0] : vector<256x64xf32> to vector<64xf32>
    %120 = vector.shape_cast %119 : vector<64xf32> to vector<1x64xf32>
    %cst_129 = arith.constant 2.560000e+02 : f32
    %121 = vector.broadcast %cst_129 : f32 to vector<1x64xf32>
    %122 = arith.divf %120, %121 : vector<1x64xf32>
    %cst_130 = arith.constant dense<0.000000e+00> : vector<1x32xf32>
    %123 = tpu.matmul %122, %6, %cst_130 {dimension_numbers = #tpu.dot_dimension_numbers<[1], [0], [0], [1], [0, 0, 1, 1], [], []>} : vector<1x64xf32>, vector<64x32xf32>, vector<1x32xf32> -> vector<1x32xf32>
    %124 = arith.addf %123, %7 : vector<1x32xf32>
    %cst_131 = arith.constant 0.000000e+00 : f32
    %125 = vector.broadcast %cst_131 : f32 to vector<1x32xf32>
    %126 = arith.maximumf %124, %125 : vector<1x32xf32>
    %cst_132 = arith.constant dense<0.000000e+00> : vector<1x64xf32>
    %127 = tpu.matmul %126, %8, %cst_132 {dimension_numbers = #tpu.dot_dimension_numbers<[1], [0], [0], [1], [0, 0, 1, 1], [], []>} : vector<1x32xf32>, vector<32x64xf32>, vector<1x64xf32> -> vector<1x64xf32>
    %128 = arith.addf %127, %9 : vector<1x64xf32>
    %cst_133 = arith.constant 0.000000e+00 : f32
    %129 = vector.broadcast %cst_133 : f32 to vector<1x64xf32>
    %130 = arith.subf %129, %128 : vector<1x64xf32>
    %131 = math.exp %130 : vector<1x64xf32>
    %cst_134 = arith.constant 1.000000e+00 : f32
    %132 = vector.broadcast %cst_134 : f32 to vector<1x64xf32>
    %133 = arith.addf %132, %131 : vector<1x64xf32>
    %134 = tpu.reciprocal %133 {approx = true} : vector<1x64xf32> -> vector<1x64xf32>
    %135 = vector.broadcast %134 : vector<1x64xf32> to vector<256x64xf32>
    %136 = arith.mulf %118, %135 : vector<256x64xf32>
    %137 = vector.shape_cast %11 : vector<16x16x64xf32> to vector<256x64xf32>
    %138 = arith.addf %136, %137 : vector<256x64xf32>
    %139 = vector.shape_cast %138 : vector<256x64xf32> to vector<16x16x64xf32>
    %c0_135 = arith.constant 0 : index
    %c0_136 = arith.constant 0 : index
    %c0_137 = arith.constant 0 : index
    %c0_138 = arith.constant 0 : index
    %140 = vector.load %arg12[%c0_135, %c0_136, %c0_137, %c0_138] : memref<1x16x16x64xf32, #tpu.memory_space<vmem>>, vector<1x16x16x64xf32>
    %141 = vector.shape_cast %140 : vector<1x16x16x64xf32> to vector<16x16x64xf32>
    %142 = vector.shape_cast %139 : vector<16x16x64xf32> to vector<1x16x16x64xf32>
    tpu.vector_store %arg12[%c0_135, %c0_136, %c0_137, %c0_138], %142 {strides = array<i32>} : memref<1x16x16x64xf32, #tpu.memory_space<vmem>>, vector<1x16x16x64xf32>,
    return
  }
  func.func @transform_0(%arg0: i32) -> (i32, i32, i32, i32) {
    %c0_i32 = arith.constant 0 : i32
    %c0_i32_0 = arith.constant 0 : i32
    %c0_i32_1 = arith.constant 0 : i32
    %c0_i32_2 = arith.constant 0 : i32
    return %arg0, %c0_i32, %c0_i32_0, %c0_i32_1 : i32, i32, i32, i32
  }
  func.func @transform_1(%arg0: i32) -> (i32, i32) {
    %c0_i32 = arith.constant 0 : i32
    %c0_i32_0 = arith.constant 0 : i32
    %c0_i32_1 = arith.constant 0 : i32
    return %c0_i32, %c0_i32_0 : i32, i32
  }
  func.func @transform_2(%arg0: i32) -> (i32, i32) {
    %c0_i32 = arith.constant 0 : i32
    %c0_i32_0 = arith.constant 0 : i32
    %c0_i32_1 = arith.constant 0 : i32
    return %c0_i32, %c0_i32_0 : i32, i32
  }
  func.func @transform_3(%arg0: i32) -> (i32, i32) {
    %c0_i32 = arith.constant 0 : i32
    %c0_i32_0 = arith.constant 0 : i32
    %c0_i32_1 = arith.constant 0 : i32
    return %c0_i32, %c0_i32_0 : i32, i32
  }
  func.func @transform_4(%arg0: i32) -> (i32, i32) {
    %c0_i32 = arith.constant 0 : i32
    %c0_i32_0 = arith.constant 0 : i32
    %c0_i32_1 = arith.constant 0 : i32
    return %c0_i32, %c0_i32_0 : i32, i32
  }
  func.func @transform_5(%arg0: i32) -> (i32, i32) {
    %c0_i32 = arith.constant 0 : i32
    %c0_i32_0 = arith.constant 0 : i32
    %c0_i32_1 = arith.constant 0 : i32
    return %c0_i32, %c0_i32_0 : i32, i32
  }
  func.func @transform_6(%arg0: i32) -> (i32, i32) {
    %c0_i32 = arith.constant 0 : i32
    %c0_i32_0 = arith.constant 0 : i32
    %c0_i32_1 = arith.constant 0 : i32
    return %c0_i32, %c0_i32_0 : i32, i32
  }
  func.func @transform_7(%arg0: i32) -> (i32, i32) {
    %c0_i32 = arith.constant 0 : i32
    %c0_i32_0 = arith.constant 0 : i32
    %c0_i32_1 = arith.constant 0 : i32
    return %c0_i32, %c0_i32_0 : i32, i32
  }
  func.func @transform_8(%arg0: i32) -> (i32, i32) {
    %c0_i32 = arith.constant 0 : i32
    %c0_i32_0 = arith.constant 0 : i32
    %c0_i32_1 = arith.constant 0 : i32
    return %c0_i32, %c0_i32_0 : i32, i32
  }
  func.func @transform_9(%arg0: i32) -> (i32, i32) {
    %c0_i32 = arith.constant 0 : i32
    %c0_i32_0 = arith.constant 0 : i32
    %c0_i32_1 = arith.constant 0 : i32
    return %c0_i32, %c0_i32_0 : i32, i32
  }
  func.func @transform_10(%arg0: i32) -> (i32, i32) {
    %c0_i32 = arith.constant 0 : i32
    %c0_i32_0 = arith.constant 0 : i32
    %c0_i32_1 = arith.constant 0 : i32
    return %c0_i32, %c0_i32_0 : i32, i32
  }
  func.func @transform_11(%arg0: i32) -> (i32, i32, i32, i32) {
    %c0_i32 = arith.constant 0 : i32
    %c0_i32_0 = arith.constant 0 : i32
    %c0_i32_1 = arith.constant 0 : i32
    %c0_i32_2 = arith.constant 0 : i32
    return %arg0, %c0_i32, %c0_i32_0, %c0_i32_1 : i32, i32, i32, i32
  }
}

</mosaic_0001>

<llo_original>
// kernel: residual_block_forward.1
$region0: #{residual_block_forward.1}
  #allocation0 [shape = 'u32[]', space=smem, size = 0x4, offset = 0x4, fixed_abs, tag = 'smem constant byte address 0x4 - core index']
  #allocation1 [shape = 'u32[144,128]{1,0:T(1,128)}', space=vmem, size = 0x12000, scoped, tag = 'internal scratch']
  #allocation2 [shape = 'bf16[18,18,64]{2,1,0:T(8,128)(2,1)}', space=vmem, size = 0x1b000, scoped, tag = 'scratch operand']
  #allocation3 [shape = 'bf16[16,18,192]{2,1,0:T(8,128)(2,1)}', space=vmem, size = 0x30000, scoped, tag = 'scratch operand']
  #allocation4 [shape = 'bf16[18,18,32]{2,1,0:T(8,128)(2,1)}', space=vmem, size = 0x1b000, scoped, tag = 'scratch operand']
  #allocation5 [shape = 'bf16[16,18,96]{2,1,0:T(8,128)(2,1)}', space=vmem, size = 0x18000, scoped, tag = 'scratch operand']
  %s0 = inlined_call_operand.vmem [shape: f32[2,16,16,64], index: 0, kind: input, shape index: {}]
  %s1 = inlined_call_operand.vmem [shape: bf16[576,32], index: 1, kind: input, shape index: {}]
  %s2 = inlined_call_operand.vmem [shape: f32[1,32], index: 2, kind: input, shape index: {}]
  %s3 = inlined_call_operand.vmem [shape: f32[1,32], index: 3, kind: input, shape index: {}]
  %s4 = inlined_call_operand.vmem [shape: bf16[288,64], index: 4, kind: input, shape index: {}]
  %s5 = inlined_call_operand.vmem [shape: f32[1,64], index: 5, kind: input, shape index: {}]
  %s6 = inlined_call_operand.vmem [shape: f32[1,64], index: 6, kind: input, shape index: {}]
  %s7 = inlined_call_operand.vmem [shape: f32[64,32], index: 7, kind: input, shape index: {}]
  %s8 = inlined_call_operand.vmem [shape: f32[1,32], index: 8, kind: input, shape index: {}]
  %s9 = inlined_call_operand.vmem [shape: f32[32,64], index: 9, kind: input, shape index: {}]
  %s10 = inlined_call_operand.vmem [shape: f32[1,64], index: 10, kind: input, shape index: {}]
  %s11 = inlined_call_operand.hbm [shape: f32[2,16,16,64], index: 11, kind: output, shape index: {}]
  %s12 = sld [smem:[#allocation0]]
  $region77: #{residual_block_forward.1} parent=0
    _
  %s14 = ssub.s32 1, %s12
  %s15 = scalar_select 0, %s14, %s12
  $region1: #{residual_block_forward.1} parent=0
    #allocation6 [shape = 'u8[262144]{0}', space=vmem, size = 0x40000, scoped, tag = 'output window, operand 0']
    #allocation7 [shape = 's32[2]{0}', space=sflag, size = 0x8, scoped, tag = 'scoped memory for residual_block_forward.1']
    %16 = vsyncpa [#allocation7], 0
    %s17 = scalar_lea.sflag [#allocation7], 1
    %18 = vsyncpa %s17, 0
    loop: start=0, step=1, limit=4
    $region2: #{residual_block_forward.1} parent=1 // loop_pre_header
      _
    $region3: #{residual_block_forward.1} parent=1 // loop_header
      %s20 = sphi 0, %s24
      %p21 = scmp.ge.s32.totalorder %s20, 4
      %s30 = sphi 0, %s32
      %s33 = sphi 0, %s30
      %s34 = sphi 0, %s33
      %s50 = sphi 0, %s34
      %s54 = sphi 0, %s54
      %s56 = sphi 0, %s54
      %s57 = sphi 0, %s56
      %s71 = sphi 0, %s57
      %s75 = sphi 0, %s75
      %s77 = sphi 0, %s75
      %s78 = sphi 0, %s77
      %s92 = sphi 0, %s78
      %s96 = sphi 0, %s96
      %s98 = sphi 0, %s96
      %s99 = sphi 0, %s98
      %s113 = sphi 0, %s99
      %s117 = sphi 0, %s117
      %s119 = sphi 0, %s117
      %s120 = sphi 0, %s119
      %s134 = sphi 0, %s120
      %s138 = sphi 0, %s138
      %s140 = sphi 0, %s138
      %s141 = sphi 0, %s140
      %s155 = sphi 0, %s141
      %s159 = sphi 0, %s159
      %s161 = sphi 0, %s159
      %s162 = sphi 0, %s161
      %s176 = sphi 0, %s162
      %s180 = sphi 0, %s180
      %s182 = sphi 0, %s180
      %s183 = sphi 0, %s182
      %s197 = sphi 0, %s183
      %s201 = sphi 0, %s201
      %s203 = sphi 0, %s201
      %s204 = sphi 0, %s203
      %s218 = sphi 0, %s204
      %s222 = sphi 0, %s222
      %s224 = sphi 0, %s222
      %s225 = sphi 0, %s224
      %s239 = sphi 0, %s225
      %s243 = sphi 0, %s243
      %s245 = sphi 0, %s243
      %s246 = sphi 0, %s245
      %s260 = sphi 0, %s246
      %s266 = sphi 0, %s268
      %s269 = sphi 0, %s266
      %s270 = sphi 0, %s269
      %s286 = sphi 0, %s270
    $region4: #{residual_block_forward.1} parent=1 // loop_header_branch
      %23 = sbr.rel (%p21) target = $region8
    $region5: #{residual_block_forward.1} parent=1 // loop_body
      %s25 = ssub.s32 %s20, 1
      %s26 = ssub.s32 %s20, 2
      %s27 = sadd.s32 %s20, 1
      %s28 = ssub.s32 %s20, %s27
      %p29 = scmp.eq.s32.totalorder %s28, 0
      %s31 = sadd.s32 %s30, 1
      %s32 = scalar_select %p29, %s30, %s31
      %p35 = pneg %p29
      %p36 = scmp.eq.s32.totalorder %s20, 1
      %p37 = por %p35, %p36
      %p38 = scmp.ne.s32.totalorder %s30, %s33
      %p39 = scmp.eq.s32.totalorder %s20, 0
      %p40 = por %p38, %p39
      %p41 = scmp.ne.s32.totalorder %s30, %s33
      %p42 = scmp.eq.s32.totalorder %s25, 1
      %p43 = por %p41, %p42
      %p44 = scmp.ne.s32.totalorder %s33, %s34
      %p45 = scmp.eq.s32.totalorder %s25, 0
      %p46 = por %p44, %p45
      %p47 = scmp.ne.s32.totalorder %s33, %s34
      %p48 = scmp.eq.s32.totalorder %s26, 1
      %p49 = por %p47, %p48
      %p51 = scmp.ne.s32.totalorder %s34, %s50
      %p52 = scmp.eq.s32.totalorder %s26, 0
      %p53 = por %p51, %p52
      %s55 = sadd.s32 %s54, 1
      %p58 = scmp.eq.s32.totalorder %s20, 1
      %p59 = scmp.ne.s32.totalorder %s54, %s56
      %p60 = scmp.eq.s32.totalorder %s20, 0
      %p61 = por %p59, %p60
      %p62 = scmp.ne.s32.totalorder %s54, %s56
      %p63 = scmp.eq.s32.totalorder %s25, 1
      %p64 = por %p62, %p63
      %p65 = scmp.ne.s32.totalorder %s56, %s57
      %p66 = scmp.eq.s32.totalorder %s25, 0
      %p67 = por %p65, %p66
      %p68 = scmp.ne.s32.totalorder %s56, %s57
      %p69 = scmp.eq.s32.totalorder %s26, 1
      %p70 = por %p68, %p69
      %p72 = scmp.ne.s32.totalorder %s57, %s71
      %p73 = scmp.eq.s32.totalorder %s26, 0
      %p74 = por %p72, %p73
      %s76 = sadd.s32 %s75, 1
      %p79 = scmp.eq.s32.totalorder %s20, 1
      %p80 = scmp.ne.s32.totalorder %s75, %s77
      %p81 = scmp.eq.s32.totalorder %s20, 0
      %p82 = por %p80, %p81
      %p83 = scmp.ne.s32.totalorder %s75, %s77
      %p84 = scmp.eq.s32.totalorder %s25, 1
      %p85 = por %p83, %p84
      %p86 = scmp.ne.s32.totalorder %s77, %s78
      %p87 = scmp.eq.s32.totalorder %s25, 0
      %p88 = por %p86, %p87
      %p89 = scmp.ne.s32.totalorder %s77, %s78
      %p90 = scmp.eq.s32.totalorder %s26, 1
      %p91 = por %p89, %p90
      %p93 = scmp.ne.s32.totalorder %s78, %s92
      %p94 = scmp.eq.s32.totalorder %s26, 0
      %p95 = por %p93, %p94
      %s97 = sadd.s32 %s96, 1
      %p100 = scmp.eq.s32.totalorder %s20, 1
      %p101 = scmp.ne.s32.totalorder %s96, %s98
      %p102 = scmp.eq.s32.totalorder %s20, 0
      %p103 = por %p101, %p102
      %p104 = scmp.ne.s32.totalorder %s96, %s98
      %p105 = scmp.eq.s32.totalorder %s25, 1
      %p106 = por %p104, %p105
      %p107 = scmp.ne.s32.totalorder %s98, %s99
      %p108 = scmp.eq.s32.totalorder %s25, 0
      %p109 = por %p107, %p108
      %p110 = scmp.ne.s32.totalorder %s98, %s99
      %p111 = scmp.eq.s32.totalorder %s26, 1
      %p112 = por %p110, %p111
      %p114 = scmp.ne.s32.totalorder %s99, %s113
      %p115 = scmp.eq.s32.totalorder %s26, 0
      %p116 = por %p114, %p115
      %s118 = sadd.s32 %s117, 1
      %p121 = scmp.eq.s32.totalorder %s20, 1
      %p122 = scmp.ne.s32.totalorder %s117, %s119
      %p123 = scmp.eq.s32.totalorder %s20, 0
      %p124 = por %p122, %p123
      %p125 = scmp.ne.s32.totalorder %s117, %s119
      %p126 = scmp.eq.s32.totalorder %s25, 1
      %p127 = por %p125, %p126
      %p128 = scmp.ne.s32.totalorder %s119, %s120
      %p129 = scmp.eq.s32.totalorder %s25, 0
      %p130 = por %p128, %p129
      %p131 = scmp.ne.s32.totalorder %s119, %s120
      %p132 = scmp.eq.s32.totalorder %s26, 1
      %p133 = por %p131, %p132
      %p135 = scmp.ne.s32.totalorder %s120, %s134
      %p136 = scmp.eq.s32.totalorder %s26, 0
      %p137 = por %p135, %p136
      %s139 = sadd.s32 %s138, 1
      %p142 = scmp.eq.s32.totalorder %s20, 1
      %p143 = scmp.ne.s32.totalorder %s138, %s140
      %p144 = scmp.eq.s32.totalorder %s20, 0
      %p145 = por %p143, %p144
      %p146 = scmp.ne.s32.totalorder %s138, %s140
      %p147 = scmp.eq.s32.totalorder %s25, 1
      %p148 = por %p146, %p147
      %p149 = scmp.ne.s32.totalorder %s140, %s141
      %p150 = scmp.eq.s32.totalorder %s25, 0
      %p151 = por %p149, %p150
      %p152 = scmp.ne.s32.totalorder %s140, %s141
      %p153 = scmp.eq.s32.totalorder %s26, 1
      %p154 = por %p152, %p153
      %p156 = scmp.ne.s32.totalorder %s141, %s155
      %p157 = scmp.eq.s32.totalorder %s26, 0
      %p158 = por %p156, %p157
      %s160 = sadd.s32 %s159, 1
      %p163 = scmp.eq.s32.totalorder %s20, 1
      %p164 = scmp.ne.s32.totalorder %s159, %s161
      %p165 = scmp.eq.s32.totalorder %s20, 0
      %p166 = por %p164, %p165
      %p167 = scmp.ne.s32.totalorder %s159, %s161
      %p168 = scmp.eq.s32.totalorder %s25, 1
      %p169 = por %p167, %p168
      %p170 = scmp.ne.s32.totalorder %s161, %s162
      %p171 = scmp.eq.s32.totalorder %s25, 0
      %p172 = por %p170, %p171
      %p173 = scmp.ne.s32.totalorder %s161, %s162
      %p174 = scmp.eq.s32.totalorder %s26, 1
      %p175 = por %p173, %p174
      %p177 = scmp.ne.s32.totalorder %s162, %s176
      %p178 = scmp.eq.s32.totalorder %s26, 0
      %p179 = por %p177, %p178
      %s181 = sadd.s32 %s180, 1
      %p184 = scmp.eq.s32.totalorder %s20, 1
      %p185 = scmp.ne.s32.totalorder %s180, %s182
      %p186 = scmp.eq.s32.totalorder %s20, 0
      %p187 = por %p185, %p186
      %p188 = scmp.ne.s32.totalorder %s180, %s182
      %p189 = scmp.eq.s32.totalorder %s25, 1
      %p190 = por %p188, %p189
      %p191 = scmp.ne.s32.totalorder %s182, %s183
      %p192 = scmp.eq.s32.totalorder %s25, 0
      %p193 = por %p191, %p192
      %p194 = scmp.ne.s32.totalorder %s182, %s183
      %p195 = scmp.eq.s32.totalorder %s26, 1
      %p196 = por %p194, %p195
      %p198 = scmp.ne.s32.totalorder %s183, %s197
      %p199 = scmp.eq.s32.totalorder %s26, 0
      %p200 = por %p198, %p199
      %s202 = sadd.s32 %s201, 1
      %p205 = scmp.eq.s32.totalorder %s20, 1
      %p206 = scmp.ne.s32.totalorder %s201, %s203
      %p207 = scmp.eq.s32.totalorder %s20, 0
      %p208 = por %p206, %p207
      %p209 = scmp.ne.s32.totalorder %s201, %s203
      %p210 = scmp.eq.s32.totalorder %s25, 1
      %p211 = por %p209, %p210
      %p212 = scmp.ne.s32.totalorder %s203, %s204
      %p213 = scmp.eq.s32.totalorder %s25, 0
      %p214 = por %p212, %p213
      %p215 = scmp.ne.s32.totalorder %s203, %s204
      %p216 = scmp.eq.s32.totalorder %s26, 1
      %p217 = por %p215, %p216
      %p219 = scmp.ne.s32.totalorder %s204, %s218
      %p220 = scmp.eq.s32.totalorder %s26, 0
      %p221 = por %p219, %p220
      %s223 = sadd.s32 %s222, 1
      %p226 = scmp.eq.s32.totalorder %s20, 1
      %p227 = scmp.ne.s32.totalorder %s222, %s224
      %p228 = scmp.eq.s32.totalorder %s20, 0
      %p229 = por %p227, %p228
      %p230 = scmp.ne.s32.totalorder %s222, %s224
      %p231 = scmp.eq.s32.totalorder %s25, 1
      %p232 = por %p230, %p231
      %p233 = scmp.ne.s32.totalorder %s224, %s225
      %p234 = scmp.eq.s32.totalorder %s25, 0
      %p235 = por %p233, %p234
      %p236 = scmp.ne.s32.totalorder %s224, %s225
      %p237 = scmp.eq.s32.totalorder %s26, 1
      %p238 = por %p236, %p237
      %p240 = scmp.ne.s32.totalorder %s225, %s239
      %p241 = scmp.eq.s32.totalorder %s26, 0
      %p242 = por %p240, %p241
      %s244 = sadd.s32 %s243, 1
      %p247 = scmp.eq.s32.totalorder %s20, 1
      %p248 = scmp.ne.s32.totalorder %s243, %s245
      %p249 = scmp.eq.s32.totalorder %s20, 0
      %p250 = por %p248, %p249
      %p251 = scmp.ne.s32.totalorder %s243, %s245
      %p252 = scmp.eq.s32.totalorder %s25, 1
      %p253 = por %p251, %p252
      %p254 = scmp.ne.s32.totalorder %s245, %s246
      %p255 = scmp.eq.s32.totalorder %s25, 0
      %p256 = por %p254, %p255
      %p257 = scmp.ne.s32.totalorder %s245, %s246
      %p258 = scmp.eq.s32.totalorder %s26, 1
      %p259 = por %p257, %p258
      %p261 = scmp.ne.s32.totalorder %s246, %s260
      %p262 = scmp.eq.s32.totalorder %s26, 0
      %p263 = por %p261, %p262
      %s264 = ssub.s32 %s20, %s27
      %p265 = scmp.eq.s32.totalorder %s264, 0
      %s267 = sadd.s32 %s266, 1
      %s268 = scalar_select %p265, %s266, %s267
      %p271 = pneg %p265
      %p272 = scmp.eq.s32.totalorder %s20, 1
      %p273 = por %p271, %p272
      %p274 = scmp.ne.s32.totalorder %s266, %s269
      %p275 = scmp.eq.s32.totalorder %s20, 0
      %p276 = por %p274, %p275
      %p277 = scmp.ne.s32.totalorder %s266, %s269
      %p278 = scmp.eq.s32.totalorder %s25, 1
      %p279 = por %p277, %p278
      %p280 = scmp.ne.s32.totalorder %s269, %s270
      %p281 = scmp.eq.s32.totalorder %s25, 0
      %p282 = por %p280, %p281
      %p283 = scmp.ne.s32.totalorder %s269, %s270
      %p284 = scmp.eq.s32.totalorder %s26, 1
      %p285 = por %p283, %p284
      %p287 = scmp.ne.s32.totalorder %s270, %s286
      %p288 = scmp.eq.s32.totalorder %s26, 0
      %p289 = por %p287, %p288
      %p290 = scmp.le.s32.totalorder 1, %s20
      %p291 = scmp.lt.s32.totalorder %s20, 3
      %p292 = pnand %p290, %p291
      %p293 = pneg %p292
      // Predicated region
      $region9: #{residual_block_forward.1} parent=5 // pred_check
        _
      $region10: #{residual_block_forward.1} parent=5 // pred_check_branch
        %295 = sbr.rel (%p292) target = $region12
      $region11: #{residual_block_forward.1} parent=5 // pred_region
        %s296 = ssub.s32 %s20, 1
        // Predicated region
        $region13: #{residual_block_forward.1} parent=11 // pred_check
          %p297 = pneg %p67
        $region14: #{residual_block_forward.1} parent=11 // pred_check_branch
          %299 = sbr.rel (%p297) target = $region16
        $region15: #{residual_block_forward.1} parent=11 // pred_region
          _
        $region16: #{residual_block_forward.1} parent=11 // pred_fallthru
          _
        // Predicated region
        $region17: #{residual_block_forward.1} parent=11 // pred_check
          %p300 = pneg %p88
        $region18: #{residual_block_forward.1} parent=11 // pred_check_branch
          %302 = sbr.rel (%p300) target = $region20
        $region19: #{residual_block_forward.1} parent=11 // pred_region
          _
        $region20: #{residual_block_forward.1} parent=11 // pred_fallthru
          _
        // Predicated region
        $region21: #{residual_block_forward.1} parent=11 // pred_check
          %p303 = pneg %p109
        $region22: #{residual_block_forward.1} parent=11 // pred_check_branch
          %305 = sbr.rel (%p303) target = $region24
        $region23: #{residual_block_forward.1} parent=11 // pred_region
          _
        $region24: #{residual_block_forward.1} parent=11 // pred_fallthru
          _
        // Predicated region
        $region25: #{residual_block_forward.1} parent=11 // pred_check
          %p306 = pneg %p130
        $region26: #{residual_block_forward.1} parent=11 // pred_check_branch
          %308 = sbr.rel (%p306) target = $region28
        $region27: #{residual_block_forward.1} parent=11 // pred_region
          _
        $region28: #{residual_block_forward.1} parent=11 // pred_fallthru
          _
        // Predicated region
        $region29: #{residual_block_forward.1} parent=11 // pred_check
          %p309 = pneg %p151
        $region30: #{residual_block_forward.1} parent=11 // pred_check_branch
          %311 = sbr.rel (%p309) target = $region32
        $region31: #{residual_block_forward.1} parent=11 // pred_region
          _
        $region32: #{residual_block_forward.1} parent=11 // pred_fallthru
          _
        // Predicated region
        $region33: #{residual_block_forward.1} parent=11 // pred_check
          %p312 = pneg %p172
        $region34: #{residual_block_forward.1} parent=11 // pred_check_branch
          %314 = sbr.rel (%p312) target = $region36
        $region35: #{residual_block_forward.1} parent=11 // pred_region
          _
        $region36: #{residual_block_forward.1} parent=11 // pred_fallthru
          _
        // Predicated region
        $region37: #{residual_block_forward.1} parent=11 // pred_check
          %p315 = pneg %p193
        $region38: #{residual_block_forward.1} parent=11 // pred_check_branch
          %317 = sbr.rel (%p315) target = $region40
        $region39: #{residual_block_forward.1} parent=11 // pred_region
          _
        $region40: #{residual_block_forward.1} parent=11 // pred_fallthru
          _
        // Predicated region
        $region41: #{residual_block_forward.1} parent=11 // pred_check
          %p318 = pneg %p214
        $region42: #{residual_block_forward.1} parent=11 // pred_check_branch
          %320 = sbr.rel (%p318) target = $region44
        $region43: #{residual_block_forward.1} parent=11 // pred_region
          _
        $region44: #{residual_block_forward.1} parent=11 // pred_fallthru
          _
        // Predicated region
        $region45: #{residual_block_forward.1} parent=11 // pred_check
          %p321 = pneg %p235
        $region46: #{residual_block_forward.1} parent=11 // pred_check_branch
          %323 = sbr.rel (%p321) target = $region48
        $region47: #{residual_block_forward.1} parent=11 // pred_region
          _
        $region48: #{residual_block_forward.1} parent=11 // pred_fallthru
          _
        // Predicated region
        $region49: #{residual_block_forward.1} parent=11 // pred_check
          %p324 = pneg %p256
        $region50: #{residual_block_forward.1} parent=11 // pred_check_branch
          %326 = sbr.rel (%p324) target = $region52
        $region51: #{residual_block_forward.1} parent=11 // pred_region
          _
        $region52: #{residual_block_forward.1} parent=11 // pred_fallthru
          _
      $region12: #{residual_block_forward.1} parent=5 // pred_fallthru
        _
      %p327 = scmp.lt.s32.totalorder %s20, 2
      // Predicated region
      $region53: #{residual_block_forward.1} parent=5 // pred_check
        %p328 = pneg %p327
      $region54: #{residual_block_forward.1} parent=5 // pred_check_branch
        %330 = sbr.rel (%p328) target = $region56
      $region55: #{residual_block_forward.1} parent=5 // pred_region
        // Predicated region
        $region57: #{residual_block_forward.1} parent=55 // pred_check
          %p331 = pneg %p40
        $region58: #{residual_block_forward.1} parent=55 // pred_check_branch
          %333 = sbr.rel (%p331) target = $region60
        $region59: #{residual_block_forward.1} parent=55 // pred_region
          %p334 = scmp.lt.s32.totalorder %s20, 1
          %s335 = scalar_select %p334, %s20, 1
          %s336 = smul.addr %s335, 32
          %s337 = smul.addr %s336, 8
          %s338 = scalar_lea.vmem %s0, %s337
        $region60: #{residual_block_forward.1} parent=55 // pred_fallthru
          _
      $region56: #{residual_block_forward.1} parent=5 // pred_fallthru
        _
      %p339 = scmp.le.s32.totalorder 1, %s20
      %p340 = scmp.lt.s32.totalorder %s20, 3
      %p341 = pnand %p339, %p340
      %p342 = pneg %p341
      // Predicated region
      $region61: #{residual_block_forward.1} parent=5 // pred_check
        _
      $region62: #{residual_block_forward.1} parent=5 // pred_check_branch
        %344 = sbr.rel (%p341) target = $region64
      $region63: #{residual_block_forward.1} parent=5 // pred_region
        %s345 = ssub.s32 %s20, 1
        %p346 = scmp.lt.s32.totalorder %s25, 1
        %s347 = scalar_select %p346, %s25, 1
        %s348 = smul.addr %s347, 32
        %s349 = smul.addr %s348, 8
        %s350 = scalar_lea.vmem %s0, %s349
        %p351 = pneg %p46
        %p352 = pneg %p43
        %p353 = pneg %p67
        %p354 = pneg %p64
        %p355 = pneg %p88
        %p356 = pneg %p85
        %p357 = pneg %p109
        %p358 = pneg %p106
        %p359 = pneg %p130
        %p360 = pneg %p127
        %p361 = pneg %p151
        %p362 = pneg %p148
        %p363 = pneg %p172
        %p364 = pneg %p169
        %p365 = pneg %p193
        %p366 = pneg %p190
        %p367 = pneg %p214
        %p368 = pneg %p211
        %p369 = pneg %p235
        %p370 = pneg %p232
        %p371 = pneg %p256
        %p372 = pneg %p253
        %p373 = pneg %p282
        %p374 = pneg %p279
        %s375 = sand.u32 %s269, 1
        %s376 = scalar_lea.sflag [#allocation7], %s375
        %s377 = sand.u32 %s269, 1
        %s378 = smul.addr %s377, 256
        %s379 = scalar_lea.vmem [#allocation6], %s378
        %p380 = scmp.lt.s32.totalorder %s25, 1
        %s381 = scalar_select %p380, %s25, 1
        %s382 = smul.addr %s381, 32
        %s383 = smul.addr %s382, 8
        %s384 = scalar_lea.vmem %s0, %s383
        %v386 = vld [vmem:[%s1] sm:$0xf]
        %v387 = vld [vmem:[%s1 + $0x4] sm:$0xf]
        %v388 = vld [vmem:[%s1 + $0x8] sm:$0xf]
        %v389 = vld [vmem:[%s1 + $0xc] sm:$0xf]
        %v390 = vld [vmem:[%s1 + $0x10] sm:$0xf]
        %v391 = vld [vmem:[%s1 + $0x14] sm:$0xf]
        %v392 = vld [vmem:[%s1 + $0x18] sm:$0xf]
        %v393 = vld [vmem:[%s1 + $0x1c] sm:$0xf]
        %v394 = vld [vmem:[%s1 + $0x20] sm:$0xf]
        %v395 = vld [vmem:[%s1 + $0x24] sm:$0xf]
        %v396 = vld [vmem:[%s1 + $0x28] sm:$0xf]
        %v397 = vld [vmem:[%s1 + $0x2c] sm:$0xf]
        %v398 = vld [vmem:[%s1 + $0x30] sm:$0xf]
        %v399 = vld [vmem:[%s1 + $0x34] sm:$0xf]
        %v400 = vld [vmem:[%s1 + $0x38] sm:$0xf]
        %v401 = vld [vmem:[%s1 + $0x3c] sm:$0xf]
        %v402 = vld [vmem:[%s1 + $0x40] sm:$0xf]
        %v403 = vld [vmem:[%s1 + $0x44] sm:$0xf]
        %v404 = vld [vmem:[%s1 + $0x48] sm:$0xf]
        %v405 = vld [vmem:[%s1 + $0x4c] sm:$0xf]
        %v406 = vld [vmem:[%s1 + $0x50] sm:$0xf]
        %v407 = vld [vmem:[%s1 + $0x54] sm:$0xf]
        %v408 = vld [vmem:[%s1 + $0x58] sm:$0xf]
        %v409 = vld [vmem:[%s1 + $0x5c] sm:$0xf]
        %v410 = vld [vmem:[%s1 + $0x60] sm:$0xf]
        %v411 = vld [vmem:[%s1 + $0x64] sm:$0xf]
        %v412 = vld [vmem:[%s1 + $0x68] sm:$0xf]
        %v413 = vld [vmem:[%s1 + $0x6c] sm:$0xf]
        %v414 = vld [vmem:[%s1 + $0x70] sm:$0xf]
        %v415 = vld [vmem:[%s1 + $0x74] sm:$0xf]
        %v416 = vld [vmem:[%s1 + $0x78] sm:$0xf]
        %v417 = vld [vmem:[%s1 + $0x7c] sm:$0xf]
        %v418 = vld [vmem:[%s1 + $0x80] sm:$0xf]
        %v419 = vld [vmem:[%s1 + $0x84] sm:$0xf]
        %v420 = vld [vmem:[%s1 + $0x88] sm:$0xf]
        %v421 = vld [vmem:[%s1 + $0x8c] sm:$0xf]
        %v422 = vld [vmem:[%s1 + $0x90] sm:$0xf]
        %v423 = vld [vmem:[%s1 + $0x94] sm:$0xf]
        %v424 = vld [vmem:[%s1 + $0x98] sm:$0xf]
        %v425 = vld [vmem:[%s1 + $0x9c] sm:$0xf]
        %v426 = vld [vmem:[%s1 + $0xa0] sm:$0xf]
        %v427 = vld [vmem:[%s1 + $0xa4] sm:$0xf]
        %v428 = vld [vmem:[%s1 + $0xa8] sm:$0xf]
        %v429 = vld [vmem:[%s1 + $0xac] sm:$0xf]
        %v430 = vld [vmem:[%s1 + $0xb0] sm:$0xf]
        %v431 = vld [vmem:[%s1 + $0xb4] sm:$0xf]
        %v432 = vld [vmem:[%s1 + $0xb8] sm:$0xf]
        %v433 = vld [vmem:[%s1 + $0xbc] sm:$0xf]
        %v434 = vld [vmem:[%s1 + $0xc0] sm:$0xf]
        %v435 = vld [vmem:[%s1 + $0xc4] sm:$0xf]
        %v436 = vld [vmem:[%s1 + $0xc8] sm:$0xf]
        %v437 = vld [vmem:[%s1 + $0xcc] sm:$0xf]
        %v438 = vld [vmem:[%s1 + $0xd0] sm:$0xf]
        %v439 = vld [vmem:[%s1 + $0xd4] sm:$0xf]
        %v440 = vld [vmem:[%s1 + $0xd8] sm:$0xf]
        %v441 = vld [vmem:[%s1 + $0xdc] sm:$0xf]
        %v442 = vld [vmem:[%s1 + $0xe0] sm:$0xf]
        %v443 = vld [vmem:[%s1 + $0xe4] sm:$0xf]
        %v444 = vld [vmem:[%s1 + $0xe8] sm:$0xf]
        %v445 = vld [vmem:[%s1 + $0xec] sm:$0xf]
        %v446 = vld [vmem:[%s1 + $0xf0] sm:$0xf]
        %v447 = vld [vmem:[%s1 + $0xf4] sm:$0xf]
        %v448 = vld [vmem:[%s1 + $0xf8] sm:$0xf]
        %v449 = vld [vmem:[%s1 + $0xfc] sm:$0xf]
        %v450 = vld [vmem:[%s1 + $0x100] sm:$0xf]
        %v451 = vld [vmem:[%s1 + $0x104] sm:$0xf]
        %v452 = vld [vmem:[%s1 + $0x108] sm:$0xf]
        %v453 = vld [vmem:[%s1 + $0x10c] sm:$0xf]
        %v454 = vld [vmem:[%s1 + $0x110] sm:$0xf]
        %v455 = vld [vmem:[%s1 + $0x114] sm:$0xf]
        %v456 = vld [vmem:[%s1 + $0x118] sm:$0xf]
        %v457 = vld [vmem:[%s1 + $0x11c] sm:$0xf]
        %v458 = vld [vmem:[%s4] sm:$0xf]
        %v459 = vld [vmem:[%s4 + $0x4] sm:$0xf]
        %v460 = vld [vmem:[%s4 + $0x8] sm:$0xf]
        %v461 = vld [vmem:[%s4 + $0xc] sm:$0xf]
        %v462 = vld [vmem:[%s4 + $0x10] sm:$0xf]
        %v463 = vld [vmem:[%s4 + $0x14] sm:$0xf]
        %v464 = vld [vmem:[%s4 + $0x18] sm:$0xf]
        %v465 = vld [vmem:[%s4 + $0x1c] sm:$0xf]
        %v466 = vld [vmem:[%s4 + $0x20] sm:$0xf]
        %v467 = vld [vmem:[%s4 + $0x24] sm:$0xf]
        %v468 = vld [vmem:[%s4 + $0x28] sm:$0xf]
        %v469 = vld [vmem:[%s4 + $0x2c] sm:$0xf]
        %v470 = vld [vmem:[%s4 + $0x30] sm:$0xf]
        %v471 = vld [vmem:[%s4 + $0x34] sm:$0xf]
        %v472 = vld [vmem:[%s4 + $0x38] sm:$0xf]
        %v473 = vld [vmem:[%s4 + $0x3c] sm:$0xf]
        %v474 = vld [vmem:[%s4 + $0x40] sm:$0xf]
        %v475 = vld [vmem:[%s4 + $0x44] sm:$0xf]
        %v476 = vld [vmem:[%s4 + $0x48] sm:$0xf]
        %v477 = vld [vmem:[%s4 + $0x4c] sm:$0xf]
        %v478 = vld [vmem:[%s4 + $0x50] sm:$0xf]
        %v479 = vld [vmem:[%s4 + $0x54] sm:$0xf]
        %v480 = vld [vmem:[%s4 + $0x58] sm:$0xf]
        %v481 = vld [vmem:[%s4 + $0x5c] sm:$0xf]
        %v482 = vld [vmem:[%s4 + $0x60] sm:$0xf]
        %v483 = vld [vmem:[%s4 + $0x64] sm:$0xf]
        %v484 = vld [vmem:[%s4 + $0x68] sm:$0xf]
        %v485 = vld [vmem:[%s4 + $0x6c] sm:$0xf]
        %v486 = vld [vmem:[%s4 + $0x70] sm:$0xf]
        %v487 = vld [vmem:[%s4 + $0x74] sm:$0xf]
        %v488 = vld [vmem:[%s4 + $0x78] sm:$0xf]
        %v489 = vld [vmem:[%s4 + $0x7c] sm:$0xf]
        %v490 = vld [vmem:[%s4 + $0x80] sm:$0xf]
        %v491 = vld [vmem:[%s4 + $0x84] sm:$0xf]
        %v492 = vld [vmem:[%s4 + $0x88] sm:$0xf]
        %v493 = vld [vmem:[%s4 + $0x8c] sm:$0xf]
        %v494 = vld [vmem:[%s2] sm:$0x1]
        %v495 = vld [vmem:[%s3] sm:$0x1]
        %v496 = vld [vmem:[%s5] sm:$0x1]
        %v497 = vld [vmem:[%s6] sm:$0x1]
        %v498 = vld [vmem:[%s7] sm:$0xff]
        %v499 = vld [vmem:[%s7 + $0x8] sm:$0xff]
        %v500 = vld [vmem:[%s7 + $0x10] sm:$0xff]
        %v501 = vld [vmem:[%s7 + $0x18] sm:$0xff]
        %v502 = vld [vmem:[%s7 + $0x20] sm:$0xff]
        %v503 = vld [vmem:[%s7 + $0x28] sm:$0xff]
        %v504 = vld [vmem:[%s7 + $0x30] sm:$0xff]
        %v505 = vld [vmem:[%s7 + $0x38] sm:$0xff]
        %v506 = vld [vmem:[%s8] sm:$0x1]
        %v507 = vld [vmem:[%s9] sm:$0xff]
        %v508 = vld [vmem:[%s9 + $0x8] sm:$0xff]
        %v509 = vld [vmem:[%s9 + $0x10] sm:$0xff]
        %v510 = vld [vmem:[%s9 + $0x18] sm:$0xff]
        %v511 = vld [vmem:[%s10] sm:$0x1]
        %v512 = vld [vmem:[%s384] sm:$0xff]
        %v513 = vld [vmem:[%s384 + $0x8] sm:$0xff]
        %v514 = vld [vmem:[%s384 + $0x10] sm:$0xff]
        %v515 = vld [vmem:[%s384 + $0x18] sm:$0xff]
        %v516 = vld [vmem:[%s384 + $0x20] sm:$0xff]
        %v517 = vld [vmem:[%s384 + $0x28] sm:$0xff]
        %v518 = vld [vmem:[%s384 + $0x30] sm:$0xff]
        %v519 = vld [vmem:[%s384 + $0x38] sm:$0xff]
        %v520 = vld [vmem:[%s384 + $0x40] sm:$0xff]
        %v521 = vld [vmem:[%s384 + $0x48] sm:$0xff]
        %v522 = vld [vmem:[%s384 + $0x50] sm:$0xff]
        %v523 = vld [vmem:[%s384 + $0x58] sm:$0xff]
        %v524 = vld [vmem:[%s384 + $0x60] sm:$0xff]
        %v525 = vld [vmem:[%s384 + $0x68] sm:$0xff]
        %v526 = vld [vmem:[%s384 + $0x70] sm:$0xff]
        %v527 = vld [vmem:[%s384 + $0x78] sm:$0xff]
        %v528 = vld [vmem:[%s384 + $0x80] sm:$0xff]
        %v529 = vld [vmem:[%s384 + $0x88] sm:$0xff]
        %v530 = vld [vmem:[%s384 + $0x90] sm:$0xff]
        %v531 = vld [vmem:[%s384 + $0x98] sm:$0xff]
        %v532 = vld [vmem:[%s384 + $0xa0] sm:$0xff]
        %v533 = vld [vmem:[%s384 + $0xa8] sm:$0xff]
        %v534 = vld [vmem:[%s384 + $0xb0] sm:$0xff]
        %v535 = vld [vmem:[%s384 + $0xb8] sm:$0xff]
        %v536 = vld [vmem:[%s384 + $0xc0] sm:$0xff]
        %v537 = vld [vmem:[%s384 + $0xc8] sm:$0xff]
        %v538 = vld [vmem:[%s384 + $0xd0] sm:$0xff]
        %v539 = vld [vmem:[%s384 + $0xd8] sm:$0xff]
        %v540 = vld [vmem:[%s384 + $0xe0] sm:$0xff]
        %v541 = vld [vmem:[%s384 + $0xe8] sm:$0xff]
        %v542 = vld [vmem:[%s384 + $0xf0] sm:$0xff]
        %v543 = vld [vmem:[%s384 + $0xf8] sm:$0xff]
        %v544 = vpack.c.bf16 %v513, %v512
        %v545 = vpack.c.bf16 %v515, %v514
        %v546 = vpack.c.bf16 %v517, %v516
        %v547 = vpack.c.bf16 %v519, %v518
        %v548 = vpack.c.bf16 %v521, %v520
        %v549 = vpack.c.bf16 %v523, %v522
        %v550 = vpack.c.bf16 %v525, %v524
        %v551 = vpack.c.bf16 %v527, %v526
        %v552 = vpack.c.bf16 %v529, %v528
        %v553 = vpack.c.bf16 %v531, %v530
        %v554 = vpack.c.bf16 %v533, %v532
        %v555 = vpack.c.bf16 %v535, %v534
        %v556 = vpack.c.bf16 %v537, %v536
        %v557 = vpack.c.bf16 %v539, %v538
        %v558 = vpack.c.bf16 %v541, %v540
        %v559 = vpack.c.bf16 %v543, %v542
        %v576 = vunpack.c.l.b16 %v544
        %v577 = vunpack.c.h.b16 %v544
        %v578 = vunpack.c.l.b16 %v545
        %v579 = vunpack.c.h.b16 %v545
        %v580 = vunpack.c.l.b16 %v546
        %v581 = vunpack.c.h.b16 %v546
        %v582 = vunpack.c.l.b16 %v547
        %v583 = vunpack.c.h.b16 %v547
        %v584 = vunpack.c.l.b16 %v548
        %v585 = vunpack.c.h.b16 %v548
        %v586 = vunpack.c.l.b16 %v549
        %v587 = vunpack.c.h.b16 %v549
        %v588 = vunpack.c.l.b16 %v550
        %v589 = vunpack.c.h.b16 %v550
        %v590 = vunpack.c.l.b16 %v551
        %v591 = vunpack.c.h.b16 %v551
        %v592 = vunpack.c.l.b16 %v552
        %v593 = vunpack.c.h.b16 %v552
        %v594 = vunpack.c.l.b16 %v553
        %v595 = vunpack.c.h.b16 %v553
        %v596 = vunpack.c.l.b16 %v554
        %v597 = vunpack.c.h.b16 %v554
        %v598 = vunpack.c.l.b16 %v555
        %v599 = vunpack.c.h.b16 %v555
        %v600 = vunpack.c.l.b16 %v556
        %v601 = vunpack.c.h.b16 %v556
        %v602 = vunpack.c.l.b16 %v557
        %v603 = vunpack.c.h.b16 %v557
        %v604 = vunpack.c.l.b16 %v558
        %v605 = vunpack.c.h.b16 %v558
        %v606 = vunpack.c.l.b16 %v559
        %v607 = vunpack.c.h.b16 %v559
        %v608 = vpack.c.b16 %v576, %v576
        %v609 = vpack.c.b16 %v577, %v577
        %v610 = vpack.c.b16 %v578, %v578
        %v611 = vpack.c.b16 %v579, %v579
        %v612 = vpack.c.b16 %v580, %v580
        %v613 = vpack.c.b16 %v581, %v581
        %v614 = vpack.c.b16 %v582, %v582
        %v615 = vpack.c.b16 %v583, %v583
        %v616 = vpack.c.b16 %v584, %v584
        %v617 = vpack.c.b16 %v585, %v585
        %v618 = vpack.c.b16 %v586, %v586
        %v619 = vpack.c.b16 %v587, %v587
        %v620 = vpack.c.b16 %v588, %v588
        %v621 = vpack.c.b16 %v589, %v589
        %v622 = vpack.c.b16 %v590, %v590
        %v623 = vpack.c.b16 %v591, %v591
        %v624 = vpack.c.b16 %v592, %v592
        %v625 = vpack.c.b16 %v593, %v593
        %v626 = vpack.c.b16 %v594, %v594
        %v627 = vpack.c.b16 %v595, %v595
        %v628 = vpack.c.b16 %v596, %v596
        %v629 = vpack.c.b16 %v597, %v597
        %v630 = vpack.c.b16 %v598, %v598
        %v631 = vpack.c.b16 %v599, %v599
        %v632 = vpack.c.b16 %v600, %v600
        %v633 = vpack.c.b16 %v601, %v601
        %v634 = vpack.c.b16 %v602, %v602
        %v635 = vpack.c.b16 %v603, %v603
        %v636 = vpack.c.b16 %v604, %v604
        %v637 = vpack.c.b16 %v605, %v605
        %v638 = vpack.c.b16 %v606, %v606
        %v639 = vpack.c.b16 %v607, %v607
        %vm640 = vsmask.f32 256
        %vm641 = vsmask.f32 4368
        %vm642 = vmor %vm640, %vm641
        %v644 = vshrl.u32 %v608, 16
        %v646 = vrot.slane %v644, 7
        %v647 = vshll.u32 %v608, 16
        %v649 = vor.u32 %v646, %v647
        %v650 = vrot.slane %v646, 4
        %v652 = vshrl.u32 %v609, 16
        %v654 = vrot.slane %v652, 7
        %v655 = vshll.u32 %v609, 16
        %v657 = vor.u32 %v654, %v655
        %v658 = vsel %vm642, %v650, %v657
        %v659 = vrot.slane %v654, 4
        %v661 = vshrl.u32 %v610, 16
        %v663 = vrot.slane %v661, 7
        %v664 = vshll.u32 %v610, 16
        %v666 = vor.u32 %v663, %v664
        %v667 = vrot.slane %v663, 4
        %v669 = vshrl.u32 %v611, 16
        %v671 = vrot.slane %v669, 7
        %v672 = vshll.u32 %v611, 16
        %v674 = vor.u32 %v671, %v672
        %v675 = vsel %vm642, %v667, %v674
        %v676 = vrot.slane %v671, 4
        %v678 = vshrl.u32 %v612, 16
        %v680 = vrot.slane %v678, 7
        %v681 = vshll.u32 %v612, 16
        %v683 = vor.u32 %v680, %v681
        %v684 = vrot.slane %v680, 4
        %v686 = vshrl.u32 %v613, 16
        %v688 = vrot.slane %v686, 7
        %v689 = vshll.u32 %v613, 16
        %v691 = vor.u32 %v688, %v689
        %v692 = vsel %vm642, %v684, %v691
        %v693 = vrot.slane %v688, 4
        %v695 = vshrl.u32 %v614, 16
        %v697 = vrot.slane %v695, 7
        %v698 = vshll.u32 %v614, 16
        %v700 = vor.u32 %v697, %v698
        %v701 = vrot.slane %v697, 4
        %v703 = vshrl.u32 %v615, 16
        %v705 = vrot.slane %v703, 7
        %v706 = vshll.u32 %v615, 16
        %v708 = vor.u32 %v705, %v706
        %v709 = vsel %vm642, %v701, %v708
        %v710 = vrot.slane %v705, 4
        %v712 = vshrl.u32 %v616, 16
        %v714 = vrot.slane %v712, 7
        %v715 = vshll.u32 %v616, 16
        %v717 = vor.u32 %v714, %v715
        %v718 = vrot.slane %v714, 4
        %v720 = vshrl.u32 %v617, 16
        %v722 = vrot.slane %v720, 7
        %v723 = vshll.u32 %v617, 16
        %v725 = vor.u32 %v722, %v723
        %v726 = vsel %vm642, %v718, %v725
        %v727 = vrot.slane %v722, 4
        %v729 = vshrl.u32 %v618, 16
        %v731 = vrot.slane %v729, 7
        %v732 = vshll.u32 %v618, 16
        %v734 = vor.u32 %v731, %v732
        %v735 = vrot.slane %v731, 4
        %v737 = vshrl.u32 %v619, 16
        %v739 = vrot.slane %v737, 7
        %v740 = vshll.u32 %v619, 16
        %v742 = vor.u32 %v739, %v740
        %v743 = vsel %vm642, %v735, %v742
        %v744 = vrot.slane %v739, 4
        %v746 = vshrl.u32 %v620, 16
        %v748 = vrot.slane %v746, 7
        %v749 = vshll.u32 %v620, 16
        %v751 = vor.u32 %v748, %v749
        %v752 = vrot.slane %v748, 4
        %v754 = vshrl.u32 %v621, 16
        %v756 = vrot.slane %v754, 7
        %v757 = vshll.u32 %v621, 16
        %v759 = vor.u32 %v756, %v757
        %v760 = vsel %vm642, %v752, %v759
        %v761 = vrot.slane %v756, 4
        %v763 = vshrl.u32 %v622, 16
        %v765 = vrot.slane %v763, 7
        %v766 = vshll.u32 %v622, 16
        %v768 = vor.u32 %v765, %v766
        %v769 = vrot.slane %v765, 4
        %v771 = vshrl.u32 %v623, 16
        %v773 = vrot.slane %v771, 7
        %v774 = vshll.u32 %v623, 16
        %v776 = vor.u32 %v773, %v774
        %v777 = vsel %vm642, %v769, %v776
        %v778 = vrot.slane %v773, 4
        %v780 = vshrl.u32 %v624, 16
        %v782 = vrot.slane %v780, 7
        %v783 = vshll.u32 %v624, 16
        %v785 = vor.u32 %v782, %v783
        %v786 = vrot.slane %v782, 4
        %v788 = vshrl.u32 %v625, 16
        %v790 = vrot.slane %v788, 7
        %v791 = vshll.u32 %v625, 16
        %v793 = vor.u32 %v790, %v791
        %v794 = vsel %vm642, %v786, %v793
        %v795 = vrot.slane %v790, 4
        %v797 = vshrl.u32 %v626, 16
        %v799 = vrot.slane %v797, 7
        %v800 = vshll.u32 %v626, 16
        %v802 = vor.u32 %v799, %v800
        %v803 = vrot.slane %v799, 4
        %v805 = vshrl.u32 %v627, 16
        %v807 = vrot.slane %v805, 7
        %v808 = vshll.u32 %v627, 16
        %v810 = vor.u32 %v807, %v808
        %v811 = vsel %vm642, %v803, %v810
        %v812 = vrot.slane %v807, 4
        %v814 = vshrl.u32 %v628, 16
        %v816 = vrot.slane %v814, 7
        %v817 = vshll.u32 %v628, 16
        %v819 = vor.u32 %v816, %v817
        %v820 = vrot.slane %v816, 4
        %v822 = vshrl.u32 %v629, 16
        %v824 = vrot.slane %v822, 7
        %v825 = vshll.u32 %v629, 16
        %v827 = vor.u32 %v824, %v825
        %v828 = vsel %vm642, %v820, %v827
        %v829 = vrot.slane %v824, 4
        %v831 = vshrl.u32 %v630, 16
        %v833 = vrot.slane %v831, 7
        %v834 = vshll.u32 %v630, 16
        %v836 = vor.u32 %v833, %v834
        %v837 = vrot.slane %v833, 4
        %v839 = vshrl.u32 %v631, 16
        %v841 = vrot.slane %v839, 7
        %v842 = vshll.u32 %v631, 16
        %v844 = vor.u32 %v841, %v842
        %v845 = vsel %vm642, %v837, %v844
        %v846 = vrot.slane %v841, 4
        %v848 = vshrl.u32 %v632, 16
        %v850 = vrot.slane %v848, 7
        %v851 = vshll.u32 %v632, 16
        %v853 = vor.u32 %v850, %v851
        %v854 = vrot.slane %v850, 4
        %v856 = vshrl.u32 %v633, 16
        %v858 = vrot.slane %v856, 7
        %v859 = vshll.u32 %v633, 16
        %v861 = vor.u32 %v858, %v859
        %v862 = vsel %vm642, %v854, %v861
        %v863 = vrot.slane %v858, 4
        %v865 = vshrl.u32 %v634, 16
        %v867 = vrot.slane %v865, 7
        %v868 = vshll.u32 %v634, 16
        %v870 = vor.u32 %v867, %v868
        %v871 = vrot.slane %v867, 4
        %v873 = vshrl.u32 %v635, 16
        %v875 = vrot.slane %v873, 7
        %v876 = vshll.u32 %v635, 16
        %v878 = vor.u32 %v875, %v876
        %v879 = vsel %vm642, %v871, %v878
        %v880 = vrot.slane %v875, 4
        %v882 = vshrl.u32 %v636, 16
        %v884 = vrot.slane %v882, 7
        %v885 = vshll.u32 %v636, 16
        %v887 = vor.u32 %v884, %v885
        %v888 = vrot.slane %v884, 4
        %v890 = vshrl.u32 %v637, 16
        %v892 = vrot.slane %v890, 7
        %v893 = vshll.u32 %v637, 16
        %v895 = vor.u32 %v892, %v893
        %v896 = vsel %vm642, %v888, %v895
        %v897 = vrot.slane %v892, 4
        %v899 = vshrl.u32 %v638, 16
        %v901 = vrot.slane %v899, 7
        %v902 = vshll.u32 %v638, 16
        %v904 = vor.u32 %v901, %v902
        %v905 = vrot.slane %v901, 4
        %v907 = vshrl.u32 %v639, 16
        %v909 = vrot.slane %v907, 7
        %v910 = vshll.u32 %v639, 16
        %v912 = vor.u32 %v909, %v910
        %v913 = vsel %vm642, %v905, %v912
        %v914 = vrot.slane %v909, 4
        %s963 = scalar_lea.vmem [#allocation2], 12
        %vm964 = vcmask 519168
        %vm965 = vsmask.f32 7938
        %vm966 = vmand %vm964, %vm965
        %v967 = vld [vmem:[%s963] sm:$0xf]
        %v968 = vsel %vm966, %v649, %v967
        %969 = vst [vmem:[%s963] sm:$0xf] %v968
        %vm970 = vcmask 519168
        %971 = vst.msk [vmem:[%s963 + $0x4] sm:$0xf] %vm970, %v658
        %vm972 = vcmask 516096
        %vm973 = vmand %vm972, %vm640
        %v974 = vld [vmem:[%s963 + $0x8] sm:$0x1]
        %v975 = vsel %vm973, %v659, %v974
        %976 = vst [vmem:[%s963 + $0x8] sm:$0x1] %v975
        %v977 = vld [vmem:[%s963 + $0xc] sm:$0xf]
        %v978 = vsel %vm966, %v666, %v977
        %979 = vst [vmem:[%s963 + $0xc] sm:$0xf] %v978
        %980 = vst.msk [vmem:[%s963 + $0x10] sm:$0xf] %vm970, %v675
        %v981 = vld [vmem:[%s963 + $0x14] sm:$0x1]
        %v982 = vsel %vm973, %v676, %v981
        %983 = vst [vmem:[%s963 + $0x14] sm:$0x1] %v982
        %v984 = vld [vmem:[%s963 + $0x18] sm:$0xf]
        %v985 = vsel %vm966, %v683, %v984
        %986 = vst [vmem:[%s963 + $0x18] sm:$0xf] %v985
        %987 = vst.msk [vmem:[%s963 + $0x1c] sm:$0xf] %vm970, %v692
        %v988 = vld [vmem:[%s963 + $0x20] sm:$0x1]
        %v989 = vsel %vm973, %v693, %v988
        %990 = vst [vmem:[%s963 + $0x20] sm:$0x1] %v989
        %v991 = vld [vmem:[%s963 + $0x24] sm:$0xf]
        %v992 = vsel %vm966, %v700, %v991
        %993 = vst [vmem:[%s963 + $0x24] sm:$0xf] %v992
        %994 = vst.msk [vmem:[%s963 + $0x28] sm:$0xf] %vm970, %v709
        %v995 = vld [vmem:[%s963 + $0x2c] sm:$0x1]
        %v996 = vsel %vm973, %v710, %v995
        %997 = vst [vmem:[%s963 + $0x2c] sm:$0x1] %v996
        %v998 = vld [vmem:[%s963 + $0x30] sm:$0xf]
        %v999 = vsel %vm966, %v717, %v998
        %1000 = vst [vmem:[%s963 + $0x30] sm:$0xf] %v999
        %1001 = vst.msk [vmem:[%s963 + $0x34] sm:$0xf] %vm970, %v726
        %v1002 = vld [vmem:[%s963 + $0x38] sm:$0x1]
        %v1003 = vsel %vm973, %v727, %v1002
        %1004 = vst [vmem:[%s963 + $0x38] sm:$0x1] %v1003
        %v1005 = vld [vmem:[%s963 + $0x3c] sm:$0xf]
        %v1006 = vsel %vm966, %v734, %v1005
        %1007 = vst [vmem:[%s963 + $0x3c] sm:$0xf] %v1006
        %1008 = vst.msk [vmem:[%s963 + $0x40] sm:$0xf] %vm970, %v743
        %v1009 = vld [vmem:[%s963 + $0x44] sm:$0x1]
        %v1010 = vsel %vm973, %v744, %v1009
        %1011 = vst [vmem:[%s963 + $0x44] sm:$0x1] %v1010
        %v1012 = vld [vmem:[%s963 + $0x48] sm:$0xf]
        %v1013 = vsel %vm966, %v751, %v1012
        %1014 = vst [vmem:[%s963 + $0x48] sm:$0xf] %v1013
        %1015 = vst.msk [vmem:[%s963 + $0x4c] sm:$0xf] %vm970, %v760
        %v1016 = vld [vmem:[%s963 + $0x50] sm:$0x1]
        %v1017 = vsel %vm973, %v761, %v1016
        %1018 = vst [vmem:[%s963 + $0x50] sm:$0x1] %v1017
        %v1019 = vld [vmem:[%s963 + $0x54] sm:$0xf]
        %v1020 = vsel %vm966, %v768, %v1019
        %1021 = vst [vmem:[%s963 + $0x54] sm:$0xf] %v1020
        %1022 = vst.msk [vmem:[%s963 + $0x58] sm:$0xf] %vm970, %v777
        %v1023 = vld [vmem:[%s963 + $0x5c] sm:$0x1]
        %v1024 = vsel %vm973, %v778, %v1023
        %1025 = vst [vmem:[%s963 + $0x5c] sm:$0x1] %v1024
        %v1026 = vld [vmem:[%s963 + $0x60] sm:$0xf]
        %v1027 = vsel %vm966, %v785, %v1026
        %1028 = vst [vmem:[%s963 + $0x60] sm:$0xf] %v1027
        %1029 = vst.msk [vmem:[%s963 + $0x64] sm:$0xf] %vm970, %v794
        %v1030 = vld [vmem:[%s963 + $0x68] sm:$0x1]
        %v1031 = vsel %vm973, %v795, %v1030
        %1032 = vst [vmem:[%s963 + $0x68] sm:$0x1] %v1031
        %v1033 = vld [vmem:[%s963 + $0x6c] sm:$0xf]
        %v1034 = vsel %vm966, %v802, %v1033
        %1035 = vst [vmem:[%s963 + $0x6c] sm:$0xf] %v1034
        %1036 = vst.msk [vmem:[%s963 + $0x70] sm:$0xf] %vm970, %v811
        %v1037 = vld [vmem:[%s963 + $0x74] sm:$0x1]
        %v1038 = vsel %vm973, %v812, %v1037
        %1039 = vst [vmem:[%s963 + $0x74] sm:$0x1] %v1038
        %v1040 = vld [vmem:[%s963 + $0x78] sm:$0xf]
        %v1041 = vsel %vm966, %v819, %v1040
        %1042 = vst [vmem:[%s963 + $0x78] sm:$0xf] %v1041
        %1043 = vst.msk [vmem:[%s963 + $0x7c] sm:$0xf] %vm970, %v828
        %v1044 = vld [vmem:[%s963 + $0x80] sm:$0x1]
        %v1045 = vsel %vm973, %v829, %v1044
        %1046 = vst [vmem:[%s963 + $0x80] sm:$0x1] %v1045
        %v1047 = vld [vmem:[%s963 + $0x84] sm:$0xf]
        %v1048 = vsel %vm966, %v836, %v1047
        %1049 = vst [vmem:[%s963 + $0x84] sm:$0xf] %v1048
        %1050 = vst.msk [vmem:[%s963 + $0x88] sm:$0xf] %vm970, %v845
        %v1051 = vld [vmem:[%s963 + $0x8c] sm:$0x1]
        %v1052 = vsel %vm973, %v846, %v1051
        %1053 = vst [vmem:[%s963 + $0x8c] sm:$0x1] %v1052
        %v1054 = vld [vmem:[%s963 + $0x90] sm:$0xf]
        %v1055 = vsel %vm966, %v853, %v1054
        %1056 = vst [vmem:[%s963 + $0x90] sm:$0xf] %v1055
        %1057 = vst.msk [vmem:[%s963 + $0x94] sm:$0xf] %vm970, %v862
        %v1058 = vld [vmem:[%s963 + $0x98] sm:$0x1]
        %v1059 = vsel %vm973, %v863, %v1058
        %1060 = vst [vmem:[%s963 + $0x98] sm:$0x1] %v1059
        %v1061 = vld [vmem:[%s963 + $0x9c] sm:$0xf]
        %v1062 = vsel %vm966, %v870, %v1061
        %1063 = vst [vmem:[%s963 + $0x9c] sm:$0xf] %v1062
        %1064 = vst.msk [vmem:[%s963 + $0xa0] sm:$0xf] %vm970, %v879
        %v1065 = vld [vmem:[%s963 + $0xa4] sm:$0x1]
        %v1066 = vsel %vm973, %v880, %v1065
        %1067 = vst [vmem:[%s963 + $0xa4] sm:$0x1] %v1066
        %v1068 = vld [vmem:[%s963 + $0xa8] sm:$0xf]
        %v1069 = vsel %vm966, %v887, %v1068
        %1070 = vst [vmem:[%s963 + $0xa8] sm:$0xf] %v1069
        %1071 = vst.msk [vmem:[%s963 + $0xac] sm:$0xf] %vm970, %v896
        %v1072 = vld [vmem:[%s963 + $0xb0] sm:$0x1]
        %v1073 = vsel %vm973, %v897, %v1072
        %1074 = vst [vmem:[%s963 + $0xb0] sm:$0x1] %v1073
        %v1075 = vld [vmem:[%s963 + $0xb4] sm:$0xf]
        %v1076 = vsel %vm966, %v904, %v1075
        %1077 = vst [vmem:[%s963 + $0xb4] sm:$0xf] %v1076
        %1078 = vst.msk [vmem:[%s963 + $0xb8] sm:$0xf] %vm970, %v913
        %v1079 = vld [vmem:[%s963 + $0xbc] sm:$0x1]
        %v1080 = vsel %vm973, %v914, %v1079
        %1081 = vst [vmem:[%s963 + $0xbc] sm:$0x1] %v1080
        %v1082 = vld [vmem:[#allocation2] sm:$0xf]
        %v1083 = vsel %vm966, %v666, %v1082
        %1084 = vst [vmem:[#allocation2] sm:$0xf] %v1083
        %1085 = vst.msk [vmem:[#allocation2 + $0x4] sm:$0xf] %vm970, %v675
        %v1086 = vld [vmem:[#allocation2 + $0x8] sm:$0x1]
        %v1087 = vsel %vm973, %v676, %v1086
        %1088 = vst [vmem:[#allocation2 + $0x8] sm:$0x1] %v1087
        %s1089 = scalar_lea.vmem [#allocation2], 204
        %v1090 = vld [vmem:[%s1089] sm:$0xf]
        %v1091 = vsel %vm966, %v887, %v1090
        %1092 = vst [vmem:[%s1089] sm:$0xf] %v1091
        %1093 = vst.msk [vmem:[%s1089 + $0x4] sm:$0xf] %vm970, %v896
        %v1094 = vld [vmem:[%s1089 + $0x8] sm:$0x1]
        %v1095 = vsel %vm973, %v897, %v1094
        %1096 = vst [vmem:[%s1089 + $0x8] sm:$0x1] %v1095
        %v1097 = vld [vmem:[#allocation2] sm:$0x2]
        %v1098 = vld [vmem:[#allocation2 + $0xc] sm:$0x2]
        %v1099 = vld [vmem:[#allocation2 + $0x18] sm:$0x2]
        %v1100 = vld [vmem:[#allocation2 + $0x24] sm:$0x2]
        %v1101 = vld [vmem:[#allocation2 + $0x30] sm:$0x2]
        %v1102 = vld [vmem:[#allocation2 + $0x3c] sm:$0x2]
        %v1103 = vld [vmem:[#allocation2 + $0x48] sm:$0x2]
        %v1104 = vld [vmem:[#allocation2 + $0x54] sm:$0x2]
        %v1105 = vld [vmem:[#allocation2 + $0x60] sm:$0x2]
        %v1106 = vld [vmem:[#allocation2 + $0x6c] sm:$0x2]
        %v1107 = vld [vmem:[#allocation2 + $0x78] sm:$0x2]
        %v1108 = vld [vmem:[#allocation2 + $0x84] sm:$0x2]
        %v1109 = vld [vmem:[#allocation2 + $0x90] sm:$0x2]
        %v1110 = vld [vmem:[#allocation2 + $0x9c] sm:$0x2]
        %v1111 = vld [vmem:[#allocation2 + $0xa8] sm:$0x2]
        %v1112 = vld [vmem:[#allocation2 + $0xb4] sm:$0x2]
        %v1113 = vld [vmem:[#allocation2 + $0xc0] sm:$0x2]
        %v1114 = vld [vmem:[#allocation2 + $0xcc] sm:$0x2]
        %v1133 = vrot.slane %v1097, 5
        %v1134 = vrot.slane %v1133, 4
        %v1135 = vrot.slane %v1098, 5
        %v1136 = vrot.slane %v1135, 4
        %v1137 = vrot.slane %v1099, 5
        %v1138 = vrot.slane %v1137, 4
        %v1139 = vrot.slane %v1100, 5
        %v1140 = vrot.slane %v1139, 4
        %v1141 = vrot.slane %v1101, 5
        %v1142 = vrot.slane %v1141, 4
        %v1143 = vrot.slane %v1102, 5
        %v1144 = vrot.slane %v1143, 4
        %v1145 = vrot.slane %v1103, 5
        %v1146 = vrot.slane %v1145, 4
        %v1147 = vrot.slane %v1104, 5
        %v1148 = vrot.slane %v1147, 4
        %v1149 = vrot.slane %v1105, 5
        %v1150 = vrot.slane %v1149, 4
        %v1151 = vrot.slane %v1106, 5
        %v1152 = vrot.slane %v1151, 4
        %v1153 = vrot.slane %v1107, 5
        %v1154 = vrot.slane %v1153, 4
        %v1155 = vrot.slane %v1108, 5
        %v1156 = vrot.slane %v1155, 4
        %v1157 = vrot.slane %v1109, 5
        %v1158 = vrot.slane %v1157, 4
        %v1159 = vrot.slane %v1110, 5
        %v1160 = vrot.slane %v1159, 4
        %v1161 = vrot.slane %v1111, 5
        %v1162 = vrot.slane %v1161, 4
        %v1163 = vrot.slane %v1112, 5
        %v1164 = vrot.slane %v1163, 4
        %v1165 = vrot.slane %v1113, 5
        %v1166 = vrot.slane %v1165, 4
        %v1167 = vrot.slane %v1114, 5
        %v1168 = vrot.slane %v1167, 4
        %v1187 = vld [vmem:[#allocation2] sm:$0x1]
        %v1188 = vsel %vm973, %v1134, %v1187
        %1189 = vst [vmem:[#allocation2] sm:$0x1] %v1188
        %v1190 = vld [vmem:[#allocation2 + $0xc] sm:$0x1]
        %v1191 = vsel %vm973, %v1136, %v1190
        %1192 = vst [vmem:[#allocation2 + $0xc] sm:$0x1] %v1191
        %v1193 = vld [vmem:[#allocation2 + $0x18] sm:$0x1]
        %v1194 = vsel %vm973, %v1138, %v1193
        %1195 = vst [vmem:[#allocation2 + $0x18] sm:$0x1] %v1194
        %v1196 = vld [vmem:[#allocation2 + $0x24] sm:$0x1]
        %v1197 = vsel %vm973, %v1140, %v1196
        %1198 = vst [vmem:[#allocation2 + $0x24] sm:$0x1] %v1197
        %v1199 = vld [vmem:[#allocation2 + $0x30] sm:$0x1]
        %v1200 = vsel %vm973, %v1142, %v1199
        %1201 = vst [vmem:[#allocation2 + $0x30] sm:$0x1] %v1200
        %v1202 = vld [vmem:[#allocation2 + $0x3c] sm:$0x1]
        %v1203 = vsel %vm973, %v1144, %v1202
        %1204 = vst [vmem:[#allocation2 + $0x3c] sm:$0x1] %v1203
        %v1205 = vld [vmem:[#allocation2 + $0x48] sm:$0x1]
        %v1206 = vsel %vm973, %v1146, %v1205
        %1207 = vst [vmem:[#allocation2 + $0x48] sm:$0x1] %v1206
        %v1208 = vld [vmem:[#allocation2 + $0x54] sm:$0x1]
        %v1209 = vsel %vm973, %v1148, %v1208
        %1210 = vst [vmem:[#allocation2 + $0x54] sm:$0x1] %v1209
        %v1211 = vld [vmem:[#allocation2 + $0x60] sm:$0x1]
        %v1212 = vsel %vm973, %v1150, %v1211
        %1213 = vst [vmem:[#allocation2 + $0x60] sm:$0x1] %v1212
        %v1214 = vld [vmem:[#allocation2 + $0x6c] sm:$0x1]
        %v1215 = vsel %vm973, %v1152, %v1214
        %1216 = vst [vmem:[#allocation2 + $0x6c] sm:$0x1] %v1215
        %v1217 = vld [vmem:[#allocation2 + $0x78] sm:$0x1]
        %v1218 = vsel %vm973, %v1154, %v1217
        %1219 = vst [vmem:[#allocation2 + $0x78] sm:$0x1] %v1218
        %v1220 = vld [vmem:[#allocation2 + $0x84] sm:$0x1]
        %v1221 = vsel %vm973, %v1156, %v1220
        %1222 = vst [vmem:[#allocation2 + $0x84] sm:$0x1] %v1221
        %v1223 = vld [vmem:[#allocation2 + $0x90] sm:$0x1]
        %v1224 = vsel %vm973, %v1158, %v1223
        %1225 = vst [vmem:[#allocation2 + $0x90] sm:$0x1] %v1224
        %v1226 = vld [vmem:[#allocation2 + $0x9c] sm:$0x1]
        %v1227 = vsel %vm973, %v1160, %v1226
        %1228 = vst [vmem:[#allocation2 + $0x9c] sm:$0x1] %v1227
        %v1229 = vld [vmem:[#allocation2 + $0xa8] sm:$0x1]
        %v1230 = vsel %vm973, %v1162, %v1229
        %1231 = vst [vmem:[#allocation2 + $0xa8] sm:$0x1] %v1230
        %v1232 = vld [vmem:[#allocation2 + $0xb4] sm:$0x1]
        %v1233 = vsel %vm973, %v1164, %v1232
        %1234 = vst [vmem:[#allocation2 + $0xb4] sm:$0x1] %v1233
        %v1235 = vld [vmem:[#allocation2 + $0xc0] sm:$0x1]
        %v1236 = vsel %vm973, %v1166, %v1235
        %1237 = vst [vmem:[#allocation2 + $0xc0] sm:$0x1] %v1236
        %v1238 = vld [vmem:[#allocation2 + $0xcc] sm:$0x1]
        %v1239 = vsel %vm973, %v1168, %v1238
        %1240 = vst [vmem:[#allocation2 + $0xcc] sm:$0x1] %v1239
        %v1241 = vld [vmem:[#allocation2 + $0x4] sm:$0x8]
        %v1242 = vld [vmem:[#allocation2 + $0x10] sm:$0x8]
        %v1243 = vld [vmem:[#allocation2 + $0x1c] sm:$0x8]
        %v1244 = vld [vmem:[#allocation2 + $0x28] sm:$0x8]
        %v1245 = vld [vmem:[#allocation2 + $0x34] sm:$0x8]
        %v1246 = vld [vmem:[#allocation2 + $0x40] sm:$0x8]
        %v1247 = vld [vmem:[#allocation2 + $0x4c] sm:$0x8]
        %v1248 = vld [vmem:[#allocation2 + $0x58] sm:$0x8]
        %v1249 = vld [vmem:[#allocation2 + $0x64] sm:$0x8]
        %v1250 = vld [vmem:[#allocation2 + $0x70] sm:$0x8]
        %v1251 = vld [vmem:[#allocation2 + $0x7c] sm:$0x8]
        %v1252 = vld [vmem:[#allocation2 + $0x88] sm:$0x8]
        %v1253 = vld [vmem:[#allocation2 + $0x94] sm:$0x8]
        %v1254 = vld [vmem:[#allocation2 + $0xa0] sm:$0x8]
        %v1255 = vld [vmem:[#allocation2 + $0xac] sm:$0x8]
        %v1256 = vld [vmem:[#allocation2 + $0xb8] sm:$0x8]
        %v1257 = vld [vmem:[#allocation2 + $0xc4] sm:$0x8]
        %v1258 = vld [vmem:[#allocation2 + $0xd0] sm:$0x8]
        %v1277 = vrot.slane %v1241, 7
        %v1278 = vrot.slane %v1277, 4
        %v1279 = vrot.slane %v1242, 7
        %v1280 = vrot.slane %v1279, 4
        %v1281 = vrot.slane %v1243, 7
        %v1282 = vrot.slane %v1281, 4
        %v1283 = vrot.slane %v1244, 7
        %v1284 = vrot.slane %v1283, 4
        %v1285 = vrot.slane %v1245, 7
        %v1286 = vrot.slane %v1285, 4
        %v1287 = vrot.slane %v1246, 7
        %v1288 = vrot.slane %v1287, 4
        %v1289 = vrot.slane %v1247, 7
        %v1290 = vrot.slane %v1289, 4
        %v1291 = vrot.slane %v1248, 7
        %v1292 = vrot.slane %v1291, 4
        %v1293 = vrot.slane %v1249, 7
        %v1294 = vrot.slane %v1293, 4
        %v1295 = vrot.slane %v1250, 7
        %v1296 = vrot.slane %v1295, 4
        %v1297 = vrot.slane %v1251, 7
        %v1298 = vrot.slane %v1297, 4
        %v1299 = vrot.slane %v1252, 7
        %v1300 = vrot.slane %v1299, 4
        %v1301 = vrot.slane %v1253, 7
        %v1302 = vrot.slane %v1301, 4
        %v1303 = vrot.slane %v1254, 7
        %v1304 = vrot.slane %v1303, 4
        %v1305 = vrot.slane %v1255, 7
        %v1306 = vrot.slane %v1305, 4
        %v1307 = vrot.slane %v1256, 7
        %v1308 = vrot.slane %v1307, 4
        %v1309 = vrot.slane %v1257, 7
        %v1310 = vrot.slane %v1309, 4
        %v1311 = vrot.slane %v1258, 7
        %v1312 = vrot.slane %v1311, 4
        %vm1331 = vmand %vm972, %vm965
        %v1332 = vld [vmem:[#allocation2 + $0x8] sm:$0x1]
        %v1333 = vsel %vm1331, %v1278, %v1332
        %1334 = vst [vmem:[#allocation2 + $0x8] sm:$0x1] %v1333
        %v1335 = vld [vmem:[#allocation2 + $0x14] sm:$0x1]
        %v1336 = vsel %vm1331, %v1280, %v1335
        %1337 = vst [vmem:[#allocation2 + $0x14] sm:$0x1] %v1336
        %v1338 = vld [vmem:[#allocation2 + $0x20] sm:$0x1]
        %v1339 = vsel %vm1331, %v1282, %v1338
        %1340 = vst [vmem:[#allocation2 + $0x20] sm:$0x1] %v1339
        %v1341 = vld [vmem:[#allocation2 + $0x2c] sm:$0x1]
        %v1342 = vsel %vm1331, %v1284, %v1341
        %1343 = vst [vmem:[#allocation2 + $0x2c] sm:$0x1] %v1342
        %v1344 = vld [vmem:[#allocation2 + $0x38] sm:$0x1]
        %v1345 = vsel %vm1331, %v1286, %v1344
        %1346 = vst [vmem:[#allocation2 + $0x38] sm:$0x1] %v1345
        %v1347 = vld [vmem:[#allocation2 + $0x44] sm:$0x1]
        %v1348 = vsel %vm1331, %v1288, %v1347
        %1349 = vst [vmem:[#allocation2 + $0x44] sm:$0x1] %v1348
        %v1350 = vld [vmem:[#allocation2 + $0x50] sm:$0x1]
        %v1351 = vsel %vm1331, %v1290, %v1350
        %1352 = vst [vmem:[#allocation2 + $0x50] sm:$0x1] %v1351
        %v1353 = vld [vmem:[#allocation2 + $0x5c] sm:$0x1]
        %v1354 = vsel %vm1331, %v1292, %v1353
        %1355 = vst [vmem:[#allocation2 + $0x5c] sm:$0x1] %v1354
        %v1356 = vld [vmem:[#allocation2 + $0x68] sm:$0x1]
        %v1357 = vsel %vm1331, %v1294, %v1356
        %1358 = vst [vmem:[#allocation2 + $0x68] sm:$0x1] %v1357
        %v1359 = vld [vmem:[#allocation2 + $0x74] sm:$0x1]
        %v1360 = vsel %vm1331, %v1296, %v1359
        %1361 = vst [vmem:[#allocation2 + $0x74] sm:$0x1] %v1360
        %v1362 = vld [vmem:[#allocation2 + $0x80] sm:$0x1]
        %v1363 = vsel %vm1331, %v1298, %v1362
        %1364 = vst [vmem:[#allocation2 + $0x80] sm:$0x1] %v1363
        %v1365 = vld [vmem:[#allocation2 + $0x8c] sm:$0x1]
        %v1366 = vsel %vm1331, %v1300, %v1365
        %1367 = vst [vmem:[#allocation2 + $0x8c] sm:$0x1] %v1366
        %v1368 = vld [vmem:[#allocation2 + $0x98] sm:$0x1]
        %v1369 = vsel %vm1331, %v1302, %v1368
        %1370 = vst [vmem:[#allocation2 + $0x98] sm:$0x1] %v1369
        %v1371 = vld [vmem:[#allocation2 + $0xa4] sm:$0x1]
        %v1372 = vsel %vm1331, %v1304, %v1371
        %1373 = vst [vmem:[#allocation2 + $0xa4] sm:$0x1] %v1372
        %v1374 = vld [vmem:[#allocation2 + $0xb0] sm:$0x1]
        %v1375 = vsel %vm1331, %v1306, %v1374
        %1376 = vst [vmem:[#allocation2 + $0xb0] sm:$0x1] %v1375
        %v1377 = vld [vmem:[#allocation2 + $0xbc] sm:$0x1]
        %v1378 = vsel %vm1331, %v1308, %v1377
        %1379 = vst [vmem:[#allocation2 + $0xbc] sm:$0x1] %v1378
        %v1380 = vld [vmem:[#allocation2 + $0xc8] sm:$0x1]
        %v1381 = vsel %vm1331, %v1310, %v1380
        %1382 = vst [vmem:[#allocation2 + $0xc8] sm:$0x1] %v1381
        %v1383 = vld [vmem:[#allocation2 + $0xd4] sm:$0x1]
        %v1384 = vsel %vm1331, %v1312, %v1383
        %1385 = vst [vmem:[#allocation2 + $0xd4] sm:$0x1] %v1384
        %v1386 = vld [vmem:[#allocation2] sm:$0xf]
        %v1387 = vld [vmem:[#allocation2 + $0x4] sm:$0xf]
        %v1388 = vld [vmem:[#allocation2 + $0x8] sm:$0x1]
        %v1389 = vld [vmem:[#allocation2 + $0xc] sm:$0xf]
        %v1390 = vld [vmem:[#allocation2 + $0x10] sm:$0xf]
        %v1391 = vld [vmem:[#allocation2 + $0x14] sm:$0x1]
        %v1392 = vld [vmem:[#allocation2 + $0x18] sm:$0xf]
        %v1393 = vld [vmem:[#allocation2 + $0x1c] sm:$0xf]
        %v1394 = vld [vmem:[#allocation2 + $0x20] sm:$0x1]
        %v1395 = vld [vmem:[#allocation2 + $0x24] sm:$0xf]
        %v1396 = vld [vmem:[#allocation2 + $0x28] sm:$0xf]
        %v1397 = vld [vmem:[#allocation2 + $0x2c] sm:$0x1]
        %v1398 = vld [vmem:[#allocation2 + $0x30] sm:$0xf]
        %v1399 = vld [vmem:[#allocation2 + $0x34] sm:$0xf]
        %v1400 = vld [vmem:[#allocation2 + $0x38] sm:$0x1]
        %v1401 = vld [vmem:[#allocation2 + $0x3c] sm:$0xf]
        %v1402 = vld [vmem:[#allocation2 + $0x40] sm:$0xf]
        %v1403 = vld [vmem:[#allocation2 + $0x44] sm:$0x1]
        %v1404 = vld [vmem:[#allocation2 + $0x48] sm:$0xf]
        %v1405 = vld [vmem:[#allocation2 + $0x4c] sm:$0xf]
        %v1406 = vld [vmem:[#allocation2 + $0x50] sm:$0x1]
        %v1407 = vld [vmem:[#allocation2 + $0x54] sm:$0xf]
        %v1408 = vld [vmem:[#allocation2 + $0x58] sm:$0xf]
        %v1409 = vld [vmem:[#allocation2 + $0x5c] sm:$0x1]
        %v1410 = vld [vmem:[#allocation2 + $0x60] sm:$0xf]
        %v1411 = vld [vmem:[#allocation2 + $0x64] sm:$0xf]
        %v1412 = vld [vmem:[#allocation2 + $0x68] sm:$0x1]
        %v1413 = vld [vmem:[#allocation2 + $0x6c] sm:$0xf]
        %v1414 = vld [vmem:[#allocation2 + $0x70] sm:$0xf]
        %v1415 = vld [vmem:[#allocation2 + $0x74] sm:$0x1]
        %v1416 = vld [vmem:[#allocation2 + $0x78] sm:$0xf]
        %v1417 = vld [vmem:[#allocation2 + $0x7c] sm:$0xf]
        %v1418 = vld [vmem:[#allocation2 + $0x80] sm:$0x1]
        %v1419 = vld [vmem:[#allocation2 + $0x84] sm:$0xf]
        %v1420 = vld [vmem:[#allocation2 + $0x88] sm:$0xf]
        %v1421 = vld [vmem:[#allocation2 + $0x8c] sm:$0x1]
        %v1422 = vld [vmem:[#allocation2 + $0x90] sm:$0xf]
        %v1423 = vld [vmem:[#allocation2 + $0x94] sm:$0xf]
        %v1424 = vld [vmem:[#allocation2 + $0x98] sm:$0x1]
        %v1425 = vld [vmem:[#allocation2 + $0x9c] sm:$0xf]
        %v1426 = vld [vmem:[#allocation2 + $0xa0] sm:$0xf]
        %v1427 = vld [vmem:[#allocation2 + $0xa4] sm:$0x1]
        %v1428 = vld [vmem:[#allocation2 + $0xa8] sm:$0xf]
        %v1429 = vld [vmem:[#allocation2 + $0xac] sm:$0xf]
        %v1430 = vld [vmem:[#allocation2 + $0xb0] sm:$0x1]
        %v1431 = vld [vmem:[#allocation2 + $0xb4] sm:$0xf]
        %v1432 = vld [vmem:[#allocation2 + $0xb8] sm:$0xf]
        %v1433 = vld [vmem:[#allocation2 + $0xbc] sm:$0x1]
        %1434 = vst.msk [vmem:[#allocation3] sm:$0xf] %vm970, %v1386
        %1435 = vst.msk [vmem:[#allocation3 + $0x8] sm:$0xf] %vm970, %v1387
        %vm1436 = vcmask 516096
        %1437 = vst.msk [vmem:[#allocation3 + $0x10] sm:$0x1] %vm1436, %v1388
        %1438 = vst.msk [vmem:[#allocation3 + $0x18] sm:$0xf] %vm970, %v1389
        %1439 = vst.msk [vmem:[#allocation3 + $0x20] sm:$0xf] %vm970, %v1390
        %1440 = vst.msk [vmem:[#allocation3 + $0x28] sm:$0x1] %vm1436, %v1391
        %1441 = vst.msk [vmem:[#allocation3 + $0x30] sm:$0xf] %vm970, %v1392
        %1442 = vst.msk [vmem:[#allocation3 + $0x38] sm:$0xf] %vm970, %v1393
        %1443 = vst.msk [vmem:[#allocation3 + $0x40] sm:$0x1] %vm1436, %v1394
        %1444 = vst.msk [vmem:[#allocation3 + $0x48] sm:$0xf] %vm970, %v1395
        %1445 = vst.msk [vmem:[#allocation3 + $0x50] sm:$0xf] %vm970, %v1396
        %1446 = vst.msk [vmem:[#allocation3 + $0x58] sm:$0x1] %vm1436, %v1397
        %1447 = vst.msk [vmem:[#allocation3 + $0x60] sm:$0xf] %vm970, %v1398
        %1448 = vst.msk [vmem:[#allocation3 + $0x68] sm:$0xf] %vm970, %v1399
        %1449 = vst.msk [vmem:[#allocation3 + $0x70] sm:$0x1] %vm1436, %v1400
        %1450 = vst.msk [vmem:[#allocation3 + $0x78] sm:$0xf] %vm970, %v1401
        %1451 = vst.msk [vmem:[#allocation3 + $0x80] sm:$0xf] %vm970, %v1402
        %1452 = vst.msk [vmem:[#allocation3 + $0x88] sm:$0x1] %vm1436, %v1403
        %1453 = vst.msk [vmem:[#allocation3 + $0x90] sm:$0xf] %vm970, %v1404
        %1454 = vst.msk [vmem:[#allocation3 + $0x98] sm:$0xf] %vm970, %v1405
        %1455 = vst.msk [vmem:[#allocation3 + $0xa0] sm:$0x1] %vm1436, %v1406
        %1456 = vst.msk [vmem:[#allocation3 + $0xa8] sm:$0xf] %vm970, %v1407
        %1457 = vst.msk [vmem:[#allocation3 + $0xb0] sm:$0xf] %vm970, %v1408
        %1458 = vst.msk [vmem:[#allocation3 + $0xb8] sm:$0x1] %vm1436, %v1409
        %1459 = vst.msk [vmem:[#allocation3 + $0xc0] sm:$0xf] %vm970, %v1410
        %1460 = vst.msk [vmem:[#allocation3 + $0xc8] sm:$0xf] %vm970, %v1411
        %1461 = vst.msk [vmem:[#allocation3 + $0xd0] sm:$0x1] %vm1436, %v1412
        %1462 = vst.msk [vmem:[#allocation3 + $0xd8] sm:$0xf] %vm970, %v1413
        %1463 = vst.msk [vmem:[#allocation3 + $0xe0] sm:$0xf] %vm970, %v1414
        %1464 = vst.msk [vmem:[#allocation3 + $0xe8] sm:$0x1] %vm1436, %v1415
        %1465 = vst.msk [vmem:[#allocation3 + $0xf0] sm:$0xf] %vm970, %v1416
        %1466 = vst.msk [vmem:[#allocation3 + $0xf8] sm:$0xf] %vm970, %v1417
        %1467 = vst.msk [vmem:[#allocation3 + $0x100] sm:$0x1] %vm1436, %v1418
        %1468 = vst.msk [vmem:[#allocation3 + $0x108] sm:$0xf] %vm970, %v1419
        %1469 = vst.msk [vmem:[#allocation3 + $0x110] sm:$0xf] %vm970, %v1420
        %1470 = vst.msk [vmem:[#allocation3 + $0x118] sm:$0x1] %vm1436, %v1421
        %1471 = vst.msk [vmem:[#allocation3 + $0x120] sm:$0xf] %vm970, %v1422
        %1472 = vst.msk [vmem:[#allocation3 + $0x128] sm:$0xf] %vm970, %v1423
        %1473 = vst.msk [vmem:[#allocation3 + $0x130] sm:$0x1] %vm1436, %v1424
        %1474 = vst.msk [vmem:[#allocation3 + $0x138] sm:$0xf] %vm970, %v1425
        %1475 = vst.msk [vmem:[#allocation3 + $0x140] sm:$0xf] %vm970, %v1426
        %1476 = vst.msk [vmem:[#allocation3 + $0x148] sm:$0x1] %vm1436, %v1427
        %1477 = vst.msk [vmem:[#allocation3 + $0x150] sm:$0xf] %vm970, %v1428
        %1478 = vst.msk [vmem:[#allocation3 + $0x158] sm:$0xf] %vm970, %v1429
        %1479 = vst.msk [vmem:[#allocation3 + $0x160] sm:$0x1] %vm1436, %v1430
        %1480 = vst.msk [vmem:[#allocation3 + $0x168] sm:$0xf] %vm970, %v1431
        %1481 = vst.msk [vmem:[#allocation3 + $0x170] sm:$0xf] %vm970, %v1432
        %1482 = vst.msk [vmem:[#allocation3 + $0x178] sm:$0x1] %vm1436, %v1433
        %v1483 = vld [vmem:[%s963] sm:$0xf]
        %v1484 = vld [vmem:[%s963 + $0x4] sm:$0xf]
        %v1485 = vld [vmem:[%s963 + $0x8] sm:$0x1]
        %v1486 = vld [vmem:[%s963 + $0xc] sm:$0xf]
        %v1487 = vld [vmem:[%s963 + $0x10] sm:$0xf]
        %v1488 = vld [vmem:[%s963 + $0x14] sm:$0x1]
        %v1489 = vld [vmem:[%s963 + $0x18] sm:$0xf]
        %v1490 = vld [vmem:[%s963 + $0x1c] sm:$0xf]
        %v1491 = vld [vmem:[%s963 + $0x20] sm:$0x1]
        %v1492 = vld [vmem:[%s963 + $0x24] sm:$0xf]
        %v1493 = vld [vmem:[%s963 + $0x28] sm:$0xf]
        %v1494 = vld [vmem:[%s963 + $0x2c] sm:$0x1]
        %v1495 = vld [vmem:[%s963 + $0x30] sm:$0xf]
        %v1496 = vld [vmem:[%s963 + $0x34] sm:$0xf]
        %v1497 = vld [vmem:[%s963 + $0x38] sm:$0x1]
        %v1498 = vld [vmem:[%s963 + $0x3c] sm:$0xf]
        %v1499 = vld [vmem:[%s963 + $0x40] sm:$0xf]
        %v1500 = vld [vmem:[%s963 + $0x44] sm:$0x1]
        %v1501 = vld [vmem:[%s963 + $0x48] sm:$0xf]
        %v1502 = vld [vmem:[%s963 + $0x4c] sm:$0xf]
        %v1503 = vld [vmem:[%s963 + $0x50] sm:$0x1]
        %v1504 = vld [vmem:[%s963 + $0x54] sm:$0xf]
        %v1505 = vld [vmem:[%s963 + $0x58] sm:$0xf]
        %v1506 = vld [vmem:[%s963 + $0x5c] sm:$0x1]
        %v1507 = vld [vmem:[%s963 + $0x60] sm:$0xf]
        %v1508 = vld [vmem:[%s963 + $0x64] sm:$0xf]
        %v1509 = vld [vmem:[%s963 + $0x68] sm:$0x1]
        %v1510 = vld [vmem:[%s963 + $0x6c] sm:$0xf]
        %v1511 = vld [vmem:[%s963 + $0x70] sm:$0xf]
        %v1512 = vld [vmem:[%s963 + $0x74] sm:$0x1]
        %v1513 = vld [vmem:[%s963 + $0x78] sm:$0xf]
        %v1514 = vld [vmem:[%s963 + $0x7c] sm:$0xf]
        %v1515 = vld [vmem:[%s963 + $0x80] sm:$0x1]
        %v1516 = vld [vmem:[%s963 + $0x84] sm:$0xf]
        %v1517 = vld [vmem:[%s963 + $0x88] sm:$0xf]
        %v1518 = vld [vmem:[%s963 + $0x8c] sm:$0x1]
        %v1519 = vld [vmem:[%s963 + $0x90] sm:$0xf]
        %v1520 = vld [vmem:[%s963 + $0x94] sm:$0xf]
        %v1521 = vld [vmem:[%s963 + $0x98] sm:$0x1]
        %v1522 = vld [vmem:[%s963 + $0x9c] sm:$0xf]
        %v1523 = vld [vmem:[%s963 + $0xa0] sm:$0xf]
        %v1524 = vld [vmem:[%s963 + $0xa4] sm:$0x1]
        %v1525 = vld [vmem:[%s963 + $0xa8] sm:$0xf]
        %v1526 = vld [vmem:[%s963 + $0xac] sm:$0xf]
        %v1527 = vld [vmem:[%s963 + $0xb0] sm:$0x1]
        %v1528 = vld [vmem:[%s963 + $0xb4] sm:$0xf]
        %v1529 = vld [vmem:[%s963 + $0xb8] sm:$0xf]
        %v1530 = vld [vmem:[%s963 + $0xbc] sm:$0x1]
        %1579 = vrot.lane.b32.xlu0 %v1483, 64
        %v1580 = vpop.permute.xlu0 %1579
        %1581 = vrot.lane.b32.xlu0 %v1484, 64
        %v1582 = vpop.permute.xlu0 %1581
        %1583 = vrot.lane.b32.xlu0 %v1485, 64
        %v1584 = vpop.permute.xlu0 %1583
        %1585 = vrot.lane.b32.xlu0 %v1486, 64
        %v1586 = vpop.permute.xlu0 %1585
        %1587 = vrot.lane.b32.xlu0 %v1487, 64
        %v1588 = vpop.permute.xlu0 %1587
        %1589 = vrot.lane.b32.xlu0 %v1488, 64
        %v1590 = vpop.permute.xlu0 %1589
        %1591 = vrot.lane.b32.xlu0 %v1489, 64
        %v1592 = vpop.permute.xlu0 %1591
        %1593 = vrot.lane.b32.xlu0 %v1490, 64
        %v1594 = vpop.permute.xlu0 %1593
        %1595 = vrot.lane.b32.xlu0 %v1491, 64
        %v1596 = vpop.permute.xlu0 %1595
        %1597 = vrot.lane.b32.xlu0 %v1492, 64
        %v1598 = vpop.permute.xlu0 %1597
        %1599 = vrot.lane.b32.xlu0 %v1493, 64
        %v1600 = vpop.permute.xlu0 %1599
        %1601 = vrot.lane.b32.xlu0 %v1494, 64
        %v1602 = vpop.permute.xlu0 %1601
        %1603 = vrot.lane.b32.xlu0 %v1495, 64
        %v1604 = vpop.permute.xlu0 %1603
        %1605 = vrot.lane.b32.xlu0 %v1496, 64
        %v1606 = vpop.permute.xlu0 %1605
        %1607 = vrot.lane.b32.xlu0 %v1497, 64
        %v1608 = vpop.permute.xlu0 %1607
        %1609 = vrot.lane.b32.xlu0 %v1498, 64
        %v1610 = vpop.permute.xlu0 %1609
        %1611 = vrot.lane.b32.xlu0 %v1499, 64
        %v1612 = vpop.permute.xlu0 %1611
        %1613 = vrot.lane.b32.xlu0 %v1500, 64
        %v1614 = vpop.permute.xlu0 %1613
        %1615 = vrot.lane.b32.xlu0 %v1501, 64
        %v1616 = vpop.permute.xlu0 %1615
        %1617 = vrot.lane.b32.xlu0 %v1502, 64
        %v1618 = vpop.permute.xlu0 %1617
        %1619 = vrot.lane.b32.xlu0 %v1503, 64
        %v1620 = vpop.permute.xlu0 %1619
        %1621 = vrot.lane.b32.xlu0 %v1504, 64
        %v1622 = vpop.permute.xlu0 %1621
        %1623 = vrot.lane.b32.xlu0 %v1505, 64
        %v1624 = vpop.permute.xlu0 %1623
        %1625 = vrot.lane.b32.xlu0 %v1506, 64
        %v1626 = vpop.permute.xlu0 %1625
        %1627 = vrot.lane.b32.xlu0 %v1507, 64
        %v1628 = vpop.permute.xlu0 %1627
        %1629 = vrot.lane.b32.xlu0 %v1508, 64
        %v1630 = vpop.permute.xlu0 %1629
        %1631 = vrot.lane.b32.xlu0 %v1509, 64
        %v1632 = vpop.permute.xlu0 %1631
        %1633 = vrot.lane.b32.xlu0 %v1510, 64
        %v1634 = vpop.permute.xlu0 %1633
        %1635 = vrot.lane.b32.xlu0 %v1511, 64
        %v1636 = vpop.permute.xlu0 %1635
        %1637 = vrot.lane.b32.xlu0 %v1512, 64
        %v1638 = vpop.permute.xlu0 %1637
        %1639 = vrot.lane.b32.xlu0 %v1513, 64
        %v1640 = vpop.permute.xlu0 %1639
        %1641 = vrot.lane.b32.xlu0 %v1514, 64
        %v1642 = vpop.permute.xlu0 %1641
        %1643 = vrot.lane.b32.xlu0 %v1515, 64
        %v1644 = vpop.permute.xlu0 %1643
        %1645 = vrot.lane.b32.xlu0 %v1516, 64
        %v1646 = vpop.permute.xlu0 %1645
        %1647 = vrot.lane.b32.xlu0 %v1517, 64
        %v1648 = vpop.permute.xlu0 %1647
        %1649 = vrot.lane.b32.xlu0 %v1518, 64
        %v1650 = vpop.permute.xlu0 %1649
        %1651 = vrot.lane.b32.xlu0 %v1519, 64
        %v1652 = vpop.permute.xlu0 %1651
        %1653 = vrot.lane.b32.xlu0 %v1520, 64
        %v1654 = vpop.permute.xlu0 %1653
        %1655 = vrot.lane.b32.xlu0 %v1521, 64
        %v1656 = vpop.permute.xlu0 %1655
        %1657 = vrot.lane.b32.xlu0 %v1522, 64
        %v1658 = vpop.permute.xlu0 %1657
        %1659 = vrot.lane.b32.xlu0 %v1523, 64
        %v1660 = vpop.permute.xlu0 %1659
        %1661 = vrot.lane.b32.xlu0 %v1524, 64
        %v1662 = vpop.permute.xlu0 %1661
        %1663 = vrot.lane.b32.xlu0 %v1525, 64
        %v1664 = vpop.permute.xlu0 %1663
        %1665 = vrot.lane.b32.xlu0 %v1526, 64
        %v1666 = vpop.permute.xlu0 %1665
        %1667 = vrot.lane.b32.xlu0 %v1527, 64
        %v1668 = vpop.permute.xlu0 %1667
        %1669 = vrot.lane.b32.xlu0 %v1528, 64
        %v1670 = vpop.permute.xlu0 %1669
        %1671 = vrot.lane.b32.xlu0 %v1529, 64
        %v1672 = vpop.permute.xlu0 %1671
        %1673 = vrot.lane.b32.xlu0 %v1530, 64
        %v1674 = vpop.permute.xlu0 %1673
        %vm1723 = vcmask 1043968
        %1724 = vst.msk [vmem:[#allocation3] sm:$0xf] %vm1723, %v1580
        %1725 = vst.msk [vmem:[#allocation3 + $0x8] sm:$0xf] %vm1723, %v1582
        %vm1726 = vcmask 1040896
        %1727 = vst.msk [vmem:[#allocation3 + $0x10] sm:$0x1] %vm1726, %v1584
        %1728 = vst.msk [vmem:[#allocation3 + $0x18] sm:$0xf] %vm1723, %v1586
        %1729 = vst.msk [vmem:[#allocation3 + $0x20] sm:$0xf] %vm1723, %v1588
        %1730 = vst.msk [vmem:[#allocation3 + $0x28] sm:$0x1] %vm1726, %v1590
        %1731 = vst.msk [vmem:[#allocation3 + $0x30] sm:$0xf] %vm1723, %v1592
        %1732 = vst.msk [vmem:[#allocation3 + $0x38] sm:$0xf] %vm1723, %v1594
        %1733 = vst.msk [vmem:[#allocation3 + $0x40] sm:$0x1] %vm1726, %v1596
        %1734 = vst.msk [vmem:[#allocation3 + $0x48] sm:$0xf] %vm1723, %v1598
        %1735 = vst.msk [vmem:[#allocation3 + $0x50] sm:$0xf] %vm1723, %v1600
        %1736 = vst.msk [vmem:[#allocation3 + $0x58] sm:$0x1] %vm1726, %v1602
        %1737 = vst.msk [vmem:[#allocation3 + $0x60] sm:$0xf] %vm1723, %v1604
        %1738 = vst.msk [vmem:[#allocation3 + $0x68] sm:$0xf] %vm1723, %v1606
        %1739 = vst.msk [vmem:[#allocation3 + $0x70] sm:$0x1] %vm1726, %v1608
        %1740 = vst.msk [vmem:[#allocation3 + $0x78] sm:$0xf] %vm1723, %v1610
        %1741 = vst.msk [vmem:[#allocation3 + $0x80] sm:$0xf] %vm1723, %v1612
        %1742 = vst.msk [vmem:[#allocation3 + $0x88] sm:$0x1] %vm1726, %v1614
        %1743 = vst.msk [vmem:[#allocation3 + $0x90] sm:$0xf] %vm1723, %v1616
        %1744 = vst.msk [vmem:[#allocation3 + $0x98] sm:$0xf] %vm1723, %v1618
        %1745 = vst.msk [vmem:[#allocation3 + $0xa0] sm:$0x1] %vm1726, %v1620
        %1746 = vst.msk [vmem:[#allocation3 + $0xa8] sm:$0xf] %vm1723, %v1622
        %1747 = vst.msk [vmem:[#allocation3 + $0xb0] sm:$0xf] %vm1723, %v1624
        %1748 = vst.msk [vmem:[#allocation3 + $0xb8] sm:$0x1] %vm1726, %v1626
        %1749 = vst.msk [vmem:[#allocation3 + $0xc0] sm:$0xf] %vm1723, %v1628
        %1750 = vst.msk [vmem:[#allocation3 + $0xc8] sm:$0xf] %vm1723, %v1630
        %1751 = vst.msk [vmem:[#allocation3 + $0xd0] sm:$0x1] %vm1726, %v1632
        %1752 = vst.msk [vmem:[#allocation3 + $0xd8] sm:$0xf] %vm1723, %v1634
        %1753 = vst.msk [vmem:[#allocation3 + $0xe0] sm:$0xf] %vm1723, %v1636
        %1754 = vst.msk [vmem:[#allocation3 + $0xe8] sm:$0x1] %vm1726, %v1638
        %1755 = vst.msk [vmem:[#allocation3 + $0xf0] sm:$0xf] %vm1723, %v1640
        %1756 = vst.msk [vmem:[#allocation3 + $0xf8] sm:$0xf] %vm1723, %v1642
        %1757 = vst.msk [vmem:[#allocation3 + $0x100] sm:$0x1] %vm1726, %v1644
        %1758 = vst.msk [vmem:[#allocation3 + $0x108] sm:$0xf] %vm1723, %v1646
        %1759 = vst.msk [vmem:[#allocation3 + $0x110] sm:$0xf] %vm1723, %v1648
        %1760 = vst.msk [vmem:[#allocation3 + $0x118] sm:$0x1] %vm1726, %v1650
        %1761 = vst.msk [vmem:[#allocation3 + $0x120] sm:$0xf] %vm1723, %v1652
        %1762 = vst.msk [vmem:[#allocation3 + $0x128] sm:$0xf] %vm1723, %v1654
        %1763 = vst.msk [vmem:[#allocation3 + $0x130] sm:$0x1] %vm1726, %v1656
        %1764 = vst.msk [vmem:[#allocation3 + $0x138] sm:$0xf] %vm1723, %v1658
        %1765 = vst.msk [vmem:[#allocation3 + $0x140] sm:$0xf] %vm1723, %v1660
        %1766 = vst.msk [vmem:[#allocation3 + $0x148] sm:$0x1] %vm1726, %v1662
        %1767 = vst.msk [vmem:[#allocation3 + $0x150] sm:$0xf] %vm1723, %v1664
        %1768 = vst.msk [vmem:[#allocation3 + $0x158] sm:$0xf] %vm1723, %v1666
        %1769 = vst.msk [vmem:[#allocation3 + $0x160] sm:$0x1] %vm1726, %v1668
        %1770 = vst.msk [vmem:[#allocation3 + $0x168] sm:$0xf] %vm1723, %v1670
        %1771 = vst.msk [vmem:[#allocation3 + $0x170] sm:$0xf] %vm1723, %v1672
        %1772 = vst.msk [vmem:[#allocation3 + $0x178] sm:$0x1] %vm1726, %v1674
        %s1773 = scalar_lea.vmem [#allocation2], 24
        %v1774 = vld [vmem:[%s1773] sm:$0xf]
        %v1775 = vld [vmem:[%s1773 + $0x4] sm:$0xf]
        %v1776 = vld [vmem:[%s1773 + $0x8] sm:$0x1]
        %v1777 = vld [vmem:[%s1773 + $0xc] sm:$0xf]
        %v1778 = vld [vmem:[%s1773 + $0x10] sm:$0xf]
        %v1779 = vld [vmem:[%s1773 + $0x14] sm:$0x1]
        %v1780 = vld [vmem:[%s1773 + $0x18] sm:$0xf]
        %v1781 = vld [vmem:[%s1773 + $0x1c] sm:$0xf]
        %v1782 = vld [vmem:[%s1773 + $0x20] sm:$0x1]
        %v1783 = vld [vmem:[%s1773 + $0x24] sm:$0xf]
        %v1784 = vld [vmem:[%s1773 + $0x28] sm:$0xf]
        %v1785 = vld [vmem:[%s1773 + $0x2c] sm:$0x1]
        %v1786 = vld [vmem:[%s1773 + $0x30] sm:$0xf]
        %v1787 = vld [vmem:[%s1773 + $0x34] sm:$0xf]
        %v1788 = vld [vmem:[%s1773 + $0x38] sm:$0x1]
        %v1789 = vld [vmem:[%s1773 + $0x3c] sm:$0xf]
        %v1790 = vld [vmem:[%s1773 + $0x40] sm:$0xf]
        %v1791 = vld [vmem:[%s1773 + $0x44] sm:$0x1]
        %v1792 = vld [vmem:[%s1773 + $0x48] sm:$0xf]
        %v1793 = vld [vmem:[%s1773 + $0x4c] sm:$0xf]
        %v1794 = vld [vmem:[%s1773 + $0x50] sm:$0x1]
        %v1795 = vld [vmem:[%s1773 + $0x54] sm:$0xf]
        %v1796 = vld [vmem:[%s1773 + $0x58] sm:$0xf]
        %v1797 = vld [vmem:[%s1773 + $0x5c] sm:$0x1]
        %v1798 = vld [vmem:[%s1773 + $0x60] sm:$0xf]
        %v1799 = vld [vmem:[%s1773 + $0x64] sm:$0xf]
        %v1800 = vld [vmem:[%s1773 + $0x68] sm:$0x1]
        %v1801 = vld [vmem:[%s1773 + $0x6c] sm:$0xf]
        %v1802 = vld [vmem:[%s1773 + $0x70] sm:$0xf]
        %v1803 = vld [vmem:[%s1773 + $0x74] sm:$0x1]
        %v1804 = vld [vmem:[%s1773 + $0x78] sm:$0xf]
        %v1805 = vld [vmem:[%s1773 + $0x7c] sm:$0xf]
        %v1806 = vld [vmem:[%s1773 + $0x80] sm:$0x1]
        %v1807 = vld [vmem:[%s1773 + $0x84] sm:$0xf]
        %v1808 = vld [vmem:[%s1773 + $0x88] sm:$0xf]
        %v1809 = vld [vmem:[%s1773 + $0x8c] sm:$0x1]
        %v1810 = vld [vmem:[%s1773 + $0x90] sm:$0xf]
        %v1811 = vld [vmem:[%s1773 + $0x94] sm:$0xf]
        %v1812 = vld [vmem:[%s1773 + $0x98] sm:$0x1]
        %v1813 = vld [vmem:[%s1773 + $0x9c] sm:$0xf]
        %v1814 = vld [vmem:[%s1773 + $0xa0] sm:$0xf]
        %v1815 = vld [vmem:[%s1773 + $0xa4] sm:$0x1]
        %v1816 = vld [vmem:[%s1773 + $0xa8] sm:$0xf]
        %v1817 = vld [vmem:[%s1773 + $0xac] sm:$0xf]
        %v1818 = vld [vmem:[%s1773 + $0xb0] sm:$0x1]
        %v1819 = vld [vmem:[%s1773 + $0xb4] sm:$0xf]
        %v1820 = vld [vmem:[%s1773 + $0xb8] sm:$0xf]
        %v1821 = vld [vmem:[%s1773 + $0xbc] sm:$0x1]
        %1822 = vst.msk [vmem:[#allocation3 + $0x4] sm:$0xf] %vm970, %v1774
        %1823 = vst.msk [vmem:[#allocation3 + $0xc] sm:$0xf] %vm970, %v1775
        %1824 = vst.msk [vmem:[#allocation3 + $0x14] sm:$0x1] %vm1436, %v1776
        %1825 = vst.msk [vmem:[#allocation3 + $0x1c] sm:$0xf] %vm970, %v1777
        %1826 = vst.msk [vmem:[#allocation3 + $0x24] sm:$0xf] %vm970, %v1778
        %1827 = vst.msk [vmem:[#allocation3 + $0x2c] sm:$0x1] %vm1436, %v1779
        %1828 = vst.msk [vmem:[#allocation3 + $0x34] sm:$0xf] %vm970, %v1780
        %1829 = vst.msk [vmem:[#allocation3 + $0x3c] sm:$0xf] %vm970, %v1781
        %1830 = vst.msk [vmem:[#allocation3 + $0x44] sm:$0x1] %vm1436, %v1782
        %1831 = vst.msk [vmem:[#allocation3 + $0x4c] sm:$0xf] %vm970, %v1783
        %1832 = vst.msk [vmem:[#allocation3 + $0x54] sm:$0xf] %vm970, %v1784
        %1833 = vst.msk [vmem:[#allocation3 + $0x5c] sm:$0x1] %vm1436, %v1785
        %1834 = vst.msk [vmem:[#allocation3 + $0x64] sm:$0xf] %vm970, %v1786
        %1835 = vst.msk [vmem:[#allocation3 + $0x6c] sm:$0xf] %vm970, %v1787
        %1836 = vst.msk [vmem:[#allocation3 + $0x74] sm:$0x1] %vm1436, %v1788
        %1837 = vst.msk [vmem:[#allocation3 + $0x7c] sm:$0xf] %vm970, %v1789
        %1838 = vst.msk [vmem:[#allocation3 + $0x84] sm:$0xf] %vm970, %v1790
        %1839 = vst.msk [vmem:[#allocation3 + $0x8c] sm:$0x1] %vm1436, %v1791
        %1840 = vst.msk [vmem:[#allocation3 + $0x94] sm:$0xf] %vm970, %v1792
        %1841 = vst.msk [vmem:[#allocation3 + $0x9c] sm:$0xf] %vm970, %v1793
        %1842 = vst.msk [vmem:[#allocation3 + $0xa4] sm:$0x1] %vm1436, %v1794
        %1843 = vst.msk [vmem:[#allocation3 + $0xac] sm:$0xf] %vm970, %v1795
        %1844 = vst.msk [vmem:[#allocation3 + $0xb4] sm:$0xf] %vm970, %v1796
        %1845 = vst.msk [vmem:[#allocation3 + $0xbc] sm:$0x1] %vm1436, %v1797
        %1846 = vst.msk [vmem:[#allocation3 + $0xc4] sm:$0xf] %vm970, %v1798
        %1847 = vst.msk [vmem:[#allocation3 + $0xcc] sm:$0xf] %vm970, %v1799
        %1848 = vst.msk [vmem:[#allocation3 + $0xd4] sm:$0x1] %vm1436, %v1800
        %1849 = vst.msk [vmem:[#allocation3 + $0xdc] sm:$0xf] %vm970, %v1801
        %1850 = vst.msk [vmem:[#allocation3 + $0xe4] sm:$0xf] %vm970, %v1802
        %1851 = vst.msk [vmem:[#allocation3 + $0xec] sm:$0x1] %vm1436, %v1803
        %1852 = vst.msk [vmem:[#allocation3 + $0xf4] sm:$0xf] %vm970, %v1804
        %1853 = vst.msk [vmem:[#allocation3 + $0xfc] sm:$0xf] %vm970, %v1805
        %1854 = vst.msk [vmem:[#allocation3 + $0x104] sm:$0x1] %vm1436, %v1806
        %1855 = vst.msk [vmem:[#allocation3 + $0x10c] sm:$0xf] %vm970, %v1807
        %1856 = vst.msk [vmem:[#allocation3 + $0x114] sm:$0xf] %vm970, %v1808
        %1857 = vst.msk [vmem:[#allocation3 + $0x11c] sm:$0x1] %vm1436, %v1809
        %1858 = vst.msk [vmem:[#allocation3 + $0x124] sm:$0xf] %vm970, %v1810
        %1859 = vst.msk [vmem:[#allocation3 + $0x12c] sm:$0xf] %vm970, %v1811
        %1860 = vst.msk [vmem:[#allocation3 + $0x134] sm:$0x1] %vm1436, %v1812
        %1861 = vst.msk [vmem:[#allocation3 + $0x13c] sm:$0xf] %vm970, %v1813
        %1862 = vst.msk [vmem:[#allocation3 + $0x144] sm:$0xf] %vm970, %v1814
        %1863 = vst.msk [vmem:[#allocation3 + $0x14c] sm:$0x1] %vm1436, %v1815
        %1864 = vst.msk [vmem:[#allocation3 + $0x154] sm:$0xf] %vm970, %v1816
        %1865 = vst.msk [vmem:[#allocation3 + $0x15c] sm:$0xf] %vm970, %v1817
        %1866 = vst.msk [vmem:[#allocation3 + $0x164] sm:$0x1] %vm1436, %v1818
        %1867 = vst.msk [vmem:[#allocation3 + $0x16c] sm:$0xf] %vm970, %v1819
        %1868 = vst.msk [vmem:[#allocation3 + $0x174] sm:$0xf] %vm970, %v1820
        %1869 = vst.msk [vmem:[#allocation3 + $0x17c] sm:$0x1] %vm1436, %v1821
        %v1870 = vld [vmem:[#allocation3] sm:$0xff]
        %v1871 = vld [vmem:[#allocation3 + $0x8] sm:$0xff]
        %v1872 = vld [vmem:[#allocation3 + $0x18] sm:$0xff]
        %v1873 = vld [vmem:[#allocation3 + $0x20] sm:$0xff]
        %v1874 = vld [vmem:[#allocation3 + $0x30] sm:$0xff]
        %v1875 = vld [vmem:[#allocation3 + $0x38] sm:$0xff]
        %v1876 = vld [vmem:[#allocation3 + $0x48] sm:$0xff]
        %v1877 = vld [vmem:[#allocation3 + $0x50] sm:$0xff]
        %v1878 = vld [vmem:[#allocation3 + $0x60] sm:$0xff]
        %v1879 = vld [vmem:[#allocation3 + $0x68] sm:$0xff]
        %v1880 = vld [vmem:[#allocation3 + $0x78] sm:$0xff]
        %v1881 = vld [vmem:[#allocation3 + $0x80] sm:$0xff]
        %v1882 = vld [vmem:[#allocation3 + $0x90] sm:$0xff]
        %v1883 = vld [vmem:[#allocation3 + $0x98] sm:$0xff]
        %v1884 = vld [vmem:[#allocation3 + $0xa8] sm:$0xff]
        %v1885 = vld [vmem:[#allocation3 + $0xb0] sm:$0xff]
        %v1886 = vld [vmem:[#allocation3 + $0xc0] sm:$0xff]
        %v1887 = vld [vmem:[#allocation3 + $0xc8] sm:$0xff]
        %v1888 = vld [vmem:[#allocation3 + $0xd8] sm:$0xff]
        %v1889 = vld [vmem:[#allocation3 + $0xe0] sm:$0xff]
        %v1890 = vld [vmem:[#allocation3 + $0xf0] sm:$0xff]
        %v1891 = vld [vmem:[#allocation3 + $0xf8] sm:$0xff]
        %v1892 = vld [vmem:[#allocation3 + $0x108] sm:$0xff]
        %v1893 = vld [vmem:[#allocation3 + $0x110] sm:$0xff]
        %v1894 = vld [vmem:[#allocation3 + $0x120] sm:$0xff]
        %v1895 = vld [vmem:[#allocation3 + $0x128] sm:$0xff]
        %v1896 = vld [vmem:[#allocation3 + $0x138] sm:$0xff]
        %v1897 = vld [vmem:[#allocation3 + $0x140] sm:$0xff]
        %v1898 = vld [vmem:[#allocation3 + $0x150] sm:$0xff]
        %v1899 = vld [vmem:[#allocation3 + $0x158] sm:$0xff]
        %v1900 = vld [vmem:[#allocation3 + $0x168] sm:$0xff]
        %v1901 = vld [vmem:[#allocation3 + $0x170] sm:$0xff]
        %v1902 = vld [vmem:[#allocation3 + $0x10] sm:$0x11]
        %v1903 = vld [vmem:[#allocation3 + $0x28] sm:$0x11]
        %v1904 = vld [vmem:[#allocation3 + $0x40] sm:$0x11]
        %v1905 = vld [vmem:[#allocation3 + $0x58] sm:$0x11]
        %v1906 = vld [vmem:[#allocation3 + $0x70] sm:$0x11]
        %v1907 = vld [vmem:[#allocation3 + $0x88] sm:$0x11]
        %v1908 = vld [vmem:[#allocation3 + $0xa0] sm:$0x11]
        %v1909 = vld [vmem:[#allocation3 + $0xb8] sm:$0x11]
        %v1910 = vld [vmem:[#allocation3 + $0xd0] sm:$0x11]
        %v1911 = vld [vmem:[#allocation3 + $0xe8] sm:$0x11]
        %v1912 = vld [vmem:[#allocation3 + $0x100] sm:$0x11]
        %v1913 = vld [vmem:[#allocation3 + $0x118] sm:$0x11]
        %v1914 = vld [vmem:[#allocation3 + $0x130] sm:$0x11]
        %v1915 = vld [vmem:[#allocation3 + $0x148] sm:$0x11]
        %v1916 = vld [vmem:[#allocation3 + $0x160] sm:$0x11]
        %v1917 = vld [vmem:[#allocation3 + $0x178] sm:$0x11]
        %vm1918 = vsmask.f32 3328
        %vm1919 = vsmask.f32 7440
        %vm1920 = vmor %vm1918, %vm1919
        %v1922 = vshrl.u32 %v1870, 16
        %v1924 = vrot.slane %v1922, 4
        %v1925 = vshll.u32 %v1870, 16
        %v1927 = vrot.slane %v1925, 5
        %v1928 = vor.u32 %v1924, %v1927
        %v1929 = vrot.slane %v1928, 4
        %v1931 = vshll.u32 %v1871, 16
        %v1933 = vrot.slane %v1931, 5
        %v1934 = vsel %vm1920, %v1929, %v1933
        %v1935 = vshrl.u32 %v1871, 16
        %v1937 = vrot.slane %v1935, 4
        %v1938 = vor.u32 %v1937, %v1933
        %v1939 = vrot.slane %v1938, 4
        %v1941 = vshll.u32 %v1902, 16
        %v1943 = vrot.slane %v1941, 5
        %v1944 = vsel %vm1920, %v1939, %v1943
        %v1946 = vshrl.u32 %v1872, 16
        %v1948 = vrot.slane %v1946, 4
        %v1949 = vshll.u32 %v1872, 16
        %v1951 = vrot.slane %v1949, 5
        %v1952 = vor.u32 %v1948, %v1951
        %v1953 = vrot.slane %v1952, 4
        %v1955 = vshll.u32 %v1873, 16
        %v1957 = vrot.slane %v1955, 5
        %v1958 = vsel %vm1920, %v1953, %v1957
        %v1959 = vshrl.u32 %v1873, 16
        %v1961 = vrot.slane %v1959, 4
        %v1962 = vor.u32 %v1961, %v1957
        %v1963 = vrot.slane %v1962, 4
        %v1965 = vshll.u32 %v1903, 16
        %v1967 = vrot.slane %v1965, 5
        %v1968 = vsel %vm1920, %v1963, %v1967
        %v1970 = vshrl.u32 %v1874, 16
        %v1972 = vrot.slane %v1970, 4
        %v1973 = vshll.u32 %v1874, 16
        %v1975 = vrot.slane %v1973, 5
        %v1976 = vor.u32 %v1972, %v1975
        %v1977 = vrot.slane %v1976, 4
        %v1979 = vshll.u32 %v1875, 16
        %v1981 = vrot.slane %v1979, 5
        %v1982 = vsel %vm1920, %v1977, %v1981
        %v1983 = vshrl.u32 %v1875, 16
        %v1985 = vrot.slane %v1983, 4
        %v1986 = vor.u32 %v1985, %v1981
        %v1987 = vrot.slane %v1986, 4
        %v1989 = vshll.u32 %v1904, 16
        %v1991 = vrot.slane %v1989, 5
        %v1992 = vsel %vm1920, %v1987, %v1991
        %v1994 = vshrl.u32 %v1876, 16
        %v1996 = vrot.slane %v1994, 4
        %v1997 = vshll.u32 %v1876, 16
        %v1999 = vrot.slane %v1997, 5
        %v2000 = vor.u32 %v1996, %v1999
        %v2001 = vrot.slane %v2000, 4
        %v2003 = vshll.u32 %v1877, 16
        %v2005 = vrot.slane %v2003, 5
        %v2006 = vsel %vm1920, %v2001, %v2005
        %v2007 = vshrl.u32 %v1877, 16
        %v2009 = vrot.slane %v2007, 4
        %v2010 = vor.u32 %v2009, %v2005
        %v2011 = vrot.slane %v2010, 4
        %v2013 = vshll.u32 %v1905, 16
        %v2015 = vrot.slane %v2013, 5
        %v2016 = vsel %vm1920, %v2011, %v2015
        %v2018 = vshrl.u32 %v1878, 16
        %v2020 = vrot.slane %v2018, 4
        %v2021 = vshll.u32 %v1878, 16
        %v2023 = vrot.slane %v2021, 5
        %v2024 = vor.u32 %v2020, %v2023
        %v2025 = vrot.slane %v2024, 4
        %v2027 = vshll.u32 %v1879, 16
        %v2029 = vrot.slane %v2027, 5
        %v2030 = vsel %vm1920, %v2025, %v2029
        %v2031 = vshrl.u32 %v1879, 16
        %v2033 = vrot.slane %v2031, 4
        %v2034 = vor.u32 %v2033, %v2029
        %v2035 = vrot.slane %v2034, 4
        %v2037 = vshll.u32 %v1906, 16
        %v2039 = vrot.slane %v2037, 5
        %v2040 = vsel %vm1920, %v2035, %v2039
        %v2042 = vshrl.u32 %v1880, 16
        %v2044 = vrot.slane %v2042, 4
        %v2045 = vshll.u32 %v1880, 16
        %v2047 = vrot.slane %v2045, 5
        %v2048 = vor.u32 %v2044, %v2047
        %v2049 = vrot.slane %v2048, 4
        %v2051 = vshll.u32 %v1881, 16
        %v2053 = vrot.slane %v2051, 5
        %v2054 = vsel %vm1920, %v2049, %v2053
        %v2055 = vshrl.u32 %v1881, 16
        %v2057 = vrot.slane %v2055, 4
        %v2058 = vor.u32 %v2057, %v2053
        %v2059 = vrot.slane %v2058, 4
        %v2061 = vshll.u32 %v1907, 16
        %v2063 = vrot.slane %v2061, 5
        %v2064 = vsel %vm1920, %v2059, %v2063
        %v2066 = vshrl.u32 %v1882, 16
        %v2068 = vrot.slane %v2066, 4
        %v2069 = vshll.u32 %v1882, 16
        %v2071 = vrot.slane %v2069, 5
        %v2072 = vor.u32 %v2068, %v2071
        %v2073 = vrot.slane %v2072, 4
        %v2075 = vshll.u32 %v1883, 16
        %v2077 = vrot.slane %v2075, 5
        %v2078 = vsel %vm1920, %v2073, %v2077
        %v2079 = vshrl.u32 %v1883, 16
        %v2081 = vrot.slane %v2079, 4
        %v2082 = vor.u32 %v2081, %v2077
        %v2083 = vrot.slane %v2082, 4
        %v2085 = vshll.u32 %v1908, 16
        %v2087 = vrot.slane %v2085, 5
        %v2088 = vsel %vm1920, %v2083, %v2087
        %v2090 = vshrl.u32 %v1884, 16
        %v2092 = vrot.slane %v2090, 4
        %v2093 = vshll.u32 %v1884, 16
        %v2095 = vrot.slane %v2093, 5
        %v2096 = vor.u32 %v2092, %v2095
        %v2097 = vrot.slane %v2096, 4
        %v2099 = vshll.u32 %v1885, 16
        %v2101 = vrot.slane %v2099, 5
        %v2102 = vsel %vm1920, %v2097, %v2101
        %v2103 = vshrl.u32 %v1885, 16
        %v2105 = vrot.slane %v2103, 4
        %v2106 = vor.u32 %v2105, %v2101
        %v2107 = vrot.slane %v2106, 4
        %v2109 = vshll.u32 %v1909, 16
        %v2111 = vrot.slane %v2109, 5
        %v2112 = vsel %vm1920, %v2107, %v2111
        %v2114 = vshrl.u32 %v1886, 16
        %v2116 = vrot.slane %v2114, 4
        %v2117 = vshll.u32 %v1886, 16
        %v2119 = vrot.slane %v2117, 5
        %v2120 = vor.u32 %v2116, %v2119
        %v2121 = vrot.slane %v2120, 4
        %v2123 = vshll.u32 %v1887, 16
        %v2125 = vrot.slane %v2123, 5
        %v2126 = vsel %vm1920, %v2121, %v2125
        %v2127 = vshrl.u32 %v1887, 16
        %v2129 = vrot.slane %v2127, 4
        %v2130 = vor.u32 %v2129, %v2125
        %v2131 = vrot.slane %v2130, 4
        %v2133 = vshll.u32 %v1910, 16
        %v2135 = vrot.slane %v2133, 5
        %v2136 = vsel %vm1920, %v2131, %v2135
        %v2138 = vshrl.u32 %v1888, 16
        %v2140 = vrot.slane %v2138, 4
        %v2141 = vshll.u32 %v1888, 16
        %v2143 = vrot.slane %v2141, 5
        %v2144 = vor.u32 %v2140, %v2143
        %v2145 = vrot.slane %v2144, 4
        %v2147 = vshll.u32 %v1889, 16
        %v2149 = vrot.slane %v2147, 5
        %v2150 = vsel %vm1920, %v2145, %v2149
        %v2151 = vshrl.u32 %v1889, 16
        %v2153 = vrot.slane %v2151, 4
        %v2154 = vor.u32 %v2153, %v2149
        %v2155 = vrot.slane %v2154, 4
        %v2157 = vshll.u32 %v1911, 16
        %v2159 = vrot.slane %v2157, 5
        %v2160 = vsel %vm1920, %v2155, %v2159
        %v2162 = vshrl.u32 %v1890, 16
        %v2164 = vrot.slane %v2162, 4
        %v2165 = vshll.u32 %v1890, 16
        %v2167 = vrot.slane %v2165, 5
        %v2168 = vor.u32 %v2164, %v2167
        %v2169 = vrot.slane %v2168, 4
        %v2171 = vshll.u32 %v1891, 16
        %v2173 = vrot.slane %v2171, 5
        %v2174 = vsel %vm1920, %v2169, %v2173
        %v2175 = vshrl.u32 %v1891, 16
        %v2177 = vrot.slane %v2175, 4
        %v2178 = vor.u32 %v2177, %v2173
        %v2179 = vrot.slane %v2178, 4
        %v2181 = vshll.u32 %v1912, 16
        %v2183 = vrot.slane %v2181, 5
        %v2184 = vsel %vm1920, %v2179, %v2183
        %v2186 = vshrl.u32 %v1892, 16
        %v2188 = vrot.slane %v2186, 4
        %v2189 = vshll.u32 %v1892, 16
        %v2191 = vrot.slane %v2189, 5
        %v2192 = vor.u32 %v2188, %v2191
        %v2193 = vrot.slane %v2192, 4
        %v2195 = vshll.u32 %v1893, 16
        %v2197 = vrot.slane %v2195, 5
        %v2198 = vsel %vm1920, %v2193, %v2197
        %v2199 = vshrl.u32 %v1893, 16
        %v2201 = vrot.slane %v2199, 4
        %v2202 = vor.u32 %v2201, %v2197
        %v2203 = vrot.slane %v2202, 4
        %v2205 = vshll.u32 %v1913, 16
        %v2207 = vrot.slane %v2205, 5
        %v2208 = vsel %vm1920, %v2203, %v2207
        %v2210 = vshrl.u32 %v1894, 16
        %v2212 = vrot.slane %v2210, 4
        %v2213 = vshll.u32 %v1894, 16
        %v2215 = vrot.slane %v2213, 5
        %v2216 = vor.u32 %v2212, %v2215
        %v2217 = vrot.slane %v2216, 4
        %v2219 = vshll.u32 %v1895, 16
        %v2221 = vrot.slane %v2219, 5
        %v2222 = vsel %vm1920, %v2217, %v2221
        %v2223 = vshrl.u32 %v1895, 16
        %v2225 = vrot.slane %v2223, 4
        %v2226 = vor.u32 %v2225, %v2221
        %v2227 = vrot.slane %v2226, 4
        %v2229 = vshll.u32 %v1914, 16
        %v2231 = vrot.slane %v2229, 5
        %v2232 = vsel %vm1920, %v2227, %v2231
        %v2234 = vshrl.u32 %v1896, 16
        %v2236 = vrot.slane %v2234, 4
        %v2237 = vshll.u32 %v1896, 16
        %v2239 = vrot.slane %v2237, 5
        %v2240 = vor.u32 %v2236, %v2239
        %v2241 = vrot.slane %v2240, 4
        %v2243 = vshll.u32 %v1897, 16
        %v2245 = vrot.slane %v2243, 5
        %v2246 = vsel %vm1920, %v2241, %v2245
        %v2247 = vshrl.u32 %v1897, 16
        %v2249 = vrot.slane %v2247, 4
        %v2250 = vor.u32 %v2249, %v2245
        %v2251 = vrot.slane %v2250, 4
        %v2253 = vshll.u32 %v1915, 16
        %v2255 = vrot.slane %v2253, 5
        %v2256 = vsel %vm1920, %v2251, %v2255
        %v2258 = vshrl.u32 %v1898, 16
        %v2260 = vrot.slane %v2258, 4
        %v2261 = vshll.u32 %v1898, 16
        %v2263 = vrot.slane %v2261, 5
        %v2264 = vor.u32 %v2260, %v2263
        %v2265 = vrot.slane %v2264, 4
        %v2267 = vshll.u32 %v1899, 16
        %v2269 = vrot.slane %v2267, 5
        %v2270 = vsel %vm1920, %v2265, %v2269
        %v2271 = vshrl.u32 %v1899, 16
        %v2273 = vrot.slane %v2271, 4
        %v2274 = vor.u32 %v2273, %v2269
        %v2275 = vrot.slane %v2274, 4
        %v2277 = vshll.u32 %v1916, 16
        %v2279 = vrot.slane %v2277, 5
        %v2280 = vsel %vm1920, %v2275, %v2279
        %v2282 = vshrl.u32 %v1900, 16
        %v2284 = vrot.slane %v2282, 4
        %v2285 = vshll.u32 %v1900, 16
        %v2287 = vrot.slane %v2285, 5
        %v2288 = vor.u32 %v2284, %v2287
        %v2289 = vrot.slane %v2288, 4
        %v2291 = vshll.u32 %v1901, 16
        %v2293 = vrot.slane %v2291, 5
        %v2294 = vsel %vm1920, %v2289, %v2293
        %v2295 = vshrl.u32 %v1901, 16
        %v2297 = vrot.slane %v2295, 4
        %v2298 = vor.u32 %v2297, %v2293
        %v2299 = vrot.slane %v2298, 4
        %v2301 = vshll.u32 %v1917, 16
        %v2303 = vrot.slane %v2301, 5
        %v2304 = vsel %vm1920, %v2299, %v2303
        %v2305 = vunpack.c.l.b16 %v1934
        %v2306 = vunpack.c.h.b16 %v1934
        %v2307 = vunpack.c.l.b16 %v1944
        %v2308 = vunpack.c.h.b16 %v1944
        %v2309 = vunpack.c.l.b16 %v1958
        %v2310 = vunpack.c.h.b16 %v1958
        %v2311 = vunpack.c.l.b16 %v1968
        %v2312 = vunpack.c.h.b16 %v1968
        %v2313 = vunpack.c.l.b16 %v1982
        %v2314 = vunpack.c.h.b16 %v1982
        %v2315 = vunpack.c.l.b16 %v1992
        %v2316 = vunpack.c.h.b16 %v1992
        %v2317 = vunpack.c.l.b16 %v2006
        %v2318 = vunpack.c.h.b16 %v2006
        %v2319 = vunpack.c.l.b16 %v2016
        %v2320 = vunpack.c.h.b16 %v2016
        %v2321 = vunpack.c.l.b16 %v2030
        %v2322 = vunpack.c.h.b16 %v2030
        %v2323 = vunpack.c.l.b16 %v2040
        %v2324 = vunpack.c.h.b16 %v2040
        %v2325 = vunpack.c.l.b16 %v2054
        %v2326 = vunpack.c.h.b16 %v2054
        %v2327 = vunpack.c.l.b16 %v2064
        %v2328 = vunpack.c.h.b16 %v2064
        %v2329 = vunpack.c.l.b16 %v2078
        %v2330 = vunpack.c.h.b16 %v2078
        %v2331 = vunpack.c.l.b16 %v2088
        %v2332 = vunpack.c.h.b16 %v2088
        %v2333 = vunpack.c.l.b16 %v2102
        %v2334 = vunpack.c.h.b16 %v2102
        %v2335 = vunpack.c.l.b16 %v2112
        %v2336 = vunpack.c.h.b16 %v2112
        %v2337 = vunpack.c.l.b16 %v2126
        %v2338 = vunpack.c.h.b16 %v2126
        %v2339 = vunpack.c.l.b16 %v2136
        %v2340 = vunpack.c.h.b16 %v2136
        %v2341 = vunpack.c.l.b16 %v2150
        %v2342 = vunpack.c.h.b16 %v2150
        %v2343 = vunpack.c.l.b16 %v2160
        %v2344 = vunpack.c.h.b16 %v2160
        %v2345 = vunpack.c.l.b16 %v2174
        %v2346 = vunpack.c.h.b16 %v2174
        %v2347 = vunpack.c.l.b16 %v2184
        %v2348 = vunpack.c.h.b16 %v2184
        %v2349 = vunpack.c.l.b16 %v2198
        %v2350 = vunpack.c.h.b16 %v2198
        %v2351 = vunpack.c.l.b16 %v2208
        %v2352 = vunpack.c.h.b16 %v2208
        %v2353 = vunpack.c.l.b16 %v2222
        %v2354 = vunpack.c.h.b16 %v2222
        %v2355 = vunpack.c.l.b16 %v2232
        %v2356 = vunpack.c.h.b16 %v2232
        %v2357 = vunpack.c.l.b16 %v2246
        %v2358 = vunpack.c.h.b16 %v2246
        %v2359 = vunpack.c.l.b16 %v2256
        %v2360 = vunpack.c.h.b16 %v2256
        %v2361 = vunpack.c.l.b16 %v2270
        %v2362 = vunpack.c.h.b16 %v2270
        %v2363 = vunpack.c.l.b16 %v2280
        %v2364 = vunpack.c.h.b16 %v2280
        %v2365 = vunpack.c.l.b16 %v2294
        %v2366 = vunpack.c.h.b16 %v2294
        %v2367 = vunpack.c.l.b16 %v2304
        %v2368 = vunpack.c.h.b16 %v2304
        %v2369 = vpack.c.b16 %v2307, %v2305
        %v2370 = vpack.c.b16 %v2308, %v2306
        %v2371 = vpack.c.b16 %v2311, %v2309
        %v2372 = vpack.c.b16 %v2312, %v2310
        %v2373 = vpack.c.b16 %v2315, %v2313
        %v2374 = vpack.c.b16 %v2316, %v2314
        %v2375 = vpack.c.b16 %v2319, %v2317
        %v2376 = vpack.c.b16 %v2320, %v2318
        %v2377 = vpack.c.b16 %v2323, %v2321
        %v2378 = vpack.c.b16 %v2324, %v2322
        %v2379 = vpack.c.b16 %v2327, %v2325
        %v2380 = vpack.c.b16 %v2328, %v2326
        %v2381 = vpack.c.b16 %v2331, %v2329
        %v2382 = vpack.c.b16 %v2332, %v2330
        %v2383 = vpack.c.b16 %v2335, %v2333
        %v2384 = vpack.c.b16 %v2336, %v2334
        %v2385 = vpack.c.b16 %v2339, %v2337
        %v2386 = vpack.c.b16 %v2340, %v2338
        %v2387 = vpack.c.b16 %v2343, %v2341
        %v2388 = vpack.c.b16 %v2344, %v2342
        %v2389 = vpack.c.b16 %v2347, %v2345
        %v2390 = vpack.c.b16 %v2348, %v2346
        %v2391 = vpack.c.b16 %v2351, %v2349
        %v2392 = vpack.c.b16 %v2352, %v2350
        %v2393 = vpack.c.b16 %v2355, %v2353
        %v2394 = vpack.c.b16 %v2356, %v2354
        %v2395 = vpack.c.b16 %v2359, %v2357
        %v2396 = vpack.c.b16 %v2360, %v2358
        %v2397 = vpack.c.b16 %v2363, %v2361
        %v2398 = vpack.c.b16 %v2364, %v2362
        %v2399 = vpack.c.b16 %v2367, %v2365
        %v2400 = vpack.c.b16 %v2368, %v2366
        %v2441 = vunpack.c.l.b16 %v410
        %v2442 = vunpack.c.l.b16 %v411
        %v2443 = vunpack.c.l.b16 %v412
        %v2444 = vunpack.c.l.b16 %v413
        %v2445 = vunpack.c.l.b16 %v414
        %v2446 = vunpack.c.l.b16 %v415
        %v2447 = vunpack.c.l.b16 %v416
        %v2448 = vunpack.c.l.b16 %v417
        %v2449 = vunpack.c.l.b16 %v418
        %v2450 = vunpack.c.l.b16 %v419
        %v2451 = vunpack.c.l.b16 %v420
        %v2452 = vunpack.c.l.b16 %v421
        %v2453 = vunpack.c.l.b16 %v422
        %v2454 = vunpack.c.l.b16 %v423
        %v2455 = vunpack.c.l.b16 %v424
        %v2456 = vunpack.c.l.b16 %v425
        %v2457 = vunpack.c.l.b16 %v426
        %v2458 = vunpack.c.l.b16 %v427
        %v2459 = vunpack.c.l.b16 %v428
        %v2460 = vunpack.c.l.b16 %v429
        %v2461 = vunpack.c.l.b16 %v430
        %v2462 = vunpack.c.l.b16 %v431
        %v2463 = vunpack.c.l.b16 %v432
        %v2464 = vunpack.c.l.b16 %v433
        %v2465 = vpack.c.b16 %v2442, %v2441
        %v2466 = vpack.c.b16 %v2444, %v2443
        %v2467 = vpack.c.b16 %v2446, %v2445
        %v2468 = vpack.c.b16 %v2448, %v2447
        %v2469 = vpack.c.b16 %v2450, %v2449
        %v2470 = vpack.c.b16 %v2452, %v2451
        %v2471 = vpack.c.b16 %v2454, %v2453
        %v2472 = vpack.c.b16 %v2456, %v2455
        %v2473 = vpack.c.b16 %v2458, %v2457
        %v2474 = vpack.c.b16 %v2460, %v2459
        %v2475 = vpack.c.b16 %v2462, %v2461
        %v2476 = vpack.c.b16 %v2464, %v2463
        %vm2489 = vcmask 523264
        %v2491 = vsel %vm2489, %v2370, 0
        %v2494 = vsel %vm2489, %v2372, 0
        %v2497 = vsel %vm2489, %v2374, 0
        %v2500 = vsel %vm2489, %v2376, 0
        %v2503 = vsel %vm2489, %v2378, 0
        %v2506 = vsel %vm2489, %v2380, 0
        %v2509 = vsel %vm2489, %v2382, 0
        %v2512 = vsel %vm2489, %v2384, 0
        %v2515 = vsel %vm2489, %v2386, 0
        %v2518 = vsel %vm2489, %v2388, 0
        %v2521 = vsel %vm2489, %v2390, 0
        %v2524 = vsel %vm2489, %v2392, 0
        %v2527 = vsel %vm2489, %v2394, 0
        %v2530 = vsel %vm2489, %v2396, 0
        %v2533 = vsel %vm2489, %v2398, 0
        %v2536 = vsel %vm2489, %v2400, 0
        %2538 = vmatprep.subr.bf16.mxu0 0
        %2539 = vmatpush1.bf16.msra.mxu0 %v2472
        %2540 = vmatprep.subr.bf16.mxu0 0
        %2541 = vmatpush1.bf16.msra.mxu0 %v2471
        %2542 = vmatprep.subr.bf16.mxu0 0
        %2543 = vmatpush1.bf16.msra.mxu0 %v2470
        %2544 = vmatprep.subr.bf16.mxu0 0
        %2545 = vmatpush1.bf16.msra.mxu0 %v2469
        %2546 = vmatprep.subr.bf16.mxu0 0
        %2547 = vmatpush1.bf16.msra.mxu0 %v2468
        %2548 = vmatprep.subr.bf16.mxu0 0
        %2549 = vmatpush1.bf16.msra.mxu0 %v2467
        %2550 = vmatprep.subr.bf16.mxu0 0
        %2551 = vmatpush1.bf16.msra.mxu0 %v2466
        %2552 = vmatprep.subr.bf16.mxu0 0
        %2553 = vmatpush1.bf16.msra.mxu0 %v2465
        %2554 = vmatprep.subr.bf16.mxu0 0
        %2555 = vmatpush2.bf16.msra.mxu0 0
        %2556 = vmatprep.subr.bf16.mxu0 0
        %2557 = vmatpush2.bf16.msra.mxu0 0
        %2558 = vmatprep.subr.bf16.mxu0 0
        %2559 = vmatpush2.bf16.msra.mxu0 0
        %2560 = vmatprep.subr.bf16.mxu0 0
        %2561 = vmatpush2.bf16.msra.mxu0 0
        %2562 = vmatprep.subr.bf16.mxu0 0
        %2563 = vmatpush2.bf16.msra.mxu0 %v2476
        %2564 = vmatprep.subr.bf16.mxu0 0
        %2565 = vmatpush2.bf16.msra.mxu0 %v2475
        %2566 = vmatprep.subr.bf16.mxu0 0
        %2567 = vmatpush2.bf16.msra.mxu0 %v2474
        %2568 = vmatprep.subr.bf16.mxu0 0
        %2569 = vmatpush2.bf16.msra.mxu0 %v2473
        %2570 = vmatprep.mubr.bf16.mxu0 %v2491
        %2571 = vmatmul.mubr.bf16.gmra.mxu0 %v2369
        %v2572 = vpop.f32.mrf.mxu0
        %v2573 = vadd.f32 0.0, %v2572
        %v2574 = vpop.f32.mrf.mxu0
        %v2575 = vpop.f32.mrf.mxu0
        %v2576 = vadd.f32 0.0, %v2575
        %v2577 = vpop.f32.mrf.mxu0
        %2578 = vmatprep.mubr.bf16.mxu0 %v2494
        %2579 = vmatmul.mubr.bf16.gmra.mxu0 %v2371
        %v2580 = vpop.f32.mrf.mxu0
        %v2581 = vadd.f32 0.0, %v2580
        %v2582 = vpop.f32.mrf.mxu0
        %v2583 = vpop.f32.mrf.mxu0
        %v2584 = vadd.f32 0.0, %v2583
        %v2585 = vpop.f32.mrf.mxu0
        %2586 = vmatprep.mubr.bf16.mxu0 %v2497
        %2587 = vmatmul.mubr.bf16.gmra.mxu0 %v2373
        %v2588 = vpop.f32.mrf.mxu0
        %v2589 = vadd.f32 0.0, %v2588
        %v2590 = vpop.f32.mrf.mxu0
        %v2591 = vpop.f32.mrf.mxu0
        %v2592 = vadd.f32 0.0, %v2591
        %v2593 = vpop.f32.mrf.mxu0
        %2594 = vmatprep.mubr.bf16.mxu0 %v2500
        %2595 = vmatmul.mubr.bf16.gmra.mxu0 %v2375
        %v2596 = vpop.f32.mrf.mxu0
        %v2597 = vadd.f32 0.0, %v2596
        %v2598 = vpop.f32.mrf.mxu0
        %v2599 = vpop.f32.mrf.mxu0
        %v2600 = vadd.f32 0.0, %v2599
        %v2601 = vpop.f32.mrf.mxu0
        %2602 = vmatprep.mubr.bf16.mxu0 %v2503
        %2603 = vmatmul.mubr.bf16.gmra.mxu0 %v2377
        %v2604 = vpop.f32.mrf.mxu0
        %v2605 = vadd.f32 0.0, %v2604
        %v2606 = vpop.f32.mrf.mxu0
        %v2607 = vpop.f32.mrf.mxu0
        %v2608 = vadd.f32 0.0, %v2607
        %v2609 = vpop.f32.mrf.mxu0
        %2610 = vmatprep.mubr.bf16.mxu0 %v2506
        %2611 = vmatmul.mubr.bf16.gmra.mxu0 %v2379
        %v2612 = vpop.f32.mrf.mxu0
        %v2613 = vadd.f32 0.0, %v2612
        %v2614 = vpop.f32.mrf.mxu0
        %v2615 = vpop.f32.mrf.mxu0
        %v2616 = vadd.f32 0.0, %v2615
        %v2617 = vpop.f32.mrf.mxu0
        %2618 = vmatprep.mubr.bf16.mxu0 %v2509
        %2619 = vmatmul.mubr.bf16.gmra.mxu0 %v2381
        %v2620 = vpop.f32.mrf.mxu0
        %v2621 = vadd.f32 0.0, %v2620
        %v2622 = vpop.f32.mrf.mxu0
        %v2623 = vpop.f32.mrf.mxu0
        %v2624 = vadd.f32 0.0, %v2623
        %v2625 = vpop.f32.mrf.mxu0
        %2626 = vmatprep.mubr.bf16.mxu0 %v2512
        %2627 = vmatmul.mubr.bf16.gmra.mxu0 %v2383
        %v2628 = vpop.f32.mrf.mxu0
        %v2629 = vadd.f32 0.0, %v2628
        %v2630 = vpop.f32.mrf.mxu0
        %v2631 = vpop.f32.mrf.mxu0
        %v2632 = vadd.f32 0.0, %v2631
        %v2633 = vpop.f32.mrf.mxu0
        %2634 = vmatprep.mubr.bf16.mxu0 %v2515
        %2635 = vmatmul.mubr.bf16.gmra.mxu0 %v2385
        %v2636 = vpop.f32.mrf.mxu0
        %v2637 = vadd.f32 0.0, %v2636
        %v2638 = vpop.f32.mrf.mxu0
        %v2639 = vpop.f32.mrf.mxu0
        %v2640 = vadd.f32 0.0, %v2639
        %v2641 = vpop.f32.mrf.mxu0
        %2642 = vmatprep.mubr.bf16.mxu0 %v2518
        %2643 = vmatmul.mubr.bf16.gmra.mxu0 %v2387
        %v2644 = vpop.f32.mrf.mxu0
        %v2645 = vadd.f32 0.0, %v2644
        %v2646 = vpop.f32.mrf.mxu0
        %v2647 = vpop.f32.mrf.mxu0
        %v2648 = vadd.f32 0.0, %v2647
        %v2649 = vpop.f32.mrf.mxu0
        %2650 = vmatprep.mubr.bf16.mxu0 %v2521
        %2651 = vmatmul.mubr.bf16.gmra.mxu0 %v2389
        %v2652 = vpop.f32.mrf.mxu0
        %v2653 = vadd.f32 0.0, %v2652
        %v2654 = vpop.f32.mrf.mxu0
        %v2655 = vpop.f32.mrf.mxu0
        %v2656 = vadd.f32 0.0, %v2655
        %v2657 = vpop.f32.mrf.mxu0
        %2658 = vmatprep.mubr.bf16.mxu0 %v2524
        %2659 = vmatmul.mubr.bf16.gmra.mxu0 %v2391
        %v2660 = vpop.f32.mrf.mxu0
        %v2661 = vadd.f32 0.0, %v2660
        %v2662 = vpop.f32.mrf.mxu0
        %v2663 = vpop.f32.mrf.mxu0
        %v2664 = vadd.f32 0.0, %v2663
        %v2665 = vpop.f32.mrf.mxu0
        %2666 = vmatprep.mubr.bf16.mxu0 %v2527
        %2667 = vmatmul.mubr.bf16.gmra.mxu0 %v2393
        %v2668 = vpop.f32.mrf.mxu0
        %v2669 = vadd.f32 0.0, %v2668
        %v2670 = vpop.f32.mrf.mxu0
        %v2671 = vpop.f32.mrf.mxu0
        %v2672 = vadd.f32 0.0, %v2671
        %v2673 = vpop.f32.mrf.mxu0
        %2674 = vmatprep.mubr.bf16.mxu0 %v2530
        %2675 = vmatmul.mubr.bf16.gmra.mxu0 %v2395
        %v2676 = vpop.f32.mrf.mxu0
        %v2677 = vadd.f32 0.0, %v2676
        %v2678 = vpop.f32.mrf.mxu0
        %v2679 = vpop.f32.mrf.mxu0
        %v2680 = vadd.f32 0.0, %v2679
        %v2681 = vpop.f32.mrf.mxu0
        %2682 = vmatprep.mubr.bf16.mxu0 %v2533
        %2683 = vmatmul.mubr.bf16.gmra.mxu0 %v2397
        %v2684 = vpop.f32.mrf.mxu0
        %v2685 = vadd.f32 0.0, %v2684
        %v2686 = vpop.f32.mrf.mxu0
        %v2687 = vpop.f32.mrf.mxu0
        %v2688 = vadd.f32 0.0, %v2687
        %v2689 = vpop.f32.mrf.mxu0
        %2690 = vmatprep.mubr.bf16.mxu0 %v2536
        %2691 = vmatmul.mubr.bf16.gmra.mxu0 %v2399
        %v2692 = vpop.f32.mrf.mxu0
        %v2693 = vadd.f32 0.0, %v2692
        %v2694 = vpop.f32.mrf.mxu0
        %v2695 = vpop.f32.mrf.mxu0
        %v2696 = vadd.f32 0.0, %v2695
        %v2697 = vpop.f32.mrf.mxu0
        %2698 = vdwg.mxu0
        %v2731 = vunpack.c.l.b16 %v1870
        %v2732 = vunpack.c.h.b16 %v1870
        %v2733 = vunpack.c.l.b16 %v1871
        %v2734 = vunpack.c.h.b16 %v1871
        %v2735 = vunpack.c.l.b16 %v1872
        %v2736 = vunpack.c.h.b16 %v1872
        %v2737 = vunpack.c.l.b16 %v1873
        %v2738 = vunpack.c.h.b16 %v1873
        %v2739 = vunpack.c.l.b16 %v1874
        %v2740 = vunpack.c.h.b16 %v1874
        %v2741 = vunpack.c.l.b16 %v1875
        %v2742 = vunpack.c.h.b16 %v1875
        %v2743 = vunpack.c.l.b16 %v1876
        %v2744 = vunpack.c.h.b16 %v1876
        %v2745 = vunpack.c.l.b16 %v1877
        %v2746 = vunpack.c.h.b16 %v1877
        %v2747 = vunpack.c.l.b16 %v1878
        %v2748 = vunpack.c.h.b16 %v1878
        %v2749 = vunpack.c.l.b16 %v1879
        %v2750 = vunpack.c.h.b16 %v1879
        %v2751 = vunpack.c.l.b16 %v1880
        %v2752 = vunpack.c.h.b16 %v1880
        %v2753 = vunpack.c.l.b16 %v1881
        %v2754 = vunpack.c.h.b16 %v1881
        %v2755 = vunpack.c.l.b16 %v1882
        %v2756 = vunpack.c.h.b16 %v1882
        %v2757 = vunpack.c.l.b16 %v1883
        %v2758 = vunpack.c.h.b16 %v1883
        %v2759 = vunpack.c.l.b16 %v1884
        %v2760 = vunpack.c.h.b16 %v1884
        %v2761 = vunpack.c.l.b16 %v1885
        %v2762 = vunpack.c.h.b16 %v1885
        %v2763 = vunpack.c.l.b16 %v1886
        %v2764 = vunpack.c.h.b16 %v1886
        %v2765 = vunpack.c.l.b16 %v1887
        %v2766 = vunpack.c.h.b16 %v1887
        %v2767 = vunpack.c.l.b16 %v1888
        %v2768 = vunpack.c.h.b16 %v1888
        %v2769 = vunpack.c.l.b16 %v1889
        %v2770 = vunpack.c.h.b16 %v1889
        %v2771 = vunpack.c.l.b16 %v1890
        %v2772 = vunpack.c.h.b16 %v1890
        %v2773 = vunpack.c.l.b16 %v1891
        %v2774 = vunpack.c.h.b16 %v1891
        %v2775 = vunpack.c.l.b16 %v1892
        %v2776 = vunpack.c.h.b16 %v1892
        %v2777 = vunpack.c.l.b16 %v1893
        %v2778 = vunpack.c.h.b16 %v1893
        %v2779 = vunpack.c.l.b16 %v1894
        %v2780 = vunpack.c.h.b16 %v1894
        %v2781 = vunpack.c.l.b16 %v1895
        %v2782 = vunpack.c.h.b16 %v1895
        %v2783 = vunpack.c.l.b16 %v1896
        %v2784 = vunpack.c.h.b16 %v1896
        %v2785 = vunpack.c.l.b16 %v1897
        %v2786 = vunpack.c.h.b16 %v1897
        %v2787 = vunpack.c.l.b16 %v1898
        %v2788 = vunpack.c.h.b16 %v1898
        %v2789 = vunpack.c.l.b16 %v1899
        %v2790 = vunpack.c.h.b16 %v1899
        %v2791 = vunpack.c.l.b16 %v1900
        %v2792 = vunpack.c.h.b16 %v1900
        %v2793 = vunpack.c.l.b16 %v1901
        %v2794 = vunpack.c.h.b16 %v1901
        %v2795 = vpack.c.b16 %v2733, %v2731
        %v2796 = vpack.c.b16 %v2734, %v2732
        %v2797 = vpack.c.b16 %v2737, %v2735
        %v2798 = vpack.c.b16 %v2738, %v2736
        %v2799 = vpack.c.b16 %v2741, %v2739
        %v2800 = vpack.c.b16 %v2742, %v2740
        %v2801 = vpack.c.b16 %v2745, %v2743
        %v2802 = vpack.c.b16 %v2746, %v2744
        %v2803 = vpack.c.b16 %v2749, %v2747
        %v2804 = vpack.c.b16 %v2750, %v2748
        %v2805 = vpack.c.b16 %v2753, %v2751
        %v2806 = vpack.c.b16 %v2754, %v2752
        %v2807 = vpack.c.b16 %v2757, %v2755
        %v2808 = vpack.c.b16 %v2758, %v2756
        %v2809 = vpack.c.b16 %v2761, %v2759
        %v2810 = vpack.c.b16 %v2762, %v2760
        %v2811 = vpack.c.b16 %v2765, %v2763
        %v2812 = vpack.c.b16 %v2766, %v2764
        %v2813 = vpack.c.b16 %v2769, %v2767
        %v2814 = vpack.c.b16 %v2770, %v2768
        %v2815 = vpack.c.b16 %v2773, %v2771
        %v2816 = vpack.c.b16 %v2774, %v2772
        %v2817 = vpack.c.b16 %v2777, %v2775
        %v2818 = vpack.c.b16 %v2778, %v2776
        %v2819 = vpack.c.b16 %v2781, %v2779
        %v2820 = vpack.c.b16 %v2782, %v2780
        %v2821 = vpack.c.b16 %v2785, %v2783
        %v2822 = vpack.c.b16 %v2786, %v2784
        %v2823 = vpack.c.b16 %v2789, %v2787
        %v2824 = vpack.c.b16 %v2790, %v2788
        %v2825 = vpack.c.b16 %v2793, %v2791
        %v2826 = vpack.c.b16 %v2794, %v2792
        %v2867 = vunpack.c.l.b16 %v386
        %v2868 = vunpack.c.l.b16 %v387
        %v2869 = vunpack.c.l.b16 %v388
        %v2870 = vunpack.c.l.b16 %v389
        %v2871 = vunpack.c.l.b16 %v390
        %v2872 = vunpack.c.l.b16 %v391
        %v2873 = vunpack.c.l.b16 %v392
        %v2874 = vunpack.c.l.b16 %v393
        %v2875 = vunpack.c.l.b16 %v394
        %v2876 = vunpack.c.l.b16 %v395
        %v2877 = vunpack.c.l.b16 %v396
        %v2878 = vunpack.c.l.b16 %v397
        %v2879 = vunpack.c.l.b16 %v398
        %v2880 = vunpack.c.l.b16 %v399
        %v2881 = vunpack.c.l.b16 %v400
        %v2882 = vunpack.c.l.b16 %v401
        %v2883 = vunpack.c.l.b16 %v402
        %v2884 = vunpack.c.l.b16 %v403
        %v2885 = vunpack.c.l.b16 %v404
        %v2886 = vunpack.c.l.b16 %v405
        %v2887 = vunpack.c.l.b16 %v406
        %v2888 = vunpack.c.l.b16 %v407
        %v2889 = vunpack.c.l.b16 %v408
        %v2890 = vunpack.c.l.b16 %v409
        %v2891 = vpack.c.b16 %v2868, %v2867
        %v2892 = vpack.c.b16 %v2870, %v2869
        %v2893 = vpack.c.b16 %v2872, %v2871
        %v2894 = vpack.c.b16 %v2874, %v2873
        %v2895 = vpack.c.b16 %v2876, %v2875
        %v2896 = vpack.c.b16 %v2878, %v2877
        %v2897 = vpack.c.b16 %v2880, %v2879
        %v2898 = vpack.c.b16 %v2882, %v2881
        %v2899 = vpack.c.b16 %v2884, %v2883
        %v2900 = vpack.c.b16 %v2886, %v2885
        %v2901 = vpack.c.b16 %v2888, %v2887
        %v2902 = vpack.c.b16 %v2890, %v2889
        %v2916 = vsel %vm2489, %v2796, 0
        %v2919 = vsel %vm2489, %v2798, 0
        %v2922 = vsel %vm2489, %v2800, 0
        %v2925 = vsel %vm2489, %v2802, 0
        %v2928 = vsel %vm2489, %v2804, 0
        %v2931 = vsel %vm2489, %v2806, 0
        %v2934 = vsel %vm2489, %v2808, 0
        %v2937 = vsel %vm2489, %v2810, 0
        %v2940 = vsel %vm2489, %v2812, 0
        %v2943 = vsel %vm2489, %v2814, 0
        %v2946 = vsel %vm2489, %v2816, 0
        %v2949 = vsel %vm2489, %v2818, 0
        %v2952 = vsel %vm2489, %v2820, 0
        %v2955 = vsel %vm2489, %v2822, 0
        %v2958 = vsel %vm2489, %v2824, 0
        %v2961 = vsel %vm2489, %v2826, 0
        %2963 = vmatprep.subr.bf16.mxu0 0
        %2964 = vmatpush1.bf16.msra.mxu0 %v2898
        %2965 = vmatprep.subr.bf16.mxu0 0
        %2966 = vmatpush1.bf16.msra.mxu0 %v2897
        %2967 = vmatprep.subr.bf16.mxu0 0
        %2968 = vmatpush1.bf16.msra.mxu0 %v2896
        %2969 = vmatprep.subr.bf16.mxu0 0
        %2970 = vmatpush1.bf16.msra.mxu0 %v2895
        %2971 = vmatprep.subr.bf16.mxu0 0
        %2972 = vmatpush1.bf16.msra.mxu0 %v2894
        %2973 = vmatprep.subr.bf16.mxu0 0
        %2974 = vmatpush1.bf16.msra.mxu0 %v2893
        %2975 = vmatprep.subr.bf16.mxu0 0
        %2976 = vmatpush1.bf16.msra.mxu0 %v2892
        %2977 = vmatprep.subr.bf16.mxu0 0
        %2978 = vmatpush1.bf16.msra.mxu0 %v2891
        %2979 = vmatprep.subr.bf16.mxu0 0
        %2980 = vmatpush2.bf16.msra.mxu0 0
        %2981 = vmatprep.subr.bf16.mxu0 0
        %2982 = vmatpush2.bf16.msra.mxu0 0
        %2983 = vmatprep.subr.bf16.mxu0 0
        %2984 = vmatpush2.bf16.msra.mxu0 0
        %2985 = vmatprep.subr.bf16.mxu0 0
        %2986 = vmatpush2.bf16.msra.mxu0 0
        %2987 = vmatprep.subr.bf16.mxu0 0
        %2988 = vmatpush2.bf16.msra.mxu0 %v2902
        %2989 = vmatprep.subr.bf16.mxu0 0
        %2990 = vmatpush2.bf16.msra.mxu0 %v2901
        %2991 = vmatprep.subr.bf16.mxu0 0
        %2992 = vmatpush2.bf16.msra.mxu0 %v2900
        %2993 = vmatprep.subr.bf16.mxu0 0
        %2994 = vmatpush2.bf16.msra.mxu0 %v2899
        %2995 = vmatprep.mubr.bf16.mxu0 %v2916
        %2996 = vmatmul.mubr.bf16.gmra.mxu0 %v2795
        %v2997 = vpop.f32.mrf.mxu0
        %v2998 = vadd.f32 %v2573, %v2997
        %v2999 = vpop.f32.mrf.mxu0
        %v3000 = vpop.f32.mrf.mxu0
        %v3001 = vadd.f32 %v2576, %v3000
        %v3002 = vpop.f32.mrf.mxu0
        %3003 = vmatprep.mubr.bf16.mxu0 %v2919
        %3004 = vmatmul.mubr.bf16.gmra.mxu0 %v2797
        %v3005 = vpop.f32.mrf.mxu0
        %v3006 = vadd.f32 %v2581, %v3005
        %v3007 = vpop.f32.mrf.mxu0
        %v3008 = vpop.f32.mrf.mxu0
        %v3009 = vadd.f32 %v2584, %v3008
        %v3010 = vpop.f32.mrf.mxu0
        %3011 = vmatprep.mubr.bf16.mxu0 %v2922
        %3012 = vmatmul.mubr.bf16.gmra.mxu0 %v2799
        %v3013 = vpop.f32.mrf.mxu0
        %v3014 = vadd.f32 %v2589, %v3013
        %v3015 = vpop.f32.mrf.mxu0
        %v3016 = vpop.f32.mrf.mxu0
        %v3017 = vadd.f32 %v2592, %v3016
        %v3018 = vpop.f32.mrf.mxu0
        %3019 = vmatprep.mubr.bf16.mxu0 %v2925
        %3020 = vmatmul.mubr.bf16.gmra.mxu0 %v2801
        %v3021 = vpop.f32.mrf.mxu0
        %v3022 = vadd.f32 %v2597, %v3021
        %v3023 = vpop.f32.mrf.mxu0
        %v3024 = vpop.f32.mrf.mxu0
        %v3025 = vadd.f32 %v2600, %v3024
        %v3026 = vpop.f32.mrf.mxu0
        %3027 = vmatprep.mubr.bf16.mxu0 %v2928
        %3028 = vmatmul.mubr.bf16.gmra.mxu0 %v2803
        %v3029 = vpop.f32.mrf.mxu0
        %v3030 = vadd.f32 %v2605, %v3029
        %v3031 = vpop.f32.mrf.mxu0
        %v3032 = vpop.f32.mrf.mxu0
        %v3033 = vadd.f32 %v2608, %v3032
        %v3034 = vpop.f32.mrf.mxu0
        %3035 = vmatprep.mubr.bf16.mxu0 %v2931
        %3036 = vmatmul.mubr.bf16.gmra.mxu0 %v2805
        %v3037 = vpop.f32.mrf.mxu0
        %v3038 = vadd.f32 %v2613, %v3037
        %v3039 = vpop.f32.mrf.mxu0
        %v3040 = vpop.f32.mrf.mxu0
        %v3041 = vadd.f32 %v2616, %v3040
        %v3042 = vpop.f32.mrf.mxu0
        %3043 = vmatprep.mubr.bf16.mxu0 %v2934
        %3044 = vmatmul.mubr.bf16.gmra.mxu0 %v2807
        %v3045 = vpop.f32.mrf.mxu0
        %v3046 = vadd.f32 %v2621, %v3045
        %v3047 = vpop.f32.mrf.mxu0
        %v3048 = vpop.f32.mrf.mxu0
        %v3049 = vadd.f32 %v2624, %v3048
        %v3050 = vpop.f32.mrf.mxu0
        %3051 = vmatprep.mubr.bf16.mxu0 %v2937
        %3052 = vmatmul.mubr.bf16.gmra.mxu0 %v2809
        %v3053 = vpop.f32.mrf.mxu0
        %v3054 = vadd.f32 %v2629, %v3053
        %v3055 = vpop.f32.mrf.mxu0
        %v3056 = vpop.f32.mrf.mxu0
        %v3057 = vadd.f32 %v2632, %v3056
        %v3058 = vpop.f32.mrf.mxu0
        %3059 = vmatprep.mubr.bf16.mxu0 %v2940
        %3060 = vmatmul.mubr.bf16.gmra.mxu0 %v2811
        %v3061 = vpop.f32.mrf.mxu0
        %v3062 = vadd.f32 %v2637, %v3061
        %v3063 = vpop.f32.mrf.mxu0
        %v3064 = vpop.f32.mrf.mxu0
        %v3065 = vadd.f32 %v2640, %v3064
        %v3066 = vpop.f32.mrf.mxu0
        %3067 = vmatprep.mubr.bf16.mxu0 %v2943
        %3068 = vmatmul.mubr.bf16.gmra.mxu0 %v2813
        %v3069 = vpop.f32.mrf.mxu0
        %v3070 = vadd.f32 %v2645, %v3069
        %v3071 = vpop.f32.mrf.mxu0
        %v3072 = vpop.f32.mrf.mxu0
        %v3073 = vadd.f32 %v2648, %v3072
        %v3074 = vpop.f32.mrf.mxu0
        %3075 = vmatprep.mubr.bf16.mxu0 %v2946
        %3076 = vmatmul.mubr.bf16.gmra.mxu0 %v2815
        %v3077 = vpop.f32.mrf.mxu0
        %v3078 = vadd.f32 %v2653, %v3077
        %v3079 = vpop.f32.mrf.mxu0
        %v3080 = vpop.f32.mrf.mxu0
        %v3081 = vadd.f32 %v2656, %v3080
        %v3082 = vpop.f32.mrf.mxu0
        %3083 = vmatprep.mubr.bf16.mxu0 %v2949
        %3084 = vmatmul.mubr.bf16.gmra.mxu0 %v2817
        %v3085 = vpop.f32.mrf.mxu0
        %v3086 = vadd.f32 %v2661, %v3085
        %v3087 = vpop.f32.mrf.mxu0
        %v3088 = vpop.f32.mrf.mxu0
        %v3089 = vadd.f32 %v2664, %v3088
        %v3090 = vpop.f32.mrf.mxu0
        %3091 = vmatprep.mubr.bf16.mxu0 %v2952
        %3092 = vmatmul.mubr.bf16.gmra.mxu0 %v2819
        %v3093 = vpop.f32.mrf.mxu0
        %v3094 = vadd.f32 %v2669, %v3093
        %v3095 = vpop.f32.mrf.mxu0
        %v3096 = vpop.f32.mrf.mxu0
        %v3097 = vadd.f32 %v2672, %v3096
        %v3098 = vpop.f32.mrf.mxu0
        %3099 = vmatprep.mubr.bf16.mxu0 %v2955
        %3100 = vmatmul.mubr.bf16.gmra.mxu0 %v2821
        %v3101 = vpop.f32.mrf.mxu0
        %v3102 = vadd.f32 %v2677, %v3101
        %v3103 = vpop.f32.mrf.mxu0
        %v3104 = vpop.f32.mrf.mxu0
        %v3105 = vadd.f32 %v2680, %v3104
        %v3106 = vpop.f32.mrf.mxu0
        %3107 = vmatprep.mubr.bf16.mxu0 %v2958
        %3108 = vmatmul.mubr.bf16.gmra.mxu0 %v2823
        %v3109 = vpop.f32.mrf.mxu0
        %v3110 = vadd.f32 %v2685, %v3109
        %v3111 = vpop.f32.mrf.mxu0
        %v3112 = vpop.f32.mrf.mxu0
        %v3113 = vadd.f32 %v2688, %v3112
        %v3114 = vpop.f32.mrf.mxu0
        %3115 = vmatprep.mubr.bf16.mxu0 %v2961
        %3116 = vmatmul.mubr.bf16.gmra.mxu0 %v2825
        %v3117 = vpop.f32.mrf.mxu0
        %v3118 = vadd.f32 %v2693, %v3117
        %v3119 = vpop.f32.mrf.mxu0
        %v3120 = vpop.f32.mrf.mxu0
        %v3121 = vadd.f32 %v2696, %v3120
        %v3122 = vpop.f32.mrf.mxu0
        %3123 = vdwg.mxu0
        %v3124 = vld [vmem:[#allocation3] sm:$0xee]
        %v3125 = vld [vmem:[#allocation3 + $0x18] sm:$0xee]
        %v3126 = vld [vmem:[#allocation3 + $0x30] sm:$0xee]
        %v3127 = vld [vmem:[#allocation3 + $0x48] sm:$0xee]
        %v3128 = vld [vmem:[#allocation3 + $0x60] sm:$0xee]
        %v3129 = vld [vmem:[#allocation3 + $0x78] sm:$0xee]
        %v3130 = vld [vmem:[#allocation3 + $0x90] sm:$0xee]
        %v3131 = vld [vmem:[#allocation3 + $0xa8] sm:$0xee]
        %v3132 = vld [vmem:[#allocation3 + $0xc0] sm:$0xee]
        %v3133 = vld [vmem:[#allocation3 + $0xd8] sm:$0xee]
        %v3134 = vld [vmem:[#allocation3 + $0xf0] sm:$0xee]
        %v3135 = vld [vmem:[#allocation3 + $0x108] sm:$0xee]
        %v3136 = vld [vmem:[#allocation3 + $0x120] sm:$0xee]
        %v3137 = vld [vmem:[#allocation3 + $0x138] sm:$0xee]
        %v3138 = vld [vmem:[#allocation3 + $0x150] sm:$0xee]
        %v3139 = vld [vmem:[#allocation3 + $0x168] sm:$0xee]
        %vm3172 = vcmask 1042432
        %vm3173 = vcmask 1046532
        %vm3174 = vmor %vm3172, %vm3173
        %v3175 = vrot.slane %v3124, 5
        %v3176 = vrot.slane %v3175, 4
        %v3177 = vrot.slane %v1871, 5
        %v3178 = vsel %vm3174, %v3176, %v3177
        %v3179 = vrot.slane %v3177, 4
        %v3180 = vrot.slane %v1902, 5
        %v3181 = vsel %vm3174, %v3179, %v3180
        %v3182 = vrot.slane %v3125, 5
        %v3183 = vrot.slane %v3182, 4
        %v3184 = vrot.slane %v1873, 5
        %v3185 = vsel %vm3174, %v3183, %v3184
        %v3186 = vrot.slane %v3184, 4
        %v3187 = vrot.slane %v1903, 5
        %v3188 = vsel %vm3174, %v3186, %v3187
        %v3189 = vrot.slane %v3126, 5
        %v3190 = vrot.slane %v3189, 4
        %v3191 = vrot.slane %v1875, 5
        %v3192 = vsel %vm3174, %v3190, %v3191
        %v3193 = vrot.slane %v3191, 4
        %v3194 = vrot.slane %v1904, 5
        %v3195 = vsel %vm3174, %v3193, %v3194
        %v3196 = vrot.slane %v3127, 5
        %v3197 = vrot.slane %v3196, 4
        %v3198 = vrot.slane %v1877, 5
        %v3199 = vsel %vm3174, %v3197, %v3198
        %v3200 = vrot.slane %v3198, 4
        %v3201 = vrot.slane %v1905, 5
        %v3202 = vsel %vm3174, %v3200, %v3201
        %v3203 = vrot.slane %v3128, 5
        %v3204 = vrot.slane %v3203, 4
        %v3205 = vrot.slane %v1879, 5
        %v3206 = vsel %vm3174, %v3204, %v3205
        %v3207 = vrot.slane %v3205, 4
        %v3208 = vrot.slane %v1906, 5
        %v3209 = vsel %vm3174, %v3207, %v3208
        %v3210 = vrot.slane %v3129, 5
        %v3211 = vrot.slane %v3210, 4
        %v3212 = vrot.slane %v1881, 5
        %v3213 = vsel %vm3174, %v3211, %v3212
        %v3214 = vrot.slane %v3212, 4
        %v3215 = vrot.slane %v1907, 5
        %v3216 = vsel %vm3174, %v3214, %v3215
        %v3217 = vrot.slane %v3130, 5
        %v3218 = vrot.slane %v3217, 4
        %v3219 = vrot.slane %v1883, 5
        %v3220 = vsel %vm3174, %v3218, %v3219
        %v3221 = vrot.slane %v3219, 4
        %v3222 = vrot.slane %v1908, 5
        %v3223 = vsel %vm3174, %v3221, %v3222
        %v3224 = vrot.slane %v3131, 5
        %v3225 = vrot.slane %v3224, 4
        %v3226 = vrot.slane %v1885, 5
        %v3227 = vsel %vm3174, %v3225, %v3226
        %v3228 = vrot.slane %v3226, 4
        %v3229 = vrot.slane %v1909, 5
        %v3230 = vsel %vm3174, %v3228, %v3229
        %v3231 = vrot.slane %v3132, 5
        %v3232 = vrot.slane %v3231, 4
        %v3233 = vrot.slane %v1887, 5
        %v3234 = vsel %vm3174, %v3232, %v3233
        %v3235 = vrot.slane %v3233, 4
        %v3236 = vrot.slane %v1910, 5
        %v3237 = vsel %vm3174, %v3235, %v3236
        %v3238 = vrot.slane %v3133, 5
        %v3239 = vrot.slane %v3238, 4
        %v3240 = vrot.slane %v1889, 5
        %v3241 = vsel %vm3174, %v3239, %v3240
        %v3242 = vrot.slane %v3240, 4
        %v3243 = vrot.slane %v1911, 5
        %v3244 = vsel %vm3174, %v3242, %v3243
        %v3245 = vrot.slane %v3134, 5
        %v3246 = vrot.slane %v3245, 4
        %v3247 = vrot.slane %v1891, 5
        %v3248 = vsel %vm3174, %v3246, %v3247
        %v3249 = vrot.slane %v3247, 4
        %v3250 = vrot.slane %v1912, 5
        %v3251 = vsel %vm3174, %v3249, %v3250
        %v3252 = vrot.slane %v3135, 5
        %v3253 = vrot.slane %v3252, 4
        %v3254 = vrot.slane %v1893, 5
        %v3255 = vsel %vm3174, %v3253, %v3254
        %v3256 = vrot.slane %v3254, 4
        %v3257 = vrot.slane %v1913, 5
        %v3258 = vsel %vm3174, %v3256, %v3257
        %v3259 = vrot.slane %v3136, 5
        %v3260 = vrot.slane %v3259, 4
        %v3261 = vrot.slane %v1895, 5
        %v3262 = vsel %vm3174, %v3260, %v3261
        %v3263 = vrot.slane %v3261, 4
        %v3264 = vrot.slane %v1914, 5
        %v3265 = vsel %vm3174, %v3263, %v3264
        %v3266 = vrot.slane %v3137, 5
        %v3267 = vrot.slane %v3266, 4
        %v3268 = vrot.slane %v1897, 5
        %v3269 = vsel %vm3174, %v3267, %v3268
        %v3270 = vrot.slane %v3268, 4
        %v3271 = vrot.slane %v1915, 5
        %v3272 = vsel %vm3174, %v3270, %v3271
        %v3273 = vrot.slane %v3138, 5
        %v3274 = vrot.slane %v3273, 4
        %v3275 = vrot.slane %v1899, 5
        %v3276 = vsel %vm3174, %v3274, %v3275
        %v3277 = vrot.slane %v3275, 4
        %v3278 = vrot.slane %v1916, 5
        %v3279 = vsel %vm3174, %v3277, %v3278
        %v3280 = vrot.slane %v3139, 5
        %v3281 = vrot.slane %v3280, 4
        %v3282 = vrot.slane %v1901, 5
        %v3283 = vsel %vm3174, %v3281, %v3282
        %v3284 = vrot.slane %v3282, 4
        %v3285 = vrot.slane %v1917, 5
        %v3286 = vsel %vm3174, %v3284, %v3285
        %v3287 = vunpack.c.l.b16 %v3178
        %v3288 = vunpack.c.h.b16 %v3178
        %v3289 = vunpack.c.l.b16 %v3181
        %v3290 = vunpack.c.h.b16 %v3181
        %v3291 = vunpack.c.l.b16 %v3185
        %v3292 = vunpack.c.h.b16 %v3185
        %v3293 = vunpack.c.l.b16 %v3188
        %v3294 = vunpack.c.h.b16 %v3188
        %v3295 = vunpack.c.l.b16 %v3192
        %v3296 = vunpack.c.h.b16 %v3192
        %v3297 = vunpack.c.l.b16 %v3195
        %v3298 = vunpack.c.h.b16 %v3195
        %v3299 = vunpack.c.l.b16 %v3199
        %v3300 = vunpack.c.h.b16 %v3199
        %v3301 = vunpack.c.l.b16 %v3202
        %v3302 = vunpack.c.h.b16 %v3202
        %v3303 = vunpack.c.l.b16 %v3206
        %v3304 = vunpack.c.h.b16 %v3206
        %v3305 = vunpack.c.l.b16 %v3209
        %v3306 = vunpack.c.h.b16 %v3209
        %v3307 = vunpack.c.l.b16 %v3213
        %v3308 = vunpack.c.h.b16 %v3213
        %v3309 = vunpack.c.l.b16 %v3216
        %v3310 = vunpack.c.h.b16 %v3216
        %v3311 = vunpack.c.l.b16 %v3220
        %v3312 = vunpack.c.h.b16 %v3220
        %v3313 = vunpack.c.l.b16 %v3223
        %v3314 = vunpack.c.h.b16 %v3223
        %v3315 = vunpack.c.l.b16 %v3227
        %v3316 = vunpack.c.h.b16 %v3227
        %v3317 = vunpack.c.l.b16 %v3230
        %v3318 = vunpack.c.h.b16 %v3230
        %v3319 = vunpack.c.l.b16 %v3234
        %v3320 = vunpack.c.h.b16 %v3234
        %v3321 = vunpack.c.l.b16 %v3237
        %v3322 = vunpack.c.h.b16 %v3237
        %v3323 = vunpack.c.l.b16 %v3241
        %v3324 = vunpack.c.h.b16 %v3241
        %v3325 = vunpack.c.l.b16 %v3244
        %v3326 = vunpack.c.h.b16 %v3244
        %v3327 = vunpack.c.l.b16 %v3248
        %v3328 = vunpack.c.h.b16 %v3248
        %v3329 = vunpack.c.l.b16 %v3251
        %v3330 = vunpack.c.h.b16 %v3251
        %v3331 = vunpack.c.l.b16 %v3255
        %v3332 = vunpack.c.h.b16 %v3255
        %v3333 = vunpack.c.l.b16 %v3258
        %v3334 = vunpack.c.h.b16 %v3258
        %v3335 = vunpack.c.l.b16 %v3262
        %v3336 = vunpack.c.h.b16 %v3262
        %v3337 = vunpack.c.l.b16 %v3265
        %v3338 = vunpack.c.h.b16 %v3265
        %v3339 = vunpack.c.l.b16 %v3269
        %v3340 = vunpack.c.h.b16 %v3269
        %v3341 = vunpack.c.l.b16 %v3272
        %v3342 = vunpack.c.h.b16 %v3272
        %v3343 = vunpack.c.l.b16 %v3276
        %v3344 = vunpack.c.h.b16 %v3276
        %v3345 = vunpack.c.l.b16 %v3279
        %v3346 = vunpack.c.h.b16 %v3279
        %v3347 = vunpack.c.l.b16 %v3283
        %v3348 = vunpack.c.h.b16 %v3283
        %v3349 = vunpack.c.l.b16 %v3286
        %v3350 = vunpack.c.h.b16 %v3286
        %v3351 = vpack.c.b16 %v3289, %v3287
        %v3352 = vpack.c.b16 %v3290, %v3288
        %v3353 = vpack.c.b16 %v3293, %v3291
        %v3354 = vpack.c.b16 %v3294, %v3292
        %v3355 = vpack.c.b16 %v3297, %v3295
        %v3356 = vpack.c.b16 %v3298, %v3296
        %v3357 = vpack.c.b16 %v3301, %v3299
        %v3358 = vpack.c.b16 %v3302, %v3300
        %v3359 = vpack.c.b16 %v3305, %v3303
        %v3360 = vpack.c.b16 %v3306, %v3304
        %v3361 = vpack.c.b16 %v3309, %v3307
        %v3362 = vpack.c.b16 %v3310, %v3308
        %v3363 = vpack.c.b16 %v3313, %v3311
        %v3364 = vpack.c.b16 %v3314, %v3312
        %v3365 = vpack.c.b16 %v3317, %v3315
        %v3366 = vpack.c.b16 %v3318, %v3316
        %v3367 = vpack.c.b16 %v3321, %v3319
        %v3368 = vpack.c.b16 %v3322, %v3320
        %v3369 = vpack.c.b16 %v3325, %v3323
        %v3370 = vpack.c.b16 %v3326, %v3324
        %v3371 = vpack.c.b16 %v3329, %v3327
        %v3372 = vpack.c.b16 %v3330, %v3328
        %v3373 = vpack.c.b16 %v3333, %v3331
        %v3374 = vpack.c.b16 %v3334, %v3332
        %v3375 = vpack.c.b16 %v3337, %v3335
        %v3376 = vpack.c.b16 %v3338, %v3336
        %v3377 = vpack.c.b16 %v3341, %v3339
        %v3378 = vpack.c.b16 %v3342, %v3340
        %v3379 = vpack.c.b16 %v3345, %v3343
        %v3380 = vpack.c.b16 %v3346, %v3344
        %v3381 = vpack.c.b16 %v3349, %v3347
        %v3382 = vpack.c.b16 %v3350, %v3348
        %v3423 = vunpack.c.l.b16 %v434
        %v3424 = vunpack.c.l.b16 %v435
        %v3425 = vunpack.c.l.b16 %v436
        %v3426 = vunpack.c.l.b16 %v437
        %v3427 = vunpack.c.l.b16 %v438
        %v3428 = vunpack.c.l.b16 %v439
        %v3429 = vunpack.c.l.b16 %v440
        %v3430 = vunpack.c.l.b16 %v441
        %v3431 = vunpack.c.l.b16 %v442
        %v3432 = vunpack.c.l.b16 %v443
        %v3433 = vunpack.c.l.b16 %v444
        %v3434 = vunpack.c.l.b16 %v445
        %v3435 = vunpack.c.l.b16 %v446
        %v3436 = vunpack.c.l.b16 %v447
        %v3437 = vunpack.c.l.b16 %v448
        %v3438 = vunpack.c.l.b16 %v449
        %v3439 = vunpack.c.l.b16 %v450
        %v3440 = vunpack.c.l.b16 %v451
        %v3441 = vunpack.c.l.b16 %v452
        %v3442 = vunpack.c.l.b16 %v453
        %v3443 = vunpack.c.l.b16 %v454
        %v3444 = vunpack.c.l.b16 %v455
        %v3445 = vunpack.c.l.b16 %v456
        %v3446 = vunpack.c.l.b16 %v457
        %v3447 = vpack.c.b16 %v3424, %v3423
        %v3448 = vpack.c.b16 %v3426, %v3425
        %v3449 = vpack.c.b16 %v3428, %v3427
        %v3450 = vpack.c.b16 %v3430, %v3429
        %v3451 = vpack.c.b16 %v3432, %v3431
        %v3452 = vpack.c.b16 %v3434, %v3433
        %v3453 = vpack.c.b16 %v3436, %v3435
        %v3454 = vpack.c.b16 %v3438, %v3437
        %v3455 = vpack.c.b16 %v3440, %v3439
        %v3456 = vpack.c.b16 %v3442, %v3441
        %v3457 = vpack.c.b16 %v3444, %v3443
        %v3458 = vpack.c.b16 %v3446, %v3445
        %v3472 = vsel %vm2489, %v3352, 0
        %v3475 = vsel %vm2489, %v3354, 0
        %v3478 = vsel %vm2489, %v3356, 0
        %v3481 = vsel %vm2489, %v3358, 0
        %v3484 = vsel %vm2489, %v3360, 0
        %v3487 = vsel %vm2489, %v3362, 0
        %v3490 = vsel %vm2489, %v3364, 0
        %v3493 = vsel %vm2489, %v3366, 0
        %v3496 = vsel %vm2489, %v3368, 0
        %v3499 = vsel %vm2489, %v3370, 0
        %v3502 = vsel %vm2489, %v3372, 0
        %v3505 = vsel %vm2489, %v3374, 0
        %v3508 = vsel %vm2489, %v3376, 0
        %v3511 = vsel %vm2489, %v3378, 0
        %v3514 = vsel %vm2489, %v3380, 0
        %v3517 = vsel %vm2489, %v3382, 0
        %3519 = vmatprep.subr.bf16.mxu0 0
        %3520 = vmatpush1.bf16.msra.mxu0 %v3454
        %3521 = vmatprep.subr.bf16.mxu0 0
        %3522 = vmatpush1.bf16.msra.mxu0 %v3453
        %3523 = vmatprep.subr.bf16.mxu0 0
        %3524 = vmatpush1.bf16.msra.mxu0 %v3452
        %3525 = vmatprep.subr.bf16.mxu0 0
        %3526 = vmatpush1.bf16.msra.mxu0 %v3451
        %3527 = vmatprep.subr.bf16.mxu0 0
        %3528 = vmatpush1.bf16.msra.mxu0 %v3450
        %3529 = vmatprep.subr.bf16.mxu0 0
        %3530 = vmatpush1.bf16.msra.mxu0 %v3449
        %3531 = vmatprep.subr.bf16.mxu0 0
        %3532 = vmatpush1.bf16.msra.mxu0 %v3448
        %3533 = vmatprep.subr.bf16.mxu0 0
        %3534 = vmatpush1.bf16.msra.mxu0 %v3447
        %3535 = vmatprep.subr.bf16.mxu0 0
        %3536 = vmatpush2.bf16.msra.mxu0 0
        %3537 = vmatprep.subr.bf16.mxu0 0
        %3538 = vmatpush2.bf16.msra.mxu0 0
        %3539 = vmatprep.subr.bf16.mxu0 0
        %3540 = vmatpush2.bf16.msra.mxu0 0
        %3541 = vmatprep.subr.bf16.mxu0 0
        %3542 = vmatpush2.bf16.msra.mxu0 0
        %3543 = vmatprep.subr.bf16.mxu0 0
        %3544 = vmatpush2.bf16.msra.mxu0 %v3458
        %3545 = vmatprep.subr.bf16.mxu0 0
        %3546 = vmatpush2.bf16.msra.mxu0 %v3457
        %3547 = vmatprep.subr.bf16.mxu0 0
        %3548 = vmatpush2.bf16.msra.mxu0 %v3456
        %3549 = vmatprep.subr.bf16.mxu0 0
        %3550 = vmatpush2.bf16.msra.mxu0 %v3455
        %3551 = vmatprep.mubr.bf16.mxu0 %v3472
        %3552 = vmatmul.mubr.bf16.gmra.mxu0 %v3351
        %v3553 = vpop.f32.mrf.mxu0
        %v3554 = vadd.f32 0.0, %v3553
        %v3555 = vpop.f32.mrf.mxu0
        %v3556 = vpop.f32.mrf.mxu0
        %v3557 = vadd.f32 0.0, %v3556
        %v3558 = vpop.f32.mrf.mxu0
        %3559 = vmatprep.mubr.bf16.mxu0 %v3475
        %3560 = vmatmul.mubr.bf16.gmra.mxu0 %v3353
        %v3561 = vpop.f32.mrf.mxu0
        %v3562 = vadd.f32 0.0, %v3561
        %v3563 = vpop.f32.mrf.mxu0
        %v3564 = vpop.f32.mrf.mxu0
        %v3565 = vadd.f32 0.0, %v3564
        %v3566 = vpop.f32.mrf.mxu0
        %3567 = vmatprep.mubr.bf16.mxu0 %v3478
        %3568 = vmatmul.mubr.bf16.gmra.mxu0 %v3355
        %v3569 = vpop.f32.mrf.mxu0
        %v3570 = vadd.f32 0.0, %v3569
        %v3571 = vpop.f32.mrf.mxu0
        %v3572 = vpop.f32.mrf.mxu0
        %v3573 = vadd.f32 0.0, %v3572
        %v3574 = vpop.f32.mrf.mxu0
        %3575 = vmatprep.mubr.bf16.mxu0 %v3481
        %3576 = vmatmul.mubr.bf16.gmra.mxu0 %v3357
        %v3577 = vpop.f32.mrf.mxu0
        %v3578 = vadd.f32 0.0, %v3577
        %v3579 = vpop.f32.mrf.mxu0
        %v3580 = vpop.f32.mrf.mxu0
        %v3581 = vadd.f32 0.0, %v3580
        %v3582 = vpop.f32.mrf.mxu0
        %3583 = vmatprep.mubr.bf16.mxu0 %v3484
        %3584 = vmatmul.mubr.bf16.gmra.mxu0 %v3359
        %v3585 = vpop.f32.mrf.mxu0
        %v3586 = vadd.f32 0.0, %v3585
        %v3587 = vpop.f32.mrf.mxu0
        %v3588 = vpop.f32.mrf.mxu0
        %v3589 = vadd.f32 0.0, %v3588
        %v3590 = vpop.f32.mrf.mxu0
        %3591 = vmatprep.mubr.bf16.mxu0 %v3487
        %3592 = vmatmul.mubr.bf16.gmra.mxu0 %v3361
        %v3593 = vpop.f32.mrf.mxu0
        %v3594 = vadd.f32 0.0, %v3593
        %v3595 = vpop.f32.mrf.mxu0
        %v3596 = vpop.f32.mrf.mxu0
        %v3597 = vadd.f32 0.0, %v3596
        %v3598 = vpop.f32.mrf.mxu0
        %3599 = vmatprep.mubr.bf16.mxu0 %v3490
        %3600 = vmatmul.mubr.bf16.gmra.mxu0 %v3363
        %v3601 = vpop.f32.mrf.mxu0
        %v3602 = vadd.f32 0.0, %v3601
        %v3603 = vpop.f32.mrf.mxu0
        %v3604 = vpop.f32.mrf.mxu0
        %v3605 = vadd.f32 0.0, %v3604
        %v3606 = vpop.f32.mrf.mxu0
        %3607 = vmatprep.mubr.bf16.mxu0 %v3493
        %3608 = vmatmul.mubr.bf16.gmra.mxu0 %v3365
        %v3609 = vpop.f32.mrf.mxu0
        %v3610 = vadd.f32 0.0, %v3609
        %v3611 = vpop.f32.mrf.mxu0
        %v3612 = vpop.f32.mrf.mxu0
        %v3613 = vadd.f32 0.0, %v3612
        %v3614 = vpop.f32.mrf.mxu0
        %3615 = vmatprep.mubr.bf16.mxu0 %v3496
        %3616 = vmatmul.mubr.bf16.gmra.mxu0 %v3367
        %v3617 = vpop.f32.mrf.mxu0
        %v3618 = vadd.f32 0.0, %v3617
        %v3619 = vpop.f32.mrf.mxu0
        %v3620 = vpop.f32.mrf.mxu0
        %v3621 = vadd.f32 0.0, %v3620
        %v3622 = vpop.f32.mrf.mxu0
        %3623 = vmatprep.mubr.bf16.mxu0 %v3499
        %3624 = vmatmul.mubr.bf16.gmra.mxu0 %v3369
        %v3625 = vpop.f32.mrf.mxu0
        %v3626 = vadd.f32 0.0, %v3625
        %v3627 = vpop.f32.mrf.mxu0
        %v3628 = vpop.f32.mrf.mxu0
        %v3629 = vadd.f32 0.0, %v3628
        %v3630 = vpop.f32.mrf.mxu0
        %3631 = vmatprep.mubr.bf16.mxu0 %v3502
        %3632 = vmatmul.mubr.bf16.gmra.mxu0 %v3371
        %v3633 = vpop.f32.mrf.mxu0
        %v3634 = vadd.f32 0.0, %v3633
        %v3635 = vpop.f32.mrf.mxu0
        %v3636 = vpop.f32.mrf.mxu0
        %v3637 = vadd.f32 0.0, %v3636
        %v3638 = vpop.f32.mrf.mxu0
        %3639 = vmatprep.mubr.bf16.mxu0 %v3505
        %3640 = vmatmul.mubr.bf16.gmra.mxu0 %v3373
        %v3641 = vpop.f32.mrf.mxu0
        %v3642 = vadd.f32 0.0, %v3641
        %v3643 = vpop.f32.mrf.mxu0
        %v3644 = vpop.f32.mrf.mxu0
        %v3645 = vadd.f32 0.0, %v3644
        %v3646 = vpop.f32.mrf.mxu0
        %3647 = vmatprep.mubr.bf16.mxu0 %v3508
        %3648 = vmatmul.mubr.bf16.gmra.mxu0 %v3375
        %v3649 = vpop.f32.mrf.mxu0
        %v3650 = vadd.f32 0.0, %v3649
        %v3651 = vpop.f32.mrf.mxu0
        %v3652 = vpop.f32.mrf.mxu0
        %v3653 = vadd.f32 0.0, %v3652
        %v3654 = vpop.f32.mrf.mxu0
        %3655 = vmatprep.mubr.bf16.mxu0 %v3511
        %3656 = vmatmul.mubr.bf16.gmra.mxu0 %v3377
        %v3657 = vpop.f32.mrf.mxu0
        %v3658 = vadd.f32 0.0, %v3657
        %v3659 = vpop.f32.mrf.mxu0
        %v3660 = vpop.f32.mrf.mxu0
        %v3661 = vadd.f32 0.0, %v3660
        %v3662 = vpop.f32.mrf.mxu0
        %3663 = vmatprep.mubr.bf16.mxu0 %v3514
        %3664 = vmatmul.mubr.bf16.gmra.mxu0 %v3379
        %v3665 = vpop.f32.mrf.mxu0
        %v3666 = vadd.f32 0.0, %v3665
        %v3667 = vpop.f32.mrf.mxu0
        %v3668 = vpop.f32.mrf.mxu0
        %v3669 = vadd.f32 0.0, %v3668
        %v3670 = vpop.f32.mrf.mxu0
        %3671 = vmatprep.mubr.bf16.mxu0 %v3517
        %3672 = vmatmul.mubr.bf16.gmra.mxu0 %v3381
        %v3673 = vpop.f32.mrf.mxu0
        %v3674 = vadd.f32 0.0, %v3673
        %v3675 = vpop.f32.mrf.mxu0
        %v3676 = vpop.f32.mrf.mxu0
        %v3677 = vadd.f32 0.0, %v3676
        %v3678 = vpop.f32.mrf.mxu0
        %3679 = vdwg.mxu0
        %v3680 = vadd.f32 %v2998, %v3554
        %v3681 = vadd.f32 %v3001, %v3557
        %v3682 = vadd.f32 %v3006, %v3562
        %v3683 = vadd.f32 %v3009, %v3565
        %v3684 = vadd.f32 %v3014, %v3570
        %v3685 = vadd.f32 %v3017, %v3573
        %v3686 = vadd.f32 %v3022, %v3578
        %v3687 = vadd.f32 %v3025, %v3581
        %v3688 = vadd.f32 %v3030, %v3586
        %v3689 = vadd.f32 %v3033, %v3589
        %v3690 = vadd.f32 %v3038, %v3594
        %v3691 = vadd.f32 %v3041, %v3597
        %v3692 = vadd.f32 %v3046, %v3602
        %v3693 = vadd.f32 %v3049, %v3605
        %v3694 = vadd.f32 %v3054, %v3610
        %v3695 = vadd.f32 %v3057, %v3613
        %v3696 = vadd.f32 %v3062, %v3618
        %v3697 = vadd.f32 %v3065, %v3621
        %v3698 = vadd.f32 %v3070, %v3626
        %v3699 = vadd.f32 %v3073, %v3629
        %v3700 = vadd.f32 %v3078, %v3634
        %v3701 = vadd.f32 %v3081, %v3637
        %v3702 = vadd.f32 %v3086, %v3642
        %v3703 = vadd.f32 %v3089, %v3645
        %v3704 = vadd.f32 %v3094, %v3650
        %v3705 = vadd.f32 %v3097, %v3653
        %v3706 = vadd.f32 %v3102, %v3658
        %v3707 = vadd.f32 %v3105, %v3661
        %v3708 = vadd.f32 %v3110, %v3666
        %v3709 = vadd.f32 %v3113, %v3669
        %v3710 = vadd.f32 %v3118, %v3674
        %v3711 = vadd.f32 %v3121, %v3677
        %vm3712 = vcmask 261120
        %v3713 = vsel %vm3712, %v3680, 0.0
        %v3714 = vsel %vm3712, %v3681, 0.0
        %v3715 = vadd.f32 %v3713, %v3714
        %v3716 = vsel %vm3712, %v3682, 0.0
        %v3717 = vadd.f32 %v3715, %v3716
        %v3718 = vsel %vm3712, %v3683, 0.0
        %v3719 = vadd.f32 %v3717, %v3718
        %v3720 = vsel %vm3712, %v3684, 0.0
        %v3721 = vadd.f32 %v3719, %v3720
        %v3722 = vsel %vm3712, %v3685, 0.0
        %v3723 = vadd.f32 %v3721, %v3722
        %v3724 = vsel %vm3712, %v3686, 0.0
        %v3725 = vadd.f32 %v3723, %v3724
        %v3726 = vsel %vm3712, %v3687, 0.0
        %v3727 = vadd.f32 %v3725, %v3726
        %v3728 = vsel %vm3712, %v3688, 0.0
        %v3729 = vadd.f32 %v3727, %v3728
        %v3730 = vsel %vm3712, %v3689, 0.0
        %v3731 = vadd.f32 %v3729, %v3730
        %v3732 = vsel %vm3712, %v3690, 0.0
        %v3733 = vadd.f32 %v3731, %v3732
        %v3734 = vsel %vm3712, %v3691, 0.0
        %v3735 = vadd.f32 %v3733, %v3734
        %v3736 = vsel %vm3712, %v3692, 0.0
        %v3737 = vadd.f32 %v3735, %v3736
        %v3738 = vsel %vm3712, %v3693, 0.0
        %v3739 = vadd.f32 %v3737, %v3738
        %v3740 = vsel %vm3712, %v3694, 0.0
        %v3741 = vadd.f32 %v3739, %v3740
        %v3742 = vsel %vm3712, %v3695, 0.0
        %v3743 = vadd.f32 %v3741, %v3742
        %v3744 = vsel %vm3712, %v3696, 0.0
        %v3745 = vadd.f32 %v3743, %v3744
        %v3746 = vsel %vm3712, %v3697, 0.0
        %v3747 = vadd.f32 %v3745, %v3746
        %v3748 = vsel %vm3712, %v3698, 0.0
        %v3749 = vadd.f32 %v3747, %v3748
        %v3750 = vsel %vm3712, %v3699, 0.0
        %v3751 = vadd.f32 %v3749, %v3750
        %v3752 = vsel %vm3712, %v3700, 0.0
        %v3753 = vadd.f32 %v3751, %v3752
        %v3754 = vsel %vm3712, %v3701, 0.0
        %v3755 = vadd.f32 %v3753, %v3754
        %v3756 = vsel %vm3712, %v3702, 0.0
        %v3757 = vadd.f32 %v3755, %v3756
        %v3758 = vsel %vm3712, %v3703, 0.0
        %v3759 = vadd.f32 %v3757, %v3758
        %v3760 = vsel %vm3712, %v3704, 0.0
        %v3761 = vadd.f32 %v3759, %v3760
        %v3762 = vsel %vm3712, %v3705, 0.0
        %v3763 = vadd.f32 %v3761, %v3762
        %v3764 = vsel %vm3712, %v3706, 0.0
        %v3765 = vadd.f32 %v3763, %v3764
        %v3766 = vsel %vm3712, %v3707, 0.0
        %v3767 = vadd.f32 %v3765, %v3766
        %v3768 = vsel %vm3712, %v3708, 0.0
        %v3769 = vadd.f32 %v3767, %v3768
        %v3770 = vsel %vm3712, %v3709, 0.0
        %v3771 = vadd.f32 %v3769, %v3770
        %v3772 = vsel %vm3712, %v3710, 0.0
        %v3773 = vadd.f32 %v3771, %v3772
        %v3774 = vsel %vm3712, %v3711, 0.0
        %v3775 = vadd.f32 %v3773, %v3774
        %v3776 = vrot.slane %v3775, 4
        %v3777 = vadd.f32 %v3775, %v3776
        %v3778 = vrot.slane %v3777, 2
        %v3779 = vadd.f32 %v3777, %v3778
        %v3780 = vrot.slane %v3779, 1
        %v3781 = vadd.f32 %v3779, %v3780
        %v3782 = vrcp.pop 256.0
        %v3783 = vmul.f32 %v3781, %v3782
        %v3784 = vsub.f32 %v3680, %v3783
        %v3785 = vsub.f32 %v3681, %v3783
        %v3786 = vsub.f32 %v3682, %v3783
        %v3787 = vsub.f32 %v3683, %v3783
        %v3788 = vsub.f32 %v3684, %v3783
        %v3789 = vsub.f32 %v3685, %v3783
        %v3790 = vsub.f32 %v3686, %v3783
        %v3791 = vsub.f32 %v3687, %v3783
        %v3792 = vsub.f32 %v3688, %v3783
        %v3793 = vsub.f32 %v3689, %v3783
        %v3794 = vsub.f32 %v3690, %v3783
        %v3795 = vsub.f32 %v3691, %v3783
        %v3796 = vsub.f32 %v3692, %v3783
        %v3797 = vsub.f32 %v3693, %v3783
        %v3798 = vsub.f32 %v3694, %v3783
        %v3799 = vsub.f32 %v3695, %v3783
        %v3800 = vsub.f32 %v3696, %v3783
        %v3801 = vsub.f32 %v3697, %v3783
        %v3802 = vsub.f32 %v3698, %v3783
        %v3803 = vsub.f32 %v3699, %v3783
        %v3804 = vsub.f32 %v3700, %v3783
        %v3805 = vsub.f32 %v3701, %v3783
        %v3806 = vsub.f32 %v3702, %v3783
        %v3807 = vsub.f32 %v3703, %v3783
        %v3808 = vsub.f32 %v3704, %v3783
        %v3809 = vsub.f32 %v3705, %v3783
        %v3810 = vsub.f32 %v3706, %v3783
        %v3811 = vsub.f32 %v3707, %v3783
        %v3812 = vsub.f32 %v3708, %v3783
        %v3813 = vsub.f32 %v3709, %v3783
        %v3814 = vsub.f32 %v3710, %v3783
        %v3815 = vsub.f32 %v3711, %v3783
        %v3816 = vmul.f32 %v3784, %v3784
        %v3817 = vmul.f32 %v3785, %v3785
        %v3818 = vmul.f32 %v3786, %v3786
        %v3819 = vmul.f32 %v3787, %v3787
        %v3820 = vmul.f32 %v3788, %v3788
        %v3821 = vmul.f32 %v3789, %v3789
        %v3822 = vmul.f32 %v3790, %v3790
        %v3823 = vmul.f32 %v3791, %v3791
        %v3824 = vmul.f32 %v3792, %v3792
        %v3825 = vmul.f32 %v3793, %v3793
        %v3826 = vmul.f32 %v3794, %v3794
        %v3827 = vmul.f32 %v3795, %v3795
        %v3828 = vmul.f32 %v3796, %v3796
        %v3829 = vmul.f32 %v3797, %v3797
        %v3830 = vmul.f32 %v3798, %v3798
        %v3831 = vmul.f32 %v3799, %v3799
        %v3832 = vmul.f32 %v3800, %v3800
        %v3833 = vmul.f32 %v3801, %v3801
        %v3834 = vmul.f32 %v3802, %v3802
        %v3835 = vmul.f32 %v3803, %v3803
        %v3836 = vmul.f32 %v3804, %v3804
        %v3837 = vmul.f32 %v3805, %v3805
        %v3838 = vmul.f32 %v3806, %v3806
        %v3839 = vmul.f32 %v3807, %v3807
        %v3840 = vmul.f32 %v3808, %v3808
        %v3841 = vmul.f32 %v3809, %v3809
        %v3842 = vmul.f32 %v3810, %v3810
        %v3843 = vmul.f32 %v3811, %v3811
        %v3844 = vmul.f32 %v3812, %v3812
        %v3845 = vmul.f32 %v3813, %v3813
        %v3846 = vmul.f32 %v3814, %v3814
        %v3847 = vmul.f32 %v3815, %v3815
        %v3848 = vsel %vm3712, %v3816, 0.0
        %v3849 = vsel %vm3712, %v3817, 0.0
        %v3850 = vadd.f32 %v3848, %v3849
        %v3851 = vsel %vm3712, %v3818, 0.0
        %v3852 = vadd.f32 %v3850, %v3851
        %v3853 = vsel %vm3712, %v3819, 0.0
        %v3854 = vadd.f32 %v3852, %v3853
        %v3855 = vsel %vm3712, %v3820, 0.0
        %v3856 = vadd.f32 %v3854, %v3855
        %v3857 = vsel %vm3712, %v3821, 0.0
        %v3858 = vadd.f32 %v3856, %v3857
        %v3859 = vsel %vm3712, %v3822, 0.0
        %v3860 = vadd.f32 %v3858, %v3859
        %v3861 = vsel %vm3712, %v3823, 0.0
        %v3862 = vadd.f32 %v3860, %v3861
        %v3863 = vsel %vm3712, %v3824, 0.0
        %v3864 = vadd.f32 %v3862, %v3863
        %v3865 = vsel %vm3712, %v3825, 0.0
        %v3866 = vadd.f32 %v3864, %v3865
        %v3867 = vsel %vm3712, %v3826, 0.0
        %v3868 = vadd.f32 %v3866, %v3867
        %v3869 = vsel %vm3712, %v3827, 0.0
        %v3870 = vadd.f32 %v3868, %v3869
        %v3871 = vsel %vm3712, %v3828, 0.0
        %v3872 = vadd.f32 %v3870, %v3871
        %v3873 = vsel %vm3712, %v3829, 0.0
        %v3874 = vadd.f32 %v3872, %v3873
        %v3875 = vsel %vm3712, %v3830, 0.0
        %v3876 = vadd.f32 %v3874, %v3875
        %v3877 = vsel %vm3712, %v3831, 0.0
        %v3878 = vadd.f32 %v3876, %v3877
        %v3879 = vsel %vm3712, %v3832, 0.0
        %v3880 = vadd.f32 %v3878, %v3879
        %v3881 = vsel %vm3712, %v3833, 0.0
        %v3882 = vadd.f32 %v3880, %v3881
        %v3883 = vsel %vm3712, %v3834, 0.0
        %v3884 = vadd.f32 %v3882, %v3883
        %v3885 = vsel %vm3712, %v3835, 0.0
        %v3886 = vadd.f32 %v3884, %v3885
        %v3887 = vsel %vm3712, %v3836, 0.0
        %v3888 = vadd.f32 %v3886, %v3887
        %v3889 = vsel %vm3712, %v3837, 0.0
        %v3890 = vadd.f32 %v3888, %v3889
        %v3891 = vsel %vm3712, %v3838, 0.0
        %v3892 = vadd.f32 %v3890, %v3891
        %v3893 = vsel %vm3712, %v3839, 0.0
        %v3894 = vadd.f32 %v3892, %v3893
        %v3895 = vsel %vm3712, %v3840, 0.0
        %v3896 = vadd.f32 %v3894, %v3895
        %v3897 = vsel %vm3712, %v3841, 0.0
        %v3898 = vadd.f32 %v3896, %v3897
        %v3899 = vsel %vm3712, %v3842, 0.0
        %v3900 = vadd.f32 %v3898, %v3899
        %v3901 = vsel %vm3712, %v3843, 0.0
        %v3902 = vadd.f32 %v3900, %v3901
        %v3903 = vsel %vm3712, %v3844, 0.0
        %v3904 = vadd.f32 %v3902, %v3903
        %v3905 = vsel %vm3712, %v3845, 0.0
        %v3906 = vadd.f32 %v3904, %v3905
        %v3907 = vsel %vm3712, %v3846, 0.0
        %v3908 = vadd.f32 %v3906, %v3907
        %v3909 = vsel %vm3712, %v3847, 0.0
        %v3910 = vadd.f32 %v3908, %v3909
        %v3911 = vrot.slane %v3910, 4
        %v3912 = vadd.f32 %v3910, %v3911
        %v3913 = vrot.slane %v3912, 2
        %v3914 = vadd.f32 %v3912, %v3913
        %v3915 = vrot.slane %v3914, 1
        %v3916 = vadd.f32 %v3914, %v3915
        %v3917 = vmul.f32 %v3916, %v3782
        %v3918 = vadd.f32 %v3917, 1e-05
        %v3919 = vrsqrt.pop %v3918
        %v3920 = vmul.f32 %v3784, %v3919
        %v3921 = vmul.f32 %v3785, %v3919
        %v3922 = vmul.f32 %v3786, %v3919
        %v3923 = vmul.f32 %v3787, %v3919
        %v3924 = vmul.f32 %v3788, %v3919
        %v3925 = vmul.f32 %v3789, %v3919
        %v3926 = vmul.f32 %v3790, %v3919
        %v3927 = vmul.f32 %v3791, %v3919
        %v3928 = vmul.f32 %v3792, %v3919
        %v3929 = vmul.f32 %v3793, %v3919
        %v3930 = vmul.f32 %v3794, %v3919
        %v3931 = vmul.f32 %v3795, %v3919
        %v3932 = vmul.f32 %v3796, %v3919
        %v3933 = vmul.f32 %v3797, %v3919
        %v3934 = vmul.f32 %v3798, %v3919
        %v3935 = vmul.f32 %v3799, %v3919
        %v3936 = vmul.f32 %v3800, %v3919
        %v3937 = vmul.f32 %v3801, %v3919
        %v3938 = vmul.f32 %v3802, %v3919
        %v3939 = vmul.f32 %v3803, %v3919
        %v3940 = vmul.f32 %v3804, %v3919
        %v3941 = vmul.f32 %v3805, %v3919
        %v3942 = vmul.f32 %v3806, %v3919
        %v3943 = vmul.f32 %v3807, %v3919
        %v3944 = vmul.f32 %v3808, %v3919
        %v3945 = vmul.f32 %v3809, %v3919
        %v3946 = vmul.f32 %v3810, %v3919
        %v3947 = vmul.f32 %v3811, %v3919
        %v3948 = vmul.f32 %v3812, %v3919
        %v3949 = vmul.f32 %v3813, %v3919
        %v3950 = vmul.f32 %v3814, %v3919
        %v3951 = vmul.f32 %v3815, %v3919
        %v3953 = vlaneseq
        %v3954 = vshrl.u32 %v3953, 7
        %v3955 = vsub.s32 0, %v3954
        %v3956 = vrot.slane %v494, %v3955
        %v3958 = vmul.f32 %v3920, %v3956
        %v3959 = vmul.f32 %v3921, %v3956
        %v3960 = vmul.f32 %v3922, %v3956
        %v3961 = vmul.f32 %v3923, %v3956
        %v3962 = vmul.f32 %v3924, %v3956
        %v3963 = vmul.f32 %v3925, %v3956
        %v3964 = vmul.f32 %v3926, %v3956
        %v3965 = vmul.f32 %v3927, %v3956
        %v3966 = vmul.f32 %v3928, %v3956
        %v3967 = vmul.f32 %v3929, %v3956
        %v3968 = vmul.f32 %v3930, %v3956
        %v3969 = vmul.f32 %v3931, %v3956
        %v3970 = vmul.f32 %v3932, %v3956
        %v3971 = vmul.f32 %v3933, %v3956
        %v3972 = vmul.f32 %v3934, %v3956
        %v3973 = vmul.f32 %v3935, %v3956
        %v3974 = vmul.f32 %v3936, %v3956
        %v3975 = vmul.f32 %v3937, %v3956
        %v3976 = vmul.f32 %v3938, %v3956
        %v3977 = vmul.f32 %v3939, %v3956
        %v3978 = vmul.f32 %v3940, %v3956
        %v3979 = vmul.f32 %v3941, %v3956
        %v3980 = vmul.f32 %v3942, %v3956
        %v3981 = vmul.f32 %v3943, %v3956
        %v3982 = vmul.f32 %v3944, %v3956
        %v3983 = vmul.f32 %v3945, %v3956
        %v3984 = vmul.f32 %v3946, %v3956
        %v3985 = vmul.f32 %v3947, %v3956
        %v3986 = vmul.f32 %v3948, %v3956
        %v3987 = vmul.f32 %v3949, %v3956
        %v3988 = vmul.f32 %v3950, %v3956
        %v3989 = vmul.f32 %v3951, %v3956
        %v3991 = vlaneseq
        %v3992 = vshrl.u32 %v3991, 7
        %v3993 = vsub.s32 0, %v3992
        %v3994 = vrot.slane %v495, %v3993
        %v3996 = vadd.f32 %v3958, %v3994
        %v3997 = vadd.f32 %v3959, %v3994
        %v3998 = vadd.f32 %v3960, %v3994
        %v3999 = vadd.f32 %v3961, %v3994
        %v4000 = vadd.f32 %v3962, %v3994
        %v4001 = vadd.f32 %v3963, %v3994
        %v4002 = vadd.f32 %v3964, %v3994
        %v4003 = vadd.f32 %v3965, %v3994
        %v4004 = vadd.f32 %v3966, %v3994
        %v4005 = vadd.f32 %v3967, %v3994
        %v4006 = vadd.f32 %v3968, %v3994
        %v4007 = vadd.f32 %v3969, %v3994
        %v4008 = vadd.f32 %v3970, %v3994
        %v4009 = vadd.f32 %v3971, %v3994
        %v4010 = vadd.f32 %v3972, %v3994
        %v4011 = vadd.f32 %v3973, %v3994
        %v4012 = vadd.f32 %v3974, %v3994
        %v4013 = vadd.f32 %v3975, %v3994
        %v4014 = vadd.f32 %v3976, %v3994
        %v4015 = vadd.f32 %v3977, %v3994
        %v4016 = vadd.f32 %v3978, %v3994
        %v4017 = vadd.f32 %v3979, %v3994
        %v4018 = vadd.f32 %v3980, %v3994
        %v4019 = vadd.f32 %v3981, %v3994
        %v4020 = vadd.f32 %v3982, %v3994
        %v4021 = vadd.f32 %v3983, %v3994
        %v4022 = vadd.f32 %v3984, %v3994
        %v4023 = vadd.f32 %v3985, %v3994
        %v4024 = vadd.f32 %v3986, %v3994
        %v4025 = vadd.f32 %v3987, %v3994
        %v4026 = vadd.f32 %v3988, %v3994
        %v4027 = vadd.f32 %v3989, %v3994
        %v4028 = vmax.f32 %v3996, 0.0
        %v4029 = vmax.f32 %v3997, 0.0
        %v4030 = vmax.f32 %v3998, 0.0
        %v4031 = vmax.f32 %v3999, 0.0
        %v4032 = vmax.f32 %v4000, 0.0
        %v4033 = vmax.f32 %v4001, 0.0
        %v4034 = vmax.f32 %v4002, 0.0
        %v4035 = vmax.f32 %v4003, 0.0
        %v4036 = vmax.f32 %v4004, 0.0
        %v4037 = vmax.f32 %v4005, 0.0
        %v4038 = vmax.f32 %v4006, 0.0
        %v4039 = vmax.f32 %v4007, 0.0
        %v4040 = vmax.f32 %v4008, 0.0
        %v4041 = vmax.f32 %v4009, 0.0
        %v4042 = vmax.f32 %v4010, 0.0
        %v4043 = vmax.f32 %v4011, 0.0
        %v4044 = vmax.f32 %v4012, 0.0
        %v4045 = vmax.f32 %v4013, 0.0
        %v4046 = vmax.f32 %v4014, 0.0
        %v4047 = vmax.f32 %v4015, 0.0
        %v4048 = vmax.f32 %v4016, 0.0
        %v4049 = vmax.f32 %v4017, 0.0
        %v4050 = vmax.f32 %v4018, 0.0
        %v4051 = vmax.f32 %v4019, 0.0
        %v4052 = vmax.f32 %v4020, 0.0
        %v4053 = vmax.f32 %v4021, 0.0
        %v4054 = vmax.f32 %v4022, 0.0
        %v4055 = vmax.f32 %v4023, 0.0
        %v4056 = vmax.f32 %v4024, 0.0
        %v4057 = vmax.f32 %v4025, 0.0
        %v4058 = vmax.f32 %v4026, 0.0
        %v4059 = vmax.f32 %v4027, 0.0
        %v4060 = vpack.c.bf16 %v4029, %v4028
        %v4061 = vpack.c.bf16 %v4031, %v4030
        %v4062 = vpack.c.bf16 %v4033, %v4032
        %v4063 = vpack.c.bf16 %v4035, %v4034
        %v4064 = vpack.c.bf16 %v4037, %v4036
        %v4065 = vpack.c.bf16 %v4039, %v4038
        %v4066 = vpack.c.bf16 %v4041, %v4040
        %v4067 = vpack.c.bf16 %v4043, %v4042
        %v4068 = vpack.c.bf16 %v4045, %v4044
        %v4069 = vpack.c.bf16 %v4047, %v4046
        %v4070 = vpack.c.bf16 %v4049, %v4048
        %v4071 = vpack.c.bf16 %v4051, %v4050
        %v4072 = vpack.c.bf16 %v4053, %v4052
        %v4073 = vpack.c.bf16 %v4055, %v4054
        %v4074 = vpack.c.bf16 %v4057, %v4056
        %v4075 = vpack.c.bf16 %v4059, %v4058
        %v4092 = vunpack.c.l.b16 %v4060
        %v4093 = vunpack.c.h.b16 %v4060
        %v4094 = vunpack.c.l.b16 %v4061
        %v4095 = vunpack.c.h.b16 %v4061
        %v4096 = vunpack.c.l.b16 %v4062
        %v4097 = vunpack.c.h.b16 %v4062
        %v4098 = vunpack.c.l.b16 %v4063
        %v4099 = vunpack.c.h.b16 %v4063
        %v4100 = vunpack.c.l.b16 %v4064
        %v4101 = vunpack.c.h.b16 %v4064
        %v4102 = vunpack.c.l.b16 %v4065
        %v4103 = vunpack.c.h.b16 %v4065
        %v4104 = vunpack.c.l.b16 %v4066
        %v4105 = vunpack.c.h.b16 %v4066
        %v4106 = vunpack.c.l.b16 %v4067
        %v4107 = vunpack.c.h.b16 %v4067
        %v4108 = vunpack.c.l.b16 %v4068
        %v4109 = vunpack.c.h.b16 %v4068
        %v4110 = vunpack.c.l.b16 %v4069
        %v4111 = vunpack.c.h.b16 %v4069
        %v4112 = vunpack.c.l.b16 %v4070
        %v4113 = vunpack.c.h.b16 %v4070
        %v4114 = vunpack.c.l.b16 %v4071
        %v4115 = vunpack.c.h.b16 %v4071
        %v4116 = vunpack.c.l.b16 %v4072
        %v4117 = vunpack.c.h.b16 %v4072
        %v4118 = vunpack.c.l.b16 %v4073
        %v4119 = vunpack.c.h.b16 %v4073
        %v4120 = vunpack.c.l.b16 %v4074
        %v4121 = vunpack.c.h.b16 %v4074
        %v4122 = vunpack.c.l.b16 %v4075
        %v4123 = vunpack.c.h.b16 %v4075
        %v4124 = vpack.c.b16 %v4092, %v4092
        %v4125 = vpack.c.b16 %v4093, %v4093
        %v4126 = vpack.c.b16 %v4094, %v4094
        %v4127 = vpack.c.b16 %v4095, %v4095
        %v4128 = vpack.c.b16 %v4096, %v4096
        %v4129 = vpack.c.b16 %v4097, %v4097
        %v4130 = vpack.c.b16 %v4098, %v4098
        %v4131 = vpack.c.b16 %v4099, %v4099
        %v4132 = vpack.c.b16 %v4100, %v4100
        %v4133 = vpack.c.b16 %v4101, %v4101
        %v4134 = vpack.c.b16 %v4102, %v4102
        %v4135 = vpack.c.b16 %v4103, %v4103
        %v4136 = vpack.c.b16 %v4104, %v4104
        %v4137 = vpack.c.b16 %v4105, %v4105
        %v4138 = vpack.c.b16 %v4106, %v4106
        %v4139 = vpack.c.b16 %v4107, %v4107
        %v4140 = vpack.c.b16 %v4108, %v4108
        %v4141 = vpack.c.b16 %v4109, %v4109
        %v4142 = vpack.c.b16 %v4110, %v4110
        %v4143 = vpack.c.b16 %v4111, %v4111
        %v4144 = vpack.c.b16 %v4112, %v4112
        %v4145 = vpack.c.b16 %v4113, %v4113
        %v4146 = vpack.c.b16 %v4114, %v4114
        %v4147 = vpack.c.b16 %v4115, %v4115
        %v4148 = vpack.c.b16 %v4116, %v4116
        %v4149 = vpack.c.b16 %v4117, %v4117
        %v4150 = vpack.c.b16 %v4118, %v4118
        %v4151 = vpack.c.b16 %v4119, %v4119
        %v4152 = vpack.c.b16 %v4120, %v4120
        %v4153 = vpack.c.b16 %v4121, %v4121
        %v4154 = vpack.c.b16 %v4122, %v4122
        %v4155 = vpack.c.b16 %v4123, %v4123
        %v4157 = vshrl.u32 %v4124, 16
        %v4159 = vrot.slane %v4157, 7
        %v4160 = vshll.u32 %v4124, 16
        %v4162 = vor.u32 %v4159, %v4160
        %v4163 = vrot.slane %v4159, 4
        %v4165 = vshrl.u32 %v4125, 16
        %v4167 = vrot.slane %v4165, 7
        %v4168 = vshll.u32 %v4125, 16
        %v4170 = vor.u32 %v4167, %v4168
        %v4171 = vsel %vm642, %v4163, %v4170
        %v4172 = vrot.slane %v4167, 4
        %v4174 = vshrl.u32 %v4126, 16
        %v4176 = vrot.slane %v4174, 7
        %v4177 = vshll.u32 %v4126, 16
        %v4179 = vor.u32 %v4176, %v4177
        %v4180 = vrot.slane %v4176, 4
        %v4182 = vshrl.u32 %v4127, 16
        %v4184 = vrot.slane %v4182, 7
        %v4185 = vshll.u32 %v4127, 16
        %v4187 = vor.u32 %v4184, %v4185
        %v4188 = vsel %vm642, %v4180, %v4187
        %v4189 = vrot.slane %v4184, 4
        %v4191 = vshrl.u32 %v4128, 16
        %v4193 = vrot.slane %v4191, 7
        %v4194 = vshll.u32 %v4128, 16
        %v4196 = vor.u32 %v4193, %v4194
        %v4197 = vrot.slane %v4193, 4
        %v4199 = vshrl.u32 %v4129, 16
        %v4201 = vrot.slane %v4199, 7
        %v4202 = vshll.u32 %v4129, 16
        %v4204 = vor.u32 %v4201, %v4202
        %v4205 = vsel %vm642, %v4197, %v4204
        %v4206 = vrot.slane %v4201, 4
        %v4208 = vshrl.u32 %v4130, 16
        %v4210 = vrot.slane %v4208, 7
        %v4211 = vshll.u32 %v4130, 16
        %v4213 = vor.u32 %v4210, %v4211
        %v4214 = vrot.slane %v4210, 4
        %v4216 = vshrl.u32 %v4131, 16
        %v4218 = vrot.slane %v4216, 7
        %v4219 = vshll.u32 %v4131, 16
        %v4221 = vor.u32 %v4218, %v4219
        %v4222 = vsel %vm642, %v4214, %v4221
        %v4223 = vrot.slane %v4218, 4
        %v4225 = vshrl.u32 %v4132, 16
        %v4227 = vrot.slane %v4225, 7
        %v4228 = vshll.u32 %v4132, 16
        %v4230 = vor.u32 %v4227, %v4228
        %v4231 = vrot.slane %v4227, 4
        %v4233 = vshrl.u32 %v4133, 16
        %v4235 = vrot.slane %v4233, 7
        %v4236 = vshll.u32 %v4133, 16
        %v4238 = vor.u32 %v4235, %v4236
        %v4239 = vsel %vm642, %v4231, %v4238
        %v4240 = vrot.slane %v4235, 4
        %v4242 = vshrl.u32 %v4134, 16
        %v4244 = vrot.slane %v4242, 7
        %v4245 = vshll.u32 %v4134, 16
        %v4247 = vor.u32 %v4244, %v4245
        %v4248 = vrot.slane %v4244, 4
        %v4250 = vshrl.u32 %v4135, 16
        %v4252 = vrot.slane %v4250, 7
        %v4253 = vshll.u32 %v4135, 16
        %v4255 = vor.u32 %v4252, %v4253
        %v4256 = vsel %vm642, %v4248, %v4255
        %v4257 = vrot.slane %v4252, 4
        %v4259 = vshrl.u32 %v4136, 16
        %v4261 = vrot.slane %v4259, 7
        %v4262 = vshll.u32 %v4136, 16
        %v4264 = vor.u32 %v4261, %v4262
        %v4265 = vrot.slane %v4261, 4
        %v4267 = vshrl.u32 %v4137, 16
        %v4269 = vrot.slane %v4267, 7
        %v4270 = vshll.u32 %v4137, 16
        %v4272 = vor.u32 %v4269, %v4270
        %v4273 = vsel %vm642, %v4265, %v4272
        %v4274 = vrot.slane %v4269, 4
        %v4276 = vshrl.u32 %v4138, 16
        %v4278 = vrot.slane %v4276, 7
        %v4279 = vshll.u32 %v4138, 16
        %v4281 = vor.u32 %v4278, %v4279
        %v4282 = vrot.slane %v4278, 4
        %v4284 = vshrl.u32 %v4139, 16
        %v4286 = vrot.slane %v4284, 7
        %v4287 = vshll.u32 %v4139, 16
        %v4289 = vor.u32 %v4286, %v4287
        %v4290 = vsel %vm642, %v4282, %v4289
        %v4291 = vrot.slane %v4286, 4
        %v4293 = vshrl.u32 %v4140, 16
        %v4295 = vrot.slane %v4293, 7
        %v4296 = vshll.u32 %v4140, 16
        %v4298 = vor.u32 %v4295, %v4296
        %v4299 = vrot.slane %v4295, 4
        %v4301 = vshrl.u32 %v4141, 16
        %v4303 = vrot.slane %v4301, 7
        %v4304 = vshll.u32 %v4141, 16
        %v4306 = vor.u32 %v4303, %v4304
        %v4307 = vsel %vm642, %v4299, %v4306
        %v4308 = vrot.slane %v4303, 4
        %v4310 = vshrl.u32 %v4142, 16
        %v4312 = vrot.slane %v4310, 7
        %v4313 = vshll.u32 %v4142, 16
        %v4315 = vor.u32 %v4312, %v4313
        %v4316 = vrot.slane %v4312, 4
        %v4318 = vshrl.u32 %v4143, 16
        %v4320 = vrot.slane %v4318, 7
        %v4321 = vshll.u32 %v4143, 16
        %v4323 = vor.u32 %v4320, %v4321
        %v4324 = vsel %vm642, %v4316, %v4323
        %v4325 = vrot.slane %v4320, 4
        %v4327 = vshrl.u32 %v4144, 16
        %v4329 = vrot.slane %v4327, 7
        %v4330 = vshll.u32 %v4144, 16
        %v4332 = vor.u32 %v4329, %v4330
        %v4333 = vrot.slane %v4329, 4
        %v4335 = vshrl.u32 %v4145, 16
        %v4337 = vrot.slane %v4335, 7
        %v4338 = vshll.u32 %v4145, 16
        %v4340 = vor.u32 %v4337, %v4338
        %v4341 = vsel %vm642, %v4333, %v4340
        %v4342 = vrot.slane %v4337, 4
        %v4344 = vshrl.u32 %v4146, 16
        %v4346 = vrot.slane %v4344, 7
        %v4347 = vshll.u32 %v4146, 16
        %v4349 = vor.u32 %v4346, %v4347
        %v4350 = vrot.slane %v4346, 4
        %v4352 = vshrl.u32 %v4147, 16
        %v4354 = vrot.slane %v4352, 7
        %v4355 = vshll.u32 %v4147, 16
        %v4357 = vor.u32 %v4354, %v4355
        %v4358 = vsel %vm642, %v4350, %v4357
        %v4359 = vrot.slane %v4354, 4
        %v4361 = vshrl.u32 %v4148, 16
        %v4363 = vrot.slane %v4361, 7
        %v4364 = vshll.u32 %v4148, 16
        %v4366 = vor.u32 %v4363, %v4364
        %v4367 = vrot.slane %v4363, 4
        %v4369 = vshrl.u32 %v4149, 16
        %v4371 = vrot.slane %v4369, 7
        %v4372 = vshll.u32 %v4149, 16
        %v4374 = vor.u32 %v4371, %v4372
        %v4375 = vsel %vm642, %v4367, %v4374
        %v4376 = vrot.slane %v4371, 4
        %v4378 = vshrl.u32 %v4150, 16
        %v4380 = vrot.slane %v4378, 7
        %v4381 = vshll.u32 %v4150, 16
        %v4383 = vor.u32 %v4380, %v4381
        %v4384 = vrot.slane %v4380, 4
        %v4386 = vshrl.u32 %v4151, 16
        %v4388 = vrot.slane %v4386, 7
        %v4389 = vshll.u32 %v4151, 16
        %v4391 = vor.u32 %v4388, %v4389
        %v4392 = vsel %vm642, %v4384, %v4391
        %v4393 = vrot.slane %v4388, 4
        %v4395 = vshrl.u32 %v4152, 16
        %v4397 = vrot.slane %v4395, 7
        %v4398 = vshll.u32 %v4152, 16
        %v4400 = vor.u32 %v4397, %v4398
        %v4401 = vrot.slane %v4397, 4
        %v4403 = vshrl.u32 %v4153, 16
        %v4405 = vrot.slane %v4403, 7
        %v4406 = vshll.u32 %v4153, 16
        %v4408 = vor.u32 %v4405, %v4406
        %v4409 = vsel %vm642, %v4401, %v4408
        %v4410 = vrot.slane %v4405, 4
        %v4412 = vshrl.u32 %v4154, 16
        %v4414 = vrot.slane %v4412, 7
        %v4415 = vshll.u32 %v4154, 16
        %v4417 = vor.u32 %v4414, %v4415
        %v4418 = vrot.slane %v4414, 4
        %v4420 = vshrl.u32 %v4155, 16
        %v4422 = vrot.slane %v4420, 7
        %v4423 = vshll.u32 %v4155, 16
        %v4425 = vor.u32 %v4422, %v4423
        %v4426 = vsel %vm642, %v4418, %v4425
        %v4427 = vrot.slane %v4422, 4
        %s4476 = scalar_lea.vmem [#allocation4], 12
        %vm4477 = vcmask 257024
        %vm4478 = vmand %vm4477, %vm965
        %v4479 = vld [vmem:[%s4476] sm:$0xf]
        %v4480 = vsel %vm4478, %v4162, %v4479
        %4481 = vst [vmem:[%s4476] sm:$0xf] %v4480
        %vm4482 = vcmask 257024
        %4483 = vst.msk [vmem:[%s4476 + $0x4] sm:$0xf] %vm4482, %v4171
        %vm4484 = vcmask 253952
        %vm4485 = vmand %vm4484, %vm640
        %v4486 = vld [vmem:[%s4476 + $0x8] sm:$0x1]
        %v4487 = vsel %vm4485, %v4172, %v4486
        %4488 = vst [vmem:[%s4476 + $0x8] sm:$0x1] %v4487
        %v4489 = vld [vmem:[%s4476 + $0xc] sm:$0xf]
        %v4490 = vsel %vm4478, %v4179, %v4489
        %4491 = vst [vmem:[%s4476 + $0xc] sm:$0xf] %v4490
        %4492 = vst.msk [vmem:[%s4476 + $0x10] sm:$0xf] %vm4482, %v4188
        %v4493 = vld [vmem:[%s4476 + $0x14] sm:$0x1]
        %v4494 = vsel %vm4485, %v4189, %v4493
        %4495 = vst [vmem:[%s4476 + $0x14] sm:$0x1] %v4494
        %v4496 = vld [vmem:[%s4476 + $0x18] sm:$0xf]
        %v4497 = vsel %vm4478, %v4196, %v4496
        %4498 = vst [vmem:[%s4476 + $0x18] sm:$0xf] %v4497
        %4499 = vst.msk [vmem:[%s4476 + $0x1c] sm:$0xf] %vm4482, %v4205
        %v4500 = vld [vmem:[%s4476 + $0x20] sm:$0x1]
        %v4501 = vsel %vm4485, %v4206, %v4500
        %4502 = vst [vmem:[%s4476 + $0x20] sm:$0x1] %v4501
        %v4503 = vld [vmem:[%s4476 + $0x24] sm:$0xf]
        %v4504 = vsel %vm4478, %v4213, %v4503
        %4505 = vst [vmem:[%s4476 + $0x24] sm:$0xf] %v4504
        %4506 = vst.msk [vmem:[%s4476 + $0x28] sm:$0xf] %vm4482, %v4222
        %v4507 = vld [vmem:[%s4476 + $0x2c] sm:$0x1]
        %v4508 = vsel %vm4485, %v4223, %v4507
        %4509 = vst [vmem:[%s4476 + $0x2c] sm:$0x1] %v4508
        %v4510 = vld [vmem:[%s4476 + $0x30] sm:$0xf]
        %v4511 = vsel %vm4478, %v4230, %v4510
        %4512 = vst [vmem:[%s4476 + $0x30] sm:$0xf] %v4511
        %4513 = vst.msk [vmem:[%s4476 + $0x34] sm:$0xf] %vm4482, %v4239
        %v4514 = vld [vmem:[%s4476 + $0x38] sm:$0x1]
        %v4515 = vsel %vm4485, %v4240, %v4514
        %4516 = vst [vmem:[%s4476 + $0x38] sm:$0x1] %v4515
        %v4517 = vld [vmem:[%s4476 + $0x3c] sm:$0xf]
        %v4518 = vsel %vm4478, %v4247, %v4517
        %4519 = vst [vmem:[%s4476 + $0x3c] sm:$0xf] %v4518
        %4520 = vst.msk [vmem:[%s4476 + $0x40] sm:$0xf] %vm4482, %v4256
        %v4521 = vld [vmem:[%s4476 + $0x44] sm:$0x1]
        %v4522 = vsel %vm4485, %v4257, %v4521
        %4523 = vst [vmem:[%s4476 + $0x44] sm:$0x1] %v4522
        %v4524 = vld [vmem:[%s4476 + $0x48] sm:$0xf]
        %v4525 = vsel %vm4478, %v4264, %v4524
        %4526 = vst [vmem:[%s4476 + $0x48] sm:$0xf] %v4525
        %4527 = vst.msk [vmem:[%s4476 + $0x4c] sm:$0xf] %vm4482, %v4273
        %v4528 = vld [vmem:[%s4476 + $0x50] sm:$0x1]
        %v4529 = vsel %vm4485, %v4274, %v4528
        %4530 = vst [vmem:[%s4476 + $0x50] sm:$0x1] %v4529
        %v4531 = vld [vmem:[%s4476 + $0x54] sm:$0xf]
        %v4532 = vsel %vm4478, %v4281, %v4531
        %4533 = vst [vmem:[%s4476 + $0x54] sm:$0xf] %v4532
        %4534 = vst.msk [vmem:[%s4476 + $0x58] sm:$0xf] %vm4482, %v4290
        %v4535 = vld [vmem:[%s4476 + $0x5c] sm:$0x1]
        %v4536 = vsel %vm4485, %v4291, %v4535
        %4537 = vst [vmem:[%s4476 + $0x5c] sm:$0x1] %v4536
        %v4538 = vld [vmem:[%s4476 + $0x60] sm:$0xf]
        %v4539 = vsel %vm4478, %v4298, %v4538
        %4540 = vst [vmem:[%s4476 + $0x60] sm:$0xf] %v4539
        %4541 = vst.msk [vmem:[%s4476 + $0x64] sm:$0xf] %vm4482, %v4307
        %v4542 = vld [vmem:[%s4476 + $0x68] sm:$0x1]
        %v4543 = vsel %vm4485, %v4308, %v4542
        %4544 = vst [vmem:[%s4476 + $0x68] sm:$0x1] %v4543
        %v4545 = vld [vmem:[%s4476 + $0x6c] sm:$0xf]
        %v4546 = vsel %vm4478, %v4315, %v4545
        %4547 = vst [vmem:[%s4476 + $0x6c] sm:$0xf] %v4546
        %4548 = vst.msk [vmem:[%s4476 + $0x70] sm:$0xf] %vm4482, %v4324
        %v4549 = vld [vmem:[%s4476 + $0x74] sm:$0x1]
        %v4550 = vsel %vm4485, %v4325, %v4549
        %4551 = vst [vmem:[%s4476 + $0x74] sm:$0x1] %v4550
        %v4552 = vld [vmem:[%s4476 + $0x78] sm:$0xf]
        %v4553 = vsel %vm4478, %v4332, %v4552
        %4554 = vst [vmem:[%s4476 + $0x78] sm:$0xf] %v4553
        %4555 = vst.msk [vmem:[%s4476 + $0x7c] sm:$0xf] %vm4482, %v4341
        %v4556 = vld [vmem:[%s4476 + $0x80] sm:$0x1]
        %v4557 = vsel %vm4485, %v4342, %v4556
        %4558 = vst [vmem:[%s4476 + $0x80] sm:$0x1] %v4557
        %v4559 = vld [vmem:[%s4476 + $0x84] sm:$0xf]
        %v4560 = vsel %vm4478, %v4349, %v4559
        %4561 = vst [vmem:[%s4476 + $0x84] sm:$0xf] %v4560
        %4562 = vst.msk [vmem:[%s4476 + $0x88] sm:$0xf] %vm4482, %v4358
        %v4563 = vld [vmem:[%s4476 + $0x8c] sm:$0x1]
        %v4564 = vsel %vm4485, %v4359, %v4563
        %4565 = vst [vmem:[%s4476 + $0x8c] sm:$0x1] %v4564
        %v4566 = vld [vmem:[%s4476 + $0x90] sm:$0xf]
        %v4567 = vsel %vm4478, %v4366, %v4566
        %4568 = vst [vmem:[%s4476 + $0x90] sm:$0xf] %v4567
        %4569 = vst.msk [vmem:[%s4476 + $0x94] sm:$0xf] %vm4482, %v4375
        %v4570 = vld [vmem:[%s4476 + $0x98] sm:$0x1]
        %v4571 = vsel %vm4485, %v4376, %v4570
        %4572 = vst [vmem:[%s4476 + $0x98] sm:$0x1] %v4571
        %v4573 = vld [vmem:[%s4476 + $0x9c] sm:$0xf]
        %v4574 = vsel %vm4478, %v4383, %v4573
        %4575 = vst [vmem:[%s4476 + $0x9c] sm:$0xf] %v4574
        %4576 = vst.msk [vmem:[%s4476 + $0xa0] sm:$0xf] %vm4482, %v4392
        %v4577 = vld [vmem:[%s4476 + $0xa4] sm:$0x1]
        %v4578 = vsel %vm4485, %v4393, %v4577
        %4579 = vst [vmem:[%s4476 + $0xa4] sm:$0x1] %v4578
        %v4580 = vld [vmem:[%s4476 + $0xa8] sm:$0xf]
        %v4581 = vsel %vm4478, %v4400, %v4580
        %4582 = vst [vmem:[%s4476 + $0xa8] sm:$0xf] %v4581
        %4583 = vst.msk [vmem:[%s4476 + $0xac] sm:$0xf] %vm4482, %v4409
        %v4584 = vld [vmem:[%s4476 + $0xb0] sm:$0x1]
        %v4585 = vsel %vm4485, %v4410, %v4584
        %4586 = vst [vmem:[%s4476 + $0xb0] sm:$0x1] %v4585
        %v4587 = vld [vmem:[%s4476 + $0xb4] sm:$0xf]
        %v4588 = vsel %vm4478, %v4417, %v4587
        %4589 = vst [vmem:[%s4476 + $0xb4] sm:$0xf] %v4588
        %4590 = vst.msk [vmem:[%s4476 + $0xb8] sm:$0xf] %vm4482, %v4426
        %v4591 = vld [vmem:[%s4476 + $0xbc] sm:$0x1]
        %v4592 = vsel %vm4485, %v4427, %v4591
        %4593 = vst [vmem:[%s4476 + $0xbc] sm:$0x1] %v4592
        %v4594 = vld [vmem:[#allocation4] sm:$0xf]
        %v4595 = vsel %vm4478, %v4179, %v4594
        %4596 = vst [vmem:[#allocation4] sm:$0xf] %v4595
        %4597 = vst.msk [vmem:[#allocation4 + $0x4] sm:$0xf] %vm4482, %v4188
        %v4598 = vld [vmem:[#allocation4 + $0x8] sm:$0x1]
        %v4599 = vsel %vm4485, %v4189, %v4598
        %4600 = vst [vmem:[#allocation4 + $0x8] sm:$0x1] %v4599
        %s4601 = scalar_lea.vmem [#allocation4], 204
        %v4602 = vld [vmem:[%s4601] sm:$0xf]
        %v4603 = vsel %vm4478, %v4400, %v4602
        %4604 = vst [vmem:[%s4601] sm:$0xf] %v4603
        %4605 = vst.msk [vmem:[%s4601 + $0x4] sm:$0xf] %vm4482, %v4409
        %v4606 = vld [vmem:[%s4601 + $0x8] sm:$0x1]
        %v4607 = vsel %vm4485, %v4410, %v4606
        %4608 = vst [vmem:[%s4601 + $0x8] sm:$0x1] %v4607
        %v4609 = vld [vmem:[#allocation4] sm:$0x2]
        %v4610 = vld [vmem:[#allocation4 + $0xc] sm:$0x2]
        %v4611 = vld [vmem:[#allocation4 + $0x18] sm:$0x2]
        %v4612 = vld [vmem:[#allocation4 + $0x24] sm:$0x2]
        %v4613 = vld [vmem:[#allocation4 + $0x30] sm:$0x2]
        %v4614 = vld [vmem:[#allocation4 + $0x3c] sm:$0x2]
        %v4615 = vld [vmem:[#allocation4 + $0x48] sm:$0x2]
        %v4616 = vld [vmem:[#allocation4 + $0x54] sm:$0x2]
        %v4617 = vld [vmem:[#allocation4 + $0x60] sm:$0x2]
        %v4618 = vld [vmem:[#allocation4 + $0x6c] sm:$0x2]
        %v4619 = vld [vmem:[#allocation4 + $0x78] sm:$0x2]
        %v4620 = vld [vmem:[#allocation4 + $0x84] sm:$0x2]
        %v4621 = vld [vmem:[#allocation4 + $0x90] sm:$0x2]
        %v4622 = vld [vmem:[#allocation4 + $0x9c] sm:$0x2]
        %v4623 = vld [vmem:[#allocation4 + $0xa8] sm:$0x2]
        %v4624 = vld [vmem:[#allocation4 + $0xb4] sm:$0x2]
        %v4625 = vld [vmem:[#allocation4 + $0xc0] sm:$0x2]
        %v4626 = vld [vmem:[#allocation4 + $0xcc] sm:$0x2]
        %v4645 = vrot.slane %v4609, 5
        %v4646 = vrot.slane %v4645, 4
        %v4647 = vrot.slane %v4610, 5
        %v4648 = vrot.slane %v4647, 4
        %v4649 = vrot.slane %v4611, 5
        %v4650 = vrot.slane %v4649, 4
        %v4651 = vrot.slane %v4612, 5
        %v4652 = vrot.slane %v4651, 4
        %v4653 = vrot.slane %v4613, 5
        %v4654 = vrot.slane %v4653, 4
        %v4655 = vrot.slane %v4614, 5
        %v4656 = vrot.slane %v4655, 4
        %v4657 = vrot.slane %v4615, 5
        %v4658 = vrot.slane %v4657, 4
        %v4659 = vrot.slane %v4616, 5
        %v4660 = vrot.slane %v4659, 4
        %v4661 = vrot.slane %v4617, 5
        %v4662 = vrot.slane %v4661, 4
        %v4663 = vrot.slane %v4618, 5
        %v4664 = vrot.slane %v4663, 4
        %v4665 = vrot.slane %v4619, 5
        %v4666 = vrot.slane %v4665, 4
        %v4667 = vrot.slane %v4620, 5
        %v4668 = vrot.slane %v4667, 4
        %v4669 = vrot.slane %v4621, 5
        %v4670 = vrot.slane %v4669, 4
        %v4671 = vrot.slane %v4622, 5
        %v4672 = vrot.slane %v4671, 4
        %v4673 = vrot.slane %v4623, 5
        %v4674 = vrot.slane %v4673, 4
        %v4675 = vrot.slane %v4624, 5
        %v4676 = vrot.slane %v4675, 4
        %v4677 = vrot.slane %v4625, 5
        %v4678 = vrot.slane %v4677, 4
        %v4679 = vrot.slane %v4626, 5
        %v4680 = vrot.slane %v4679, 4
        %v4699 = vld [vmem:[#allocation4] sm:$0x1]
        %v4700 = vsel %vm4485, %v4646, %v4699
        %4701 = vst [vmem:[#allocation4] sm:$0x1] %v4700
        %v4702 = vld [vmem:[#allocation4 + $0xc] sm:$0x1]
        %v4703 = vsel %vm4485, %v4648, %v4702
        %4704 = vst [vmem:[#allocation4 + $0xc] sm:$0x1] %v4703
        %v4705 = vld [vmem:[#allocation4 + $0x18] sm:$0x1]
        %v4706 = vsel %vm4485, %v4650, %v4705
        %4707 = vst [vmem:[#allocation4 + $0x18] sm:$0x1] %v4706
        %v4708 = vld [vmem:[#allocation4 + $0x24] sm:$0x1]
        %v4709 = vsel %vm4485, %v4652, %v4708
        %4710 = vst [vmem:[#allocation4 + $0x24] sm:$0x1] %v4709
        %v4711 = vld [vmem:[#allocation4 + $0x30] sm:$0x1]
        %v4712 = vsel %vm4485, %v4654, %v4711
        %4713 = vst [vmem:[#allocation4 + $0x30] sm:$0x1] %v4712
        %v4714 = vld [vmem:[#allocation4 + $0x3c] sm:$0x1]
        %v4715 = vsel %vm4485, %v4656, %v4714
        %4716 = vst [vmem:[#allocation4 + $0x3c] sm:$0x1] %v4715
        %v4717 = vld [vmem:[#allocation4 + $0x48] sm:$0x1]
        %v4718 = vsel %vm4485, %v4658, %v4717
        %4719 = vst [vmem:[#allocation4 + $0x48] sm:$0x1] %v4718
        %v4720 = vld [vmem:[#allocation4 + $0x54] sm:$0x1]
        %v4721 = vsel %vm4485, %v4660, %v4720
        %4722 = vst [vmem:[#allocation4 + $0x54] sm:$0x1] %v4721
        %v4723 = vld [vmem:[#allocation4 + $0x60] sm:$0x1]
        %v4724 = vsel %vm4485, %v4662, %v4723
        %4725 = vst [vmem:[#allocation4 + $0x60] sm:$0x1] %v4724
        %v4726 = vld [vmem:[#allocation4 + $0x6c] sm:$0x1]
        %v4727 = vsel %vm4485, %v4664, %v4726
        %4728 = vst [vmem:[#allocation4 + $0x6c] sm:$0x1] %v4727
        %v4729 = vld [vmem:[#allocation4 + $0x78] sm:$0x1]
        %v4730 = vsel %vm4485, %v4666, %v4729
        %4731 = vst [vmem:[#allocation4 + $0x78] sm:$0x1] %v4730
        %v4732 = vld [vmem:[#allocation4 + $0x84] sm:$0x1]
        %v4733 = vsel %vm4485, %v4668, %v4732
        %4734 = vst [vmem:[#allocation4 + $0x84] sm:$0x1] %v4733
        %v4735 = vld [vmem:[#allocation4 + $0x90] sm:$0x1]
        %v4736 = vsel %vm4485, %v4670, %v4735
        %4737 = vst [vmem:[#allocation4 + $0x90] sm:$0x1] %v4736
        %v4738 = vld [vmem:[#allocation4 + $0x9c] sm:$0x1]
        %v4739 = vsel %vm4485, %v4672, %v4738
        %4740 = vst [vmem:[#allocation4 + $0x9c] sm:$0x1] %v4739
        %v4741 = vld [vmem:[#allocation4 + $0xa8] sm:$0x1]
        %v4742 = vsel %vm4485, %v4674, %v4741
        %4743 = vst [vmem:[#allocation4 + $0xa8] sm:$0x1] %v4742
        %v4744 = vld [vmem:[#allocation4 + $0xb4] sm:$0x1]
        %v4745 = vsel %vm4485, %v4676, %v4744
        %4746 = vst [vmem:[#allocation4 + $0xb4] sm:$0x1] %v4745
        %v4747 = vld [vmem:[#allocation4 + $0xc0] sm:$0x1]
        %v4748 = vsel %vm4485, %v4678, %v4747
        %4749 = vst [vmem:[#allocation4 + $0xc0] sm:$0x1] %v4748
        %v4750 = vld [vmem:[#allocation4 + $0xcc] sm:$0x1]
        %v4751 = vsel %vm4485, %v4680, %v4750
        %4752 = vst [vmem:[#allocation4 + $0xcc] sm:$0x1] %v4751
        %v4753 = vld [vmem:[#allocation4 + $0x4] sm:$0x8]
        %v4754 = vld [vmem:[#allocation4 + $0x10] sm:$0x8]
        %v4755 = vld [vmem:[#allocation4 + $0x1c] sm:$0x8]
        %v4756 = vld [vmem:[#allocation4 + $0x28] sm:$0x8]
        %v4757 = vld [vmem:[#allocation4 + $0x34] sm:$0x8]
        %v4758 = vld [vmem:[#allocation4 + $0x40] sm:$0x8]
        %v4759 = vld [vmem:[#allocation4 + $0x4c] sm:$0x8]
        %v4760 = vld [vmem:[#allocation4 + $0x58] sm:$0x8]
        %v4761 = vld [vmem:[#allocation4 + $0x64] sm:$0x8]
        %v4762 = vld [vmem:[#allocation4 + $0x70] sm:$0x8]
        %v4763 = vld [vmem:[#allocation4 + $0x7c] sm:$0x8]
        %v4764 = vld [vmem:[#allocation4 + $0x88] sm:$0x8]
        %v4765 = vld [vmem:[#allocation4 + $0x94] sm:$0x8]
        %v4766 = vld [vmem:[#allocation4 + $0xa0] sm:$0x8]
        %v4767 = vld [vmem:[#allocation4 + $0xac] sm:$0x8]
        %v4768 = vld [vmem:[#allocation4 + $0xb8] sm:$0x8]
        %v4769 = vld [vmem:[#allocation4 + $0xc4] sm:$0x8]
        %v4770 = vld [vmem:[#allocation4 + $0xd0] sm:$0x8]
        %v4789 = vrot.slane %v4753, 7
        %v4790 = vrot.slane %v4789, 4
        %v4791 = vrot.slane %v4754, 7
        %v4792 = vrot.slane %v4791, 4
        %v4793 = vrot.slane %v4755, 7
        %v4794 = vrot.slane %v4793, 4
        %v4795 = vrot.slane %v4756, 7
        %v4796 = vrot.slane %v4795, 4
        %v4797 = vrot.slane %v4757, 7
        %v4798 = vrot.slane %v4797, 4
        %v4799 = vrot.slane %v4758, 7
        %v4800 = vrot.slane %v4799, 4
        %v4801 = vrot.slane %v4759, 7
        %v4802 = vrot.slane %v4801, 4
        %v4803 = vrot.slane %v4760, 7
        %v4804 = vrot.slane %v4803, 4
        %v4805 = vrot.slane %v4761, 7
        %v4806 = vrot.slane %v4805, 4
        %v4807 = vrot.slane %v4762, 7
        %v4808 = vrot.slane %v4807, 4
        %v4809 = vrot.slane %v4763, 7
        %v4810 = vrot.slane %v4809, 4
        %v4811 = vrot.slane %v4764, 7
        %v4812 = vrot.slane %v4811, 4
        %v4813 = vrot.slane %v4765, 7
        %v4814 = vrot.slane %v4813, 4
        %v4815 = vrot.slane %v4766, 7
        %v4816 = vrot.slane %v4815, 4
        %v4817 = vrot.slane %v4767, 7
        %v4818 = vrot.slane %v4817, 4
        %v4819 = vrot.slane %v4768, 7
        %v4820 = vrot.slane %v4819, 4
        %v4821 = vrot.slane %v4769, 7
        %v4822 = vrot.slane %v4821, 4
        %v4823 = vrot.slane %v4770, 7
        %v4824 = vrot.slane %v4823, 4
        %vm4843 = vmand %vm4484, %vm965
        %v4844 = vld [vmem:[#allocation4 + $0x8] sm:$0x1]
        %v4845 = vsel %vm4843, %v4790, %v4844
        %4846 = vst [vmem:[#allocation4 + $0x8] sm:$0x1] %v4845
        %v4847 = vld [vmem:[#allocation4 + $0x14] sm:$0x1]
        %v4848 = vsel %vm4843, %v4792, %v4847
        %4849 = vst [vmem:[#allocation4 + $0x14] sm:$0x1] %v4848
        %v4850 = vld [vmem:[#allocation4 + $0x20] sm:$0x1]
        %v4851 = vsel %vm4843, %v4794, %v4850
        %4852 = vst [vmem:[#allocation4 + $0x20] sm:$0x1] %v4851
        %v4853 = vld [vmem:[#allocation4 + $0x2c] sm:$0x1]
        %v4854 = vsel %vm4843, %v4796, %v4853
        %4855 = vst [vmem:[#allocation4 + $0x2c] sm:$0x1] %v4854
        %v4856 = vld [vmem:[#allocation4 + $0x38] sm:$0x1]
        %v4857 = vsel %vm4843, %v4798, %v4856
        %4858 = vst [vmem:[#allocation4 + $0x38] sm:$0x1] %v4857
        %v4859 = vld [vmem:[#allocation4 + $0x44] sm:$0x1]
        %v4860 = vsel %vm4843, %v4800, %v4859
        %4861 = vst [vmem:[#allocation4 + $0x44] sm:$0x1] %v4860
        %v4862 = vld [vmem:[#allocation4 + $0x50] sm:$0x1]
        %v4863 = vsel %vm4843, %v4802, %v4862
        %4864 = vst [vmem:[#allocation4 + $0x50] sm:$0x1] %v4863
        %v4865 = vld [vmem:[#allocation4 + $0x5c] sm:$0x1]
        %v4866 = vsel %vm4843, %v4804, %v4865
        %4867 = vst [vmem:[#allocation4 + $0x5c] sm:$0x1] %v4866
        %v4868 = vld [vmem:[#allocation4 + $0x68] sm:$0x1]
        %v4869 = vsel %vm4843, %v4806, %v4868
        %4870 = vst [vmem:[#allocation4 + $0x68] sm:$0x1] %v4869
        %v4871 = vld [vmem:[#allocation4 + $0x74] sm:$0x1]
        %v4872 = vsel %vm4843, %v4808, %v4871
        %4873 = vst [vmem:[#allocation4 + $0x74] sm:$0x1] %v4872
        %v4874 = vld [vmem:[#allocation4 + $0x80] sm:$0x1]
        %v4875 = vsel %vm4843, %v4810, %v4874
        %4876 = vst [vmem:[#allocation4 + $0x80] sm:$0x1] %v4875
        %v4877 = vld [vmem:[#allocation4 + $0x8c] sm:$0x1]
        %v4878 = vsel %vm4843, %v4812, %v4877
        %4879 = vst [vmem:[#allocation4 + $0x8c] sm:$0x1] %v4878
        %v4880 = vld [vmem:[#allocation4 + $0x98] sm:$0x1]
        %v4881 = vsel %vm4843, %v4814, %v4880
        %4882 = vst [vmem:[#allocation4 + $0x98] sm:$0x1] %v4881
        %v4883 = vld [vmem:[#allocation4 + $0xa4] sm:$0x1]
        %v4884 = vsel %vm4843, %v4816, %v4883
        %4885 = vst [vmem:[#allocation4 + $0xa4] sm:$0x1] %v4884
        %v4886 = vld [vmem:[#allocation4 + $0xb0] sm:$0x1]
        %v4887 = vsel %vm4843, %v4818, %v4886
        %4888 = vst [vmem:[#allocation4 + $0xb0] sm:$0x1] %v4887
        %v4889 = vld [vmem:[#allocation4 + $0xbc] sm:$0x1]
        %v4890 = vsel %vm4843, %v4820, %v4889
        %4891 = vst [vmem:[#allocation4 + $0xbc] sm:$0x1] %v4890
        %v4892 = vld [vmem:[#allocation4 + $0xc8] sm:$0x1]
        %v4893 = vsel %vm4843, %v4822, %v4892
        %4894 = vst [vmem:[#allocation4 + $0xc8] sm:$0x1] %v4893
        %v4895 = vld [vmem:[#allocation4 + $0xd4] sm:$0x1]
        %v4896 = vsel %vm4843, %v4824, %v4895
        %4897 = vst [vmem:[#allocation4 + $0xd4] sm:$0x1] %v4896
        %v4898 = vld [vmem:[#allocation4] sm:$0xf]
        %v4899 = vld [vmem:[#allocation4 + $0x4] sm:$0xf]
        %v4900 = vld [vmem:[#allocation4 + $0x8] sm:$0x1]
        %v4901 = vld [vmem:[#allocation4 + $0xc] sm:$0xf]
        %v4902 = vld [vmem:[#allocation4 + $0x10] sm:$0xf]
        %v4903 = vld [vmem:[#allocation4 + $0x14] sm:$0x1]
        %v4904 = vld [vmem:[#allocation4 + $0x18] sm:$0xf]
        %v4905 = vld [vmem:[#allocation4 + $0x1c] sm:$0xf]
        %v4906 = vld [vmem:[#allocation4 + $0x20] sm:$0x1]
        %v4907 = vld [vmem:[#allocation4 + $0x24] sm:$0xf]
        %v4908 = vld [vmem:[#allocation4 + $0x28] sm:$0xf]
        %v4909 = vld [vmem:[#allocation4 + $0x2c] sm:$0x1]
        %v4910 = vld [vmem:[#allocation4 + $0x30] sm:$0xf]
        %v4911 = vld [vmem:[#allocation4 + $0x34] sm:$0xf]
        %v4912 = vld [vmem:[#allocation4 + $0x38] sm:$0x1]
        %v4913 = vld [vmem:[#allocation4 + $0x3c] sm:$0xf]
        %v4914 = vld [vmem:[#allocation4 + $0x40] sm:$0xf]
        %v4915 = vld [vmem:[#allocation4 + $0x44] sm:$0x1]
        %v4916 = vld [vmem:[#allocation4 + $0x48] sm:$0xf]
        %v4917 = vld [vmem:[#allocation4 + $0x4c] sm:$0xf]
        %v4918 = vld [vmem:[#allocation4 + $0x50] sm:$0x1]
        %v4919 = vld [vmem:[#allocation4 + $0x54] sm:$0xf]
        %v4920 = vld [vmem:[#allocation4 + $0x58] sm:$0xf]
        %v4921 = vld [vmem:[#allocation4 + $0x5c] sm:$0x1]
        %v4922 = vld [vmem:[#allocation4 + $0x60] sm:$0xf]
        %v4923 = vld [vmem:[#allocation4 + $0x64] sm:$0xf]
        %v4924 = vld [vmem:[#allocation4 + $0x68] sm:$0x1]
        %v4925 = vld [vmem:[#allocation4 + $0x6c] sm:$0xf]
        %v4926 = vld [vmem:[#allocation4 + $0x70] sm:$0xf]
        %v4927 = vld [vmem:[#allocation4 + $0x74] sm:$0x1]
        %v4928 = vld [vmem:[#allocation4 + $0x78] sm:$0xf]
        %v4929 = vld [vmem:[#allocation4 + $0x7c] sm:$0xf]
        %v4930 = vld [vmem:[#allocation4 + $0x80] sm:$0x1]
        %v4931 = vld [vmem:[#allocation4 + $0x84] sm:$0xf]
        %v4932 = vld [vmem:[#allocation4 + $0x88] sm:$0xf]
        %v4933 = vld [vmem:[#allocation4 + $0x8c] sm:$0x1]
        %v4934 = vld [vmem:[#allocation4 + $0x90] sm:$0xf]
        %v4935 = vld [vmem:[#allocation4 + $0x94] sm:$0xf]
        %v4936 = vld [vmem:[#allocation4 + $0x98] sm:$0x1]
        %v4937 = vld [vmem:[#allocation4 + $0x9c] sm:$0xf]
        %v4938 = vld [vmem:[#allocation4 + $0xa0] sm:$0xf]
        %v4939 = vld [vmem:[#allocation4 + $0xa4] sm:$0x1]
        %v4940 = vld [vmem:[#allocation4 + $0xa8] sm:$0xf]
        %v4941 = vld [vmem:[#allocation4 + $0xac] sm:$0xf]
        %v4942 = vld [vmem:[#allocation4 + $0xb0] sm:$0x1]
        %v4943 = vld [vmem:[#allocation4 + $0xb4] sm:$0xf]
        %v4944 = vld [vmem:[#allocation4 + $0xb8] sm:$0xf]
        %v4945 = vld [vmem:[#allocation4 + $0xbc] sm:$0x1]
        %4946 = vst.msk [vmem:[#allocation5] sm:$0xf] %vm4482, %v4898
        %4947 = vst.msk [vmem:[#allocation5 + $0x4] sm:$0xf] %vm4482, %v4899
        %vm4948 = vcmask 253952
        %4949 = vst.msk [vmem:[#allocation5 + $0x8] sm:$0x1] %vm4948, %v4900
        %4950 = vst.msk [vmem:[#allocation5 + $0xc] sm:$0xf] %vm4482, %v4901
        %4951 = vst.msk [vmem:[#allocation5 + $0x10] sm:$0xf] %vm4482, %v4902
        %4952 = vst.msk [vmem:[#allocation5 + $0x14] sm:$0x1] %vm4948, %v4903
        %4953 = vst.msk [vmem:[#allocation5 + $0x18] sm:$0xf] %vm4482, %v4904
        %4954 = vst.msk [vmem:[#allocation5 + $0x1c] sm:$0xf] %vm4482, %v4905
        %4955 = vst.msk [vmem:[#allocation5 + $0x20] sm:$0x1] %vm4948, %v4906
        %4956 = vst.msk [vmem:[#allocation5 + $0x24] sm:$0xf] %vm4482, %v4907
        %4957 = vst.msk [vmem:[#allocation5 + $0x28] sm:$0xf] %vm4482, %v4908
        %4958 = vst.msk [vmem:[#allocation5 + $0x2c] sm:$0x1] %vm4948, %v4909
        %4959 = vst.msk [vmem:[#allocation5 + $0x30] sm:$0xf] %vm4482, %v4910
        %4960 = vst.msk [vmem:[#allocation5 + $0x34] sm:$0xf] %vm4482, %v4911
        %4961 = vst.msk [vmem:[#allocation5 + $0x38] sm:$0x1] %vm4948, %v4912
        %4962 = vst.msk [vmem:[#allocation5 + $0x3c] sm:$0xf] %vm4482, %v4913
        %4963 = vst.msk [vmem:[#allocation5 + $0x40] sm:$0xf] %vm4482, %v4914
        %4964 = vst.msk [vmem:[#allocation5 + $0x44] sm:$0x1] %vm4948, %v4915
        %4965 = vst.msk [vmem:[#allocation5 + $0x48] sm:$0xf] %vm4482, %v4916
        %4966 = vst.msk [vmem:[#allocation5 + $0x4c] sm:$0xf] %vm4482, %v4917
        %4967 = vst.msk [vmem:[#allocation5 + $0x50] sm:$0x1] %vm4948, %v4918
        %4968 = vst.msk [vmem:[#allocation5 + $0x54] sm:$0xf] %vm4482, %v4919
        %4969 = vst.msk [vmem:[#allocation5 + $0x58] sm:$0xf] %vm4482, %v4920
        %4970 = vst.msk [vmem:[#allocation5 + $0x5c] sm:$0x1] %vm4948, %v4921
        %4971 = vst.msk [vmem:[#allocation5 + $0x60] sm:$0xf] %vm4482, %v4922
        %4972 = vst.msk [vmem:[#allocation5 + $0x64] sm:$0xf] %vm4482, %v4923
        %4973 = vst.msk [vmem:[#allocation5 + $0x68] sm:$0x1] %vm4948, %v4924
        %4974 = vst.msk [vmem:[#allocation5 + $0x6c] sm:$0xf] %vm4482, %v4925
        %4975 = vst.msk [vmem:[#allocation5 + $0x70] sm:$0xf] %vm4482, %v4926
        %4976 = vst.msk [vmem:[#allocation5 + $0x74] sm:$0x1] %vm4948, %v4927
        %4977 = vst.msk [vmem:[#allocation5 + $0x78] sm:$0xf] %vm4482, %v4928
        %4978 = vst.msk [vmem:[#allocation5 + $0x7c] sm:$0xf] %vm4482, %v4929
        %4979 = vst.msk [vmem:[#allocation5 + $0x80] sm:$0x1] %vm4948, %v4930
        %4980 = vst.msk [vmem:[#allocation5 + $0x84] sm:$0xf] %vm4482, %v4931
        %4981 = vst.msk [vmem:[#allocation5 + $0x88] sm:$0xf] %vm4482, %v4932
        %4982 = vst.msk [vmem:[#allocation5 + $0x8c] sm:$0x1] %vm4948, %v4933
        %4983 = vst.msk [vmem:[#allocation5 + $0x90] sm:$0xf] %vm4482, %v4934
        %4984 = vst.msk [vmem:[#allocation5 + $0x94] sm:$0xf] %vm4482, %v4935
        %4985 = vst.msk [vmem:[#allocation5 + $0x98] sm:$0x1] %vm4948, %v4936
        %4986 = vst.msk [vmem:[#allocation5 + $0x9c] sm:$0xf] %vm4482, %v4937
        %4987 = vst.msk [vmem:[#allocation5 + $0xa0] sm:$0xf] %vm4482, %v4938
        %4988 = vst.msk [vmem:[#allocation5 + $0xa4] sm:$0x1] %vm4948, %v4939
        %4989 = vst.msk [vmem:[#allocation5 + $0xa8] sm:$0xf] %vm4482, %v4940
        %4990 = vst.msk [vmem:[#allocation5 + $0xac] sm:$0xf] %vm4482, %v4941
        %4991 = vst.msk [vmem:[#allocation5 + $0xb0] sm:$0x1] %vm4948, %v4942
        %4992 = vst.msk [vmem:[#allocation5 + $0xb4] sm:$0xf] %vm4482, %v4943
        %4993 = vst.msk [vmem:[#allocation5 + $0xb8] sm:$0xf] %vm4482, %v4944
        %4994 = vst.msk [vmem:[#allocation5 + $0xbc] sm:$0x1] %vm4948, %v4945
        %v4995 = vld [vmem:[%s4476] sm:$0xf]
        %v4996 = vld [vmem:[%s4476 + $0x4] sm:$0xf]
        %v4997 = vld [vmem:[%s4476 + $0x8] sm:$0x1]
        %v4998 = vld [vmem:[%s4476 + $0xc] sm:$0xf]
        %v4999 = vld [vmem:[%s4476 + $0x10] sm:$0xf]
        %v5000 = vld [vmem:[%s4476 + $0x14] sm:$0x1]
        %v5001 = vld [vmem:[%s4476 + $0x18] sm:$0xf]
        %v5002 = vld [vmem:[%s4476 + $0x1c] sm:$0xf]
        %v5003 = vld [vmem:[%s4476 + $0x20] sm:$0x1]
        %v5004 = vld [vmem:[%s4476 + $0x24] sm:$0xf]
        %v5005 = vld [vmem:[%s4476 + $0x28] sm:$0xf]
        %v5006 = vld [vmem:[%s4476 + $0x2c] sm:$0x1]
        %v5007 = vld [vmem:[%s4476 + $0x30] sm:$0xf]
        %v5008 = vld [vmem:[%s4476 + $0x34] sm:$0xf]
        %v5009 = vld [vmem:[%s4476 + $0x38] sm:$0x1]
        %v5010 = vld [vmem:[%s4476 + $0x3c] sm:$0xf]
        %v5011 = vld [vmem:[%s4476 + $0x40] sm:$0xf]
        %v5012 = vld [vmem:[%s4476 + $0x44] sm:$0x1]
        %v5013 = vld [vmem:[%s4476 + $0x48] sm:$0xf]
        %v5014 = vld [vmem:[%s4476 + $0x4c] sm:$0xf]
        %v5015 = vld [vmem:[%s4476 + $0x50] sm:$0x1]
        %v5016 = vld [vmem:[%s4476 + $0x54] sm:$0xf]
        %v5017 = vld [vmem:[%s4476 + $0x58] sm:$0xf]
        %v5018 = vld [vmem:[%s4476 + $0x5c] sm:$0x1]
        %v5019 = vld [vmem:[%s4476 + $0x60] sm:$0xf]
        %v5020 = vld [vmem:[%s4476 + $0x64] sm:$0xf]
        %v5021 = vld [vmem:[%s4476 + $0x68] sm:$0x1]
        %v5022 = vld [vmem:[%s4476 + $0x6c] sm:$0xf]
        %v5023 = vld [vmem:[%s4476 + $0x70] sm:$0xf]
        %v5024 = vld [vmem:[%s4476 + $0x74] sm:$0x1]
        %v5025 = vld [vmem:[%s4476 + $0x78] sm:$0xf]
        %v5026 = vld [vmem:[%s4476 + $0x7c] sm:$0xf]
        %v5027 = vld [vmem:[%s4476 + $0x80] sm:$0x1]
        %v5028 = vld [vmem:[%s4476 + $0x84] sm:$0xf]
        %v5029 = vld [vmem:[%s4476 + $0x88] sm:$0xf]
        %v5030 = vld [vmem:[%s4476 + $0x8c] sm:$0x1]
        %v5031 = vld [vmem:[%s4476 + $0x90] sm:$0xf]
        %v5032 = vld [vmem:[%s4476 + $0x94] sm:$0xf]
        %v5033 = vld [vmem:[%s4476 + $0x98] sm:$0x1]
        %v5034 = vld [vmem:[%s4476 + $0x9c] sm:$0xf]
        %v5035 = vld [vmem:[%s4476 + $0xa0] sm:$0xf]
        %v5036 = vld [vmem:[%s4476 + $0xa4] sm:$0x1]
        %v5037 = vld [vmem:[%s4476 + $0xa8] sm:$0xf]
        %v5038 = vld [vmem:[%s4476 + $0xac] sm:$0xf]
        %v5039 = vld [vmem:[%s4476 + $0xb0] sm:$0x1]
        %v5040 = vld [vmem:[%s4476 + $0xb4] sm:$0xf]
        %v5041 = vld [vmem:[%s4476 + $0xb8] sm:$0xf]
        %v5042 = vld [vmem:[%s4476 + $0xbc] sm:$0x1]
        %5091 = vrot.lane.b32.xlu0 %v4995, 32
        %v5092 = vpop.permute.xlu0 %5091
        %5093 = vrot.lane.b32.xlu0 %v4996, 32
        %v5094 = vpop.permute.xlu0 %5093
        %5095 = vrot.lane.b32.xlu0 %v4997, 32
        %v5096 = vpop.permute.xlu0 %5095
        %5097 = vrot.lane.b32.xlu0 %v4998, 32
        %v5098 = vpop.permute.xlu0 %5097
        %5099 = vrot.lane.b32.xlu0 %v4999, 32
        %v5100 = vpop.permute.xlu0 %5099
        %5101 = vrot.lane.b32.xlu0 %v5000, 32
        %v5102 = vpop.permute.xlu0 %5101
        %5103 = vrot.lane.b32.xlu0 %v5001, 32
        %v5104 = vpop.permute.xlu0 %5103
        %5105 = vrot.lane.b32.xlu0 %v5002, 32
        %v5106 = vpop.permute.xlu0 %5105
        %5107 = vrot.lane.b32.xlu0 %v5003, 32
        %v5108 = vpop.permute.xlu0 %5107
        %5109 = vrot.lane.b32.xlu0 %v5004, 32
        %v5110 = vpop.permute.xlu0 %5109
        %5111 = vrot.lane.b32.xlu0 %v5005, 32
        %v5112 = vpop.permute.xlu0 %5111
        %5113 = vrot.lane.b32.xlu0 %v5006, 32
        %v5114 = vpop.permute.xlu0 %5113
        %5115 = vrot.lane.b32.xlu0 %v5007, 32
        %v5116 = vpop.permute.xlu0 %5115
        %5117 = vrot.lane.b32.xlu0 %v5008, 32
        %v5118 = vpop.permute.xlu0 %5117
        %5119 = vrot.lane.b32.xlu0 %v5009, 32
        %v5120 = vpop.permute.xlu0 %5119
        %5121 = vrot.lane.b32.xlu0 %v5010, 32
        %v5122 = vpop.permute.xlu0 %5121
        %5123 = vrot.lane.b32.xlu0 %v5011, 32
        %v5124 = vpop.permute.xlu0 %5123
        %5125 = vrot.lane.b32.xlu0 %v5012, 32
        %v5126 = vpop.permute.xlu0 %5125
        %5127 = vrot.lane.b32.xlu0 %v5013, 32
        %v5128 = vpop.permute.xlu0 %5127
        %5129 = vrot.lane.b32.xlu0 %v5014, 32
        %v5130 = vpop.permute.xlu0 %5129
        %5131 = vrot.lane.b32.xlu0 %v5015, 32
        %v5132 = vpop.permute.xlu0 %5131
        %5133 = vrot.lane.b32.xlu0 %v5016, 32
        %v5134 = vpop.permute.xlu0 %5133
        %5135 = vrot.lane.b32.xlu0 %v5017, 32
        %v5136 = vpop.permute.xlu0 %5135
        %5137 = vrot.lane.b32.xlu0 %v5018, 32
        %v5138 = vpop.permute.xlu0 %5137
        %5139 = vrot.lane.b32.xlu0 %v5019, 32
        %v5140 = vpop.permute.xlu0 %5139
        %5141 = vrot.lane.b32.xlu0 %v5020, 32
        %v5142 = vpop.permute.xlu0 %5141
        %5143 = vrot.lane.b32.xlu0 %v5021, 32
        %v5144 = vpop.permute.xlu0 %5143
        %5145 = vrot.lane.b32.xlu0 %v5022, 32
        %v5146 = vpop.permute.xlu0 %5145
        %5147 = vrot.lane.b32.xlu0 %v5023, 32
        %v5148 = vpop.permute.xlu0 %5147
        %5149 = vrot.lane.b32.xlu0 %v5024, 32
        %v5150 = vpop.permute.xlu0 %5149
        %5151 = vrot.lane.b32.xlu0 %v5025, 32
        %v5152 = vpop.permute.xlu0 %5151
        %5153 = vrot.lane.b32.xlu0 %v5026, 32
        %v5154 = vpop.permute.xlu0 %5153
        %5155 = vrot.lane.b32.xlu0 %v5027, 32
        %v5156 = vpop.permute.xlu0 %5155
        %5157 = vrot.lane.b32.xlu0 %v5028, 32
        %v5158 = vpop.permute.xlu0 %5157
        %5159 = vrot.lane.b32.xlu0 %v5029, 32
        %v5160 = vpop.permute.xlu0 %5159
        %5161 = vrot.lane.b32.xlu0 %v5030, 32
        %v5162 = vpop.permute.xlu0 %5161
        %5163 = vrot.lane.b32.xlu0 %v5031, 32
        %v5164 = vpop.permute.xlu0 %5163
        %5165 = vrot.lane.b32.xlu0 %v5032, 32
        %v5166 = vpop.permute.xlu0 %5165
        %5167 = vrot.lane.b32.xlu0 %v5033, 32
        %v5168 = vpop.permute.xlu0 %5167
        %5169 = vrot.lane.b32.xlu0 %v5034, 32
        %v5170 = vpop.permute.xlu0 %5169
        %5171 = vrot.lane.b32.xlu0 %v5035, 32
        %v5172 = vpop.permute.xlu0 %5171
        %5173 = vrot.lane.b32.xlu0 %v5036, 32
        %v5174 = vpop.permute.xlu0 %5173
        %5175 = vrot.lane.b32.xlu0 %v5037, 32
        %v5176 = vpop.permute.xlu0 %5175
        %5177 = vrot.lane.b32.xlu0 %v5038, 32
        %v5178 = vpop.permute.xlu0 %5177
        %5179 = vrot.lane.b32.xlu0 %v5039, 32
        %v5180 = vpop.permute.xlu0 %5179
        %5181 = vrot.lane.b32.xlu0 %v5040, 32
        %v5182 = vpop.permute.xlu0 %5181
        %5183 = vrot.lane.b32.xlu0 %v5041, 32
        %v5184 = vpop.permute.xlu0 %5183
        %5185 = vrot.lane.b32.xlu0 %v5042, 32
        %v5186 = vpop.permute.xlu0 %5185
        %vm5235 = vcmask 519424
        %5236 = vst.msk [vmem:[#allocation5] sm:$0xf] %vm5235, %v5092
        %5237 = vst.msk [vmem:[#allocation5 + $0x4] sm:$0xf] %vm5235, %v5094
        %vm5238 = vcmask 516352
        %5239 = vst.msk [vmem:[#allocation5 + $0x8] sm:$0x1] %vm5238, %v5096
        %5240 = vst.msk [vmem:[#allocation5 + $0xc] sm:$0xf] %vm5235, %v5098
        %5241 = vst.msk [vmem:[#allocation5 + $0x10] sm:$0xf] %vm5235, %v5100
        %5242 = vst.msk [vmem:[#allocation5 + $0x14] sm:$0x1] %vm5238, %v5102
        %5243 = vst.msk [vmem:[#allocation5 + $0x18] sm:$0xf] %vm5235, %v5104
        %5244 = vst.msk [vmem:[#allocation5 + $0x1c] sm:$0xf] %vm5235, %v5106
        %5245 = vst.msk [vmem:[#allocation5 + $0x20] sm:$0x1] %vm5238, %v5108
        %5246 = vst.msk [vmem:[#allocation5 + $0x24] sm:$0xf] %vm5235, %v5110
        %5247 = vst.msk [vmem:[#allocation5 + $0x28] sm:$0xf] %vm5235, %v5112
        %5248 = vst.msk [vmem:[#allocation5 + $0x2c] sm:$0x1] %vm5238, %v5114
        %5249 = vst.msk [vmem:[#allocation5 + $0x30] sm:$0xf] %vm5235, %v5116
        %5250 = vst.msk [vmem:[#allocation5 + $0x34] sm:$0xf] %vm5235, %v5118
        %5251 = vst.msk [vmem:[#allocation5 + $0x38] sm:$0x1] %vm5238, %v5120
        %5252 = vst.msk [vmem:[#allocation5 + $0x3c] sm:$0xf] %vm5235, %v5122
        %5253 = vst.msk [vmem:[#allocation5 + $0x40] sm:$0xf] %vm5235, %v5124
        %5254 = vst.msk [vmem:[#allocation5 + $0x44] sm:$0x1] %vm5238, %v5126
        %5255 = vst.msk [vmem:[#allocation5 + $0x48] sm:$0xf] %vm5235, %v5128
        %5256 = vst.msk [vmem:[#allocation5 + $0x4c] sm:$0xf] %vm5235, %v5130
        %5257 = vst.msk [vmem:[#allocation5 + $0x50] sm:$0x1] %vm5238, %v5132
        %5258 = vst.msk [vmem:[#allocation5 + $0x54] sm:$0xf] %vm5235, %v5134
        %5259 = vst.msk [vmem:[#allocation5 + $0x58] sm:$0xf] %vm5235, %v5136
        %5260 = vst.msk [vmem:[#allocation5 + $0x5c] sm:$0x1] %vm5238, %v5138
        %5261 = vst.msk [vmem:[#allocation5 + $0x60] sm:$0xf] %vm5235, %v5140
        %5262 = vst.msk [vmem:[#allocation5 + $0x64] sm:$0xf] %vm5235, %v5142
        %5263 = vst.msk [vmem:[#allocation5 + $0x68] sm:$0x1] %vm5238, %v5144
        %5264 = vst.msk [vmem:[#allocation5 + $0x6c] sm:$0xf] %vm5235, %v5146
        %5265 = vst.msk [vmem:[#allocation5 + $0x70] sm:$0xf] %vm5235, %v5148
        %5266 = vst.msk [vmem:[#allocation5 + $0x74] sm:$0x1] %vm5238, %v5150
        %5267 = vst.msk [vmem:[#allocation5 + $0x78] sm:$0xf] %vm5235, %v5152
        %5268 = vst.msk [vmem:[#allocation5 + $0x7c] sm:$0xf] %vm5235, %v5154
        %5269 = vst.msk [vmem:[#allocation5 + $0x80] sm:$0x1] %vm5238, %v5156
        %5270 = vst.msk [vmem:[#allocation5 + $0x84] sm:$0xf] %vm5235, %v5158
        %5271 = vst.msk [vmem:[#allocation5 + $0x88] sm:$0xf] %vm5235, %v5160
        %5272 = vst.msk [vmem:[#allocation5 + $0x8c] sm:$0x1] %vm5238, %v5162
        %5273 = vst.msk [vmem:[#allocation5 + $0x90] sm:$0xf] %vm5235, %v5164
        %5274 = vst.msk [vmem:[#allocation5 + $0x94] sm:$0xf] %vm5235, %v5166
        %5275 = vst.msk [vmem:[#allocation5 + $0x98] sm:$0x1] %vm5238, %v5168
        %5276 = vst.msk [vmem:[#allocation5 + $0x9c] sm:$0xf] %vm5235, %v5170
        %5277 = vst.msk [vmem:[#allocation5 + $0xa0] sm:$0xf] %vm5235, %v5172
        %5278 = vst.msk [vmem:[#allocation5 + $0xa4] sm:$0x1] %vm5238, %v5174
        %5279 = vst.msk [vmem:[#allocation5 + $0xa8] sm:$0xf] %vm5235, %v5176
        %5280 = vst.msk [vmem:[#allocation5 + $0xac] sm:$0xf] %vm5235, %v5178
        %5281 = vst.msk [vmem:[#allocation5 + $0xb0] sm:$0x1] %vm5238, %v5180
        %5282 = vst.msk [vmem:[#allocation5 + $0xb4] sm:$0xf] %vm5235, %v5182
        %5283 = vst.msk [vmem:[#allocation5 + $0xb8] sm:$0xf] %vm5235, %v5184
        %5284 = vst.msk [vmem:[#allocation5 + $0xbc] sm:$0x1] %vm5238, %v5186
        %s5285 = scalar_lea.vmem [#allocation4], 24
        %v5286 = vld [vmem:[%s5285] sm:$0xf]
        %v5287 = vld [vmem:[%s5285 + $0x4] sm:$0xf]
        %v5288 = vld [vmem:[%s5285 + $0x8] sm:$0x1]
        %v5289 = vld [vmem:[%s5285 + $0xc] sm:$0xf]
        %v5290 = vld [vmem:[%s5285 + $0x10] sm:$0xf]
        %v5291 = vld [vmem:[%s5285 + $0x14] sm:$0x1]
        %v5292 = vld [vmem:[%s5285 + $0x18] sm:$0xf]
        %v5293 = vld [vmem:[%s5285 + $0x1c] sm:$0xf]
        %v5294 = vld [vmem:[%s5285 + $0x20] sm:$0x1]
        %v5295 = vld [vmem:[%s5285 + $0x24] sm:$0xf]
        %v5296 = vld [vmem:[%s5285 + $0x28] sm:$0xf]
        %v5297 = vld [vmem:[%s5285 + $0x2c] sm:$0x1]
        %v5298 = vld [vmem:[%s5285 + $0x30] sm:$0xf]
        %v5299 = vld [vmem:[%s5285 + $0x34] sm:$0xf]
        %v5300 = vld [vmem:[%s5285 + $0x38] sm:$0x1]
        %v5301 = vld [vmem:[%s5285 + $0x3c] sm:$0xf]
        %v5302 = vld [vmem:[%s5285 + $0x40] sm:$0xf]
        %v5303 = vld [vmem:[%s5285 + $0x44] sm:$0x1]
        %v5304 = vld [vmem:[%s5285 + $0x48] sm:$0xf]
        %v5305 = vld [vmem:[%s5285 + $0x4c] sm:$0xf]
        %v5306 = vld [vmem:[%s5285 + $0x50] sm:$0x1]
        %v5307 = vld [vmem:[%s5285 + $0x54] sm:$0xf]
        %v5308 = vld [vmem:[%s5285 + $0x58] sm:$0xf]
        %v5309 = vld [vmem:[%s5285 + $0x5c] sm:$0x1]
        %v5310 = vld [vmem:[%s5285 + $0x60] sm:$0xf]
        %v5311 = vld [vmem:[%s5285 + $0x64] sm:$0xf]
        %v5312 = vld [vmem:[%s5285 + $0x68] sm:$0x1]
        %v5313 = vld [vmem:[%s5285 + $0x6c] sm:$0xf]
        %v5314 = vld [vmem:[%s5285 + $0x70] sm:$0xf]
        %v5315 = vld [vmem:[%s5285 + $0x74] sm:$0x1]
        %v5316 = vld [vmem:[%s5285 + $0x78] sm:$0xf]
        %v5317 = vld [vmem:[%s5285 + $0x7c] sm:$0xf]
        %v5318 = vld [vmem:[%s5285 + $0x80] sm:$0x1]
        %v5319 = vld [vmem:[%s5285 + $0x84] sm:$0xf]
        %v5320 = vld [vmem:[%s5285 + $0x88] sm:$0xf]
        %v5321 = vld [vmem:[%s5285 + $0x8c] sm:$0x1]
        %v5322 = vld [vmem:[%s5285 + $0x90] sm:$0xf]
        %v5323 = vld [vmem:[%s5285 + $0x94] sm:$0xf]
        %v5324 = vld [vmem:[%s5285 + $0x98] sm:$0x1]
        %v5325 = vld [vmem:[%s5285 + $0x9c] sm:$0xf]
        %v5326 = vld [vmem:[%s5285 + $0xa0] sm:$0xf]
        %v5327 = vld [vmem:[%s5285 + $0xa4] sm:$0x1]
        %v5328 = vld [vmem:[%s5285 + $0xa8] sm:$0xf]
        %v5329 = vld [vmem:[%s5285 + $0xac] sm:$0xf]
        %v5330 = vld [vmem:[%s5285 + $0xb0] sm:$0x1]
        %v5331 = vld [vmem:[%s5285 + $0xb4] sm:$0xf]
        %v5332 = vld [vmem:[%s5285 + $0xb8] sm:$0xf]
        %v5333 = vld [vmem:[%s5285 + $0xbc] sm:$0x1]
        %5382 = vrot.lane.b32.xlu0 %v5286, 64
        %v5383 = vpop.permute.xlu0 %5382
        %5384 = vrot.lane.b32.xlu0 %v5287, 64
        %v5385 = vpop.permute.xlu0 %5384
        %5386 = vrot.lane.b32.xlu0 %v5288, 64
        %v5387 = vpop.permute.xlu0 %5386
        %5388 = vrot.lane.b32.xlu0 %v5289, 64
        %v5389 = vpop.permute.xlu0 %5388
        %5390 = vrot.lane.b32.xlu0 %v5290, 64
        %v5391 = vpop.permute.xlu0 %5390
        %5392 = vrot.lane.b32.xlu0 %v5291, 64
        %v5393 = vpop.permute.xlu0 %5392
        %5394 = vrot.lane.b32.xlu0 %v5292, 64
        %v5395 = vpop.permute.xlu0 %5394
        %5396 = vrot.lane.b32.xlu0 %v5293, 64
        %v5397 = vpop.permute.xlu0 %5396
        %5398 = vrot.lane.b32.xlu0 %v5294, 64
        %v5399 = vpop.permute.xlu0 %5398
        %5400 = vrot.lane.b32.xlu0 %v5295, 64
        %v5401 = vpop.permute.xlu0 %5400
        %5402 = vrot.lane.b32.xlu0 %v5296, 64
        %v5403 = vpop.permute.xlu0 %5402
        %5404 = vrot.lane.b32.xlu0 %v5297, 64
        %v5405 = vpop.permute.xlu0 %5404
        %5406 = vrot.lane.b32.xlu0 %v5298, 64
        %v5407 = vpop.permute.xlu0 %5406
        %5408 = vrot.lane.b32.xlu0 %v5299, 64
        %v5409 = vpop.permute.xlu0 %5408
        %5410 = vrot.lane.b32.xlu0 %v5300, 64
        %v5411 = vpop.permute.xlu0 %5410
        %5412 = vrot.lane.b32.xlu0 %v5301, 64
        %v5413 = vpop.permute.xlu0 %5412
        %5414 = vrot.lane.b32.xlu0 %v5302, 64
        %v5415 = vpop.permute.xlu0 %5414
        %5416 = vrot.lane.b32.xlu0 %v5303, 64
        %v5417 = vpop.permute.xlu0 %5416
        %5418 = vrot.lane.b32.xlu0 %v5304, 64
        %v5419 = vpop.permute.xlu0 %5418
        %5420 = vrot.lane.b32.xlu0 %v5305, 64
        %v5421 = vpop.permute.xlu0 %5420
        %5422 = vrot.lane.b32.xlu0 %v5306, 64
        %v5423 = vpop.permute.xlu0 %5422
        %5424 = vrot.lane.b32.xlu0 %v5307, 64
        %v5425 = vpop.permute.xlu0 %5424
        %5426 = vrot.lane.b32.xlu0 %v5308, 64
        %v5427 = vpop.permute.xlu0 %5426
        %5428 = vrot.lane.b32.xlu0 %v5309, 64
        %v5429 = vpop.permute.xlu0 %5428
        %5430 = vrot.lane.b32.xlu0 %v5310, 64
        %v5431 = vpop.permute.xlu0 %5430
        %5432 = vrot.lane.b32.xlu0 %v5311, 64
        %v5433 = vpop.permute.xlu0 %5432
        %5434 = vrot.lane.b32.xlu0 %v5312, 64
        %v5435 = vpop.permute.xlu0 %5434
        %5436 = vrot.lane.b32.xlu0 %v5313, 64
        %v5437 = vpop.permute.xlu0 %5436
        %5438 = vrot.lane.b32.xlu0 %v5314, 64
        %v5439 = vpop.permute.xlu0 %5438
        %5440 = vrot.lane.b32.xlu0 %v5315, 64
        %v5441 = vpop.permute.xlu0 %5440
        %5442 = vrot.lane.b32.xlu0 %v5316, 64
        %v5443 = vpop.permute.xlu0 %5442
        %5444 = vrot.lane.b32.xlu0 %v5317, 64
        %v5445 = vpop.permute.xlu0 %5444
        %5446 = vrot.lane.b32.xlu0 %v5318, 64
        %v5447 = vpop.permute.xlu0 %5446
        %5448 = vrot.lane.b32.xlu0 %v5319, 64
        %v5449 = vpop.permute.xlu0 %5448
        %5450 = vrot.lane.b32.xlu0 %v5320, 64
        %v5451 = vpop.permute.xlu0 %5450
        %5452 = vrot.lane.b32.xlu0 %v5321, 64
        %v5453 = vpop.permute.xlu0 %5452
        %5454 = vrot.lane.b32.xlu0 %v5322, 64
        %v5455 = vpop.permute.xlu0 %5454
        %5456 = vrot.lane.b32.xlu0 %v5323, 64
        %v5457 = vpop.permute.xlu0 %5456
        %5458 = vrot.lane.b32.xlu0 %v5324, 64
        %v5459 = vpop.permute.xlu0 %5458
        %5460 = vrot.lane.b32.xlu0 %v5325, 64
        %v5461 = vpop.permute.xlu0 %5460
        %5462 = vrot.lane.b32.xlu0 %v5326, 64
        %v5463 = vpop.permute.xlu0 %5462
        %5464 = vrot.lane.b32.xlu0 %v5327, 64
        %v5465 = vpop.permute.xlu0 %5464
        %5466 = vrot.lane.b32.xlu0 %v5328, 64
        %v5467 = vpop.permute.xlu0 %5466
        %5468 = vrot.lane.b32.xlu0 %v5329, 64
        %v5469 = vpop.permute.xlu0 %5468
        %5470 = vrot.lane.b32.xlu0 %v5330, 64
        %v5471 = vpop.permute.xlu0 %5470
        %5472 = vrot.lane.b32.xlu0 %v5331, 64
        %v5473 = vpop.permute.xlu0 %5472
        %5474 = vrot.lane.b32.xlu0 %v5332, 64
        %v5475 = vpop.permute.xlu0 %5474
        %5476 = vrot.lane.b32.xlu0 %v5333, 64
        %v5477 = vpop.permute.xlu0 %5476
        %vm5526 = vcmask 781824
        %5527 = vst.msk [vmem:[#allocation5] sm:$0xf] %vm5526, %v5383
        %5528 = vst.msk [vmem:[#allocation5 + $0x4] sm:$0xf] %vm5526, %v5385
        %vm5529 = vcmask 778752
        %5530 = vst.msk [vmem:[#allocation5 + $0x8] sm:$0x1] %vm5529, %v5387
        %5531 = vst.msk [vmem:[#allocation5 + $0xc] sm:$0xf] %vm5526, %v5389
        %5532 = vst.msk [vmem:[#allocation5 + $0x10] sm:$0xf] %vm5526, %v5391
        %5533 = vst.msk [vmem:[#allocation5 + $0x14] sm:$0x1] %vm5529, %v5393
        %5534 = vst.msk [vmem:[#allocation5 + $0x18] sm:$0xf] %vm5526, %v5395
        %5535 = vst.msk [vmem:[#allocation5 + $0x1c] sm:$0xf] %vm5526, %v5397
        %5536 = vst.msk [vmem:[#allocation5 + $0x20] sm:$0x1] %vm5529, %v5399
        %5537 = vst.msk [vmem:[#allocation5 + $0x24] sm:$0xf] %vm5526, %v5401
        %5538 = vst.msk [vmem:[#allocation5 + $0x28] sm:$0xf] %vm5526, %v5403
        %5539 = vst.msk [vmem:[#allocation5 + $0x2c] sm:$0x1] %vm5529, %v5405
        %5540 = vst.msk [vmem:[#allocation5 + $0x30] sm:$0xf] %vm5526, %v5407
        %5541 = vst.msk [vmem:[#allocation5 + $0x34] sm:$0xf] %vm5526, %v5409
        %5542 = vst.msk [vmem:[#allocation5 + $0x38] sm:$0x1] %vm5529, %v5411
        %5543 = vst.msk [vmem:[#allocation5 + $0x3c] sm:$0xf] %vm5526, %v5413
        %5544 = vst.msk [vmem:[#allocation5 + $0x40] sm:$0xf] %vm5526, %v5415
        %5545 = vst.msk [vmem:[#allocation5 + $0x44] sm:$0x1] %vm5529, %v5417
        %5546 = vst.msk [vmem:[#allocation5 + $0x48] sm:$0xf] %vm5526, %v5419
        %5547 = vst.msk [vmem:[#allocation5 + $0x4c] sm:$0xf] %vm5526, %v5421
        %5548 = vst.msk [vmem:[#allocation5 + $0x50] sm:$0x1] %vm5529, %v5423
        %5549 = vst.msk [vmem:[#allocation5 + $0x54] sm:$0xf] %vm5526, %v5425
        %5550 = vst.msk [vmem:[#allocation5 + $0x58] sm:$0xf] %vm5526, %v5427
        %5551 = vst.msk [vmem:[#allocation5 + $0x5c] sm:$0x1] %vm5529, %v5429
        %5552 = vst.msk [vmem:[#allocation5 + $0x60] sm:$0xf] %vm5526, %v5431
        %5553 = vst.msk [vmem:[#allocation5 + $0x64] sm:$0xf] %vm5526, %v5433
        %5554 = vst.msk [vmem:[#allocation5 + $0x68] sm:$0x1] %vm5529, %v5435
        %5555 = vst.msk [vmem:[#allocation5 + $0x6c] sm:$0xf] %vm5526, %v5437
        %5556 = vst.msk [vmem:[#allocation5 + $0x70] sm:$0xf] %vm5526, %v5439
        %5557 = vst.msk [vmem:[#allocation5 + $0x74] sm:$0x1] %vm5529, %v5441
        %5558 = vst.msk [vmem:[#allocation5 + $0x78] sm:$0xf] %vm5526, %v5443
        %5559 = vst.msk [vmem:[#allocation5 + $0x7c] sm:$0xf] %vm5526, %v5445
        %5560 = vst.msk [vmem:[#allocation5 + $0x80] sm:$0x1] %vm5529, %v5447
        %5561 = vst.msk [vmem:[#allocation5 + $0x84] sm:$0xf] %vm5526, %v5449
        %5562 = vst.msk [vmem:[#allocation5 + $0x88] sm:$0xf] %vm5526, %v5451
        %5563 = vst.msk [vmem:[#allocation5 + $0x8c] sm:$0x1] %vm5529, %v5453
        %5564 = vst.msk [vmem:[#allocation5 + $0x90] sm:$0xf] %vm5526, %v5455
        %5565 = vst.msk [vmem:[#allocation5 + $0x94] sm:$0xf] %vm5526, %v5457
        %5566 = vst.msk [vmem:[#allocation5 + $0x98] sm:$0x1] %vm5529, %v5459
        %5567 = vst.msk [vmem:[#allocation5 + $0x9c] sm:$0xf] %vm5526, %v5461
        %5568 = vst.msk [vmem:[#allocation5 + $0xa0] sm:$0xf] %vm5526, %v5463
        %5569 = vst.msk [vmem:[#allocation5 + $0xa4] sm:$0x1] %vm5529, %v5465
        %5570 = vst.msk [vmem:[#allocation5 + $0xa8] sm:$0xf] %vm5526, %v5467
        %5571 = vst.msk [vmem:[#allocation5 + $0xac] sm:$0xf] %vm5526, %v5469
        %5572 = vst.msk [vmem:[#allocation5 + $0xb0] sm:$0x1] %vm5529, %v5471
        %5573 = vst.msk [vmem:[#allocation5 + $0xb4] sm:$0xf] %vm5526, %v5473
        %5574 = vst.msk [vmem:[#allocation5 + $0xb8] sm:$0xf] %vm5526, %v5475
        %5575 = vst.msk [vmem:[#allocation5 + $0xbc] sm:$0x1] %vm5529, %v5477
        %v5576 = vld [vmem:[#allocation5] sm:$0xf]
        %v5577 = vld [vmem:[#allocation5 + $0x4] sm:$0xf]
        %v5578 = vld [vmem:[#allocation5 + $0xc] sm:$0xf]
        %v5579 = vld [vmem:[#allocation5 + $0x10] sm:$0xf]
        %v5580 = vld [vmem:[#allocation5 + $0x18] sm:$0xf]
        %v5581 = vld [vmem:[#allocation5 + $0x1c] sm:$0xf]
        %v5582 = vld [vmem:[#allocation5 + $0x24] sm:$0xf]
        %v5583 = vld [vmem:[#allocation5 + $0x28] sm:$0xf]
        %v5584 = vld [vmem:[#allocation5 + $0x30] sm:$0xf]
        %v5585 = vld [vmem:[#allocation5 + $0x34] sm:$0xf]
        %v5586 = vld [vmem:[#allocation5 + $0x3c] sm:$0xf]
        %v5587 = vld [vmem:[#allocation5 + $0x40] sm:$0xf]
        %v5588 = vld [vmem:[#allocation5 + $0x48] sm:$0xf]
        %v5589 = vld [vmem:[#allocation5 + $0x4c] sm:$0xf]
        %v5590 = vld [vmem:[#allocation5 + $0x54] sm:$0xf]
        %v5591 = vld [vmem:[#allocation5 + $0x58] sm:$0xf]
        %v5592 = vld [vmem:[#allocation5 + $0x60] sm:$0xf]
        %v5593 = vld [vmem:[#allocation5 + $0x64] sm:$0xf]
        %v5594 = vld [vmem:[#allocation5 + $0x6c] sm:$0xf]
        %v5595 = vld [vmem:[#allocation5 + $0x70] sm:$0xf]
        %v5596 = vld [vmem:[#allocation5 + $0x78] sm:$0xf]
        %v5597 = vld [vmem:[#allocation5 + $0x7c] sm:$0xf]
        %v5598 = vld [vmem:[#allocation5 + $0x84] sm:$0xf]
        %v5599 = vld [vmem:[#allocation5 + $0x88] sm:$0xf]
        %v5600 = vld [vmem:[#allocation5 + $0x90] sm:$0xf]
        %v5601 = vld [vmem:[#allocation5 + $0x94] sm:$0xf]
        %v5602 = vld [vmem:[#allocation5 + $0x9c] sm:$0xf]
        %v5603 = vld [vmem:[#allocation5 + $0xa0] sm:$0xf]
        %v5604 = vld [vmem:[#allocation5 + $0xa8] sm:$0xf]
        %v5605 = vld [vmem:[#allocation5 + $0xac] sm:$0xf]
        %v5606 = vld [vmem:[#allocation5 + $0xb4] sm:$0xf]
        %v5607 = vld [vmem:[#allocation5 + $0xb8] sm:$0xf]
        %v5608 = vld [vmem:[#allocation5 + $0x8] sm:$0x1]
        %v5609 = vld [vmem:[#allocation5 + $0x14] sm:$0x1]
        %v5610 = vld [vmem:[#allocation5 + $0x20] sm:$0x1]
        %v5611 = vld [vmem:[#allocation5 + $0x2c] sm:$0x1]
        %v5612 = vld [vmem:[#allocation5 + $0x38] sm:$0x1]
        %v5613 = vld [vmem:[#allocation5 + $0x44] sm:$0x1]
        %v5614 = vld [vmem:[#allocation5 + $0x50] sm:$0x1]
        %v5615 = vld [vmem:[#allocation5 + $0x5c] sm:$0x1]
        %v5616 = vld [vmem:[#allocation5 + $0x68] sm:$0x1]
        %v5617 = vld [vmem:[#allocation5 + $0x74] sm:$0x1]
        %v5618 = vld [vmem:[#allocation5 + $0x80] sm:$0x1]
        %v5619 = vld [vmem:[#allocation5 + $0x8c] sm:$0x1]
        %v5620 = vld [vmem:[#allocation5 + $0x98] sm:$0x1]
        %v5621 = vld [vmem:[#allocation5 + $0xa4] sm:$0x1]
        %v5622 = vld [vmem:[#allocation5 + $0xb0] sm:$0x1]
        %v5623 = vld [vmem:[#allocation5 + $0xbc] sm:$0x1]
        %v5625 = vshrl.u32 %v5576, 16
        %v5627 = vrot.slane %v5625, 4
        %v5628 = vshll.u32 %v5576, 16
        %v5630 = vrot.slane %v5628, 5
        %v5631 = vor.u32 %v5627, %v5630
        %v5632 = vrot.slane %v5631, 4
        %v5634 = vshll.u32 %v5577, 16
        %v5636 = vrot.slane %v5634, 5
        %v5637 = vsel %vm1920, %v5632, %v5636
        %v5638 = vshrl.u32 %v5577, 16
        %v5640 = vrot.slane %v5638, 4
        %v5641 = vor.u32 %v5640, %v5636
        %v5642 = vrot.slane %v5641, 4
        %v5644 = vshll.u32 %v5608, 16
        %v5646 = vrot.slane %v5644, 5
        %v5647 = vsel %vm1920, %v5642, %v5646
        %v5649 = vshrl.u32 %v5578, 16
        %v5651 = vrot.slane %v5649, 4
        %v5652 = vshll.u32 %v5578, 16
        %v5654 = vrot.slane %v5652, 5
        %v5655 = vor.u32 %v5651, %v5654
        %v5656 = vrot.slane %v5655, 4
        %v5658 = vshll.u32 %v5579, 16
        %v5660 = vrot.slane %v5658, 5
        %v5661 = vsel %vm1920, %v5656, %v5660
        %v5662 = vshrl.u32 %v5579, 16
        %v5664 = vrot.slane %v5662, 4
        %v5665 = vor.u32 %v5664, %v5660
        %v5666 = vrot.slane %v5665, 4
        %v5668 = vshll.u32 %v5609, 16
        %v5670 = vrot.slane %v5668, 5
        %v5671 = vsel %vm1920, %v5666, %v5670
        %v5673 = vshrl.u32 %v5580, 16
        %v5675 = vrot.slane %v5673, 4
        %v5676 = vshll.u32 %v5580, 16
        %v5678 = vrot.slane %v5676, 5
        %v5679 = vor.u32 %v5675, %v5678
        %v5680 = vrot.slane %v5679, 4
        %v5682 = vshll.u32 %v5581, 16
        %v5684 = vrot.slane %v5682, 5
        %v5685 = vsel %vm1920, %v5680, %v5684
        %v5686 = vshrl.u32 %v5581, 16
        %v5688 = vrot.slane %v5686, 4
        %v5689 = vor.u32 %v5688, %v5684
        %v5690 = vrot.slane %v5689, 4
        %v5692 = vshll.u32 %v5610, 16
        %v5694 = vrot.slane %v5692, 5
        %v5695 = vsel %vm1920, %v5690, %v5694
        %v5697 = vshrl.u32 %v5582, 16
        %v5699 = vrot.slane %v5697, 4
        %v5700 = vshll.u32 %v5582, 16
        %v5702 = vrot.slane %v5700, 5
        %v5703 = vor.u32 %v5699, %v5702
        %v5704 = vrot.slane %v5703, 4
        %v5706 = vshll.u32 %v5583, 16
        %v5708 = vrot.slane %v5706, 5
        %v5709 = vsel %vm1920, %v5704, %v5708
        %v5710 = vshrl.u32 %v5583, 16
        %v5712 = vrot.slane %v5710, 4
        %v5713 = vor.u32 %v5712, %v5708
        %v5714 = vrot.slane %v5713, 4
        %v5716 = vshll.u32 %v5611, 16
        %v5718 = vrot.slane %v5716, 5
        %v5719 = vsel %vm1920, %v5714, %v5718
        %v5721 = vshrl.u32 %v5584, 16
        %v5723 = vrot.slane %v5721, 4
        %v5724 = vshll.u32 %v5584, 16
        %v5726 = vrot.slane %v5724, 5
        %v5727 = vor.u32 %v5723, %v5726
        %v5728 = vrot.slane %v5727, 4
        %v5730 = vshll.u32 %v5585, 16
        %v5732 = vrot.slane %v5730, 5
        %v5733 = vsel %vm1920, %v5728, %v5732
        %v5734 = vshrl.u32 %v5585, 16
        %v5736 = vrot.slane %v5734, 4
        %v5737 = vor.u32 %v5736, %v5732
        %v5738 = vrot.slane %v5737, 4
        %v5740 = vshll.u32 %v5612, 16
        %v5742 = vrot.slane %v5740, 5
        %v5743 = vsel %vm1920, %v5738, %v5742
        %v5745 = vshrl.u32 %v5586, 16
        %v5747 = vrot.slane %v5745, 4
        %v5748 = vshll.u32 %v5586, 16
        %v5750 = vrot.slane %v5748, 5
        %v5751 = vor.u32 %v5747, %v5750
        %v5752 = vrot.slane %v5751, 4
        %v5754 = vshll.u32 %v5587, 16
        %v5756 = vrot.slane %v5754, 5
        %v5757 = vsel %vm1920, %v5752, %v5756
        %v5758 = vshrl.u32 %v5587, 16
        %v5760 = vrot.slane %v5758, 4
        %v5761 = vor.u32 %v5760, %v5756
        %v5762 = vrot.slane %v5761, 4
        %v5764 = vshll.u32 %v5613, 16
        %v5766 = vrot.slane %v5764, 5
        %v5767 = vsel %vm1920, %v5762, %v5766
        %v5769 = vshrl.u32 %v5588, 16
        %v5771 = vrot.slane %v5769, 4
        %v5772 = vshll.u32 %v5588, 16
        %v5774 = vrot.slane %v5772, 5
        %v5775 = vor.u32 %v5771, %v5774
        %v5776 = vrot.slane %v5775, 4
        %v5778 = vshll.u32 %v5589, 16
        %v5780 = vrot.slane %v5778, 5
        %v5781 = vsel %vm1920, %v5776, %v5780
        %v5782 = vshrl.u32 %v5589, 16
        %v5784 = vrot.slane %v5782, 4
        %v5785 = vor.u32 %v5784, %v5780
        %v5786 = vrot.slane %v5785, 4
        %v5788 = vshll.u32 %v5614, 16
        %v5790 = vrot.slane %v5788, 5
        %v5791 = vsel %vm1920, %v5786, %v5790
        %v5793 = vshrl.u32 %v5590, 16
        %v5795 = vrot.slane %v5793, 4
        %v5796 = vshll.u32 %v5590, 16
        %v5798 = vrot.slane %v5796, 5
        %v5799 = vor.u32 %v5795, %v5798
        %v5800 = vrot.slane %v5799, 4
        %v5802 = vshll.u32 %v5591, 16
        %v5804 = vrot.slane %v5802, 5
        %v5805 = vsel %vm1920, %v5800, %v5804
        %v5806 = vshrl.u32 %v5591, 16
        %v5808 = vrot.slane %v5806, 4
        %v5809 = vor.u32 %v5808, %v5804
        %v5810 = vrot.slane %v5809, 4
        %v5812 = vshll.u32 %v5615, 16
        %v5814 = vrot.slane %v5812, 5
        %v5815 = vsel %vm1920, %v5810, %v5814
        %v5817 = vshrl.u32 %v5592, 16
        %v5819 = vrot.slane %v5817, 4
        %v5820 = vshll.u32 %v5592, 16
        %v5822 = vrot.slane %v5820, 5
        %v5823 = vor.u32 %v5819, %v5822
        %v5824 = vrot.slane %v5823, 4
        %v5826 = vshll.u32 %v5593, 16
        %v5828 = vrot.slane %v5826, 5
        %v5829 = vsel %vm1920, %v5824, %v5828
        %v5830 = vshrl.u32 %v5593, 16
        %v5832 = vrot.slane %v5830, 4
        %v5833 = vor.u32 %v5832, %v5828
        %v5834 = vrot.slane %v5833, 4
        %v5836 = vshll.u32 %v5616, 16
        %v5838 = vrot.slane %v5836, 5
        %v5839 = vsel %vm1920, %v5834, %v5838
        %v5841 = vshrl.u32 %v5594, 16
        %v5843 = vrot.slane %v5841, 4
        %v5844 = vshll.u32 %v5594, 16
        %v5846 = vrot.slane %v5844, 5
        %v5847 = vor.u32 %v5843, %v5846
        %v5848 = vrot.slane %v5847, 4
        %v5850 = vshll.u32 %v5595, 16
        %v5852 = vrot.slane %v5850, 5
        %v5853 = vsel %vm1920, %v5848, %v5852
        %v5854 = vshrl.u32 %v5595, 16
        %v5856 = vrot.slane %v5854, 4
        %v5857 = vor.u32 %v5856, %v5852
        %v5858 = vrot.slane %v5857, 4
        %v5860 = vshll.u32 %v5617, 16
        %v5862 = vrot.slane %v5860, 5
        %v5863 = vsel %vm1920, %v5858, %v5862
        %v5865 = vshrl.u32 %v5596, 16
        %v5867 = vrot.slane %v5865, 4
        %v5868 = vshll.u32 %v5596, 16
        %v5870 = vrot.slane %v5868, 5
        %v5871 = vor.u32 %v5867, %v5870
        %v5872 = vrot.slane %v5871, 4
        %v5874 = vshll.u32 %v5597, 16
        %v5876 = vrot.slane %v5874, 5
        %v5877 = vsel %vm1920, %v5872, %v5876
        %v5878 = vshrl.u32 %v5597, 16
        %v5880 = vrot.slane %v5878, 4
        %v5881 = vor.u32 %v5880, %v5876
        %v5882 = vrot.slane %v5881, 4
        %v5884 = vshll.u32 %v5618, 16
        %v5886 = vrot.slane %v5884, 5
        %v5887 = vsel %vm1920, %v5882, %v5886
        %v5889 = vshrl.u32 %v5598, 16
        %v5891 = vrot.slane %v5889, 4
        %v5892 = vshll.u32 %v5598, 16
        %v5894 = vrot.slane %v5892, 5
        %v5895 = vor.u32 %v5891, %v5894
        %v5896 = vrot.slane %v5895, 4
        %v5898 = vshll.u32 %v5599, 16
        %v5900 = vrot.slane %v5898, 5
        %v5901 = vsel %vm1920, %v5896, %v5900
        %v5902 = vshrl.u32 %v5599, 16
        %v5904 = vrot.slane %v5902, 4
        %v5905 = vor.u32 %v5904, %v5900
        %v5906 = vrot.slane %v5905, 4
        %v5908 = vshll.u32 %v5619, 16
        %v5910 = vrot.slane %v5908, 5
        %v5911 = vsel %vm1920, %v5906, %v5910
        %v5913 = vshrl.u32 %v5600, 16
        %v5915 = vrot.slane %v5913, 4
        %v5916 = vshll.u32 %v5600, 16
        %v5918 = vrot.slane %v5916, 5
        %v5919 = vor.u32 %v5915, %v5918
        %v5920 = vrot.slane %v5919, 4
        %v5922 = vshll.u32 %v5601, 16
        %v5924 = vrot.slane %v5922, 5
        %v5925 = vsel %vm1920, %v5920, %v5924
        %v5926 = vshrl.u32 %v5601, 16
        %v5928 = vrot.slane %v5926, 4
        %v5929 = vor.u32 %v5928, %v5924
        %v5930 = vrot.slane %v5929, 4
        %v5932 = vshll.u32 %v5620, 16
        %v5934 = vrot.slane %v5932, 5
        %v5935 = vsel %vm1920, %v5930, %v5934
        %v5937 = vshrl.u32 %v5602, 16
        %v5939 = vrot.slane %v5937, 4
        %v5940 = vshll.u32 %v5602, 16
        %v5942 = vrot.slane %v5940, 5
        %v5943 = vor.u32 %v5939, %v5942
        %v5944 = vrot.slane %v5943, 4
        %v5946 = vshll.u32 %v5603, 16
        %v5948 = vrot.slane %v5946, 5
        %v5949 = vsel %vm1920, %v5944, %v5948
        %v5950 = vshrl.u32 %v5603, 16
        %v5952 = vrot.slane %v5950, 4
        %v5953 = vor.u32 %v5952, %v5948
        %v5954 = vrot.slane %v5953, 4
        %v5956 = vshll.u32 %v5621, 16
        %v5958 = vrot.slane %v5956, 5
        %v5959 = vsel %vm1920, %v5954, %v5958
        %v5961 = vshrl.u32 %v5604, 16
        %v5963 = vrot.slane %v5961, 4
        %v5964 = vshll.u32 %v5604, 16
        %v5966 = vrot.slane %v5964, 5
        %v5967 = vor.u32 %v5963, %v5966
        %v5968 = vrot.slane %v5967, 4
        %v5970 = vshll.u32 %v5605, 16
        %v5972 = vrot.slane %v5970, 5
        %v5973 = vsel %vm1920, %v5968, %v5972
        %v5974 = vshrl.u32 %v5605, 16
        %v5976 = vrot.slane %v5974, 4
        %v5977 = vor.u32 %v5976, %v5972
        %v5978 = vrot.slane %v5977, 4
        %v5980 = vshll.u32 %v5622, 16
        %v5982 = vrot.slane %v5980, 5
        %v5983 = vsel %vm1920, %v5978, %v5982
        %v5985 = vshrl.u32 %v5606, 16
        %v5987 = vrot.slane %v5985, 4
        %v5988 = vshll.u32 %v5606, 16
        %v5990 = vrot.slane %v5988, 5
        %v5991 = vor.u32 %v5987, %v5990
        %v5992 = vrot.slane %v5991, 4
        %v5994 = vshll.u32 %v5607, 16
        %v5996 = vrot.slane %v5994, 5
        %v5997 = vsel %vm1920, %v5992, %v5996
        %v5998 = vshrl.u32 %v5607, 16
        %v6000 = vrot.slane %v5998, 4
        %v6001 = vor.u32 %v6000, %v5996
        %v6002 = vrot.slane %v6001, 4
        %v6004 = vshll.u32 %v5623, 16
        %v6006 = vrot.slane %v6004, 5
        %v6007 = vsel %vm1920, %v6002, %v6006
        %v6008 = vunpack.c.l.b16 %v5637
        %v6009 = vunpack.c.l.b16 %v5647
        %v6010 = vunpack.c.l.b16 %v5661
        %v6011 = vunpack.c.l.b16 %v5671
        %v6012 = vunpack.c.l.b16 %v5685
        %v6013 = vunpack.c.l.b16 %v5695
        %v6014 = vunpack.c.l.b16 %v5709
        %v6015 = vunpack.c.l.b16 %v5719
        %v6016 = vunpack.c.l.b16 %v5733
        %v6017 = vunpack.c.l.b16 %v5743
        %v6018 = vunpack.c.l.b16 %v5757
        %v6019 = vunpack.c.l.b16 %v5767
        %v6020 = vunpack.c.l.b16 %v5781
        %v6021 = vunpack.c.l.b16 %v5791
        %v6022 = vunpack.c.l.b16 %v5805
        %v6023 = vunpack.c.l.b16 %v5815
        %v6024 = vunpack.c.l.b16 %v5829
        %v6025 = vunpack.c.l.b16 %v5839
        %v6026 = vunpack.c.l.b16 %v5853
        %v6027 = vunpack.c.l.b16 %v5863
        %v6028 = vunpack.c.l.b16 %v5877
        %v6029 = vunpack.c.l.b16 %v5887
        %v6030 = vunpack.c.l.b16 %v5901
        %v6031 = vunpack.c.l.b16 %v5911
        %v6032 = vunpack.c.l.b16 %v5925
        %v6033 = vunpack.c.l.b16 %v5935
        %v6034 = vunpack.c.l.b16 %v5949
        %v6035 = vunpack.c.l.b16 %v5959
        %v6036 = vunpack.c.l.b16 %v5973
        %v6037 = vunpack.c.l.b16 %v5983
        %v6038 = vunpack.c.l.b16 %v5997
        %v6039 = vunpack.c.l.b16 %v6007
        %v6040 = vpack.c.b16 %v6009, %v6008
        %v6041 = vpack.c.b16 %v6011, %v6010
        %v6042 = vpack.c.b16 %v6013, %v6012
        %v6043 = vpack.c.b16 %v6015, %v6014
        %v6044 = vpack.c.b16 %v6017, %v6016
        %v6045 = vpack.c.b16 %v6019, %v6018
        %v6046 = vpack.c.b16 %v6021, %v6020
        %v6047 = vpack.c.b16 %v6023, %v6022
        %v6048 = vpack.c.b16 %v6025, %v6024
        %v6049 = vpack.c.b16 %v6027, %v6026
        %v6050 = vpack.c.b16 %v6029, %v6028
        %v6051 = vpack.c.b16 %v6031, %v6030
        %v6052 = vpack.c.b16 %v6033, %v6032
        %v6053 = vpack.c.b16 %v6035, %v6034
        %v6054 = vpack.c.b16 %v6037, %v6036
        %v6055 = vpack.c.b16 %v6039, %v6038
        %v6068 = vunpack.c.l.b16 %v470
        %v6069 = vunpack.c.l.b16 %v471
        %v6070 = vunpack.c.l.b16 %v472
        %v6071 = vunpack.c.l.b16 %v473
        %v6072 = vunpack.c.l.b16 %v474
        %v6073 = vunpack.c.l.b16 %v475
        %v6074 = vunpack.c.l.b16 %v476
        %v6075 = vunpack.c.l.b16 %v477
        %v6076 = vunpack.c.l.b16 %v478
        %v6077 = vunpack.c.l.b16 %v479
        %v6078 = vunpack.c.l.b16 %v480
        %v6079 = vunpack.c.l.b16 %v481
        %v6080 = vpack.c.b16 %v6069, %v6068
        %v6081 = vpack.c.b16 %v6071, %v6070
        %v6082 = vpack.c.b16 %v6073, %v6072
        %v6083 = vpack.c.b16 %v6075, %v6074
        %v6084 = vpack.c.b16 %v6077, %v6076
        %v6085 = vpack.c.b16 %v6079, %v6078
        %vm6092 = vcmask 785408
        %v6094 = vsel %vm6092, %v6040, 0
        %v6097 = vsel %vm6092, %v6041, 0
        %v6100 = vsel %vm6092, %v6042, 0
        %v6103 = vsel %vm6092, %v6043, 0
        %v6106 = vsel %vm6092, %v6044, 0
        %v6109 = vsel %vm6092, %v6045, 0
        %v6112 = vsel %vm6092, %v6046, 0
        %v6115 = vsel %vm6092, %v6047, 0
        %v6118 = vsel %vm6092, %v6048, 0
        %v6121 = vsel %vm6092, %v6049, 0
        %v6124 = vsel %vm6092, %v6050, 0
        %v6127 = vsel %vm6092, %v6051, 0
        %v6130 = vsel %vm6092, %v6052, 0
        %v6133 = vsel %vm6092, %v6053, 0
        %v6136 = vsel %vm6092, %v6054, 0
        %v6139 = vsel %vm6092, %v6055, 0
        %6141 = vmatprep.subr.bf16.mxu0 0
        %6142 = vmatpush1.bf16.msra.mxu0 0
        %6143 = vmatprep.subr.bf16.mxu0 0
        %6144 = vmatpush1.bf16.msra.mxu0 0
        %6145 = vmatprep.subr.bf16.mxu0 0
        %6146 = vmatpush1.bf16.msra.mxu0 %v6085
        %6147 = vmatprep.subr.bf16.mxu0 0
        %6148 = vmatpush1.bf16.msra.mxu0 %v6084
        %6149 = vmatprep.subr.bf16.mxu0 0
        %6150 = vmatpush1.bf16.msra.mxu0 %v6083
        %6151 = vmatprep.subr.bf16.mxu0 0
        %6152 = vmatpush1.bf16.msra.mxu0 %v6082
        %6153 = vmatprep.subr.bf16.mxu0 0
        %6154 = vmatpush1.bf16.msra.mxu0 %v6081
        %6155 = vmatprep.subr.bf16.mxu0 0
        %6156 = vmatpush1.bf16.msra.mxu0 %v6080
        %6157 = vmatprep.subr.bf16.mxu0 0
        %6158 = vmatpush2.bf16.msra.mxu0 0
        %6159 = vmatprep.subr.bf16.mxu0 0
        %6160 = vmatpush2.bf16.msra.mxu0 0
        %6161 = vmatprep.subr.bf16.mxu0 0
        %6162 = vmatpush2.bf16.msra.mxu0 0
        %6163 = vmatprep.subr.bf16.mxu0 0
        %6164 = vmatpush2.bf16.msra.mxu0 0
        %6165 = vmatprep.subr.bf16.mxu0 0
        %6166 = vmatpush2.bf16.msra.mxu0 0
        %6167 = vmatprep.subr.bf16.mxu0 0
        %6168 = vmatpush2.bf16.msra.mxu0 0
        %6169 = vmatprep.subr.bf16.mxu0 0
        %6170 = vmatpush2.bf16.msra.mxu0 0
        %6171 = vmatprep.subr.bf16.mxu0 0
        %6172 = vmatpush2.bf16.msra.mxu0 0
        %6173 = vmatprep.mubr.bf16.mxu0 0
        %6174 = vmatmul.mubr.bf16.gmra.mxu0 %v6094
        %v6175 = vpop.f32.mrf.mxu0
        %v6176 = vadd.f32 0.0, %v6175
        %v6177 = vpop.f32.mrf.mxu0
        %v6178 = vpop.f32.mrf.mxu0
        %v6179 = vadd.f32 0.0, %v6178
        %v6180 = vpop.f32.mrf.mxu0
        %6181 = vmatprep.mubr.bf16.mxu0 0
        %6182 = vmatmul.mubr.bf16.gmra.mxu0 %v6097
        %v6183 = vpop.f32.mrf.mxu0
        %v6184 = vadd.f32 0.0, %v6183
        %v6185 = vpop.f32.mrf.mxu0
        %v6186 = vpop.f32.mrf.mxu0
        %v6187 = vadd.f32 0.0, %v6186
        %v6188 = vpop.f32.mrf.mxu0
        %6189 = vmatprep.mubr.bf16.mxu0 0
        %6190 = vmatmul.mubr.bf16.gmra.mxu0 %v6100
        %v6191 = vpop.f32.mrf.mxu0
        %v6192 = vadd.f32 0.0, %v6191
        %v6193 = vpop.f32.mrf.mxu0
        %v6194 = vpop.f32.mrf.mxu0
        %v6195 = vadd.f32 0.0, %v6194
        %v6196 = vpop.f32.mrf.mxu0
        %6197 = vmatprep.mubr.bf16.mxu0 0
        %6198 = vmatmul.mubr.bf16.gmra.mxu0 %v6103
        %v6199 = vpop.f32.mrf.mxu0
        %v6200 = vadd.f32 0.0, %v6199
        %v6201 = vpop.f32.mrf.mxu0
        %v6202 = vpop.f32.mrf.mxu0
        %v6203 = vadd.f32 0.0, %v6202
        %v6204 = vpop.f32.mrf.mxu0
        %6205 = vmatprep.mubr.bf16.mxu0 0
        %6206 = vmatmul.mubr.bf16.gmra.mxu0 %v6106
        %v6207 = vpop.f32.mrf.mxu0
        %v6208 = vadd.f32 0.0, %v6207
        %v6209 = vpop.f32.mrf.mxu0
        %v6210 = vpop.f32.mrf.mxu0
        %v6211 = vadd.f32 0.0, %v6210
        %v6212 = vpop.f32.mrf.mxu0
        %6213 = vmatprep.mubr.bf16.mxu0 0
        %6214 = vmatmul.mubr.bf16.gmra.mxu0 %v6109
        %v6215 = vpop.f32.mrf.mxu0
        %v6216 = vadd.f32 0.0, %v6215
        %v6217 = vpop.f32.mrf.mxu0
        %v6218 = vpop.f32.mrf.mxu0
        %v6219 = vadd.f32 0.0, %v6218
        %v6220 = vpop.f32.mrf.mxu0
        %6221 = vmatprep.mubr.bf16.mxu0 0
        %6222 = vmatmul.mubr.bf16.gmra.mxu0 %v6112
        %v6223 = vpop.f32.mrf.mxu0
        %v6224 = vadd.f32 0.0, %v6223
        %v6225 = vpop.f32.mrf.mxu0
        %v6226 = vpop.f32.mrf.mxu0
        %v6227 = vadd.f32 0.0, %v6226
        %v6228 = vpop.f32.mrf.mxu0
        %6229 = vmatprep.mubr.bf16.mxu0 0
        %6230 = vmatmul.mubr.bf16.gmra.mxu0 %v6115
        %v6231 = vpop.f32.mrf.mxu0
        %v6232 = vadd.f32 0.0, %v6231
        %v6233 = vpop.f32.mrf.mxu0
        %v6234 = vpop.f32.mrf.mxu0
        %v6235 = vadd.f32 0.0, %v6234
        %v6236 = vpop.f32.mrf.mxu0
        %6237 = vmatprep.mubr.bf16.mxu0 0
        %6238 = vmatmul.mubr.bf16.gmra.mxu0 %v6118
        %v6239 = vpop.f32.mrf.mxu0
        %v6240 = vadd.f32 0.0, %v6239
        %v6241 = vpop.f32.mrf.mxu0
        %v6242 = vpop.f32.mrf.mxu0
        %v6243 = vadd.f32 0.0, %v6242
        %v6244 = vpop.f32.mrf.mxu0
        %6245 = vmatprep.mubr.bf16.mxu0 0
        %6246 = vmatmul.mubr.bf16.gmra.mxu0 %v6121
        %v6247 = vpop.f32.mrf.mxu0
        %v6248 = vadd.f32 0.0, %v6247
        %v6249 = vpop.f32.mrf.mxu0
        %v6250 = vpop.f32.mrf.mxu0
        %v6251 = vadd.f32 0.0, %v6250
        %v6252 = vpop.f32.mrf.mxu0
        %6253 = vmatprep.mubr.bf16.mxu0 0
        %6254 = vmatmul.mubr.bf16.gmra.mxu0 %v6124
        %v6255 = vpop.f32.mrf.mxu0
        %v6256 = vadd.f32 0.0, %v6255
        %v6257 = vpop.f32.mrf.mxu0
        %v6258 = vpop.f32.mrf.mxu0
        %v6259 = vadd.f32 0.0, %v6258
        %v6260 = vpop.f32.mrf.mxu0
        %6261 = vmatprep.mubr.bf16.mxu0 0
        %6262 = vmatmul.mubr.bf16.gmra.mxu0 %v6127
        %v6263 = vpop.f32.mrf.mxu0
        %v6264 = vadd.f32 0.0, %v6263
        %v6265 = vpop.f32.mrf.mxu0
        %v6266 = vpop.f32.mrf.mxu0
        %v6267 = vadd.f32 0.0, %v6266
        %v6268 = vpop.f32.mrf.mxu0
        %6269 = vmatprep.mubr.bf16.mxu0 0
        %6270 = vmatmul.mubr.bf16.gmra.mxu0 %v6130
        %v6271 = vpop.f32.mrf.mxu0
        %v6272 = vadd.f32 0.0, %v6271
        %v6273 = vpop.f32.mrf.mxu0
        %v6274 = vpop.f32.mrf.mxu0
        %v6275 = vadd.f32 0.0, %v6274
        %v6276 = vpop.f32.mrf.mxu0
        %6277 = vmatprep.mubr.bf16.mxu0 0
        %6278 = vmatmul.mubr.bf16.gmra.mxu0 %v6133
        %v6279 = vpop.f32.mrf.mxu0
        %v6280 = vadd.f32 0.0, %v6279
        %v6281 = vpop.f32.mrf.mxu0
        %v6282 = vpop.f32.mrf.mxu0
        %v6283 = vadd.f32 0.0, %v6282
        %v6284 = vpop.f32.mrf.mxu0
        %6285 = vmatprep.mubr.bf16.mxu0 0
        %6286 = vmatmul.mubr.bf16.gmra.mxu0 %v6136
        %v6287 = vpop.f32.mrf.mxu0
        %v6288 = vadd.f32 0.0, %v6287
        %v6289 = vpop.f32.mrf.mxu0
        %v6290 = vpop.f32.mrf.mxu0
        %v6291 = vadd.f32 0.0, %v6290
        %v6292 = vpop.f32.mrf.mxu0
        %6293 = vmatprep.mubr.bf16.mxu0 0
        %6294 = vmatmul.mubr.bf16.gmra.mxu0 %v6139
        %v6295 = vpop.f32.mrf.mxu0
        %v6296 = vadd.f32 0.0, %v6295
        %v6297 = vpop.f32.mrf.mxu0
        %v6298 = vpop.f32.mrf.mxu0
        %v6299 = vadd.f32 0.0, %v6298
        %v6300 = vpop.f32.mrf.mxu0
        %6301 = vdwg.mxu0
        %v6334 = vunpack.c.l.b16 %v5576
        %v6335 = vunpack.c.l.b16 %v5577
        %v6336 = vunpack.c.l.b16 %v5578
        %v6337 = vunpack.c.l.b16 %v5579
        %v6338 = vunpack.c.l.b16 %v5580
        %v6339 = vunpack.c.l.b16 %v5581
        %v6340 = vunpack.c.l.b16 %v5582
        %v6341 = vunpack.c.l.b16 %v5583
        %v6342 = vunpack.c.l.b16 %v5584
        %v6343 = vunpack.c.l.b16 %v5585
        %v6344 = vunpack.c.l.b16 %v5586
        %v6345 = vunpack.c.l.b16 %v5587
        %v6346 = vunpack.c.l.b16 %v5588
        %v6347 = vunpack.c.l.b16 %v5589
        %v6348 = vunpack.c.l.b16 %v5590
        %v6349 = vunpack.c.l.b16 %v5591
        %v6350 = vunpack.c.l.b16 %v5592
        %v6351 = vunpack.c.l.b16 %v5593
        %v6352 = vunpack.c.l.b16 %v5594
        %v6353 = vunpack.c.l.b16 %v5595
        %v6354 = vunpack.c.l.b16 %v5596
        %v6355 = vunpack.c.l.b16 %v5597
        %v6356 = vunpack.c.l.b16 %v5598
        %v6357 = vunpack.c.l.b16 %v5599
        %v6358 = vunpack.c.l.b16 %v5600
        %v6359 = vunpack.c.l.b16 %v5601
        %v6360 = vunpack.c.l.b16 %v5602
        %v6361 = vunpack.c.l.b16 %v5603
        %v6362 = vunpack.c.l.b16 %v5604
        %v6363 = vunpack.c.l.b16 %v5605
        %v6364 = vunpack.c.l.b16 %v5606
        %v6365 = vunpack.c.l.b16 %v5607
        %v6366 = vpack.c.b16 %v6335, %v6334
        %v6367 = vpack.c.b16 %v6337, %v6336
        %v6368 = vpack.c.b16 %v6339, %v6338
        %v6369 = vpack.c.b16 %v6341, %v6340
        %v6370 = vpack.c.b16 %v6343, %v6342
        %v6371 = vpack.c.b16 %v6345, %v6344
        %v6372 = vpack.c.b16 %v6347, %v6346
        %v6373 = vpack.c.b16 %v6349, %v6348
        %v6374 = vpack.c.b16 %v6351, %v6350
        %v6375 = vpack.c.b16 %v6353, %v6352
        %v6376 = vpack.c.b16 %v6355, %v6354
        %v6377 = vpack.c.b16 %v6357, %v6356
        %v6378 = vpack.c.b16 %v6359, %v6358
        %v6379 = vpack.c.b16 %v6361, %v6360
        %v6380 = vpack.c.b16 %v6363, %v6362
        %v6381 = vpack.c.b16 %v6365, %v6364
        %v6394 = vunpack.c.l.b16 %v458
        %v6395 = vunpack.c.l.b16 %v459
        %v6396 = vunpack.c.l.b16 %v460
        %v6397 = vunpack.c.l.b16 %v461
        %v6398 = vunpack.c.l.b16 %v462
        %v6399 = vunpack.c.l.b16 %v463
        %v6400 = vunpack.c.l.b16 %v464
        %v6401 = vunpack.c.l.b16 %v465
        %v6402 = vunpack.c.l.b16 %v466
        %v6403 = vunpack.c.l.b16 %v467
        %v6404 = vunpack.c.l.b16 %v468
        %v6405 = vunpack.c.l.b16 %v469
        %v6406 = vpack.c.b16 %v6395, %v6394
        %v6407 = vpack.c.b16 %v6397, %v6396
        %v6408 = vpack.c.b16 %v6399, %v6398
        %v6409 = vpack.c.b16 %v6401, %v6400
        %v6410 = vpack.c.b16 %v6403, %v6402
        %v6411 = vpack.c.b16 %v6405, %v6404
        %v6419 = vsel %vm6092, %v6366, 0
        %v6422 = vsel %vm6092, %v6367, 0
        %v6425 = vsel %vm6092, %v6368, 0
        %v6428 = vsel %vm6092, %v6369, 0
        %v6431 = vsel %vm6092, %v6370, 0
        %v6434 = vsel %vm6092, %v6371, 0
        %v6437 = vsel %vm6092, %v6372, 0
        %v6440 = vsel %vm6092, %v6373, 0
        %v6443 = vsel %vm6092, %v6374, 0
        %v6446 = vsel %vm6092, %v6375, 0
        %v6449 = vsel %vm6092, %v6376, 0
        %v6452 = vsel %vm6092, %v6377, 0
        %v6455 = vsel %vm6092, %v6378, 0
        %v6458 = vsel %vm6092, %v6379, 0
        %v6461 = vsel %vm6092, %v6380, 0
        %v6464 = vsel %vm6092, %v6381, 0
        %6466 = vmatprep.subr.bf16.mxu0 0
        %6467 = vmatpush1.bf16.msra.mxu0 0
        %6468 = vmatprep.subr.bf16.mxu0 0
        %6469 = vmatpush1.bf16.msra.mxu0 0
        %6470 = vmatprep.subr.bf16.mxu0 0
        %6471 = vmatpush1.bf16.msra.mxu0 %v6411
        %6472 = vmatprep.subr.bf16.mxu0 0
        %6473 = vmatpush1.bf16.msra.mxu0 %v6410
        %6474 = vmatprep.subr.bf16.mxu0 0
        %6475 = vmatpush1.bf16.msra.mxu0 %v6409
        %6476 = vmatprep.subr.bf16.mxu0 0
        %6477 = vmatpush1.bf16.msra.mxu0 %v6408
        %6478 = vmatprep.subr.bf16.mxu0 0
        %6479 = vmatpush1.bf16.msra.mxu0 %v6407
        %6480 = vmatprep.subr.bf16.mxu0 0
        %6481 = vmatpush1.bf16.msra.mxu0 %v6406
        %6482 = vmatprep.subr.bf16.mxu0 0
        %6483 = vmatpush2.bf16.msra.mxu0 0
        %6484 = vmatprep.subr.bf16.mxu0 0
        %6485 = vmatpush2.bf16.msra.mxu0 0
        %6486 = vmatprep.subr.bf16.mxu0 0
        %6487 = vmatpush2.bf16.msra.mxu0 0
        %6488 = vmatprep.subr.bf16.mxu0 0
        %6489 = vmatpush2.bf16.msra.mxu0 0
        %6490 = vmatprep.subr.bf16.mxu0 0
        %6491 = vmatpush2.bf16.msra.mxu0 0
        %6492 = vmatprep.subr.bf16.mxu0 0
        %6493 = vmatpush2.bf16.msra.mxu0 0
        %6494 = vmatprep.subr.bf16.mxu0 0
        %6495 = vmatpush2.bf16.msra.mxu0 0
        %6496 = vmatprep.subr.bf16.mxu0 0
        %6497 = vmatpush2.bf16.msra.mxu0 0
        %6498 = vmatprep.mubr.bf16.mxu0 0
        %6499 = vmatmul.mubr.bf16.gmra.mxu0 %v6419
        %v6500 = vpop.f32.mrf.mxu0
        %v6501 = vadd.f32 %v6176, %v6500
        %v6502 = vpop.f32.mrf.mxu0
        %v6503 = vpop.f32.mrf.mxu0
        %v6504 = vadd.f32 %v6179, %v6503
        %v6505 = vpop.f32.mrf.mxu0
        %6506 = vmatprep.mubr.bf16.mxu0 0
        %6507 = vmatmul.mubr.bf16.gmra.mxu0 %v6422
        %v6508 = vpop.f32.mrf.mxu0
        %v6509 = vadd.f32 %v6184, %v6508
        %v6510 = vpop.f32.mrf.mxu0
        %v6511 = vpop.f32.mrf.mxu0
        %v6512 = vadd.f32 %v6187, %v6511
        %v6513 = vpop.f32.mrf.mxu0
        %6514 = vmatprep.mubr.bf16.mxu0 0
        %6515 = vmatmul.mubr.bf16.gmra.mxu0 %v6425
        %v6516 = vpop.f32.mrf.mxu0
        %v6517 = vadd.f32 %v6192, %v6516
        %v6518 = vpop.f32.mrf.mxu0
        %v6519 = vpop.f32.mrf.mxu0
        %v6520 = vadd.f32 %v6195, %v6519
        %v6521 = vpop.f32.mrf.mxu0
        %6522 = vmatprep.mubr.bf16.mxu0 0
        %6523 = vmatmul.mubr.bf16.gmra.mxu0 %v6428
        %v6524 = vpop.f32.mrf.mxu0
        %v6525 = vadd.f32 %v6200, %v6524
        %v6526 = vpop.f32.mrf.mxu0
        %v6527 = vpop.f32.mrf.mxu0
        %v6528 = vadd.f32 %v6203, %v6527
        %v6529 = vpop.f32.mrf.mxu0
        %6530 = vmatprep.mubr.bf16.mxu0 0
        %6531 = vmatmul.mubr.bf16.gmra.mxu0 %v6431
        %v6532 = vpop.f32.mrf.mxu0
        %v6533 = vadd.f32 %v6208, %v6532
        %v6534 = vpop.f32.mrf.mxu0
        %v6535 = vpop.f32.mrf.mxu0
        %v6536 = vadd.f32 %v6211, %v6535
        %v6537 = vpop.f32.mrf.mxu0
        %6538 = vmatprep.mubr.bf16.mxu0 0
        %6539 = vmatmul.mubr.bf16.gmra.mxu0 %v6434
        %v6540 = vpop.f32.mrf.mxu0
        %v6541 = vadd.f32 %v6216, %v6540
        %v6542 = vpop.f32.mrf.mxu0
        %v6543 = vpop.f32.mrf.mxu0
        %v6544 = vadd.f32 %v6219, %v6543
        %v6545 = vpop.f32.mrf.mxu0
        %6546 = vmatprep.mubr.bf16.mxu0 0
        %6547 = vmatmul.mubr.bf16.gmra.mxu0 %v6437
        %v6548 = vpop.f32.mrf.mxu0
        %v6549 = vadd.f32 %v6224, %v6548
        %v6550 = vpop.f32.mrf.mxu0
        %v6551 = vpop.f32.mrf.mxu0
        %v6552 = vadd.f32 %v6227, %v6551
        %v6553 = vpop.f32.mrf.mxu0
        %6554 = vmatprep.mubr.bf16.mxu0 0
        %6555 = vmatmul.mubr.bf16.gmra.mxu0 %v6440
        %v6556 = vpop.f32.mrf.mxu0
        %v6557 = vadd.f32 %v6232, %v6556
        %v6558 = vpop.f32.mrf.mxu0
        %v6559 = vpop.f32.mrf.mxu0
        %v6560 = vadd.f32 %v6235, %v6559
        %v6561 = vpop.f32.mrf.mxu0
        %6562 = vmatprep.mubr.bf16.mxu0 0
        %6563 = vmatmul.mubr.bf16.gmra.mxu0 %v6443
        %v6564 = vpop.f32.mrf.mxu0
        %v6565 = vadd.f32 %v6240, %v6564
        %v6566 = vpop.f32.mrf.mxu0
        %v6567 = vpop.f32.mrf.mxu0
        %v6568 = vadd.f32 %v6243, %v6567
        %v6569 = vpop.f32.mrf.mxu0
        %6570 = vmatprep.mubr.bf16.mxu0 0
        %6571 = vmatmul.mubr.bf16.gmra.mxu0 %v6446
        %v6572 = vpop.f32.mrf.mxu0
        %v6573 = vadd.f32 %v6248, %v6572
        %v6574 = vpop.f32.mrf.mxu0
        %v6575 = vpop.f32.mrf.mxu0
        %v6576 = vadd.f32 %v6251, %v6575
        %v6577 = vpop.f32.mrf.mxu0
        %6578 = vmatprep.mubr.bf16.mxu0 0
        %6579 = vmatmul.mubr.bf16.gmra.mxu0 %v6449
        %v6580 = vpop.f32.mrf.mxu0
        %v6581 = vadd.f32 %v6256, %v6580
        %v6582 = vpop.f32.mrf.mxu0
        %v6583 = vpop.f32.mrf.mxu0
        %v6584 = vadd.f32 %v6259, %v6583
        %v6585 = vpop.f32.mrf.mxu0
        %6586 = vmatprep.mubr.bf16.mxu0 0
        %6587 = vmatmul.mubr.bf16.gmra.mxu0 %v6452
        %v6588 = vpop.f32.mrf.mxu0
        %v6589 = vadd.f32 %v6264, %v6588
        %v6590 = vpop.f32.mrf.mxu0
        %v6591 = vpop.f32.mrf.mxu0
        %v6592 = vadd.f32 %v6267, %v6591
        %v6593 = vpop.f32.mrf.mxu0
        %6594 = vmatprep.mubr.bf16.mxu0 0
        %6595 = vmatmul.mubr.bf16.gmra.mxu0 %v6455
        %v6596 = vpop.f32.mrf.mxu0
        %v6597 = vadd.f32 %v6272, %v6596
        %v6598 = vpop.f32.mrf.mxu0
        %v6599 = vpop.f32.mrf.mxu0
        %v6600 = vadd.f32 %v6275, %v6599
        %v6601 = vpop.f32.mrf.mxu0
        %6602 = vmatprep.mubr.bf16.mxu0 0
        %6603 = vmatmul.mubr.bf16.gmra.mxu0 %v6458
        %v6604 = vpop.f32.mrf.mxu0
        %v6605 = vadd.f32 %v6280, %v6604
        %v6606 = vpop.f32.mrf.mxu0
        %v6607 = vpop.f32.mrf.mxu0
        %v6608 = vadd.f32 %v6283, %v6607
        %v6609 = vpop.f32.mrf.mxu0
        %6610 = vmatprep.mubr.bf16.mxu0 0
        %6611 = vmatmul.mubr.bf16.gmra.mxu0 %v6461
        %v6612 = vpop.f32.mrf.mxu0
        %v6613 = vadd.f32 %v6288, %v6612
        %v6614 = vpop.f32.mrf.mxu0
        %v6615 = vpop.f32.mrf.mxu0
        %v6616 = vadd.f32 %v6291, %v6615
        %v6617 = vpop.f32.mrf.mxu0
        %6618 = vmatprep.mubr.bf16.mxu0 0
        %6619 = vmatmul.mubr.bf16.gmra.mxu0 %v6464
        %v6620 = vpop.f32.mrf.mxu0
        %v6621 = vadd.f32 %v6296, %v6620
        %v6622 = vpop.f32.mrf.mxu0
        %v6623 = vpop.f32.mrf.mxu0
        %v6624 = vadd.f32 %v6299, %v6623
        %v6625 = vpop.f32.mrf.mxu0
        %6626 = vdwg.mxu0
        %v6627 = vld [vmem:[#allocation5] sm:$0xe]
        %v6628 = vld [vmem:[#allocation5 + $0xc] sm:$0xe]
        %v6629 = vld [vmem:[#allocation5 + $0x18] sm:$0xe]
        %v6630 = vld [vmem:[#allocation5 + $0x24] sm:$0xe]
        %v6631 = vld [vmem:[#allocation5 + $0x30] sm:$0xe]
        %v6632 = vld [vmem:[#allocation5 + $0x3c] sm:$0xe]
        %v6633 = vld [vmem:[#allocation5 + $0x48] sm:$0xe]
        %v6634 = vld [vmem:[#allocation5 + $0x54] sm:$0xe]
        %v6635 = vld [vmem:[#allocation5 + $0x60] sm:$0xe]
        %v6636 = vld [vmem:[#allocation5 + $0x6c] sm:$0xe]
        %v6637 = vld [vmem:[#allocation5 + $0x78] sm:$0xe]
        %v6638 = vld [vmem:[#allocation5 + $0x84] sm:$0xe]
        %v6639 = vld [vmem:[#allocation5 + $0x90] sm:$0xe]
        %v6640 = vld [vmem:[#allocation5 + $0x9c] sm:$0xe]
        %v6641 = vld [vmem:[#allocation5 + $0xa8] sm:$0xe]
        %v6642 = vld [vmem:[#allocation5 + $0xb4] sm:$0xe]
        %v6675 = vrot.slane %v6627, 5
        %v6676 = vrot.slane %v6675, 4
        %v6677 = vrot.slane %v5577, 5
        %v6678 = vsel %vm3174, %v6676, %v6677
        %v6679 = vrot.slane %v6677, 4
        %v6680 = vrot.slane %v5608, 5
        %v6681 = vsel %vm3174, %v6679, %v6680
        %v6682 = vrot.slane %v6628, 5
        %v6683 = vrot.slane %v6682, 4
        %v6684 = vrot.slane %v5579, 5
        %v6685 = vsel %vm3174, %v6683, %v6684
        %v6686 = vrot.slane %v6684, 4
        %v6687 = vrot.slane %v5609, 5
        %v6688 = vsel %vm3174, %v6686, %v6687
        %v6689 = vrot.slane %v6629, 5
        %v6690 = vrot.slane %v6689, 4
        %v6691 = vrot.slane %v5581, 5
        %v6692 = vsel %vm3174, %v6690, %v6691
        %v6693 = vrot.slane %v6691, 4
        %v6694 = vrot.slane %v5610, 5
        %v6695 = vsel %vm3174, %v6693, %v6694
        %v6696 = vrot.slane %v6630, 5
        %v6697 = vrot.slane %v6696, 4
        %v6698 = vrot.slane %v5583, 5
        %v6699 = vsel %vm3174, %v6697, %v6698
        %v6700 = vrot.slane %v6698, 4
        %v6701 = vrot.slane %v5611, 5
        %v6702 = vsel %vm3174, %v6700, %v6701
        %v6703 = vrot.slane %v6631, 5
        %v6704 = vrot.slane %v6703, 4
        %v6705 = vrot.slane %v5585, 5
        %v6706 = vsel %vm3174, %v6704, %v6705
        %v6707 = vrot.slane %v6705, 4
        %v6708 = vrot.slane %v5612, 5
        %v6709 = vsel %vm3174, %v6707, %v6708
        %v6710 = vrot.slane %v6632, 5
        %v6711 = vrot.slane %v6710, 4
        %v6712 = vrot.slane %v5587, 5
        %v6713 = vsel %vm3174, %v6711, %v6712
        %v6714 = vrot.slane %v6712, 4
        %v6715 = vrot.slane %v5613, 5
        %v6716 = vsel %vm3174, %v6714, %v6715
        %v6717 = vrot.slane %v6633, 5
        %v6718 = vrot.slane %v6717, 4
        %v6719 = vrot.slane %v5589, 5
        %v6720 = vsel %vm3174, %v6718, %v6719
        %v6721 = vrot.slane %v6719, 4
        %v6722 = vrot.slane %v5614, 5
        %v6723 = vsel %vm3174, %v6721, %v6722
        %v6724 = vrot.slane %v6634, 5
        %v6725 = vrot.slane %v6724, 4
        %v6726 = vrot.slane %v5591, 5
        %v6727 = vsel %vm3174, %v6725, %v6726
        %v6728 = vrot.slane %v6726, 4
        %v6729 = vrot.slane %v5615, 5
        %v6730 = vsel %vm3174, %v6728, %v6729
        %v6731 = vrot.slane %v6635, 5
        %v6732 = vrot.slane %v6731, 4
        %v6733 = vrot.slane %v5593, 5
        %v6734 = vsel %vm3174, %v6732, %v6733
        %v6735 = vrot.slane %v6733, 4
        %v6736 = vrot.slane %v5616, 5
        %v6737 = vsel %vm3174, %v6735, %v6736
        %v6738 = vrot.slane %v6636, 5
        %v6739 = vrot.slane %v6738, 4
        %v6740 = vrot.slane %v5595, 5
        %v6741 = vsel %vm3174, %v6739, %v6740
        %v6742 = vrot.slane %v6740, 4
        %v6743 = vrot.slane %v5617, 5
        %v6744 = vsel %vm3174, %v6742, %v6743
        %v6745 = vrot.slane %v6637, 5
        %v6746 = vrot.slane %v6745, 4
        %v6747 = vrot.slane %v5597, 5
        %v6748 = vsel %vm3174, %v6746, %v6747
        %v6749 = vrot.slane %v6747, 4
        %v6750 = vrot.slane %v5618, 5
        %v6751 = vsel %vm3174, %v6749, %v6750
        %v6752 = vrot.slane %v6638, 5
        %v6753 = vrot.slane %v6752, 4
        %v6754 = vrot.slane %v5599, 5
        %v6755 = vsel %vm3174, %v6753, %v6754
        %v6756 = vrot.slane %v6754, 4
        %v6757 = vrot.slane %v5619, 5
        %v6758 = vsel %vm3174, %v6756, %v6757
        %v6759 = vrot.slane %v6639, 5
        %v6760 = vrot.slane %v6759, 4
        %v6761 = vrot.slane %v5601, 5
        %v6762 = vsel %vm3174, %v6760, %v6761
        %v6763 = vrot.slane %v6761, 4
        %v6764 = vrot.slane %v5620, 5
        %v6765 = vsel %vm3174, %v6763, %v6764
        %v6766 = vrot.slane %v6640, 5
        %v6767 = vrot.slane %v6766, 4
        %v6768 = vrot.slane %v5603, 5
        %v6769 = vsel %vm3174, %v6767, %v6768
        %v6770 = vrot.slane %v6768, 4
        %v6771 = vrot.slane %v5621, 5
        %v6772 = vsel %vm3174, %v6770, %v6771
        %v6773 = vrot.slane %v6641, 5
        %v6774 = vrot.slane %v6773, 4
        %v6775 = vrot.slane %v5605, 5
        %v6776 = vsel %vm3174, %v6774, %v6775
        %v6777 = vrot.slane %v6775, 4
        %v6778 = vrot.slane %v5622, 5
        %v6779 = vsel %vm3174, %v6777, %v6778
        %v6780 = vrot.slane %v6642, 5
        %v6781 = vrot.slane %v6780, 4
        %v6782 = vrot.slane %v5607, 5
        %v6783 = vsel %vm3174, %v6781, %v6782
        %v6784 = vrot.slane %v6782, 4
        %v6785 = vrot.slane %v5623, 5
        %v6786 = vsel %vm3174, %v6784, %v6785
        %v6787 = vunpack.c.l.b16 %v6678
        %v6788 = vunpack.c.l.b16 %v6681
        %v6789 = vunpack.c.l.b16 %v6685
        %v6790 = vunpack.c.l.b16 %v6688
        %v6791 = vunpack.c.l.b16 %v6692
        %v6792 = vunpack.c.l.b16 %v6695
        %v6793 = vunpack.c.l.b16 %v6699
        %v6794 = vunpack.c.l.b16 %v6702
        %v6795 = vunpack.c.l.b16 %v6706
        %v6796 = vunpack.c.l.b16 %v6709
        %v6797 = vunpack.c.l.b16 %v6713
        %v6798 = vunpack.c.l.b16 %v6716
        %v6799 = vunpack.c.l.b16 %v6720
        %v6800 = vunpack.c.l.b16 %v6723
        %v6801 = vunpack.c.l.b16 %v6727
        %v6802 = vunpack.c.l.b16 %v6730
        %v6803 = vunpack.c.l.b16 %v6734
        %v6804 = vunpack.c.l.b16 %v6737
        %v6805 = vunpack.c.l.b16 %v6741
        %v6806 = vunpack.c.l.b16 %v6744
        %v6807 = vunpack.c.l.b16 %v6748
        %v6808 = vunpack.c.l.b16 %v6751
        %v6809 = vunpack.c.l.b16 %v6755
        %v6810 = vunpack.c.l.b16 %v6758
        %v6811 = vunpack.c.l.b16 %v6762
        %v6812 = vunpack.c.l.b16 %v6765
        %v6813 = vunpack.c.l.b16 %v6769
        %v6814 = vunpack.c.l.b16 %v6772
        %v6815 = vunpack.c.l.b16 %v6776
        %v6816 = vunpack.c.l.b16 %v6779
        %v6817 = vunpack.c.l.b16 %v6783
        %v6818 = vunpack.c.l.b16 %v6786
        %v6819 = vpack.c.b16 %v6788, %v6787
        %v6820 = vpack.c.b16 %v6790, %v6789
        %v6821 = vpack.c.b16 %v6792, %v6791
        %v6822 = vpack.c.b16 %v6794, %v6793
        %v6823 = vpack.c.b16 %v6796, %v6795
        %v6824 = vpack.c.b16 %v6798, %v6797
        %v6825 = vpack.c.b16 %v6800, %v6799
        %v6826 = vpack.c.b16 %v6802, %v6801
        %v6827 = vpack.c.b16 %v6804, %v6803
        %v6828 = vpack.c.b16 %v6806, %v6805
        %v6829 = vpack.c.b16 %v6808, %v6807
        %v6830 = vpack.c.b16 %v6810, %v6809
        %v6831 = vpack.c.b16 %v6812, %v6811
        %v6832 = vpack.c.b16 %v6814, %v6813
        %v6833 = vpack.c.b16 %v6816, %v6815
        %v6834 = vpack.c.b16 %v6818, %v6817
        %v6847 = vunpack.c.l.b16 %v482
        %v6848 = vunpack.c.l.b16 %v483
        %v6849 = vunpack.c.l.b16 %v484
        %v6850 = vunpack.c.l.b16 %v485
        %v6851 = vunpack.c.l.b16 %v486
        %v6852 = vunpack.c.l.b16 %v487
        %v6853 = vunpack.c.l.b16 %v488
        %v6854 = vunpack.c.l.b16 %v489
        %v6855 = vunpack.c.l.b16 %v490
        %v6856 = vunpack.c.l.b16 %v491
        %v6857 = vunpack.c.l.b16 %v492
        %v6858 = vunpack.c.l.b16 %v493
        %v6859 = vpack.c.b16 %v6848, %v6847
        %v6860 = vpack.c.b16 %v6850, %v6849
        %v6861 = vpack.c.b16 %v6852, %v6851
        %v6862 = vpack.c.b16 %v6854, %v6853
        %v6863 = vpack.c.b16 %v6856, %v6855
        %v6864 = vpack.c.b16 %v6858, %v6857
        %v6872 = vsel %vm6092, %v6819, 0
        %v6875 = vsel %vm6092, %v6820, 0
        %v6878 = vsel %vm6092, %v6821, 0
        %v6881 = vsel %vm6092, %v6822, 0
        %v6884 = vsel %vm6092, %v6823, 0
        %v6887 = vsel %vm6092, %v6824, 0
        %v6890 = vsel %vm6092, %v6825, 0
        %v6893 = vsel %vm6092, %v6826, 0
        %v6896 = vsel %vm6092, %v6827, 0
        %v6899 = vsel %vm6092, %v6828, 0
        %v6902 = vsel %vm6092, %v6829, 0
        %v6905 = vsel %vm6092, %v6830, 0
        %v6908 = vsel %vm6092, %v6831, 0
        %v6911 = vsel %vm6092, %v6832, 0
        %v6914 = vsel %vm6092, %v6833, 0
        %v6917 = vsel %vm6092, %v6834, 0
        %6919 = vmatprep.subr.bf16.mxu0 0
        %6920 = vmatpush1.bf16.msra.mxu0 0
        %6921 = vmatprep.subr.bf16.mxu0 0
        %6922 = vmatpush1.bf16.msra.mxu0 0
        %6923 = vmatprep.subr.bf16.mxu0 0
        %6924 = vmatpush1.bf16.msra.mxu0 %v6864
        %6925 = vmatprep.subr.bf16.mxu0 0
        %6926 = vmatpush1.bf16.msra.mxu0 %v6863
        %6927 = vmatprep.subr.bf16.mxu0 0
        %6928 = vmatpush1.bf16.msra.mxu0 %v6862
        %6929 = vmatprep.subr.bf16.mxu0 0
        %6930 = vmatpush1.bf16.msra.mxu0 %v6861
        %6931 = vmatprep.subr.bf16.mxu0 0
        %6932 = vmatpush1.bf16.msra.mxu0 %v6860
        %6933 = vmatprep.subr.bf16.mxu0 0
        %6934 = vmatpush1.bf16.msra.mxu0 %v6859
        %6935 = vmatprep.subr.bf16.mxu0 0
        %6936 = vmatpush2.bf16.msra.mxu0 0
        %6937 = vmatprep.subr.bf16.mxu0 0
        %6938 = vmatpush2.bf16.msra.mxu0 0
        %6939 = vmatprep.subr.bf16.mxu0 0
        %6940 = vmatpush2.bf16.msra.mxu0 0
        %6941 = vmatprep.subr.bf16.mxu0 0
        %6942 = vmatpush2.bf16.msra.mxu0 0
        %6943 = vmatprep.subr.bf16.mxu0 0
        %6944 = vmatpush2.bf16.msra.mxu0 0
        %6945 = vmatprep.subr.bf16.mxu0 0
        %6946 = vmatpush2.bf16.msra.mxu0 0
        %6947 = vmatprep.subr.bf16.mxu0 0
        %6948 = vmatpush2.bf16.msra.mxu0 0
        %6949 = vmatprep.subr.bf16.mxu0 0
        %6950 = vmatpush2.bf16.msra.mxu0 0
        %6951 = vmatprep.mubr.bf16.mxu0 0
        %6952 = vmatmul.mubr.bf16.gmra.mxu0 %v6872
        %v6953 = vpop.f32.mrf.mxu0
        %v6954 = vadd.f32 0.0, %v6953
        %v6955 = vpop.f32.mrf.mxu0
        %v6956 = vpop.f32.mrf.mxu0
        %v6957 = vadd.f32 0.0, %v6956
        %v6958 = vpop.f32.mrf.mxu0
        %6959 = vmatprep.mubr.bf16.mxu0 0
        %6960 = vmatmul.mubr.bf16.gmra.mxu0 %v6875
        %v6961 = vpop.f32.mrf.mxu0
        %v6962 = vadd.f32 0.0, %v6961
        %v6963 = vpop.f32.mrf.mxu0
        %v6964 = vpop.f32.mrf.mxu0
        %v6965 = vadd.f32 0.0, %v6964
        %v6966 = vpop.f32.mrf.mxu0
        %6967 = vmatprep.mubr.bf16.mxu0 0
        %6968 = vmatmul.mubr.bf16.gmra.mxu0 %v6878
        %v6969 = vpop.f32.mrf.mxu0
        %v6970 = vadd.f32 0.0, %v6969
        %v6971 = vpop.f32.mrf.mxu0
        %v6972 = vpop.f32.mrf.mxu0
        %v6973 = vadd.f32 0.0, %v6972
        %v6974 = vpop.f32.mrf.mxu0
        %6975 = vmatprep.mubr.bf16.mxu0 0
        %6976 = vmatmul.mubr.bf16.gmra.mxu0 %v6881
        %v6977 = vpop.f32.mrf.mxu0
        %v6978 = vadd.f32 0.0, %v6977
        %v6979 = vpop.f32.mrf.mxu0
        %v6980 = vpop.f32.mrf.mxu0
        %v6981 = vadd.f32 0.0, %v6980
        %v6982 = vpop.f32.mrf.mxu0
        %6983 = vmatprep.mubr.bf16.mxu0 0
        %6984 = vmatmul.mubr.bf16.gmra.mxu0 %v6884
        %v6985 = vpop.f32.mrf.mxu0
        %v6986 = vadd.f32 0.0, %v6985
        %v6987 = vpop.f32.mrf.mxu0
        %v6988 = vpop.f32.mrf.mxu0
        %v6989 = vadd.f32 0.0, %v6988
        %v6990 = vpop.f32.mrf.mxu0
        %6991 = vmatprep.mubr.bf16.mxu0 0
        %6992 = vmatmul.mubr.bf16.gmra.mxu0 %v6887
        %v6993 = vpop.f32.mrf.mxu0
        %v6994 = vadd.f32 0.0, %v6993
        %v6995 = vpop.f32.mrf.mxu0
        %v6996 = vpop.f32.mrf.mxu0
        %v6997 = vadd.f32 0.0, %v6996
        %v6998 = vpop.f32.mrf.mxu0
        %6999 = vmatprep.mubr.bf16.mxu0 0
        %7000 = vmatmul.mubr.bf16.gmra.mxu0 %v6890
        %v7001 = vpop.f32.mrf.mxu0
        %v7002 = vadd.f32 0.0, %v7001
        %v7003 = vpop.f32.mrf.mxu0
        %v7004 = vpop.f32.mrf.mxu0
        %v7005 = vadd.f32 0.0, %v7004
        %v7006 = vpop.f32.mrf.mxu0
        %7007 = vmatprep.mubr.bf16.mxu0 0
        %7008 = vmatmul.mubr.bf16.gmra.mxu0 %v6893
        %v7009 = vpop.f32.mrf.mxu0
        %v7010 = vadd.f32 0.0, %v7009
        %v7011 = vpop.f32.mrf.mxu0
        %v7012 = vpop.f32.mrf.mxu0
        %v7013 = vadd.f32 0.0, %v7012
        %v7014 = vpop.f32.mrf.mxu0
        %7015 = vmatprep.mubr.bf16.mxu0 0
        %7016 = vmatmul.mubr.bf16.gmra.mxu0 %v6896
        %v7017 = vpop.f32.mrf.mxu0
        %v7018 = vadd.f32 0.0, %v7017
        %v7019 = vpop.f32.mrf.mxu0
        %v7020 = vpop.f32.mrf.mxu0
        %v7021 = vadd.f32 0.0, %v7020
        %v7022 = vpop.f32.mrf.mxu0
        %7023 = vmatprep.mubr.bf16.mxu0 0
        %7024 = vmatmul.mubr.bf16.gmra.mxu0 %v6899
        %v7025 = vpop.f32.mrf.mxu0
        %v7026 = vadd.f32 0.0, %v7025
        %v7027 = vpop.f32.mrf.mxu0
        %v7028 = vpop.f32.mrf.mxu0
        %v7029 = vadd.f32 0.0, %v7028
        %v7030 = vpop.f32.mrf.mxu0
        %7031 = vmatprep.mubr.bf16.mxu0 0
        %7032 = vmatmul.mubr.bf16.gmra.mxu0 %v6902
        %v7033 = vpop.f32.mrf.mxu0
        %v7034 = vadd.f32 0.0, %v7033
        %v7035 = vpop.f32.mrf.mxu0
        %v7036 = vpop.f32.mrf.mxu0
        %v7037 = vadd.f32 0.0, %v7036
        %v7038 = vpop.f32.mrf.mxu0
        %7039 = vmatprep.mubr.bf16.mxu0 0
        %7040 = vmatmul.mubr.bf16.gmra.mxu0 %v6905
        %v7041 = vpop.f32.mrf.mxu0
        %v7042 = vadd.f32 0.0, %v7041
        %v7043 = vpop.f32.mrf.mxu0
        %v7044 = vpop.f32.mrf.mxu0
        %v7045 = vadd.f32 0.0, %v7044
        %v7046 = vpop.f32.mrf.mxu0
        %7047 = vmatprep.mubr.bf16.mxu0 0
        %7048 = vmatmul.mubr.bf16.gmra.mxu0 %v6908
        %v7049 = vpop.f32.mrf.mxu0
        %v7050 = vadd.f32 0.0, %v7049
        %v7051 = vpop.f32.mrf.mxu0
        %v7052 = vpop.f32.mrf.mxu0
        %v7053 = vadd.f32 0.0, %v7052
        %v7054 = vpop.f32.mrf.mxu0
        %7055 = vmatprep.mubr.bf16.mxu0 0
        %7056 = vmatmul.mubr.bf16.gmra.mxu0 %v6911
        %v7057 = vpop.f32.mrf.mxu0
        %v7058 = vadd.f32 0.0, %v7057
        %v7059 = vpop.f32.mrf.mxu0
        %v7060 = vpop.f32.mrf.mxu0
        %v7061 = vadd.f32 0.0, %v7060
        %v7062 = vpop.f32.mrf.mxu0
        %7063 = vmatprep.mubr.bf16.mxu0 0
        %7064 = vmatmul.mubr.bf16.gmra.mxu0 %v6914
        %v7065 = vpop.f32.mrf.mxu0
        %v7066 = vadd.f32 0.0, %v7065
        %v7067 = vpop.f32.mrf.mxu0
        %v7068 = vpop.f32.mrf.mxu0
        %v7069 = vadd.f32 0.0, %v7068
        %v7070 = vpop.f32.mrf.mxu0
        %7071 = vmatprep.mubr.bf16.mxu0 0
        %7072 = vmatmul.mubr.bf16.gmra.mxu0 %v6917
        %v7073 = vpop.f32.mrf.mxu0
        %v7074 = vadd.f32 0.0, %v7073
        %v7075 = vpop.f32.mrf.mxu0
        %v7076 = vpop.f32.mrf.mxu0
        %v7077 = vadd.f32 0.0, %v7076
        %v7078 = vpop.f32.mrf.mxu0
        %7079 = vdwg.mxu0
        %v7080 = vadd.f32 %v6501, %v6954
        %v7081 = vadd.f32 %v6504, %v6957
        %v7082 = vadd.f32 %v6509, %v6962
        %v7083 = vadd.f32 %v6512, %v6965
        %v7084 = vadd.f32 %v6517, %v6970
        %v7085 = vadd.f32 %v6520, %v6973
        %v7086 = vadd.f32 %v6525, %v6978
        %v7087 = vadd.f32 %v6528, %v6981
        %v7088 = vadd.f32 %v6533, %v6986
        %v7089 = vadd.f32 %v6536, %v6989
        %v7090 = vadd.f32 %v6541, %v6994
        %v7091 = vadd.f32 %v6544, %v6997
        %v7092 = vadd.f32 %v6549, %v7002
        %v7093 = vadd.f32 %v6552, %v7005
        %v7094 = vadd.f32 %v6557, %v7010
        %v7095 = vadd.f32 %v6560, %v7013
        %v7096 = vadd.f32 %v6565, %v7018
        %v7097 = vadd.f32 %v6568, %v7021
        %v7098 = vadd.f32 %v6573, %v7026
        %v7099 = vadd.f32 %v6576, %v7029
        %v7100 = vadd.f32 %v6581, %v7034
        %v7101 = vadd.f32 %v6584, %v7037
        %v7102 = vadd.f32 %v6589, %v7042
        %v7103 = vadd.f32 %v6592, %v7045
        %v7104 = vadd.f32 %v6597, %v7050
        %v7105 = vadd.f32 %v6600, %v7053
        %v7106 = vadd.f32 %v6605, %v7058
        %v7107 = vadd.f32 %v6608, %v7061
        %v7108 = vadd.f32 %v6613, %v7066
        %v7109 = vadd.f32 %v6616, %v7069
        %v7110 = vadd.f32 %v6621, %v7074
        %v7111 = vadd.f32 %v6624, %v7077
        %v7112 = vsel %vm2489, %v7080, 0.0
        %v7113 = vsel %vm2489, %v7081, 0.0
        %v7114 = vadd.f32 %v7112, %v7113
        %v7115 = vsel %vm2489, %v7082, 0.0
        %v7116 = vadd.f32 %v7114, %v7115
        %v7117 = vsel %vm2489, %v7083, 0.0
        %v7118 = vadd.f32 %v7116, %v7117
        %v7119 = vsel %vm2489, %v7084, 0.0
        %v7120 = vadd.f32 %v7118, %v7119
        %v7121 = vsel %vm2489, %v7085, 0.0
        %v7122 = vadd.f32 %v7120, %v7121
        %v7123 = vsel %vm2489, %v7086, 0.0
        %v7124 = vadd.f32 %v7122, %v7123
        %v7125 = vsel %vm2489, %v7087, 0.0
        %v7126 = vadd.f32 %v7124, %v7125
        %v7127 = vsel %vm2489, %v7088, 0.0
        %v7128 = vadd.f32 %v7126, %v7127
        %v7129 = vsel %vm2489, %v7089, 0.0
        %v7130 = vadd.f32 %v7128, %v7129
        %v7131 = vsel %vm2489, %v7090, 0.0
        %v7132 = vadd.f32 %v7130, %v7131
        %v7133 = vsel %vm2489, %v7091, 0.0
        %v7134 = vadd.f32 %v7132, %v7133
        %v7135 = vsel %vm2489, %v7092, 0.0
        %v7136 = vadd.f32 %v7134, %v7135
        %v7137 = vsel %vm2489, %v7093, 0.0
        %v7138 = vadd.f32 %v7136, %v7137
        %v7139 = vsel %vm2489, %v7094, 0.0
        %v7140 = vadd.f32 %v7138, %v7139
        %v7141 = vsel %vm2489, %v7095, 0.0
        %v7142 = vadd.f32 %v7140, %v7141
        %v7143 = vsel %vm2489, %v7096, 0.0
        %v7144 = vadd.f32 %v7142, %v7143
        %v7145 = vsel %vm2489, %v7097, 0.0
        %v7146 = vadd.f32 %v7144, %v7145
        %v7147 = vsel %vm2489, %v7098, 0.0
        %v7148 = vadd.f32 %v7146, %v7147
        %v7149 = vsel %vm2489, %v7099, 0.0
        %v7150 = vadd.f32 %v7148, %v7149
        %v7151 = vsel %vm2489, %v7100, 0.0
        %v7152 = vadd.f32 %v7150, %v7151
        %v7153 = vsel %vm2489, %v7101, 0.0
        %v7154 = vadd.f32 %v7152, %v7153
        %v7155 = vsel %vm2489, %v7102, 0.0
        %v7156 = vadd.f32 %v7154, %v7155
        %v7157 = vsel %vm2489, %v7103, 0.0
        %v7158 = vadd.f32 %v7156, %v7157
        %v7159 = vsel %vm2489, %v7104, 0.0
        %v7160 = vadd.f32 %v7158, %v7159
        %v7161 = vsel %vm2489, %v7105, 0.0
        %v7162 = vadd.f32 %v7160, %v7161
        %v7163 = vsel %vm2489, %v7106, 0.0
        %v7164 = vadd.f32 %v7162, %v7163
        %v7165 = vsel %vm2489, %v7107, 0.0
        %v7166 = vadd.f32 %v7164, %v7165
        %v7167 = vsel %vm2489, %v7108, 0.0
        %v7168 = vadd.f32 %v7166, %v7167
        %v7169 = vsel %vm2489, %v7109, 0.0
        %v7170 = vadd.f32 %v7168, %v7169
        %v7171 = vsel %vm2489, %v7110, 0.0
        %v7172 = vadd.f32 %v7170, %v7171
        %v7173 = vsel %vm2489, %v7111, 0.0
        %v7174 = vadd.f32 %v7172, %v7173
        %v7175 = vrot.slane %v7174, 4
        %v7176 = vadd.f32 %v7174, %v7175
        %v7177 = vrot.slane %v7176, 2
        %v7178 = vadd.f32 %v7176, %v7177
        %v7179 = vrot.slane %v7178, 1
        %v7180 = vadd.f32 %v7178, %v7179
        %v7181 = vmul.f32 %v7180, %v3782
        %v7182 = vsub.f32 %v7080, %v7181
        %v7183 = vsub.f32 %v7081, %v7181
        %v7184 = vsub.f32 %v7082, %v7181
        %v7185 = vsub.f32 %v7083, %v7181
        %v7186 = vsub.f32 %v7084, %v7181
        %v7187 = vsub.f32 %v7085, %v7181
        %v7188 = vsub.f32 %v7086, %v7181
        %v7189 = vsub.f32 %v7087, %v7181
        %v7190 = vsub.f32 %v7088, %v7181
        %v7191 = vsub.f32 %v7089, %v7181
        %v7192 = vsub.f32 %v7090, %v7181
        %v7193 = vsub.f32 %v7091, %v7181
        %v7194 = vsub.f32 %v7092, %v7181
        %v7195 = vsub.f32 %v7093, %v7181
        %v7196 = vsub.f32 %v7094, %v7181
        %v7197 = vsub.f32 %v7095, %v7181
        %v7198 = vsub.f32 %v7096, %v7181
        %v7199 = vsub.f32 %v7097, %v7181
        %v7200 = vsub.f32 %v7098, %v7181
        %v7201 = vsub.f32 %v7099, %v7181
        %v7202 = vsub.f32 %v7100, %v7181
        %v7203 = vsub.f32 %v7101, %v7181
        %v7204 = vsub.f32 %v7102, %v7181
        %v7205 = vsub.f32 %v7103, %v7181
        %v7206 = vsub.f32 %v7104, %v7181
        %v7207 = vsub.f32 %v7105, %v7181
        %v7208 = vsub.f32 %v7106, %v7181
        %v7209 = vsub.f32 %v7107, %v7181
        %v7210 = vsub.f32 %v7108, %v7181
        %v7211 = vsub.f32 %v7109, %v7181
        %v7212 = vsub.f32 %v7110, %v7181
        %v7213 = vsub.f32 %v7111, %v7181
        %v7214 = vmul.f32 %v7182, %v7182
        %v7215 = vmul.f32 %v7183, %v7183
        %v7216 = vmul.f32 %v7184, %v7184
        %v7217 = vmul.f32 %v7185, %v7185
        %v7218 = vmul.f32 %v7186, %v7186
        %v7219 = vmul.f32 %v7187, %v7187
        %v7220 = vmul.f32 %v7188, %v7188
        %v7221 = vmul.f32 %v7189, %v7189
        %v7222 = vmul.f32 %v7190, %v7190
        %v7223 = vmul.f32 %v7191, %v7191
        %v7224 = vmul.f32 %v7192, %v7192
        %v7225 = vmul.f32 %v7193, %v7193
        %v7226 = vmul.f32 %v7194, %v7194
        %v7227 = vmul.f32 %v7195, %v7195
        %v7228 = vmul.f32 %v7196, %v7196
        %v7229 = vmul.f32 %v7197, %v7197
        %v7230 = vmul.f32 %v7198, %v7198
        %v7231 = vmul.f32 %v7199, %v7199
        %v7232 = vmul.f32 %v7200, %v7200
        %v7233 = vmul.f32 %v7201, %v7201
        %v7234 = vmul.f32 %v7202, %v7202
        %v7235 = vmul.f32 %v7203, %v7203
        %v7236 = vmul.f32 %v7204, %v7204
        %v7237 = vmul.f32 %v7205, %v7205
        %v7238 = vmul.f32 %v7206, %v7206
        %v7239 = vmul.f32 %v7207, %v7207
        %v7240 = vmul.f32 %v7208, %v7208
        %v7241 = vmul.f32 %v7209, %v7209
        %v7242 = vmul.f32 %v7210, %v7210
        %v7243 = vmul.f32 %v7211, %v7211
        %v7244 = vmul.f32 %v7212, %v7212
        %v7245 = vmul.f32 %v7213, %v7213
        %v7246 = vsel %vm2489, %v7214, 0.0
        %v7247 = vsel %vm2489, %v7215, 0.0
        %v7248 = vadd.f32 %v7246, %v7247
        %v7249 = vsel %vm2489, %v7216, 0.0
        %v7250 = vadd.f32 %v7248, %v7249
        %v7251 = vsel %vm2489, %v7217, 0.0
        %v7252 = vadd.f32 %v7250, %v7251
        %v7253 = vsel %vm2489, %v7218, 0.0
        %v7254 = vadd.f32 %v7252, %v7253
        %v7255 = vsel %vm2489, %v7219, 0.0
        %v7256 = vadd.f32 %v7254, %v7255
        %v7257 = vsel %vm2489, %v7220, 0.0
        %v7258 = vadd.f32 %v7256, %v7257
        %v7259 = vsel %vm2489, %v7221, 0.0
        %v7260 = vadd.f32 %v7258, %v7259
        %v7261 = vsel %vm2489, %v7222, 0.0
        %v7262 = vadd.f32 %v7260, %v7261
        %v7263 = vsel %vm2489, %v7223, 0.0
        %v7264 = vadd.f32 %v7262, %v7263
        %v7265 = vsel %vm2489, %v7224, 0.0
        %v7266 = vadd.f32 %v7264, %v7265
        %v7267 = vsel %vm2489, %v7225, 0.0
        %v7268 = vadd.f32 %v7266, %v7267
        %v7269 = vsel %vm2489, %v7226, 0.0
        %v7270 = vadd.f32 %v7268, %v7269
        %v7271 = vsel %vm2489, %v7227, 0.0
        %v7272 = vadd.f32 %v7270, %v7271
        %v7273 = vsel %vm2489, %v7228, 0.0
        %v7274 = vadd.f32 %v7272, %v7273
        %v7275 = vsel %vm2489, %v7229, 0.0
        %v7276 = vadd.f32 %v7274, %v7275
        %v7277 = vsel %vm2489, %v7230, 0.0
        %v7278 = vadd.f32 %v7276, %v7277
        %v7279 = vsel %vm2489, %v7231, 0.0
        %v7280 = vadd.f32 %v7278, %v7279
        %v7281 = vsel %vm2489, %v7232, 0.0
        %v7282 = vadd.f32 %v7280, %v7281
        %v7283 = vsel %vm2489, %v7233, 0.0
        %v7284 = vadd.f32 %v7282, %v7283
        %v7285 = vsel %vm2489, %v7234, 0.0
        %v7286 = vadd.f32 %v7284, %v7285
        %v7287 = vsel %vm2489, %v7235, 0.0
        %v7288 = vadd.f32 %v7286, %v7287
        %v7289 = vsel %vm2489, %v7236, 0.0
        %v7290 = vadd.f32 %v7288, %v7289
        %v7291 = vsel %vm2489, %v7237, 0.0
        %v7292 = vadd.f32 %v7290, %v7291
        %v7293 = vsel %vm2489, %v7238, 0.0
        %v7294 = vadd.f32 %v7292, %v7293
        %v7295 = vsel %vm2489, %v7239, 0.0
        %v7296 = vadd.f32 %v7294, %v7295
        %v7297 = vsel %vm2489, %v7240, 0.0
        %v7298 = vadd.f32 %v7296, %v7297
        %v7299 = vsel %vm2489, %v7241, 0.0
        %v7300 = vadd.f32 %v7298, %v7299
        %v7301 = vsel %vm2489, %v7242, 0.0
        %v7302 = vadd.f32 %v7300, %v7301
        %v7303 = vsel %vm2489, %v7243, 0.0
        %v7304 = vadd.f32 %v7302, %v7303
        %v7305 = vsel %vm2489, %v7244, 0.0
        %v7306 = vadd.f32 %v7304, %v7305
        %v7307 = vsel %vm2489, %v7245, 0.0
        %v7308 = vadd.f32 %v7306, %v7307
        %v7309 = vrot.slane %v7308, 4
        %v7310 = vadd.f32 %v7308, %v7309
        %v7311 = vrot.slane %v7310, 2
        %v7312 = vadd.f32 %v7310, %v7311
        %v7313 = vrot.slane %v7312, 1
        %v7314 = vadd.f32 %v7312, %v7313
        %v7315 = vmul.f32 %v7314, %v3782
        %v7316 = vadd.f32 %v7315, 1e-05
        %v7317 = vrsqrt.pop %v7316
        %v7318 = vmul.f32 %v7182, %v7317
        %v7319 = vmul.f32 %v7183, %v7317
        %v7320 = vmul.f32 %v7184, %v7317
        %v7321 = vmul.f32 %v7185, %v7317
        %v7322 = vmul.f32 %v7186, %v7317
        %v7323 = vmul.f32 %v7187, %v7317
        %v7324 = vmul.f32 %v7188, %v7317
        %v7325 = vmul.f32 %v7189, %v7317
        %v7326 = vmul.f32 %v7190, %v7317
        %v7327 = vmul.f32 %v7191, %v7317
        %v7328 = vmul.f32 %v7192, %v7317
        %v7329 = vmul.f32 %v7193, %v7317
        %v7330 = vmul.f32 %v7194, %v7317
        %v7331 = vmul.f32 %v7195, %v7317
        %v7332 = vmul.f32 %v7196, %v7317
        %v7333 = vmul.f32 %v7197, %v7317
        %v7334 = vmul.f32 %v7198, %v7317
        %v7335 = vmul.f32 %v7199, %v7317
        %v7336 = vmul.f32 %v7200, %v7317
        %v7337 = vmul.f32 %v7201, %v7317
        %v7338 = vmul.f32 %v7202, %v7317
        %v7339 = vmul.f32 %v7203, %v7317
        %v7340 = vmul.f32 %v7204, %v7317
        %v7341 = vmul.f32 %v7205, %v7317
        %v7342 = vmul.f32 %v7206, %v7317
        %v7343 = vmul.f32 %v7207, %v7317
        %v7344 = vmul.f32 %v7208, %v7317
        %v7345 = vmul.f32 %v7209, %v7317
        %v7346 = vmul.f32 %v7210, %v7317
        %v7347 = vmul.f32 %v7211, %v7317
        %v7348 = vmul.f32 %v7212, %v7317
        %v7349 = vmul.f32 %v7213, %v7317
        %v7351 = vlaneseq
        %v7352 = vshrl.u32 %v7351, 7
        %v7353 = vsub.s32 0, %v7352
        %v7354 = vrot.slane %v496, %v7353
        %v7356 = vmul.f32 %v7318, %v7354
        %v7357 = vmul.f32 %v7319, %v7354
        %v7358 = vmul.f32 %v7320, %v7354
        %v7359 = vmul.f32 %v7321, %v7354
        %v7360 = vmul.f32 %v7322, %v7354
        %v7361 = vmul.f32 %v7323, %v7354
        %v7362 = vmul.f32 %v7324, %v7354
        %v7363 = vmul.f32 %v7325, %v7354
        %v7364 = vmul.f32 %v7326, %v7354
        %v7365 = vmul.f32 %v7327, %v7354
        %v7366 = vmul.f32 %v7328, %v7354
        %v7367 = vmul.f32 %v7329, %v7354
        %v7368 = vmul.f32 %v7330, %v7354
        %v7369 = vmul.f32 %v7331, %v7354
        %v7370 = vmul.f32 %v7332, %v7354
        %v7371 = vmul.f32 %v7333, %v7354
        %v7372 = vmul.f32 %v7334, %v7354
        %v7373 = vmul.f32 %v7335, %v7354
        %v7374 = vmul.f32 %v7336, %v7354
        %v7375 = vmul.f32 %v7337, %v7354
        %v7376 = vmul.f32 %v7338, %v7354
        %v7377 = vmul.f32 %v7339, %v7354
        %v7378 = vmul.f32 %v7340, %v7354
        %v7379 = vmul.f32 %v7341, %v7354
        %v7380 = vmul.f32 %v7342, %v7354
        %v7381 = vmul.f32 %v7343, %v7354
        %v7382 = vmul.f32 %v7344, %v7354
        %v7383 = vmul.f32 %v7345, %v7354
        %v7384 = vmul.f32 %v7346, %v7354
        %v7385 = vmul.f32 %v7347, %v7354
        %v7386 = vmul.f32 %v7348, %v7354
        %v7387 = vmul.f32 %v7349, %v7354
        %v7389 = vlaneseq
        %v7390 = vshrl.u32 %v7389, 7
        %v7391 = vsub.s32 0, %v7390
        %v7392 = vrot.slane %v497, %v7391
        %v7394 = vadd.f32 %v7356, %v7392
        %v7395 = vadd.f32 %v7357, %v7392
        %v7396 = vadd.f32 %v7358, %v7392
        %v7397 = vadd.f32 %v7359, %v7392
        %v7398 = vadd.f32 %v7360, %v7392
        %v7399 = vadd.f32 %v7361, %v7392
        %v7400 = vadd.f32 %v7362, %v7392
        %v7401 = vadd.f32 %v7363, %v7392
        %v7402 = vadd.f32 %v7364, %v7392
        %v7403 = vadd.f32 %v7365, %v7392
        %v7404 = vadd.f32 %v7366, %v7392
        %v7405 = vadd.f32 %v7367, %v7392
        %v7406 = vadd.f32 %v7368, %v7392
        %v7407 = vadd.f32 %v7369, %v7392
        %v7408 = vadd.f32 %v7370, %v7392
        %v7409 = vadd.f32 %v7371, %v7392
        %v7410 = vadd.f32 %v7372, %v7392
        %v7411 = vadd.f32 %v7373, %v7392
        %v7412 = vadd.f32 %v7374, %v7392
        %v7413 = vadd.f32 %v7375, %v7392
        %v7414 = vadd.f32 %v7376, %v7392
        %v7415 = vadd.f32 %v7377, %v7392
        %v7416 = vadd.f32 %v7378, %v7392
        %v7417 = vadd.f32 %v7379, %v7392
        %v7418 = vadd.f32 %v7380, %v7392
        %v7419 = vadd.f32 %v7381, %v7392
        %v7420 = vadd.f32 %v7382, %v7392
        %v7421 = vadd.f32 %v7383, %v7392
        %v7422 = vadd.f32 %v7384, %v7392
        %v7423 = vadd.f32 %v7385, %v7392
        %v7424 = vadd.f32 %v7386, %v7392
        %v7425 = vadd.f32 %v7387, %v7392
        %v7426 = vsel %vm2489, %v7394, 0.0
        %v7427 = vsel %vm2489, %v7395, 0.0
        %v7428 = vadd.f32 %v7426, %v7427
        %v7429 = vsel %vm2489, %v7396, 0.0
        %v7430 = vadd.f32 %v7428, %v7429
        %v7431 = vsel %vm2489, %v7397, 0.0
        %v7432 = vadd.f32 %v7430, %v7431
        %v7433 = vsel %vm2489, %v7398, 0.0
        %v7434 = vadd.f32 %v7432, %v7433
        %v7435 = vsel %vm2489, %v7399, 0.0
        %v7436 = vadd.f32 %v7434, %v7435
        %v7437 = vsel %vm2489, %v7400, 0.0
        %v7438 = vadd.f32 %v7436, %v7437
        %v7439 = vsel %vm2489, %v7401, 0.0
        %v7440 = vadd.f32 %v7438, %v7439
        %v7441 = vsel %vm2489, %v7402, 0.0
        %v7442 = vadd.f32 %v7440, %v7441
        %v7443 = vsel %vm2489, %v7403, 0.0
        %v7444 = vadd.f32 %v7442, %v7443
        %v7445 = vsel %vm2489, %v7404, 0.0
        %v7446 = vadd.f32 %v7444, %v7445
        %v7447 = vsel %vm2489, %v7405, 0.0
        %v7448 = vadd.f32 %v7446, %v7447
        %v7449 = vsel %vm2489, %v7406, 0.0
        %v7450 = vadd.f32 %v7448, %v7449
        %v7451 = vsel %vm2489, %v7407, 0.0
        %v7452 = vadd.f32 %v7450, %v7451
        %v7453 = vsel %vm2489, %v7408, 0.0
        %v7454 = vadd.f32 %v7452, %v7453
        %v7455 = vsel %vm2489, %v7409, 0.0
        %v7456 = vadd.f32 %v7454, %v7455
        %v7457 = vsel %vm2489, %v7410, 0.0
        %v7458 = vadd.f32 %v7456, %v7457
        %v7459 = vsel %vm2489, %v7411, 0.0
        %v7460 = vadd.f32 %v7458, %v7459
        %v7461 = vsel %vm2489, %v7412, 0.0
        %v7462 = vadd.f32 %v7460, %v7461
        %v7463 = vsel %vm2489, %v7413, 0.0
        %v7464 = vadd.f32 %v7462, %v7463
        %v7465 = vsel %vm2489, %v7414, 0.0
        %v7466 = vadd.f32 %v7464, %v7465
        %v7467 = vsel %vm2489, %v7415, 0.0
        %v7468 = vadd.f32 %v7466, %v7467
        %v7469 = vsel %vm2489, %v7416, 0.0
        %v7470 = vadd.f32 %v7468, %v7469
        %v7471 = vsel %vm2489, %v7417, 0.0
        %v7472 = vadd.f32 %v7470, %v7471
        %v7473 = vsel %vm2489, %v7418, 0.0
        %v7474 = vadd.f32 %v7472, %v7473
        %v7475 = vsel %vm2489, %v7419, 0.0
        %v7476 = vadd.f32 %v7474, %v7475
        %v7477 = vsel %vm2489, %v7420, 0.0
        %v7478 = vadd.f32 %v7476, %v7477
        %v7479 = vsel %vm2489, %v7421, 0.0
        %v7480 = vadd.f32 %v7478, %v7479
        %v7481 = vsel %vm2489, %v7422, 0.0
        %v7482 = vadd.f32 %v7480, %v7481
        %v7483 = vsel %vm2489, %v7423, 0.0
        %v7484 = vadd.f32 %v7482, %v7483
        %v7485 = vsel %vm2489, %v7424, 0.0
        %v7486 = vadd.f32 %v7484, %v7485
        %v7487 = vsel %vm2489, %v7425, 0.0
        %v7488 = vadd.f32 %v7486, %v7487
        %v7489 = vrot.slane %v7488, 4
        %v7490 = vadd.f32 %v7488, %v7489
        %v7491 = vrot.slane %v7490, 2
        %v7492 = vadd.f32 %v7490, %v7491
        %v7493 = vrot.slane %v7492, 1
        %v7494 = vadd.f32 %v7492, %v7493
        %v7495 = vmul.f32 %v7494, %v3782
        %v7497 = vsel %vm2489, %v7495, 0
        %7499 = vmatprep.subr.mxu0 0.0
        %7500 = vmatpush1.msra.mxu0 0.0
        %7501 = vmatprep.subr.mxu0 0.0
        %7502 = vmatpush1.msra.mxu0 0.0
        %7503 = vmatprep.subr.mxu0 0.0
        %7504 = vmatpush1.msra.mxu0 0.0
        %7505 = vmatprep.subr.mxu0 0.0
        %7506 = vmatpush1.msra.mxu0 0.0
        %7507 = vmatprep.subr.mxu0 0.0
        %7508 = vmatpush1.msra.mxu0 0.0
        %7509 = vmatprep.subr.mxu0 0.0
        %7510 = vmatpush1.msra.mxu0 0.0
        %7511 = vmatprep.subr.mxu0 0.0
        %7512 = vmatpush1.msra.mxu0 0.0
        %7513 = vmatprep.subr.mxu0 0.0
        %7514 = vmatpush1.msra.mxu0 0.0
        %7515 = vmatprep.subr.mxu0 0.0
        %7516 = vmatpush1.msra.mxu0 %v505
        %7517 = vmatprep.subr.mxu0 0.0
        %7518 = vmatpush1.msra.mxu0 %v504
        %7519 = vmatprep.subr.mxu0 0.0
        %7520 = vmatpush1.msra.mxu0 %v503
        %7521 = vmatprep.subr.mxu0 0.0
        %7522 = vmatpush1.msra.mxu0 %v502
        %7523 = vmatprep.subr.mxu0 0.0
        %7524 = vmatpush1.msra.mxu0 %v501
        %7525 = vmatprep.subr.mxu0 0.0
        %7526 = vmatpush1.msra.mxu0 %v500
        %7527 = vmatprep.subr.mxu0 0.0
        %7528 = vmatpush1.msra.mxu0 %v499
        %7529 = vmatprep.subr.mxu0 0.0
        %7530 = vmatpush1.msra.mxu0 %v498
        %7531 = vmatprep.subr.mxu0 0.0
        %7532 = vmatpush2.msra.mxu0 0.0
        %7533 = vmatprep.subr.mxu0 0.0
        %7534 = vmatpush2.msra.mxu0 0.0
        %7535 = vmatprep.subr.mxu0 0.0
        %7536 = vmatpush2.msra.mxu0 0.0
        %7537 = vmatprep.subr.mxu0 0.0
        %7538 = vmatpush2.msra.mxu0 0.0
        %7539 = vmatprep.subr.mxu0 0.0
        %7540 = vmatpush2.msra.mxu0 0.0
        %7541 = vmatprep.subr.mxu0 0.0
        %7542 = vmatpush2.msra.mxu0 0.0
        %7543 = vmatprep.subr.mxu0 0.0
        %7544 = vmatpush2.msra.mxu0 0.0
        %7545 = vmatprep.subr.mxu0 0.0
        %7546 = vmatpush2.msra.mxu0 0.0
        %7547 = vmatprep.subr.mxu0 0.0
        %7548 = vmatpush2.msra.mxu0 0.0
        %7549 = vmatprep.subr.mxu0 0.0
        %7550 = vmatpush2.msra.mxu0 0.0
        %7551 = vmatprep.subr.mxu0 0.0
        %7552 = vmatpush2.msra.mxu0 0.0
        %7553 = vmatprep.subr.mxu0 0.0
        %7554 = vmatpush2.msra.mxu0 0.0
        %7555 = vmatprep.subr.mxu0 0.0
        %7556 = vmatpush2.msra.mxu0 0.0
        %7557 = vmatprep.subr.mxu0 0.0
        %7558 = vmatpush2.msra.mxu0 0.0
        %7559 = vmatprep.subr.mxu0 0.0
        %7560 = vmatpush2.msra.mxu0 0.0
        %7561 = vmatprep.subr.mxu0 0.0
        %7562 = vmatpush2.msra.mxu0 0.0
        %7563 = vmatprep.mubr.f32.mxu0 0.0
        %7564 = vmatmul.mubr.f32.gmra.mxu0 %v7497
        %v7565 = vpop.f32.mrf.mxu0
        %v7566 = vadd.f32 %v506, %v7565
        %v7567 = vpop.f32.mrf.mxu0
        %7568 = vdwg.mxu0
        %v7569 = vmax.f32 %v7566, 0.0
        %v7571 = vsel %vm3712, %v7569, 0
        %7573 = vmatprep.subr.mxu0 0.0
        %7574 = vmatpush1.msra.mxu0 0.0
        %7575 = vmatprep.subr.mxu0 0.0
        %7576 = vmatpush1.msra.mxu0 0.0
        %7577 = vmatprep.subr.mxu0 0.0
        %7578 = vmatpush1.msra.mxu0 0.0
        %7579 = vmatprep.subr.mxu0 0.0
        %7580 = vmatpush1.msra.mxu0 0.0
        %7581 = vmatprep.subr.mxu0 0.0
        %7582 = vmatpush1.msra.mxu0 0.0
        %7583 = vmatprep.subr.mxu0 0.0
        %7584 = vmatpush1.msra.mxu0 0.0
        %7585 = vmatprep.subr.mxu0 0.0
        %7586 = vmatpush1.msra.mxu0 0.0
        %7587 = vmatprep.subr.mxu0 0.0
        %7588 = vmatpush1.msra.mxu0 0.0
        %7589 = vmatprep.subr.mxu0 0.0
        %7590 = vmatpush1.msra.mxu0 0.0
        %7591 = vmatprep.subr.mxu0 0.0
        %7592 = vmatpush1.msra.mxu0 0.0
        %7593 = vmatprep.subr.mxu0 0.0
        %7594 = vmatpush1.msra.mxu0 0.0
        %7595 = vmatprep.subr.mxu0 0.0
        %7596 = vmatpush1.msra.mxu0 0.0
        %7597 = vmatprep.subr.mxu0 0.0
        %7598 = vmatpush1.msra.mxu0 %v510
        %7599 = vmatprep.subr.mxu0 0.0
        %7600 = vmatpush1.msra.mxu0 %v509
        %7601 = vmatprep.subr.mxu0 0.0
        %7602 = vmatpush1.msra.mxu0 %v508
        %7603 = vmatprep.subr.mxu0 0.0
        %7604 = vmatpush1.msra.mxu0 %v507
        %7605 = vmatprep.subr.mxu0 0.0
        %7606 = vmatpush2.msra.mxu0 0.0
        %7607 = vmatprep.subr.mxu0 0.0
        %7608 = vmatpush2.msra.mxu0 0.0
        %7609 = vmatprep.subr.mxu0 0.0
        %7610 = vmatpush2.msra.mxu0 0.0
        %7611 = vmatprep.subr.mxu0 0.0
        %7612 = vmatpush2.msra.mxu0 0.0
        %7613 = vmatprep.subr.mxu0 0.0
        %7614 = vmatpush2.msra.mxu0 0.0
        %7615 = vmatprep.subr.mxu0 0.0
        %7616 = vmatpush2.msra.mxu0 0.0
        %7617 = vmatprep.subr.mxu0 0.0
        %7618 = vmatpush2.msra.mxu0 0.0
        %7619 = vmatprep.subr.mxu0 0.0
        %7620 = vmatpush2.msra.mxu0 0.0
        %7621 = vmatprep.subr.mxu0 0.0
        %7622 = vmatpush2.msra.mxu0 0.0
        %7623 = vmatprep.subr.mxu0 0.0
        %7624 = vmatpush2.msra.mxu0 0.0
        %7625 = vmatprep.subr.mxu0 0.0
        %7626 = vmatpush2.msra.mxu0 0.0
        %7627 = vmatprep.subr.mxu0 0.0
        %7628 = vmatpush2.msra.mxu0 0.0
        %7629 = vmatprep.subr.mxu0 0.0
        %7630 = vmatpush2.msra.mxu0 0.0
        %7631 = vmatprep.subr.mxu0 0.0
        %7632 = vmatpush2.msra.mxu0 0.0
        %7633 = vmatprep.subr.mxu0 0.0
        %7634 = vmatpush2.msra.mxu0 0.0
        %7635 = vmatprep.subr.mxu0 0.0
        %7636 = vmatpush2.msra.mxu0 0.0
        %7637 = vmatprep.mubr.f32.mxu0 0.0
        %7638 = vmatmul.mubr.f32.gmra.mxu0 %v7571
        %v7639 = vpop.f32.mrf.mxu0
        %v7640 = vadd.f32 %v511, %v7639
        %v7641 = vpop.f32.mrf.mxu0
        %7642 = vdwg.mxu0
        %v7643 = vsub.f32 0.0, %v7640
        %v7644 = vmul.f32 %v7643, 1.442695
        %v7645 = vpow.pop %v7644
        %v7646 = vadd.f32 %v7645, 1.0
        %v7647 = vrcp.pop %v7646
        %v7648 = vlaneseq
        %v7649 = vshrl.u32 %v7648, 7
        %v7650 = vsub.s32 0, %v7649
        %v7651 = vrot.slane %v7647, %v7650
        %v7652 = vmul.f32 %v7394, %v7651
        %v7653 = vmul.f32 %v7395, %v7651
        %v7654 = vmul.f32 %v7396, %v7651
        %v7655 = vmul.f32 %v7397, %v7651
        %v7656 = vmul.f32 %v7398, %v7651
        %v7657 = vmul.f32 %v7399, %v7651
        %v7658 = vmul.f32 %v7400, %v7651
        %v7659 = vmul.f32 %v7401, %v7651
        %v7660 = vmul.f32 %v7402, %v7651
        %v7661 = vmul.f32 %v7403, %v7651
        %v7662 = vmul.f32 %v7404, %v7651
        %v7663 = vmul.f32 %v7405, %v7651
        %v7664 = vmul.f32 %v7406, %v7651
        %v7665 = vmul.f32 %v7407, %v7651
        %v7666 = vmul.f32 %v7408, %v7651
        %v7667 = vmul.f32 %v7409, %v7651
        %v7668 = vmul.f32 %v7410, %v7651
        %v7669 = vmul.f32 %v7411, %v7651
        %v7670 = vmul.f32 %v7412, %v7651
        %v7671 = vmul.f32 %v7413, %v7651
        %v7672 = vmul.f32 %v7414, %v7651
        %v7673 = vmul.f32 %v7415, %v7651
        %v7674 = vmul.f32 %v7416, %v7651
        %v7675 = vmul.f32 %v7417, %v7651
        %v7676 = vmul.f32 %v7418, %v7651
        %v7677 = vmul.f32 %v7419, %v7651
        %v7678 = vmul.f32 %v7420, %v7651
        %v7679 = vmul.f32 %v7421, %v7651
        %v7680 = vmul.f32 %v7422, %v7651
        %v7681 = vmul.f32 %v7423, %v7651
        %v7682 = vmul.f32 %v7424, %v7651
        %v7683 = vmul.f32 %v7425, %v7651
        %v7684 = vadd.f32 %v7652, %v512
        %v7685 = vadd.f32 %v7653, %v513
        %v7686 = vadd.f32 %v7654, %v514
        %v7687 = vadd.f32 %v7655, %v515
        %v7688 = vadd.f32 %v7656, %v516
        %v7689 = vadd.f32 %v7657, %v517
        %v7690 = vadd.f32 %v7658, %v518
        %v7691 = vadd.f32 %v7659, %v519
        %v7692 = vadd.f32 %v7660, %v520
        %v7693 = vadd.f32 %v7661, %v521
        %v7694 = vadd.f32 %v7662, %v522
        %v7695 = vadd.f32 %v7663, %v523
        %v7696 = vadd.f32 %v7664, %v524
        %v7697 = vadd.f32 %v7665, %v525
        %v7698 = vadd.f32 %v7666, %v526
        %v7699 = vadd.f32 %v7667, %v527
        %v7700 = vadd.f32 %v7668, %v528
        %v7701 = vadd.f32 %v7669, %v529
        %v7702 = vadd.f32 %v7670, %v530
        %v7703 = vadd.f32 %v7671, %v531
        %v7704 = vadd.f32 %v7672, %v532
        %v7705 = vadd.f32 %v7673, %v533
        %v7706 = vadd.f32 %v7674, %v534
        %v7707 = vadd.f32 %v7675, %v535
        %v7708 = vadd.f32 %v7676, %v536
        %v7709 = vadd.f32 %v7677, %v537
        %v7710 = vadd.f32 %v7678, %v538
        %v7711 = vadd.f32 %v7679, %v539
        %v7712 = vadd.f32 %v7680, %v540
        %v7713 = vadd.f32 %v7681, %v541
        %v7714 = vadd.f32 %v7682, %v542
        %v7715 = vadd.f32 %v7683, %v543
        %7716 = vst.msk [vmem:[%s379] sm:$0xff] %vm2489, %v7684
        %7717 = vst.msk [vmem:[%s379 + $0x8] sm:$0xff] %vm2489, %v7685
        %7718 = vst.msk [vmem:[%s379 + $0x10] sm:$0xff] %vm2489, %v7686
        %7719 = vst.msk [vmem:[%s379 + $0x18] sm:$0xff] %vm2489, %v7687
        %7720 = vst.msk [vmem:[%s379 + $0x20] sm:$0xff] %vm2489, %v7688
        %7721 = vst.msk [vmem:[%s379 + $0x28] sm:$0xff] %vm2489, %v7689
        %7722 = vst.msk [vmem:[%s379 + $0x30] sm:$0xff] %vm2489, %v7690
        %7723 = vst.msk [vmem:[%s379 + $0x38] sm:$0xff] %vm2489, %v7691
        %7724 = vst.msk [vmem:[%s379 + $0x40] sm:$0xff] %vm2489, %v7692
        %7725 = vst.msk [vmem:[%s379 + $0x48] sm:$0xff] %vm2489, %v7693
        %7726 = vst.msk [vmem:[%s379 + $0x50] sm:$0xff] %vm2489, %v7694
        %7727 = vst.msk [vmem:[%s379 + $0x58] sm:$0xff] %vm2489, %v7695
        %7728 = vst.msk [vmem:[%s379 + $0x60] sm:$0xff] %vm2489, %v7696
        %7729 = vst.msk [vmem:[%s379 + $0x68] sm:$0xff] %vm2489, %v7697
        %7730 = vst.msk [vmem:[%s379 + $0x70] sm:$0xff] %vm2489, %v7698
        %7731 = vst.msk [vmem:[%s379 + $0x78] sm:$0xff] %vm2489, %v7699
        %7732 = vst.msk [vmem:[%s379 + $0x80] sm:$0xff] %vm2489, %v7700
        %7733 = vst.msk [vmem:[%s379 + $0x88] sm:$0xff] %vm2489, %v7701
        %7734 = vst.msk [vmem:[%s379 + $0x90] sm:$0xff] %vm2489, %v7702
        %7735 = vst.msk [vmem:[%s379 + $0x98] sm:$0xff] %vm2489, %v7703
        %7736 = vst.msk [vmem:[%s379 + $0xa0] sm:$0xff] %vm2489, %v7704
        %7737 = vst.msk [vmem:[%s379 + $0xa8] sm:$0xff] %vm2489, %v7705
        %7738 = vst.msk [vmem:[%s379 + $0xb0] sm:$0xff] %vm2489, %v7706
        %7739 = vst.msk [vmem:[%s379 + $0xb8] sm:$0xff] %vm2489, %v7707
        %7740 = vst.msk [vmem:[%s379 + $0xc0] sm:$0xff] %vm2489, %v7708
        %7741 = vst.msk [vmem:[%s379 + $0xc8] sm:$0xff] %vm2489, %v7709
        %7742 = vst.msk [vmem:[%s379 + $0xd0] sm:$0xff] %vm2489, %v7710
        %7743 = vst.msk [vmem:[%s379 + $0xd8] sm:$0xff] %vm2489, %v7711
        %7744 = vst.msk [vmem:[%s379 + $0xe0] sm:$0xff] %vm2489, %v7712
        %7745 = vst.msk [vmem:[%s379 + $0xe8] sm:$0xff] %vm2489, %v7713
        %7746 = vst.msk [vmem:[%s379 + $0xf0] sm:$0xff] %vm2489, %v7714
        %7747 = vst.msk [vmem:[%s379 + $0xf8] sm:$0xff] %vm2489, %v7715
        %s7748 = sand.u32 %s269, 1
        %s7749 = scalar_lea.sflag [#allocation7], %s7748
        %s7750 = sand.u32 %s269, 1
        %s7751 = smul.addr %s7750, 256
        %s7752 = scalar_lea.vmem [#allocation6], %s7751
        // Predicated region
        $region65: #{residual_block_forward.1} parent=63 // pred_check
          %p7753 = pneg %p279
        $region66: #{residual_block_forward.1} parent=63 // pred_check_branch
          %7755 = sbr.rel (%p7753) target = $region68
        $region67: #{residual_block_forward.1} parent=63 // pred_region
          %s7757 = ssub.s32 4096, 4096
          %7758 = vsyncadd %s7749, %s7757
          %s7759 = smul.addr %s25, 32
          %s7760 = smul.addr %s7759, 128
          %s7761 = scalar_lea.hbm %s11, %s7760
          %s7762 = sshll.u32 %s7752, 4
          %s7763 = int_to_ptr.vmem [resolvable:$true] %s7762
          %7768 = dma.vmem_to_hbm [thread:$0]  %s7763, 4096, %s7761, %s7749, 128, 128, 8
        $region68: #{residual_block_forward.1} parent=63 // pred_fallthru
          _
      $region64: #{residual_block_forward.1} parent=5 // pred_fallthru
        _
      %p7769 = scmp.le.s32.totalorder 2, %s20
      // Predicated region
      $region69: #{residual_block_forward.1} parent=5 // pred_check
        %p7770 = pneg %p7769
      $region70: #{residual_block_forward.1} parent=5 // pred_check_branch
        %7772 = sbr.rel (%p7770) target = $region72
      $region71: #{residual_block_forward.1} parent=5 // pred_region
        %s7773 = ssub.s32 %s20, 2
        // Predicated region
        $region73: #{residual_block_forward.1} parent=71 // pred_check
          %p7774 = pneg %p285
        $region74: #{residual_block_forward.1} parent=71 // pred_check_branch
          %7776 = sbr.rel (%p7774) target = $region76
        $region75: #{residual_block_forward.1} parent=71 // pred_region
          %s7777 = sand.u32 %s270, 1
          %s7778 = scalar_lea.sflag [#allocation7], %s7777
          %s7779 = sand.u32 %s270, 1
          %s7780 = smul.addr %s7779, 256
          %s7781 = scalar_lea.vmem [#allocation6], %s7780
          %7782 = dma.done %s7778, 4096
        $region76: #{residual_block_forward.1} parent=71 // pred_fallthru
          _
      $region72: #{residual_block_forward.1} parent=5 // pred_fallthru
        _
    $region6: #{residual_block_forward.1} parent=1 // loop_footer
      %s24 = sadd.s32 1, %s20
    $region7: #{residual_block_forward.1} parent=1 // loop_footer_branch
      %19 = sbr.rel target = $region3
    $region8: #{residual_block_forward.1} parent=1 // loop_exit
      _
    %7783 = vsyncpa [#allocation7], 1
    %s7784 = scalar_lea.sflag [#allocation7], 1
    %7785 = vsyncpa %s7784, 1

</llo_original>
